<compile_context>
chip_gen: v6e
topology: v6e:2x2x1
jax: 0.10.0
libtpu: 0.0.40
codegen_flags: <defaults>
</compile_context>

<pallas_src>
import jax
import jax.numpy as jnp
import numpy as np
from jax.experimental import pallas as pl
from jax.experimental.pallas import tpu as pltpu

# ---- model hyper-parameters (from the PyTorch module) ----
N_EMBD = 64
N_HEAD = 4
N_LAYER = 4
BLOCK_SIZE = 32          # max sequence length (causal mask size)
VOCAB_SIZE = 65          # len(chars) of tiny char-level corpus (synthetic)
VOCAB_PAD = 128          # vocab padded to a full lane width for dense stores
HEAD_SIZE = N_EMBD // N_HEAD
LN_EPS = 1e-5
NEG_BIG = -1e30          # finite "-inf" for the causal mask


def _layernorm(x, g, b):
    mu = jnp.mean(x, axis=-1, keepdims=True)
    var = jnp.mean((x - mu) ** 2, axis=-1, keepdims=True)
    return (x - mu) * jax.lax.rsqrt(var + LN_EPS) * g + b


# ------------------------------------------------------------------
# Single fused Pallas kernel: 4 transformer blocks + final LN + head
# (one batch row / sequence per grid step; weights VMEM-resident)
# ------------------------------------------------------------------
def _gpt_fused_kernel(x_ref,
                      ln1g_ref, ln1b_ref, wqkv_ref,
                      projw_ref, projb_ref, ln2g_ref, ln2b_ref,
                      w1_ref, b1_ref, w2_ref, b2_ref,
                      lnfg_ref, lnfb_ref, headw_ref, headb_ref,
                      out_ref):
    x = x_ref[0].astype(jnp.float32)                  # (T, C) f32 residual stream
    T, C = x.shape
    hs = C // N_HEAD
    scale = float(hs) ** (-0.5)

    # additive causal mask built once (0 where visible, -1e30 where masked)
    row = jax.lax.broadcasted_iota(jnp.int32, (T, T), 0)
    col = jax.lax.broadcasted_iota(jnp.int32, (T, T), 1)
    mask_add = jnp.where(row >= col, 0.0, NEG_BIG).astype(jnp.float32)

    for l in range(N_LAYER):                          # static unroll over layers
        # ----- multi-head causal self-attention on layernorm(x) -----
        h = _layernorm(x, ln1g_ref[l], ln1b_ref[l]).astype(jnp.bfloat16)
        qkv = jnp.dot(h, wqkv_ref[l], preferred_element_type=jnp.float32)  # (T, 3C)
        q = qkv[:, :C] * scale                        # scale folded in once
        k = qkv[:, C:2 * C]
        v = qkv[:, 2 * C:]

        # TODO(synk): a fully head-batched (H, T, hs) einsum would cut the tiny
        # per-head MXU pushes further, but its batched/transposed dot_general
        # layouts are riskier to lower at hs=16; keep the proven unrolled loop.
        heads = []
        for hd in range(N_HEAD):
            sl = slice(hd * hs, (hd + 1) * hs)
            s = jnp.dot(q[:, sl], k[:, sl].T,
                        preferred_element_type=jnp.float32) + mask_add
            s = s - jnp.max(s, axis=-1, keepdims=True)
            p = jnp.exp(s)
            p = p * pl.reciprocal(jnp.sum(p, axis=-1, keepdims=True), approx=True)
            heads.append(jnp.dot(p, v[:, sl], preferred_element_type=jnp.float32))
        att = jnp.concatenate(heads, axis=-1).astype(jnp.bfloat16)   # (T, C)
        att = jnp.dot(att, projw_ref[l],
                      preferred_element_type=jnp.float32) + projb_ref[l]
        x = x + att

        # ----- feed-forward MLP on layernorm(x) -----
        h2 = _layernorm(x, ln2g_ref[l], ln2b_ref[l]).astype(jnp.bfloat16)
        m = jnp.dot(h2, w1_ref[l], preferred_element_type=jnp.float32) + b1_ref[l]
        m = jnp.maximum(m, 0.0).astype(jnp.bfloat16)
        m = jnp.dot(m, w2_ref[l], preferred_element_type=jnp.float32) + b2_ref[l]
        x = x + m

    # ----- final LayerNorm + padded vocab head (lane-dense 128-wide store) -----
    hf = _layernorm(x, lnfg_ref[...], lnfb_ref[...]).astype(jnp.bfloat16)
    logits = jnp.dot(hf, headw_ref[...],
                     preferred_element_type=jnp.float32) + headb_ref[...]
    out_ref[0] = logits.astype(out_ref.dtype)


# ------------------------------------------------------------------
# Wrapper
# ------------------------------------------------------------------
def _fixed(shape):
    # same full block every grid step -> weight DMA'd once, stays VMEM-resident
    zeros = (0,) * len(shape)
    return pl.BlockSpec(shape, lambda b: zeros)


def gpt_fused(x, p):
    B, T, C = x.shape
    L = N_LAYER
    Cf = 4 * C
    Vp = p["head_w"].shape[1]
    in_specs = [
        pl.BlockSpec((1, T, C), lambda b: (b, 0, 0)),               # activations
        _fixed((L, 1, C)), _fixed((L, 1, C)),                       # ln1 g/b
        _fixed((L, C, 3 * C)),                                      # fused wqkv
        _fixed((L, C, C)), _fixed((L, 1, C)),                       # proj w/b
        _fixed((L, 1, C)), _fixed((L, 1, C)),                       # ln2 g/b
        _fixed((L, C, Cf)), _fixed((L, 1, Cf)),                     # mlp w1/b1
        _fixed((L, Cf, C)), _fixed((L, 1, C)),                      # mlp w2/b2
        _fixed((1, C)), _fixed((1, C)),                             # final LN g/b
        _fixed((C, Vp)), _fixed((1, Vp)),                           # head w/b
    ]
    return pl.pallas_call(
        _gpt_fused_kernel,
        out_shape=jax.ShapeDtypeStruct((B, T, Vp), jnp.float32),
        grid=(B,),
        in_specs=in_specs,
        out_specs=pl.BlockSpec((1, T, Vp), lambda b: (b, 0, 0)),
        compiler_params=pltpu.CompilerParams(dimension_semantics=("parallel",)),
    )(x,
      p["ln1g"], p["ln1b"], p["wqkv"],
      p["projw"], p["projb"], p["ln2g"], p["ln2b"],
      p["w1"], p["b1"], p["w2"], p["b2"],
      p["lnf_g"], p["lnf_b"], p["head_w"], p["head_b"])


@jax.jit
def gpt_forward(idx, packed):
    """idx: (B, T) int32 -> logits (B, T, VOCAB_SIZE) float32."""
    T = idx.shape[1]
    tok = packed["tok_emb"][idx]                    # (B, T, C) gather (glue)
    pos = packed["pos_emb"][:T]                     # (T, C)
    x = tok + pos[None, :, :]
    logits_padded = gpt_fused(x, packed)            # (B, T, VOCAB_PAD)
    return logits_padded[:, :, :VOCAB_SIZE]


# ------------------------------------------------------------------
# Deterministic parameter construction (PyTorch-layout f32 params)
# ------------------------------------------------------------------
def init_params(key):
    def nrm(k, shape, scale=0.02):
        return (scale * jax.random.normal(k, shape)).astype(jnp.float32)

    keys = jax.random.split(key, 3 + N_LAYER)
    params = {
        "tok_emb": nrm(keys[0], (VOCAB_SIZE, N_EMBD), 1.0),
        "pos_emb": nrm(keys[1], (BLOCK_SIZE, N_EMBD), 1.0),
        "lnf_g": jnp.ones((1, N_EMBD), jnp.float32),
        "lnf_b": jnp.zeros((1, N_EMBD), jnp.float32),
        "blocks": [],
    }
    for l in range(N_LAYER):
        ks = jax.random.split(keys[2 + l], 8)
        params["blocks"].append({
            "ln1g": jnp.ones((1, N_EMBD), jnp.float32),
            "ln1b": jnp.zeros((1, N_EMBD), jnp.float32),
            "wq": nrm(ks[0], (N_EMBD, N_EMBD)),
            "wk": nrm(ks[1], (N_EMBD, N_EMBD)),
            "wv": nrm(ks[2], (N_EMBD, N_EMBD)),
            "projw": nrm(ks[3], (N_EMBD, N_EMBD)),
            "projb": nrm(ks[4], (1, N_EMBD)),
            "ln2g": jnp.ones((1, N_EMBD), jnp.float32),
            "ln2b": jnp.zeros((1, N_EMBD), jnp.float32),
            "w1": nrm(ks[5], (N_EMBD, 4 * N_EMBD)),
            "b1": jnp.zeros((1, 4 * N_EMBD), jnp.float32),
            "w2": nrm(ks[6], (4 * N_EMBD, N_EMBD)),
            "b2": jnp.zeros((1, N_EMBD), jnp.float32),
        })
    kh = jax.random.split(keys[-1], 2)
    params["head_w"] = nrm(kh[0], (N_EMBD, VOCAB_SIZE))
    params["head_b"] = jnp.zeros((1, VOCAB_SIZE), jnp.float32)
    return params


def pack_params(params):
    """Stack per-layer weights, fuse QKV, cast matmul weights bf16, pad head."""
    bl = params["blocks"]
    stack = lambda name: jnp.stack([b[name] for b in bl])          # (L, ...)
    bf16 = lambda a: a.astype(jnp.bfloat16)
    wqkv = jnp.stack([jnp.concatenate([b["wq"], b["wk"], b["wv"]], axis=-1)
                      for b in bl])                                # (L, C, 3C)
    C, V = params["head_w"].shape
    head_w = jnp.zeros((C, VOCAB_PAD), jnp.float32).at[:, :V].set(params["head_w"])
    head_b = jnp.zeros((1, VOCAB_PAD), jnp.float32).at[:, :V].set(params["head_b"])
    return {
        "tok_emb": params["tok_emb"],
        "pos_emb": params["pos_emb"],
        "ln1g": stack("ln1g"), "ln1b": stack("ln1b"),
        "wqkv": bf16(wqkv),
        "projw": bf16(stack("projw")), "projb": stack("projb"),
        "ln2g": stack("ln2g"), "ln2b": stack("ln2b"),
        "w1": bf16(stack("w1")), "b1": stack("b1"),
        "w2": bf16(stack("w2")), "b2": stack("b2"),
        "lnf_g": params["lnf_g"], "lnf_b": params["lnf_b"],
        "head_w": bf16(head_w), "head_b": head_b,
    }


# ------------------------------------------------------------------
# Pure-JAX f32 reference (same math, no Pallas) for correctness check
# ------------------------------------------------------------------
def ref_forward(idx, params):
    T = idx.shape[1]
    x = params["tok_emb"][idx] + params["pos_emb"][:T][None]
    mask = jnp.tril(jnp.ones((T, T), bool))
    with jax.default_matmul_precision("highest"):
        for p in params["blocks"]:
            h = _layernorm(x, p["ln1g"][0], p["ln1b"][0])
            q, k, v = h @ p["wq"], h @ p["wk"], h @ p["wv"]
            outs = []
            for hd in range(N_HEAD):
                sl = slice(hd * HEAD_SIZE, (hd + 1) * HEAD_SIZE)
                s = (q[..., sl] @ jnp.swapaxes(k[..., sl], -1, -2)) * HEAD_SIZE ** -0.5
                s = jnp.where(mask, s, -jnp.inf)
                pr = jax.nn.softmax(s, axis=-1)
                outs.append(pr @ v[..., sl])
            attn = jnp.concatenate(outs, axis=-1) @ p["projw"] + p["projb"][0]
            x = x + attn
            h2 = _layernorm(x, p["ln2g"][0], p["ln2b"][0])
            m = jnp.maximum(h2 @ p["w1"] + p["b1"][0], 0.0) @ p["w2"] + p["b2"][0]
            x = x + m
        x = _layernorm(x, params["lnf_g"][0], params["lnf_b"][0])
        return x @ params["head_w"] + params["head_b"][0]


if __name__ == "__main__":
    key = jax.random.PRNGKey(0)
    pkey, ikey = jax.random.split(key)
    params = init_params(pkey)
    packed = pack_params(params)

    B, T = 2, 8                              # T <= block_size (32)
    idx = jax.random.randint(ikey, (B, T), 0, VOCAB_SIZE, dtype=jnp.int32)

    logits = gpt_forward(idx, packed)
    jax.block_until_ready(logits)

    ref = ref_forward(idx, params)           # full-f32 reference
    np.testing.assert_allclose(np.asarray(logits), np.asarray(ref),
                               rtol=1e-2, atol=1e-2)
    assert logits.shape == (B, T, VOCAB_SIZE)
    print("KERNEL_OK")
</pallas_src>

<mosaic_0001>
module attributes {stable_mosaic.version = 11 : i64} {
  func.func @_gpt_fused_kernel(%arg0: i32, %arg1: memref<1x8x64xf32, #tpu.memory_space<vmem>>, %arg2: memref<4x1x64xf32, #tpu.memory_space<vmem>>, %arg3: memref<4x1x64xf32, #tpu.memory_space<vmem>>, %arg4: memref<4x64x192xbf16, #tpu.memory_space<vmem>>, %arg5: memref<4x64x64xbf16, #tpu.memory_space<vmem>>, %arg6: memref<4x1x64xf32, #tpu.memory_space<vmem>>, %arg7: memref<4x1x64xf32, #tpu.memory_space<vmem>>, %arg8: memref<4x1x64xf32, #tpu.memory_space<vmem>>, %arg9: memref<4x64x256xbf16, #tpu.memory_space<vmem>>, %arg10: memref<4x1x256xf32, #tpu.memory_space<vmem>>, %arg11: memref<4x256x64xbf16, #tpu.memory_space<vmem>>, %arg12: memref<4x1x64xf32, #tpu.memory_space<vmem>>, %arg13: memref<1x64xf32, #tpu.memory_space<vmem>>, %arg14: memref<1x64xf32, #tpu.memory_space<vmem>>, %arg15: memref<64x128xbf16, #tpu.memory_space<vmem>>, %arg16: memref<1x128xf32, #tpu.memory_space<vmem>>, %arg17: memref<1x8x128xf32, #tpu.memory_space<vmem>>) attributes {dimension_semantics = [#tpu.dimension_semantics<parallel>], iteration_bounds = array<i64: 2>, scalar_prefetch = 0 : i64, scratch_operands = 0 : i64, tpu.core_type = #tpu.core_type<tc>, window_params = [{transform_indices = @transform_0, window_bounds = array<i64: 1, 8, 64>}, {pipeline_mode = #tpu.pipeline_mode<synchronous>, transform_indices = @transform_1, window_bounds = array<i64: 4, 1, 64>}, {pipeline_mode = #tpu.pipeline_mode<synchronous>, transform_indices = @transform_2, window_bounds = array<i64: 4, 1, 64>}, {pipeline_mode = #tpu.pipeline_mode<synchronous>, transform_indices = @transform_3, window_bounds = array<i64: 4, 64, 192>}, {pipeline_mode = #tpu.pipeline_mode<synchronous>, transform_indices = @transform_4, window_bounds = array<i64: 4, 64, 64>}, {pipeline_mode = #tpu.pipeline_mode<synchronous>, transform_indices = @transform_5, window_bounds = array<i64: 4, 1, 64>}, {pipeline_mode = #tpu.pipeline_mode<synchronous>, transform_indices = @transform_6, window_bounds = array<i64: 4, 1, 64>}, {pipeline_mode = #tpu.pipeline_mode<synchronous>, transform_indices = @transform_7, window_bounds = array<i64: 4, 1, 64>}, {pipeline_mode = #tpu.pipeline_mode<synchronous>, transform_indices = @transform_8, window_bounds = array<i64: 4, 64, 256>}, {pipeline_mode = #tpu.pipeline_mode<synchronous>, transform_indices = @transform_9, window_bounds = array<i64: 4, 1, 256>}, {pipeline_mode = #tpu.pipeline_mode<synchronous>, transform_indices = @transform_10, window_bounds = array<i64: 4, 256, 64>}, {pipeline_mode = #tpu.pipeline_mode<synchronous>, transform_indices = @transform_11, window_bounds = array<i64: 4, 1, 64>}, {pipeline_mode = #tpu.pipeline_mode<synchronous>, transform_indices = @transform_12, window_bounds = array<i64: 1, 64>}, {pipeline_mode = #tpu.pipeline_mode<synchronous>, transform_indices = @transform_13, window_bounds = array<i64: 1, 64>}, {pipeline_mode = #tpu.pipeline_mode<synchronous>, transform_indices = @transform_14, window_bounds = array<i64: 64, 128>}, {pipeline_mode = #tpu.pipeline_mode<synchronous>, transform_indices = @transform_15, window_bounds = array<i64: 1, 128>}, {transform_indices = @transform_16, window_bounds = array<i64: 1, 8, 128>}]} {
    %c0 = arith.constant 0 : index
    %c0_0 = arith.constant 0 : index
    %c0_1 = arith.constant 0 : index
    %0 = vector.load %arg1[%c0, %c0_0, %c0_1] : memref<1x8x64xf32, #tpu.memory_space<vmem>>, vector<1x8x64xf32>
    %1 = vector.shape_cast %0 : vector<1x8x64xf32> to vector<8x64xf32>
    %2 = tpu.iota {dimensions = array<i32: 0>} : vector<8x8xi32>
    %3 = tpu.iota {dimensions = array<i32: 1>} : vector<8x8xi32>
    %4 = arith.cmpi sge, %2, %3 : vector<8x8xi32>
    %cst = arith.constant 0.000000e+00 : f32
    %cst_2 = arith.constant -1.000000e+30 : f32
    %5 = vector.broadcast %cst : f32 to vector<8x8xf32>
    %6 = vector.broadcast %cst_2 : f32 to vector<8x8xf32>
    %7 = arith.select %4, %5, %6 : vector<8x8xi1>, vector<8x8xf32>
    %c0_3 = arith.constant 0 : index
    %c0_4 = arith.constant 0 : index
    %c0_5 = arith.constant 0 : index
    %8 = vector.load %arg2[%c0_3, %c0_4, %c0_5] : memref<4x1x64xf32, #tpu.memory_space<vmem>>, vector<1x1x64xf32>
    %9 = vector.shape_cast %8 : vector<1x1x64xf32> to vector<1x64xf32>
    %c0_6 = arith.constant 0 : index
    %c0_7 = arith.constant 0 : index
    %c0_8 = arith.constant 0 : index
    %10 = vector.load %arg3[%c0_6, %c0_7, %c0_8] : memref<4x1x64xf32, #tpu.memory_space<vmem>>, vector<1x1x64xf32>
    %11 = vector.shape_cast %10 : vector<1x1x64xf32> to vector<1x64xf32>
    %cst_9 = arith.constant dense<0.000000e+00> : vector<8xf32>
    %12 = vector.multi_reduction <add>, %1, %cst_9 [1] : vector<8x64xf32> to vector<8xf32>
    %13 = vector.shape_cast %12 : vector<8xf32> to vector<8x1xf32>
    %cst_10 = arith.constant 6.400000e+01 : f32
    %14 = vector.broadcast %cst_10 : f32 to vector<8x1xf32>
    %15 = arith.divf %13, %14 : vector<8x1xf32>
    %16 = vector.broadcast %15 : vector<8x1xf32> to vector<8x64xf32>
    %17 = arith.subf %1, %16 : vector<8x64xf32>
    %18 = arith.mulf %17, %17 : vector<8x64xf32>
    %cst_11 = arith.constant dense<0.000000e+00> : vector<8xf32>
    %19 = vector.multi_reduction <add>, %18, %cst_11 [1] : vector<8x64xf32> to vector<8xf32>
    %20 = vector.shape_cast %19 : vector<8xf32> to vector<8x1xf32>
    %cst_12 = arith.constant 6.400000e+01 : f32
    %21 = vector.broadcast %cst_12 : f32 to vector<8x1xf32>
    %22 = arith.divf %20, %21 : vector<8x1xf32>
    %23 = vector.broadcast %15 : vector<8x1xf32> to vector<8x64xf32>
    %24 = arith.subf %1, %23 : vector<8x64xf32>
    %cst_13 = arith.constant 9.99999974E-6 : f32
    %25 = vector.broadcast %cst_13 : f32 to vector<8x1xf32>
    %26 = arith.addf %22, %25 : vector<8x1xf32>
    %27 = math.rsqrt %26 : vector<8x1xf32>
    %28 = vector.broadcast %27 : vector<8x1xf32> to vector<8x64xf32>
    %29 = arith.mulf %24, %28 : vector<8x64xf32>
    %30 = vector.broadcast %9 : vector<1x64xf32> to vector<8x64xf32>
    %31 = arith.mulf %29, %30 : vector<8x64xf32>
    %32 = vector.broadcast %11 : vector<1x64xf32> to vector<8x64xf32>
    %33 = arith.addf %31, %32 : vector<8x64xf32>
    %34 = arith.truncf %33 : vector<8x64xf32> to vector<8x64xbf16>
    %c0_14 = arith.constant 0 : index
    %c0_15 = arith.constant 0 : index
    %c0_16 = arith.constant 0 : index
    %35 = vector.load %arg4[%c0_14, %c0_15, %c0_16] : memref<4x64x192xbf16, #tpu.memory_space<vmem>>, vector<1x64x192xbf16>
    %36 = vector.shape_cast %35 : vector<1x64x192xbf16> to vector<64x192xbf16>
    %cst_17 = arith.constant dense<0.000000e+00> : vector<8x192xf32>
    %37 = tpu.matmul %34, %36, %cst_17 {dimension_numbers = #tpu.dot_dimension_numbers<[1], [0], [0], [1], [0, 0, 1, 1], [], []>} : vector<8x64xbf16>, vector<64x192xbf16>, vector<8x192xf32> -> vector<8x192xf32>
    %38 = vector.extract_strided_slice %37 {offsets = [0, 0], sizes = [8, 64], strides = [1, 1]} : vector<8x192xf32> to vector<8x64xf32>
    %cst_18 = arith.constant 2.500000e-01 : f32
    %39 = vector.broadcast %cst_18 : f32 to vector<8x64xf32>
    %40 = arith.mulf %38, %39 : vector<8x64xf32>
    %41 = vector.extract_strided_slice %37 {offsets = [0, 64], sizes = [8, 64], strides = [1, 1]} : vector<8x192xf32> to vector<8x64xf32>
    %42 = vector.extract_strided_slice %37 {offsets = [0, 128], sizes = [8, 64], strides = [1, 1]} : vector<8x192xf32> to vector<8x64xf32>
    %43 = vector.extract_strided_slice %40 {offsets = [0, 0], sizes = [8, 16], strides = [1, 1]} : vector<8x64xf32> to vector<8x16xf32>
    %44 = vector.extract_strided_slice %41 {offsets = [0, 0], sizes = [8, 16], strides = [1, 1]} : vector<8x64xf32> to vector<8x16xf32>
    %45 = tpu.transpose %44, [1, 0] : vector<8x16xf32> -> vector<16x8xf32>
    %cst_19 = arith.constant dense<0.000000e+00> : vector<8x8xf32>
    %46 = tpu.matmul %43, %45, %cst_19 {dimension_numbers = #tpu.dot_dimension_numbers<[1], [0], [0], [1], [0, 0, 1, 1], [], []>} : vector<8x16xf32>, vector<16x8xf32>, vector<8x8xf32> -> vector<8x8xf32>
    %47 = arith.addf %46, %7 : vector<8x8xf32>
    %cst_20 = arith.constant dense<0xFF800000> : vector<8xf32>
    %48 = vector.multi_reduction <maximumf>, %47, %cst_20 [1] : vector<8x8xf32> to vector<8xf32>
    %49 = vector.shape_cast %48 : vector<8xf32> to vector<8x1xf32>
    %50 = vector.broadcast %49 : vector<8x1xf32> to vector<8x8xf32>
    %51 = arith.subf %47, %50 : vector<8x8xf32>
    %52 = math.exp %51 : vector<8x8xf32>
    %cst_21 = arith.constant dense<0.000000e+00> : vector<8xf32>
    %53 = vector.multi_reduction <add>, %52, %cst_21 [1] : vector<8x8xf32> to vector<8xf32>
    %54 = vector.shape_cast %53 : vector<8xf32> to vector<8x1xf32>
    %55 = tpu.reciprocal %54 {approx = true} : vector<8x1xf32> -> vector<8x1xf32>
    %56 = vector.broadcast %55 : vector<8x1xf32> to vector<8x8xf32>
    %57 = arith.mulf %52, %56 : vector<8x8xf32>
    %58 = vector.extract_strided_slice %42 {offsets = [0, 0], sizes = [8, 16], strides = [1, 1]} : vector<8x64xf32> to vector<8x16xf32>
    %cst_22 = arith.constant dense<0.000000e+00> : vector<8x16xf32>
    %59 = tpu.matmul %57, %58, %cst_22 {dimension_numbers = #tpu.dot_dimension_numbers<[1], [0], [0], [1], [0, 0, 1, 1], [], []>} : vector<8x8xf32>, vector<8x16xf32>, vector<8x16xf32> -> vector<8x16xf32>
    %60 = vector.extract_strided_slice %40 {offsets = [0, 16], sizes = [8, 16], strides = [1, 1]} : vector<8x64xf32> to vector<8x16xf32>
    %61 = vector.extract_strided_slice %41 {offsets = [0, 16], sizes = [8, 16], strides = [1, 1]} : vector<8x64xf32> to vector<8x16xf32>
    %62 = tpu.transpose %61, [1, 0] : vector<8x16xf32> -> vector<16x8xf32>
    %cst_23 = arith.constant dense<0.000000e+00> : vector<8x8xf32>
    %63 = tpu.matmul %60, %62, %cst_23 {dimension_numbers = #tpu.dot_dimension_numbers<[1], [0], [0], [1], [0, 0, 1, 1], [], []>} : vector<8x16xf32>, vector<16x8xf32>, vector<8x8xf32> -> vector<8x8xf32>
    %64 = arith.addf %63, %7 : vector<8x8xf32>
    %cst_24 = arith.constant dense<0xFF800000> : vector<8xf32>
    %65 = vector.multi_reduction <maximumf>, %64, %cst_24 [1] : vector<8x8xf32> to vector<8xf32>
    %66 = vector.shape_cast %65 : vector<8xf32> to vector<8x1xf32>
    %67 = vector.broadcast %66 : vector<8x1xf32> to vector<8x8xf32>
    %68 = arith.subf %64, %67 : vector<8x8xf32>
    %69 = math.exp %68 : vector<8x8xf32>
    %cst_25 = arith.constant dense<0.000000e+00> : vector<8xf32>
    %70 = vector.multi_reduction <add>, %69, %cst_25 [1] : vector<8x8xf32> to vector<8xf32>
    %71 = vector.shape_cast %70 : vector<8xf32> to vector<8x1xf32>
    %72 = tpu.reciprocal %71 {approx = true} : vector<8x1xf32> -> vector<8x1xf32>
    %73 = vector.broadcast %72 : vector<8x1xf32> to vector<8x8xf32>
    %74 = arith.mulf %69, %73 : vector<8x8xf32>
    %75 = vector.extract_strided_slice %42 {offsets = [0, 16], sizes = [8, 16], strides = [1, 1]} : vector<8x64xf32> to vector<8x16xf32>
    %cst_26 = arith.constant dense<0.000000e+00> : vector<8x16xf32>
    %76 = tpu.matmul %74, %75, %cst_26 {dimension_numbers = #tpu.dot_dimension_numbers<[1], [0], [0], [1], [0, 0, 1, 1], [], []>} : vector<8x8xf32>, vector<8x16xf32>, vector<8x16xf32> -> vector<8x16xf32>
    %77 = vector.extract_strided_slice %40 {offsets = [0, 32], sizes = [8, 16], strides = [1, 1]} : vector<8x64xf32> to vector<8x16xf32>
    %78 = vector.extract_strided_slice %41 {offsets = [0, 32], sizes = [8, 16], strides = [1, 1]} : vector<8x64xf32> to vector<8x16xf32>
    %79 = tpu.transpose %78, [1, 0] : vector<8x16xf32> -> vector<16x8xf32>
    %cst_27 = arith.constant dense<0.000000e+00> : vector<8x8xf32>
    %80 = tpu.matmul %77, %79, %cst_27 {dimension_numbers = #tpu.dot_dimension_numbers<[1], [0], [0], [1], [0, 0, 1, 1], [], []>} : vector<8x16xf32>, vector<16x8xf32>, vector<8x8xf32> -> vector<8x8xf32>
    %81 = arith.addf %80, %7 : vector<8x8xf32>
    %cst_28 = arith.constant dense<0xFF800000> : vector<8xf32>
    %82 = vector.multi_reduction <maximumf>, %81, %cst_28 [1] : vector<8x8xf32> to vector<8xf32>
    %83 = vector.shape_cast %82 : vector<8xf32> to vector<8x1xf32>
    %84 = vector.broadcast %83 : vector<8x1xf32> to vector<8x8xf32>
    %85 = arith.subf %81, %84 : vector<8x8xf32>
    %86 = math.exp %85 : vector<8x8xf32>
    %cst_29 = arith.constant dense<0.000000e+00> : vector<8xf32>
    %87 = vector.multi_reduction <add>, %86, %cst_29 [1] : vector<8x8xf32> to vector<8xf32>
    %88 = vector.shape_cast %87 : vector<8xf32> to vector<8x1xf32>
    %89 = tpu.reciprocal %88 {approx = true} : vector<8x1xf32> -> vector<8x1xf32>
    %90 = vector.broadcast %89 : vector<8x1xf32> to vector<8x8xf32>
    %91 = arith.mulf %86, %90 : vector<8x8xf32>
    %92 = vector.extract_strided_slice %42 {offsets = [0, 32], sizes = [8, 16], strides = [1, 1]} : vector<8x64xf32> to vector<8x16xf32>
    %cst_30 = arith.constant dense<0.000000e+00> : vector<8x16xf32>
    %93 = tpu.matmul %91, %92, %cst_30 {dimension_numbers = #tpu.dot_dimension_numbers<[1], [0], [0], [1], [0, 0, 1, 1], [], []>} : vector<8x8xf32>, vector<8x16xf32>, vector<8x16xf32> -> vector<8x16xf32>
    %94 = vector.extract_strided_slice %40 {offsets = [0, 48], sizes = [8, 16], strides = [1, 1]} : vector<8x64xf32> to vector<8x16xf32>
    %95 = vector.extract_strided_slice %41 {offsets = [0, 48], sizes = [8, 16], strides = [1, 1]} : vector<8x64xf32> to vector<8x16xf32>
    %96 = tpu.transpose %95, [1, 0] : vector<8x16xf32> -> vector<16x8xf32>
    %cst_31 = arith.constant dense<0.000000e+00> : vector<8x8xf32>
    %97 = tpu.matmul %94, %96, %cst_31 {dimension_numbers = #tpu.dot_dimension_numbers<[1], [0], [0], [1], [0, 0, 1, 1], [], []>} : vector<8x16xf32>, vector<16x8xf32>, vector<8x8xf32> -> vector<8x8xf32>
    %98 = arith.addf %97, %7 : vector<8x8xf32>
    %cst_32 = arith.constant dense<0xFF800000> : vector<8xf32>
    %99 = vector.multi_reduction <maximumf>, %98, %cst_32 [1] : vector<8x8xf32> to vector<8xf32>
    %100 = vector.shape_cast %99 : vector<8xf32> to vector<8x1xf32>
    %101 = vector.broadcast %100 : vector<8x1xf32> to vector<8x8xf32>
    %102 = arith.subf %98, %101 : vector<8x8xf32>
    %103 = math.exp %102 : vector<8x8xf32>
    %cst_33 = arith.constant dense<0.000000e+00> : vector<8xf32>
    %104 = vector.multi_reduction <add>, %103, %cst_33 [1] : vector<8x8xf32> to vector<8xf32>
    %105 = vector.shape_cast %104 : vector<8xf32> to vector<8x1xf32>
    %106 = tpu.reciprocal %105 {approx = true} : vector<8x1xf32> -> vector<8x1xf32>
    %107 = vector.broadcast %106 : vector<8x1xf32> to vector<8x8xf32>
    %108 = arith.mulf %103, %107 : vector<8x8xf32>
    %109 = vector.extract_strided_slice %42 {offsets = [0, 48], sizes = [8, 16], strides = [1, 1]} : vector<8x64xf32> to vector<8x16xf32>
    %cst_34 = arith.constant dense<0.000000e+00> : vector<8x16xf32>
    %110 = tpu.matmul %108, %109, %cst_34 {dimension_numbers = #tpu.dot_dimension_numbers<[1], [0], [0], [1], [0, 0, 1, 1], [], []>} : vector<8x8xf32>, vector<8x16xf32>, vector<8x16xf32> -> vector<8x16xf32>
    %111 = tpu.concatenate %59, %76, %93, %110 in 1 : vector<8x16xf32>, vector<8x16xf32>, vector<8x16xf32>, vector<8x16xf32> -> vector<8x64xf32>
    %112 = arith.truncf %111 : vector<8x64xf32> to vector<8x64xbf16>
    %c0_35 = arith.constant 0 : index
    %c0_36 = arith.constant 0 : index
    %c0_37 = arith.constant 0 : index
    %113 = vector.load %arg5[%c0_35, %c0_36, %c0_37] : memref<4x64x64xbf16, #tpu.memory_space<vmem>>, vector<1x64x64xbf16>
    %114 = vector.shape_cast %113 : vector<1x64x64xbf16> to vector<64x64xbf16>
    %cst_38 = arith.constant dense<0.000000e+00> : vector<8x64xf32>
    %115 = tpu.matmul %112, %114, %cst_38 {dimension_numbers = #tpu.dot_dimension_numbers<[1], [0], [0], [1], [0, 0, 1, 1], [], []>} : vector<8x64xbf16>, vector<64x64xbf16>, vector<8x64xf32> -> vector<8x64xf32>
    %c0_39 = arith.constant 0 : index
    %c0_40 = arith.constant 0 : index
    %c0_41 = arith.constant 0 : index
    %116 = vector.load %arg6[%c0_39, %c0_40, %c0_41] : memref<4x1x64xf32, #tpu.memory_space<vmem>>, vector<1x1x64xf32>
    %117 = vector.shape_cast %116 : vector<1x1x64xf32> to vector<1x64xf32>
    %118 = vector.broadcast %117 : vector<1x64xf32> to vector<8x64xf32>
    %119 = arith.addf %115, %118 : vector<8x64xf32>
    %120 = arith.addf %1, %119 : vector<8x64xf32>
    %c0_42 = arith.constant 0 : index
    %c0_43 = arith.constant 0 : index
    %c0_44 = arith.constant 0 : index
    %121 = vector.load %arg7[%c0_42, %c0_43, %c0_44] : memref<4x1x64xf32, #tpu.memory_space<vmem>>, vector<1x1x64xf32>
    %122 = vector.shape_cast %121 : vector<1x1x64xf32> to vector<1x64xf32>
    %c0_45 = arith.constant 0 : index
    %c0_46 = arith.constant 0 : index
    %c0_47 = arith.constant 0 : index
    %123 = vector.load %arg8[%c0_45, %c0_46, %c0_47] : memref<4x1x64xf32, #tpu.memory_space<vmem>>, vector<1x1x64xf32>
    %124 = vector.shape_cast %123 : vector<1x1x64xf32> to vector<1x64xf32>
    %cst_48 = arith.constant dense<0.000000e+00> : vector<8xf32>
    %125 = vector.multi_reduction <add>, %120, %cst_48 [1] : vector<8x64xf32> to vector<8xf32>
    %126 = vector.shape_cast %125 : vector<8xf32> to vector<8x1xf32>
    %cst_49 = arith.constant 6.400000e+01 : f32
    %127 = vector.broadcast %cst_49 : f32 to vector<8x1xf32>
    %128 = arith.divf %126, %127 : vector<8x1xf32>
    %129 = vector.broadcast %128 : vector<8x1xf32> to vector<8x64xf32>
    %130 = arith.subf %120, %129 : vector<8x64xf32>
    %131 = arith.mulf %130, %130 : vector<8x64xf32>
    %cst_50 = arith.constant dense<0.000000e+00> : vector<8xf32>
    %132 = vector.multi_reduction <add>, %131, %cst_50 [1] : vector<8x64xf32> to vector<8xf32>
    %133 = vector.shape_cast %132 : vector<8xf32> to vector<8x1xf32>
    %cst_51 = arith.constant 6.400000e+01 : f32
    %134 = vector.broadcast %cst_51 : f32 to vector<8x1xf32>
    %135 = arith.divf %133, %134 : vector<8x1xf32>
    %136 = vector.broadcast %128 : vector<8x1xf32> to vector<8x64xf32>
    %137 = arith.subf %120, %136 : vector<8x64xf32>
    %cst_52 = arith.constant 9.99999974E-6 : f32
    %138 = vector.broadcast %cst_52 : f32 to vector<8x1xf32>
    %139 = arith.addf %135, %138 : vector<8x1xf32>
    %140 = math.rsqrt %139 : vector<8x1xf32>
    %141 = vector.broadcast %140 : vector<8x1xf32> to vector<8x64xf32>
    %142 = arith.mulf %137, %141 : vector<8x64xf32>
    %143 = vector.broadcast %122 : vector<1x64xf32> to vector<8x64xf32>
    %144 = arith.mulf %142, %143 : vector<8x64xf32>
    %145 = vector.broadcast %124 : vector<1x64xf32> to vector<8x64xf32>
    %146 = arith.addf %144, %145 : vector<8x64xf32>
    %147 = arith.truncf %146 : vector<8x64xf32> to vector<8x64xbf16>
    %c0_53 = arith.constant 0 : index
    %c0_54 = arith.constant 0 : index
    %c0_55 = arith.constant 0 : index
    %148 = vector.load %arg9[%c0_53, %c0_54, %c0_55] : memref<4x64x256xbf16, #tpu.memory_space<vmem>>, vector<1x64x256xbf16>
    %149 = vector.shape_cast %148 : vector<1x64x256xbf16> to vector<64x256xbf16>
    %cst_56 = arith.constant dense<0.000000e+00> : vector<8x256xf32>
    %150 = tpu.matmul %147, %149, %cst_56 {dimension_numbers = #tpu.dot_dimension_numbers<[1], [0], [0], [1], [0, 0, 1, 1], [], []>} : vector<8x64xbf16>, vector<64x256xbf16>, vector<8x256xf32> -> vector<8x256xf32>
    %c0_57 = arith.constant 0 : index
    %c0_58 = arith.constant 0 : index
    %c0_59 = arith.constant 0 : index
    %151 = vector.load %arg10[%c0_57, %c0_58, %c0_59] : memref<4x1x256xf32, #tpu.memory_space<vmem>>, vector<1x1x256xf32>
    %152 = vector.shape_cast %151 : vector<1x1x256xf32> to vector<1x256xf32>
    %153 = vector.broadcast %152 : vector<1x256xf32> to vector<8x256xf32>
    %154 = arith.addf %150, %153 : vector<8x256xf32>
    %cst_60 = arith.constant 0.000000e+00 : f32
    %155 = vector.broadcast %cst_60 : f32 to vector<8x256xf32>
    %156 = arith.maximumf %154, %155 : vector<8x256xf32>
    %157 = arith.truncf %156 : vector<8x256xf32> to vector<8x256xbf16>
    %c0_61 = arith.constant 0 : index
    %c0_62 = arith.constant 0 : index
    %c0_63 = arith.constant 0 : index
    %158 = vector.load %arg11[%c0_61, %c0_62, %c0_63] : memref<4x256x64xbf16, #tpu.memory_space<vmem>>, vector<1x256x64xbf16>
    %159 = vector.shape_cast %158 : vector<1x256x64xbf16> to vector<256x64xbf16>
    %cst_64 = arith.constant dense<0.000000e+00> : vector<8x64xf32>
    %160 = tpu.matmul %157, %159, %cst_64 {dimension_numbers = #tpu.dot_dimension_numbers<[1], [0], [0], [1], [0, 0, 1, 1], [], []>} : vector<8x256xbf16>, vector<256x64xbf16>, vector<8x64xf32> -> vector<8x64xf32>
    %c0_65 = arith.constant 0 : index
    %c0_66 = arith.constant 0 : index
    %c0_67 = arith.constant 0 : index
    %161 = vector.load %arg12[%c0_65, %c0_66, %c0_67] : memref<4x1x64xf32, #tpu.memory_space<vmem>>, vector<1x1x64xf32>
    %162 = vector.shape_cast %161 : vector<1x1x64xf32> to vector<1x64xf32>
    %163 = vector.broadcast %162 : vector<1x64xf32> to vector<8x64xf32>
    %164 = arith.addf %160, %163 : vector<8x64xf32>
    %165 = arith.addf %120, %164 : vector<8x64xf32>
    %c1 = arith.constant 1 : index
    %c0_68 = arith.constant 0 : index
    %c0_69 = arith.constant 0 : index
    %166 = vector.load %arg2[%c1, %c0_68, %c0_69] : memref<4x1x64xf32, #tpu.memory_space<vmem>>, vector<1x1x64xf32>
    %167 = vector.shape_cast %166 : vector<1x1x64xf32> to vector<1x64xf32>
    %c1_70 = arith.constant 1 : index
    %c0_71 = arith.constant 0 : index
    %c0_72 = arith.constant 0 : index
    %168 = vector.load %arg3[%c1_70, %c0_71, %c0_72] : memref<4x1x64xf32, #tpu.memory_space<vmem>>, vector<1x1x64xf32>
    %169 = vector.shape_cast %168 : vector<1x1x64xf32> to vector<1x64xf32>
    %cst_73 = arith.constant dense<0.000000e+00> : vector<8xf32>
    %170 = vector.multi_reduction <add>, %165, %cst_73 [1] : vector<8x64xf32> to vector<8xf32>
    %171 = vector.shape_cast %170 : vector<8xf32> to vector<8x1xf32>
    %cst_74 = arith.constant 6.400000e+01 : f32
    %172 = vector.broadcast %cst_74 : f32 to vector<8x1xf32>
    %173 = arith.divf %171, %172 : vector<8x1xf32>
    %174 = vector.broadcast %173 : vector<8x1xf32> to vector<8x64xf32>
    %175 = arith.subf %165, %174 : vector<8x64xf32>
    %176 = arith.mulf %175, %175 : vector<8x64xf32>
    %cst_75 = arith.constant dense<0.000000e+00> : vector<8xf32>
    %177 = vector.multi_reduction <add>, %176, %cst_75 [1] : vector<8x64xf32> to vector<8xf32>
    %178 = vector.shape_cast %177 : vector<8xf32> to vector<8x1xf32>
    %cst_76 = arith.constant 6.400000e+01 : f32
    %179 = vector.broadcast %cst_76 : f32 to vector<8x1xf32>
    %180 = arith.divf %178, %179 : vector<8x1xf32>
    %181 = vector.broadcast %173 : vector<8x1xf32> to vector<8x64xf32>
    %182 = arith.subf %165, %181 : vector<8x64xf32>
    %cst_77 = arith.constant 9.99999974E-6 : f32
    %183 = vector.broadcast %cst_77 : f32 to vector<8x1xf32>
    %184 = arith.addf %180, %183 : vector<8x1xf32>
    %185 = math.rsqrt %184 : vector<8x1xf32>
    %186 = vector.broadcast %185 : vector<8x1xf32> to vector<8x64xf32>
    %187 = arith.mulf %182, %186 : vector<8x64xf32>
    %188 = vector.broadcast %167 : vector<1x64xf32> to vector<8x64xf32>
    %189 = arith.mulf %187, %188 : vector<8x64xf32>
    %190 = vector.broadcast %169 : vector<1x64xf32> to vector<8x64xf32>
    %191 = arith.addf %189, %190 : vector<8x64xf32>
    %192 = arith.truncf %191 : vector<8x64xf32> to vector<8x64xbf16>
    %c1_78 = arith.constant 1 : index
    %c0_79 = arith.constant 0 : index
    %c0_80 = arith.constant 0 : index
    %193 = vector.load %arg4[%c1_78, %c0_79, %c0_80] : memref<4x64x192xbf16, #tpu.memory_space<vmem>>, vector<1x64x192xbf16>
    %194 = vector.shape_cast %193 : vector<1x64x192xbf16> to vector<64x192xbf16>
    %cst_81 = arith.constant dense<0.000000e+00> : vector<8x192xf32>
    %195 = tpu.matmul %192, %194, %cst_81 {dimension_numbers = #tpu.dot_dimension_numbers<[1], [0], [0], [1], [0, 0, 1, 1], [], []>} : vector<8x64xbf16>, vector<64x192xbf16>, vector<8x192xf32> -> vector<8x192xf32>
    %196 = vector.extract_strided_slice %195 {offsets = [0, 0], sizes = [8, 64], strides = [1, 1]} : vector<8x192xf32> to vector<8x64xf32>
    %cst_82 = arith.constant 2.500000e-01 : f32
    %197 = vector.broadcast %cst_82 : f32 to vector<8x64xf32>
    %198 = arith.mulf %196, %197 : vector<8x64xf32>
    %199 = vector.extract_strided_slice %195 {offsets = [0, 64], sizes = [8, 64], strides = [1, 1]} : vector<8x192xf32> to vector<8x64xf32>
    %200 = vector.extract_strided_slice %195 {offsets = [0, 128], sizes = [8, 64], strides = [1, 1]} : vector<8x192xf32> to vector<8x64xf32>
    %201 = vector.extract_strided_slice %198 {offsets = [0, 0], sizes = [8, 16], strides = [1, 1]} : vector<8x64xf32> to vector<8x16xf32>
    %202 = vector.extract_strided_slice %199 {offsets = [0, 0], sizes = [8, 16], strides = [1, 1]} : vector<8x64xf32> to vector<8x16xf32>
    %203 = tpu.transpose %202, [1, 0] : vector<8x16xf32> -> vector<16x8xf32>
    %cst_83 = arith.constant dense<0.000000e+00> : vector<8x8xf32>
    %204 = tpu.matmul %201, %203, %cst_83 {dimension_numbers = #tpu.dot_dimension_numbers<[1], [0], [0], [1], [0, 0, 1, 1], [], []>} : vector<8x16xf32>, vector<16x8xf32>, vector<8x8xf32> -> vector<8x8xf32>
    %205 = arith.addf %204, %7 : vector<8x8xf32>
    %cst_84 = arith.constant dense<0xFF800000> : vector<8xf32>
    %206 = vector.multi_reduction <maximumf>, %205, %cst_84 [1] : vector<8x8xf32> to vector<8xf32>
    %207 = vector.shape_cast %206 : vector<8xf32> to vector<8x1xf32>
    %208 = vector.broadcast %207 : vector<8x1xf32> to vector<8x8xf32>
    %209 = arith.subf %205, %208 : vector<8x8xf32>
    %210 = math.exp %209 : vector<8x8xf32>
    %cst_85 = arith.constant dense<0.000000e+00> : vector<8xf32>
    %211 = vector.multi_reduction <add>, %210, %cst_85 [1] : vector<8x8xf32> to vector<8xf32>
    %212 = vector.shape_cast %211 : vector<8xf32> to vector<8x1xf32>
    %213 = tpu.reciprocal %212 {approx = true} : vector<8x1xf32> -> vector<8x1xf32>
    %214 = vector.broadcast %213 : vector<8x1xf32> to vector<8x8xf32>
    %215 = arith.mulf %210, %214 : vector<8x8xf32>
    %216 = vector.extract_strided_slice %200 {offsets = [0, 0], sizes = [8, 16], strides = [1, 1]} : vector<8x64xf32> to vector<8x16xf32>
    %cst_86 = arith.constant dense<0.000000e+00> : vector<8x16xf32>
    %217 = tpu.matmul %215, %216, %cst_86 {dimension_numbers = #tpu.dot_dimension_numbers<[1], [0], [0], [1], [0, 0, 1, 1], [], []>} : vector<8x8xf32>, vector<8x16xf32>, vector<8x16xf32> -> vector<8x16xf32>
    %218 = vector.extract_strided_slice %198 {offsets = [0, 16], sizes = [8, 16], strides = [1, 1]} : vector<8x64xf32> to vector<8x16xf32>
    %219 = vector.extract_strided_slice %199 {offsets = [0, 16], sizes = [8, 16], strides = [1, 1]} : vector<8x64xf32> to vector<8x16xf32>
    %220 = tpu.transpose %219, [1, 0] : vector<8x16xf32> -> vector<16x8xf32>
    %cst_87 = arith.constant dense<0.000000e+00> : vector<8x8xf32>
    %221 = tpu.matmul %218, %220, %cst_87 {dimension_numbers = #tpu.dot_dimension_numbers<[1], [0], [0], [1], [0, 0, 1, 1], [], []>} : vector<8x16xf32>, vector<16x8xf32>, vector<8x8xf32> -> vector<8x8xf32>
    %222 = arith.addf %221, %7 : vector<8x8xf32>
    %cst_88 = arith.constant dense<0xFF800000> : vector<8xf32>
    %223 = vector.multi_reduction <maximumf>, %222, %cst_88 [1] : vector<8x8xf32> to vector<8xf32>
    %224 = vector.shape_cast %223 : vector<8xf32> to vector<8x1xf32>
    %225 = vector.broadcast %224 : vector<8x1xf32> to vector<8x8xf32>
    %226 = arith.subf %222, %225 : vector<8x8xf32>
    %227 = math.exp %226 : vector<8x8xf32>
    %cst_89 = arith.constant dense<0.000000e+00> : vector<8xf32>
    %228 = vector.multi_reduction <add>, %227, %cst_89 [1] : vector<8x8xf32> to vector<8xf32>
    %229 = vector.shape_cast %228 : vector<8xf32> to vector<8x1xf32>
    %230 = tpu.reciprocal %229 {approx = true} : vector<8x1xf32> -> vector<8x1xf32>
    %231 = vector.broadcast %230 : vector<8x1xf32> to vector<8x8xf32>
    %232 = arith.mulf %227, %231 : vector<8x8xf32>
    %233 = vector.extract_strided_slice %200 {offsets = [0, 16], sizes = [8, 16], strides = [1, 1]} : vector<8x64xf32> to vector<8x16xf32>
    %cst_90 = arith.constant dense<0.000000e+00> : vector<8x16xf32>
    %234 = tpu.matmul %232, %233, %cst_90 {dimension_numbers = #tpu.dot_dimension_numbers<[1], [0], [0], [1], [0, 0, 1, 1], [], []>} : vector<8x8xf32>, vector<8x16xf32>, vector<8x16xf32> -> vector<8x16xf32>
    %235 = vector.extract_strided_slice %198 {offsets = [0, 32], sizes = [8, 16], strides = [1, 1]} : vector<8x64xf32> to vector<8x16xf32>
    %236 = vector.extract_strided_slice %199 {offsets = [0, 32], sizes = [8, 16], strides = [1, 1]} : vector<8x64xf32> to vector<8x16xf32>
    %237 = tpu.transpose %236, [1, 0] : vector<8x16xf32> -> vector<16x8xf32>
    %cst_91 = arith.constant dense<0.000000e+00> : vector<8x8xf32>
    %238 = tpu.matmul %235, %237, %cst_91 {dimension_numbers = #tpu.dot_dimension_numbers<[1], [0], [0], [1], [0, 0, 1, 1], [], []>} : vector<8x16xf32>, vector<16x8xf32>, vector<8x8xf32> -> vector<8x8xf32>
    %239 = arith.addf %238, %7 : vector<8x8xf32>
    %cst_92 = arith.constant dense<0xFF800000> : vector<8xf32>
    %240 = vector.multi_reduction <maximumf>, %239, %cst_92 [1] : vector<8x8xf32> to vector<8xf32>
    %241 = vector.shape_cast %240 : vector<8xf32> to vector<8x1xf32>
    %242 = vector.broadcast %241 : vector<8x1xf32> to vector<8x8xf32>
    %243 = arith.subf %239, %242 : vector<8x8xf32>
    %244 = math.exp %243 : vector<8x8xf32>
    %cst_93 = arith.constant dense<0.000000e+00> : vector<8xf32>
    %245 = vector.multi_reduction <add>, %244, %cst_93 [1] : vector<8x8xf32> to vector<8xf32>
    %246 = vector.shape_cast %245 : vector<8xf32> to vector<8x1xf32>
    %247 = tpu.reciprocal %246 {approx = true} : vector<8x1xf32> -> vector<8x1xf32>
    %248 = vector.broadcast %247 : vector<8x1xf32> to vector<8x8xf32>
    %249 = arith.mulf %244, %248 : vector<8x8xf32>
    %250 = vector.extract_strided_slice %200 {offsets = [0, 32], sizes = [8, 16], strides = [1, 1]} : vector<8x64xf32> to vector<8x16xf32>
    %cst_94 = arith.constant dense<0.000000e+00> : vector<8x16xf32>
    %251 = tpu.matmul %249, %250, %cst_94 {dimension_numbers = #tpu.dot_dimension_numbers<[1], [0], [0], [1], [0, 0, 1, 1], [], []>} : vector<8x8xf32>, vector<8x16xf32>, vector<8x16xf32> -> vector<8x16xf32>
    %252 = vector.extract_strided_slice %198 {offsets = [0, 48], sizes = [8, 16], strides = [1, 1]} : vector<8x64xf32> to vector<8x16xf32>
    %253 = vector.extract_strided_slice %199 {offsets = [0, 48], sizes = [8, 16], strides = [1, 1]} : vector<8x64xf32> to vector<8x16xf32>
    %254 = tpu.transpose %253, [1, 0] : vector<8x16xf32> -> vector<16x8xf32>
    %cst_95 = arith.constant dense<0.000000e+00> : vector<8x8xf32>
    %255 = tpu.matmul %252, %254, %cst_95 {dimension_numbers = #tpu.dot_dimension_numbers<[1], [0], [0], [1], [0, 0, 1, 1], [], []>} : vector<8x16xf32>, vector<16x8xf32>, vector<8x8xf32> -> vector<8x8xf32>
    %256 = arith.addf %255, %7 : vector<8x8xf32>
    %cst_96 = arith.constant dense<0xFF800000> : vector<8xf32>
    %257 = vector.multi_reduction <maximumf>, %256, %cst_96 [1] : vector<8x8xf32> to vector<8xf32>
    %258 = vector.shape_cast %257 : vector<8xf32> to vector<8x1xf32>
    %259 = vector.broadcast %258 : vector<8x1xf32> to vector<8x8xf32>
    %260 = arith.subf %256, %259 : vector<8x8xf32>
    %261 = math.exp %260 : vector<8x8xf32>
    %cst_97 = arith.constant dense<0.000000e+00> : vector<8xf32>
    %262 = vector.multi_reduction <add>, %261, %cst_97 [1] : vector<8x8xf32> to vector<8xf32>
    %263 = vector.shape_cast %262 : vector<8xf32> to vector<8x1xf32>
    %264 = tpu.reciprocal %263 {approx = true} : vector<8x1xf32> -> vector<8x1xf32>
    %265 = vector.broadcast %264 : vector<8x1xf32> to vector<8x8xf32>
    %266 = arith.mulf %261, %265 : vector<8x8xf32>
    %267 = vector.extract_strided_slice %200 {offsets = [0, 48], sizes = [8, 16], strides = [1, 1]} : vector<8x64xf32> to vector<8x16xf32>
    %cst_98 = arith.constant dense<0.000000e+00> : vector<8x16xf32>
    %268 = tpu.matmul %266, %267, %cst_98 {dimension_numbers = #tpu.dot_dimension_numbers<[1], [0], [0], [1], [0, 0, 1, 1], [], []>} : vector<8x8xf32>, vector<8x16xf32>, vector<8x16xf32> -> vector<8x16xf32>
    %269 = tpu.concatenate %217, %234, %251, %268 in 1 : vector<8x16xf32>, vector<8x16xf32>, vector<8x16xf32>, vector<8x16xf32> -> vector<8x64xf32>
    %270 = arith.truncf %269 : vector<8x64xf32> to vector<8x64xbf16>
    %c1_99 = arith.constant 1 : index
    %c0_100 = arith.constant 0 : index
    %c0_101 = arith.constant 0 : index
    %271 = vector.load %arg5[%c1_99, %c0_100, %c0_101] : memref<4x64x64xbf16, #tpu.memory_space<vmem>>, vector<1x64x64xbf16>
    %272 = vector.shape_cast %271 : vector<1x64x64xbf16> to vector<64x64xbf16>
    %cst_102 = arith.constant dense<0.000000e+00> : vector<8x64xf32>
    %273 = tpu.matmul %270, %272, %cst_102 {dimension_numbers = #tpu.dot_dimension_numbers<[1], [0], [0], [1], [0, 0, 1, 1], [], []>} : vector<8x64xbf16>, vector<64x64xbf16>, vector<8x64xf32> -> vector<8x64xf32>
    %c1_103 = arith.constant 1 : index
    %c0_104 = arith.constant 0 : index
    %c0_105 = arith.constant 0 : index
    %274 = vector.load %arg6[%c1_103, %c0_104, %c0_105] : memref<4x1x64xf32, #tpu.memory_space<vmem>>, vector<1x1x64xf32>
    %275 = vector.shape_cast %274 : vector<1x1x64xf32> to vector<1x64xf32>
    %276 = vector.broadcast %275 : vector<1x64xf32> to vector<8x64xf32>
    %277 = arith.addf %273, %276 : vector<8x64xf32>
    %278 = arith.addf %165, %277 : vector<8x64xf32>
    %c1_106 = arith.constant 1 : index
    %c0_107 = arith.constant 0 : index
    %c0_108 = arith.constant 0 : index
    %279 = vector.load %arg7[%c1_106, %c0_107, %c0_108] : memref<4x1x64xf32, #tpu.memory_space<vmem>>, vector<1x1x64xf32>
    %280 = vector.shape_cast %279 : vector<1x1x64xf32> to vector<1x64xf32>
    %c1_109 = arith.constant 1 : index
    %c0_110 = arith.constant 0 : index
    %c0_111 = arith.constant 0 : index
    %281 = vector.load %arg8[%c1_109, %c0_110, %c0_111] : memref<4x1x64xf32, #tpu.memory_space<vmem>>, vector<1x1x64xf32>
    %282 = vector.shape_cast %281 : vector<1x1x64xf32> to vector<1x64xf32>
    %cst_112 = arith.constant dense<0.000000e+00> : vector<8xf32>
    %283 = vector.multi_reduction <add>, %278, %cst_112 [1] : vector<8x64xf32> to vector<8xf32>
    %284 = vector.shape_cast %283 : vector<8xf32> to vector<8x1xf32>
    %cst_113 = arith.constant 6.400000e+01 : f32
    %285 = vector.broadcast %cst_113 : f32 to vector<8x1xf32>
    %286 = arith.divf %284, %285 : vector<8x1xf32>
    %287 = vector.broadcast %286 : vector<8x1xf32> to vector<8x64xf32>
    %288 = arith.subf %278, %287 : vector<8x64xf32>
    %289 = arith.mulf %288, %288 : vector<8x64xf32>
    %cst_114 = arith.constant dense<0.000000e+00> : vector<8xf32>
    %290 = vector.multi_reduction <add>, %289, %cst_114 [1] : vector<8x64xf32> to vector<8xf32>
    %291 = vector.shape_cast %290 : vector<8xf32> to vector<8x1xf32>
    %cst_115 = arith.constant 6.400000e+01 : f32
    %292 = vector.broadcast %cst_115 : f32 to vector<8x1xf32>
    %293 = arith.divf %291, %292 : vector<8x1xf32>
    %294 = vector.broadcast %286 : vector<8x1xf32> to vector<8x64xf32>
    %295 = arith.subf %278, %294 : vector<8x64xf32>
    %cst_116 = arith.constant 9.99999974E-6 : f32
    %296 = vector.broadcast %cst_116 : f32 to vector<8x1xf32>
    %297 = arith.addf %293, %296 : vector<8x1xf32>
    %298 = math.rsqrt %297 : vector<8x1xf32>
    %299 = vector.broadcast %298 : vector<8x1xf32> to vector<8x64xf32>
    %300 = arith.mulf %295, %299 : vector<8x64xf32>
    %301 = vector.broadcast %280 : vector<1x64xf32> to vector<8x64xf32>
    %302 = arith.mulf %300, %301 : vector<8x64xf32>
    %303 = vector.broadcast %282 : vector<1x64xf32> to vector<8x64xf32>
    %304 = arith.addf %302, %303 : vector<8x64xf32>
    %305 = arith.truncf %304 : vector<8x64xf32> to vector<8x64xbf16>
    %c1_117 = arith.constant 1 : index
    %c0_118 = arith.constant 0 : index
    %c0_119 = arith.constant 0 : index
    %306 = vector.load %arg9[%c1_117, %c0_118, %c0_119] : memref<4x64x256xbf16, #tpu.memory_space<vmem>>, vector<1x64x256xbf16>
    %307 = vector.shape_cast %306 : vector<1x64x256xbf16> to vector<64x256xbf16>
    %cst_120 = arith.constant dense<0.000000e+00> : vector<8x256xf32>
    %308 = tpu.matmul %305, %307, %cst_120 {dimension_numbers = #tpu.dot_dimension_numbers<[1], [0], [0], [1], [0, 0, 1, 1], [], []>} : vector<8x64xbf16>, vector<64x256xbf16>, vector<8x256xf32> -> vector<8x256xf32>
    %c1_121 = arith.constant 1 : index
    %c0_122 = arith.constant 0 : index
    %c0_123 = arith.constant 0 : index
    %309 = vector.load %arg10[%c1_121, %c0_122, %c0_123] : memref<4x1x256xf32, #tpu.memory_space<vmem>>, vector<1x1x256xf32>
    %310 = vector.shape_cast %309 : vector<1x1x256xf32> to vector<1x256xf32>
    %311 = vector.broadcast %310 : vector<1x256xf32> to vector<8x256xf32>
    %312 = arith.addf %308, %311 : vector<8x256xf32>
    %cst_124 = arith.constant 0.000000e+00 : f32
    %313 = vector.broadcast %cst_124 : f32 to vector<8x256xf32>
    %314 = arith.maximumf %312, %313 : vector<8x256xf32>
    %315 = arith.truncf %314 : vector<8x256xf32> to vector<8x256xbf16>
    %c1_125 = arith.constant 1 : index
    %c0_126 = arith.constant 0 : index
    %c0_127 = arith.constant 0 : index
    %316 = vector.load %arg11[%c1_125, %c0_126, %c0_127] : memref<4x256x64xbf16, #tpu.memory_space<vmem>>, vector<1x256x64xbf16>
    %317 = vector.shape_cast %316 : vector<1x256x64xbf16> to vector<256x64xbf16>
    %cst_128 = arith.constant dense<0.000000e+00> : vector<8x64xf32>
    %318 = tpu.matmul %315, %317, %cst_128 {dimension_numbers = #tpu.dot_dimension_numbers<[1], [0], [0], [1], [0, 0, 1, 1], [], []>} : vector<8x256xbf16>, vector<256x64xbf16>, vector<8x64xf32> -> vector<8x64xf32>
    %c1_129 = arith.constant 1 : index
    %c0_130 = arith.constant 0 : index
    %c0_131 = arith.constant 0 : index
    %319 = vector.load %arg12[%c1_129, %c0_130, %c0_131] : memref<4x1x64xf32, #tpu.memory_space<vmem>>, vector<1x1x64xf32>
    %320 = vector.shape_cast %319 : vector<1x1x64xf32> to vector<1x64xf32>
    %321 = vector.broadcast %320 : vector<1x64xf32> to vector<8x64xf32>
    %322 = arith.addf %318, %321 : vector<8x64xf32>
    %323 = arith.addf %278, %322 : vector<8x64xf32>
    %c2 = arith.constant 2 : index
    %c0_132 = arith.constant 0 : index
    %c0_133 = arith.constant 0 : index
    %324 = vector.load %arg2[%c2, %c0_132, %c0_133] : memref<4x1x64xf32, #tpu.memory_space<vmem>>, vector<1x1x64xf32>
    %325 = vector.shape_cast %324 : vector<1x1x64xf32> to vector<1x64xf32>
    %c2_134 = arith.constant 2 : index
    %c0_135 = arith.constant 0 : index
    %c0_136 = arith.constant 0 : index
    %326 = vector.load %arg3[%c2_134, %c0_135, %c0_136] : memref<4x1x64xf32, #tpu.memory_space<vmem>>, vector<1x1x64xf32>
    %327 = vector.shape_cast %326 : vector<1x1x64xf32> to vector<1x64xf32>
    %cst_137 = arith.constant dense<0.000000e+00> : vector<8xf32>
    %328 = vector.multi_reduction <add>, %323, %cst_137 [1] : vector<8x64xf32> to vector<8xf32>
    %329 = vector.shape_cast %328 : vector<8xf32> to vector<8x1xf32>
    %cst_138 = arith.constant 6.400000e+01 : f32
    %330 = vector.broadcast %cst_138 : f32 to vector<8x1xf32>
    %331 = arith.divf %329, %330 : vector<8x1xf32>
    %332 = vector.broadcast %331 : vector<8x1xf32> to vector<8x64xf32>
    %333 = arith.subf %323, %332 : vector<8x64xf32>
    %334 = arith.mulf %333, %333 : vector<8x64xf32>
    %cst_139 = arith.constant dense<0.000000e+00> : vector<8xf32>
    %335 = vector.multi_reduction <add>, %334, %cst_139 [1] : vector<8x64xf32> to vector<8xf32>
    %336 = vector.shape_cast %335 : vector<8xf32> to vector<8x1xf32>
    %cst_140 = arith.constant 6.400000e+01 : f32
    %337 = vector.broadcast %cst_140 : f32 to vector<8x1xf32>
    %338 = arith.divf %336, %337 : vector<8x1xf32>
    %339 = vector.broadcast %331 : vector<8x1xf32> to vector<8x64xf32>
    %340 = arith.subf %323, %339 : vector<8x64xf32>
    %cst_141 = arith.constant 9.99999974E-6 : f32
    %341 = vector.broadcast %cst_141 : f32 to vector<8x1xf32>
    %342 = arith.addf %338, %341 : vector<8x1xf32>
    %343 = math.rsqrt %342 : vector<8x1xf32>
    %344 = vector.broadcast %343 : vector<8x1xf32> to vector<8x64xf32>
    %345 = arith.mulf %340, %344 : vector<8x64xf32>
    %346 = vector.broadcast %325 : vector<1x64xf32> to vector<8x64xf32>
    %347 = arith.mulf %345, %346 : vector<8x64xf32>
    %348 = vector.broadcast %327 : vector<1x64xf32> to vector<8x64xf32>
    %349 = arith.addf %347, %348 : vector<8x64xf32>
    %350 = arith.truncf %349 : vector<8x64xf32> to vector<8x64xbf16>
    %c2_142 = arith.constant 2 : index
    %c0_143 = arith.constant 0 : index
    %c0_144 = arith.constant 0 : index
    %351 = vector.load %arg4[%c2_142, %c0_143, %c0_144] : memref<4x64x192xbf16, #tpu.memory_space<vmem>>, vector<1x64x192xbf16>
    %352 = vector.shape_cast %351 : vector<1x64x192xbf16> to vector<64x192xbf16>
    %cst_145 = arith.constant dense<0.000000e+00> : vector<8x192xf32>
    %353 = tpu.matmul %350, %352, %cst_145 {dimension_numbers = #tpu.dot_dimension_numbers<[1], [0], [0], [1], [0, 0, 1, 1], [], []>} : vector<8x64xbf16>, vector<64x192xbf16>, vector<8x192xf32> -> vector<8x192xf32>
    %354 = vector.extract_strided_slice %353 {offsets = [0, 0], sizes = [8, 64], strides = [1, 1]} : vector<8x192xf32> to vector<8x64xf32>
    %cst_146 = arith.constant 2.500000e-01 : f32
    %355 = vector.broadcast %cst_146 : f32 to vector<8x64xf32>
    %356 = arith.mulf %354, %355 : vector<8x64xf32>
    %357 = vector.extract_strided_slice %353 {offsets = [0, 64], sizes = [8, 64], strides = [1, 1]} : vector<8x192xf32> to vector<8x64xf32>
    %358 = vector.extract_strided_slice %353 {offsets = [0, 128], sizes = [8, 64], strides = [1, 1]} : vector<8x192xf32> to vector<8x64xf32>
    %359 = vector.extract_strided_slice %356 {offsets = [0, 0], sizes = [8, 16], strides = [1, 1]} : vector<8x64xf32> to vector<8x16xf32>
    %360 = vector.extract_strided_slice %357 {offsets = [0, 0], sizes = [8, 16], strides = [1, 1]} : vector<8x64xf32> to vector<8x16xf32>
    %361 = tpu.transpose %360, [1, 0] : vector<8x16xf32> -> vector<16x8xf32>
    %cst_147 = arith.constant dense<0.000000e+00> : vector<8x8xf32>
    %362 = tpu.matmul %359, %361, %cst_147 {dimension_numbers = #tpu.dot_dimension_numbers<[1], [0], [0], [1], [0, 0, 1, 1], [], []>} : vector<8x16xf32>, vector<16x8xf32>, vector<8x8xf32> -> vector<8x8xf32>
    %363 = arith.addf %362, %7 : vector<8x8xf32>
    %cst_148 = arith.constant dense<0xFF800000> : vector<8xf32>
    %364 = vector.multi_reduction <maximumf>, %363, %cst_148 [1] : vector<8x8xf32> to vector<8xf32>
    %365 = vector.shape_cast %364 : vector<8xf32> to vector<8x1xf32>
    %366 = vector.broadcast %365 : vector<8x1xf32> to vector<8x8xf32>
    %367 = arith.subf %363, %366 : vector<8x8xf32>
    %368 = math.exp %367 : vector<8x8xf32>
    %cst_149 = arith.constant dense<0.000000e+00> : vector<8xf32>
    %369 = vector.multi_reduction <add>, %368, %cst_149 [1] : vector<8x8xf32> to vector<8xf32>
    %370 = vector.shape_cast %369 : vector<8xf32> to vector<8x1xf32>
    %371 = tpu.reciprocal %370 {approx = true} : vector<8x1xf32> -> vector<8x1xf32>
    %372 = vector.broadcast %371 : vector<8x1xf32> to vector<8x8xf32>
    %373 = arith.mulf %368, %372 : vector<8x8xf32>
    %374 = vector.extract_strided_slice %358 {offsets = [0, 0], sizes = [8, 16], strides = [1, 1]} : vector<8x64xf32> to vector<8x16xf32>
    %cst_150 = arith.constant dense<0.000000e+00> : vector<8x16xf32>
    %375 = tpu.matmul %373, %374, %cst_150 {dimension_numbers = #tpu.dot_dimension_numbers<[1], [0], [0], [1], [0, 0, 1, 1], [], []>} : vector<8x8xf32>, vector<8x16xf32>, vector<8x16xf32> -> vector<8x16xf32>
    %376 = vector.extract_strided_slice %356 {offsets = [0, 16], sizes = [8, 16], strides = [1, 1]} : vector<8x64xf32> to vector<8x16xf32>
    %377 = vector.extract_strided_slice %357 {offsets = [0, 16], sizes = [8, 16], strides = [1, 1]} : vector<8x64xf32> to vector<8x16xf32>
    %378 = tpu.transpose %377, [1, 0] : vector<8x16xf32> -> vector<16x8xf32>
    %cst_151 = arith.constant dense<0.000000e+00> : vector<8x8xf32>
    %379 = tpu.matmul %376, %378, %cst_151 {dimension_numbers = #tpu.dot_dimension_numbers<[1], [0], [0], [1], [0, 0, 1, 1], [], []>} : vector<8x16xf32>, vector<16x8xf32>, vector<8x8xf32> -> vector<8x8xf32>
    %380 = arith.addf %379, %7 : vector<8x8xf32>
    %cst_152 = arith.constant dense<0xFF800000> : vector<8xf32>
    %381 = vector.multi_reduction <maximumf>, %380, %cst_152 [1] : vector<8x8xf32> to vector<8xf32>
    %382 = vector.shape_cast %381 : vector<8xf32> to vector<8x1xf32>
    %383 = vector.broadcast %382 : vector<8x1xf32> to vector<8x8xf32>
    %384 = arith.subf %380, %383 : vector<8x8xf32>
    %385 = math.exp %384 : vector<8x8xf32>
    %cst_153 = arith.constant dense<0.000000e+00> : vector<8xf32>
    %386 = vector.multi_reduction <add>, %385, %cst_153 [1] : vector<8x8xf32> to vector<8xf32>
    %387 = vector.shape_cast %386 : vector<8xf32> to vector<8x1xf32>
    %388 = tpu.reciprocal %387 {approx = true} : vector<8x1xf32> -> vector<8x1xf32>
    %389 = vector.broadcast %388 : vector<8x1xf32> to vector<8x8xf32>
    %390 = arith.mulf %385, %389 : vector<8x8xf32>
    %391 = vector.extract_strided_slice %358 {offsets = [0, 16], sizes = [8, 16], strides = [1, 1]} : vector<8x64xf32> to vector<8x16xf32>
    %cst_154 = arith.constant dense<0.000000e+00> : vector<8x16xf32>
    %392 = tpu.matmul %390, %391, %cst_154 {dimension_numbers = #tpu.dot_dimension_numbers<[1], [0], [0], [1], [0, 0, 1, 1], [], []>} : vector<8x8xf32>, vector<8x16xf32>, vector<8x16xf32> -> vector<8x16xf32>
    %393 = vector.extract_strided_slice %356 {offsets = [0, 32], sizes = [8, 16], strides = [1, 1]} : vector<8x64xf32> to vector<8x16xf32>
    %394 = vector.extract_strided_slice %357 {offsets = [0, 32], sizes = [8, 16], strides = [1, 1]} : vector<8x64xf32> to vector<8x16xf32>
    %395 = tpu.transpose %394, [1, 0] : vector<8x16xf32> -> vector<16x8xf32>
    %cst_155 = arith.constant dense<0.000000e+00> : vector<8x8xf32>
    %396 = tpu.matmul %393, %395, %cst_155 {dimension_numbers = #tpu.dot_dimension_numbers<[1], [0], [0], [1], [0, 0, 1, 1], [], []>} : vector<8x16xf32>, vector<16x8xf32>, vector<8x8xf32> -> vector<8x8xf32>
    %397 = arith.addf %396, %7 : vector<8x8xf32>
    %cst_156 = arith.constant dense<0xFF800000> : vector<8xf32>
    %398 = vector.multi_reduction <maximumf>, %397, %cst_156 [1] : vector<8x8xf32> to vector<8xf32>
    %399 = vector.shape_cast %398 : vector<8xf32> to vector<8x1xf32>
    %400 = vector.broadcast %399 : vector<8x1xf32> to vector<8x8xf32>
    %401 = arith.subf %397, %400 : vector<8x8xf32>
    %402 = math.exp %401 : vector<8x8xf32>
    %cst_157 = arith.constant dense<0.000000e+00> : vector<8xf32>
    %403 = vector.multi_reduction <add>, %402, %cst_157 [1] : vector<8x8xf32> to vector<8xf32>
    %404 = vector.shape_cast %403 : vector<8xf32> to vector<8x1xf32>
    %405 = tpu.reciprocal %404 {approx = true} : vector<8x1xf32> -> vector<8x1xf32>
    %406 = vector.broadcast %405 : vector<8x1xf32> to vector<8x8xf32>
    %407 = arith.mulf %402, %406 : vector<8x8xf32>
    %408 = vector.extract_strided_slice %358 {offsets = [0, 32], sizes = [8, 16], strides = [1, 1]} : vector<8x64xf32> to vector<8x16xf32>
    %cst_158 = arith.constant dense<0.000000e+00> : vector<8x16xf32>
    %409 = tpu.matmul %407, %408, %cst_158 {dimension_numbers = #tpu.dot_dimension_numbers<[1], [0], [0], [1], [0, 0, 1, 1], [], []>} : vector<8x8xf32>, vector<8x16xf32>, vector<8x16xf32> -> vector<8x16xf32>
    %410 = vector.extract_strided_slice %356 {offsets = [0, 48], sizes = [8, 16], strides = [1, 1]} : vector<8x64xf32> to vector<8x16xf32>
    %411 = vector.extract_strided_slice %357 {offsets = [0, 48], sizes = [8, 16], strides = [1, 1]} : vector<8x64xf32> to vector<8x16xf32>
    %412 = tpu.transpose %411, [1, 0] : vector<8x16xf32> -> vector<16x8xf32>
    %cst_159 = arith.constant dense<0.000000e+00> : vector<8x8xf32>
    %413 = tpu.matmul %410, %412, %cst_159 {dimension_numbers = #tpu.dot_dimension_numbers<[1], [0], [0], [1], [0, 0, 1, 1], [], []>} : vector<8x16xf32>, vector<16x8xf32>, vector<8x8xf32> -> vector<8x8xf32>
    %414 = arith.addf %413, %7 : vector<8x8xf32>
    %cst_160 = arith.constant dense<0xFF800000> : vector<8xf32>
    %415 = vector.multi_reduction <maximumf>, %414, %cst_160 [1] : vector<8x8xf32> to vector<8xf32>
    %416 = vector.shape_cast %415 : vector<8xf32> to vector<8x1xf32>
    %417 = vector.broadcast %416 : vector<8x1xf32> to vector<8x8xf32>
    %418 = arith.subf %414, %417 : vector<8x8xf32>
    %419 = math.exp %418 : vector<8x8xf32>
    %cst_161 = arith.constant dense<0.000000e+00> : vector<8xf32>
    %420 = vector.multi_reduction <add>, %419, %cst_161 [1] : vector<8x8xf32> to vector<8xf32>
    %421 = vector.shape_cast %420 : vector<8xf32> to vector<8x1xf32>
    %422 = tpu.reciprocal %421 {approx = true} : vector<8x1xf32> -> vector<8x1xf32>
    %423 = vector.broadcast %422 : vector<8x1xf32> to vector<8x8xf32>
    %424 = arith.mulf %419, %423 : vector<8x8xf32>
    %425 = vector.extract_strided_slice %358 {offsets = [0, 48], sizes = [8, 16], strides = [1, 1]} : vector<8x64xf32> to vector<8x16xf32>
    %cst_162 = arith.constant dense<0.000000e+00> : vector<8x16xf32>
    %426 = tpu.matmul %424, %425, %cst_162 {dimension_numbers = #tpu.dot_dimension_numbers<[1], [0], [0], [1], [0, 0, 1, 1], [], []>} : vector<8x8xf32>, vector<8x16xf32>, vector<8x16xf32> -> vector<8x16xf32>
    %427 = tpu.concatenate %375, %392, %409, %426 in 1 : vector<8x16xf32>, vector<8x16xf32>, vector<8x16xf32>, vector<8x16xf32> -> vector<8x64xf32>
    %428 = arith.truncf %427 : vector<8x64xf32> to vector<8x64xbf16>
    %c2_163 = arith.constant 2 : index
    %c0_164 = arith.constant 0 : index
    %c0_165 = arith.constant 0 : index
    %429 = vector.load %arg5[%c2_163, %c0_164, %c0_165] : memref<4x64x64xbf16, #tpu.memory_space<vmem>>, vector<1x64x64xbf16>
    %430 = vector.shape_cast %429 : vector<1x64x64xbf16> to vector<64x64xbf16>
    %cst_166 = arith.constant dense<0.000000e+00> : vector<8x64xf32>
    %431 = tpu.matmul %428, %430, %cst_166 {dimension_numbers = #tpu.dot_dimension_numbers<[1], [0], [0], [1], [0, 0, 1, 1], [], []>} : vector<8x64xbf16>, vector<64x64xbf16>, vector<8x64xf32> -> vector<8x64xf32>
    %c2_167 = arith.constant 2 : index
    %c0_168 = arith.constant 0 : index
    %c0_169 = arith.constant 0 : index
    %432 = vector.load %arg6[%c2_167, %c0_168, %c0_169] : memref<4x1x64xf32, #tpu.memory_space<vmem>>, vector<1x1x64xf32>
    %433 = vector.shape_cast %432 : vector<1x1x64xf32> to vector<1x64xf32>
    %434 = vector.broadcast %433 : vector<1x64xf32> to vector<8x64xf32>
    %435 = arith.addf %431, %434 : vector<8x64xf32>
    %436 = arith.addf %323, %435 : vector<8x64xf32>
    %c2_170 = arith.constant 2 : index
    %c0_171 = arith.constant 0 : index
    %c0_172 = arith.constant 0 : index
    %437 = vector.load %arg7[%c2_170, %c0_171, %c0_172] : memref<4x1x64xf32, #tpu.memory_space<vmem>>, vector<1x1x64xf32>
    %438 = vector.shape_cast %437 : vector<1x1x64xf32> to vector<1x64xf32>
    %c2_173 = arith.constant 2 : index
    %c0_174 = arith.constant 0 : index
    %c0_175 = arith.constant 0 : index
    %439 = vector.load %arg8[%c2_173, %c0_174, %c0_175] : memref<4x1x64xf32, #tpu.memory_space<vmem>>, vector<1x1x64xf32>
    %440 = vector.shape_cast %439 : vector<1x1x64xf32> to vector<1x64xf32>
    %cst_176 = arith.constant dense<0.000000e+00> : vector<8xf32>
    %441 = vector.multi_reduction <add>, %436, %cst_176 [1] : vector<8x64xf32> to vector<8xf32>
    %442 = vector.shape_cast %441 : vector<8xf32> to vector<8x1xf32>
    %cst_177 = arith.constant 6.400000e+01 : f32
    %443 = vector.broadcast %cst_177 : f32 to vector<8x1xf32>
    %444 = arith.divf %442, %443 : vector<8x1xf32>
    %445 = vector.broadcast %444 : vector<8x1xf32> to vector<8x64xf32>
    %446 = arith.subf %436, %445 : vector<8x64xf32>
    %447 = arith.mulf %446, %446 : vector<8x64xf32>
    %cst_178 = arith.constant dense<0.000000e+00> : vector<8xf32>
    %448 = vector.multi_reduction <add>, %447, %cst_178 [1] : vector<8x64xf32> to vector<8xf32>
    %449 = vector.shape_cast %448 : vector<8xf32> to vector<8x1xf32>
    %cst_179 = arith.constant 6.400000e+01 : f32
    %450 = vector.broadcast %cst_179 : f32 to vector<8x1xf32>
    %451 = arith.divf %449, %450 : vector<8x1xf32>
    %452 = vector.broadcast %444 : vector<8x1xf32> to vector<8x64xf32>
    %453 = arith.subf %436, %452 : vector<8x64xf32>
    %cst_180 = arith.constant 9.99999974E-6 : f32
    %454 = vector.broadcast %cst_180 : f32 to vector<8x1xf32>
    %455 = arith.addf %451, %454 : vector<8x1xf32>
    %456 = math.rsqrt %455 : vector<8x1xf32>
    %457 = vector.broadcast %456 : vector<8x1xf32> to vector<8x64xf32>
    %458 = arith.mulf %453, %457 : vector<8x64xf32>
    %459 = vector.broadcast %438 : vector<1x64xf32> to vector<8x64xf32>
    %460 = arith.mulf %458, %459 : vector<8x64xf32>
    %461 = vector.broadcast %440 : vector<1x64xf32> to vector<8x64xf32>
    %462 = arith.addf %460, %461 : vector<8x64xf32>
    %463 = arith.truncf %462 : vector<8x64xf32> to vector<8x64xbf16>
    %c2_181 = arith.constant 2 : index
    %c0_182 = arith.constant 0 : index
    %c0_183 = arith.constant 0 : index
    %464 = vector.load %arg9[%c2_181, %c0_182, %c0_183] : memref<4x64x256xbf16, #tpu.memory_space<vmem>>, vector<1x64x256xbf16>
    %465 = vector.shape_cast %464 : vector<1x64x256xbf16> to vector<64x256xbf16>
    %cst_184 = arith.constant dense<0.000000e+00> : vector<8x256xf32>
    %466 = tpu.matmul %463, %465, %cst_184 {dimension_numbers = #tpu.dot_dimension_numbers<[1], [0], [0], [1], [0, 0, 1, 1], [], []>} : vector<8x64xbf16>, vector<64x256xbf16>, vector<8x256xf32> -> vector<8x256xf32>
    %c2_185 = arith.constant 2 : index
    %c0_186 = arith.constant 0 : index
    %c0_187 = arith.constant 0 : index
    %467 = vector.load %arg10[%c2_185, %c0_186, %c0_187] : memref<4x1x256xf32, #tpu.memory_space<vmem>>, vector<1x1x256xf32>
    %468 = vector.shape_cast %467 : vector<1x1x256xf32> to vector<1x256xf32>
    %469 = vector.broadcast %468 : vector<1x256xf32> to vector<8x256xf32>
    %470 = arith.addf %466, %469 : vector<8x256xf32>
    %cst_188 = arith.constant 0.000000e+00 : f32
    %471 = vector.broadcast %cst_188 : f32 to vector<8x256xf32>
    %472 = arith.maximumf %470, %471 : vector<8x256xf32>
    %473 = arith.truncf %472 : vector<8x256xf32> to vector<8x256xbf16>
    %c2_189 = arith.constant 2 : index
    %c0_190 = arith.constant 0 : index
    %c0_191 = arith.constant 0 : index
    %474 = vector.load %arg11[%c2_189, %c0_190, %c0_191] : memref<4x256x64xbf16, #tpu.memory_space<vmem>>, vector<1x256x64xbf16>
    %475 = vector.shape_cast %474 : vector<1x256x64xbf16> to vector<256x64xbf16>
    %cst_192 = arith.constant dense<0.000000e+00> : vector<8x64xf32>
    %476 = tpu.matmul %473, %475, %cst_192 {dimension_numbers = #tpu.dot_dimension_numbers<[1], [0], [0], [1], [0, 0, 1, 1], [], []>} : vector<8x256xbf16>, vector<256x64xbf16>, vector<8x64xf32> -> vector<8x64xf32>
    %c2_193 = arith.constant 2 : index
    %c0_194 = arith.constant 0 : index
    %c0_195 = arith.constant 0 : index
    %477 = vector.load %arg12[%c2_193, %c0_194, %c0_195] : memref<4x1x64xf32, #tpu.memory_space<vmem>>, vector<1x1x64xf32>
    %478 = vector.shape_cast %477 : vector<1x1x64xf32> to vector<1x64xf32>
    %479 = vector.broadcast %478 : vector<1x64xf32> to vector<8x64xf32>
    %480 = arith.addf %476, %479 : vector<8x64xf32>
    %481 = arith.addf %436, %480 : vector<8x64xf32>
    %c3 = arith.constant 3 : index
    %c0_196 = arith.constant 0 : index
    %c0_197 = arith.constant 0 : index
    %482 = vector.load %arg2[%c3, %c0_196, %c0_197] : memref<4x1x64xf32, #tpu.memory_space<vmem>>, vector<1x1x64xf32>
    %483 = vector.shape_cast %482 : vector<1x1x64xf32> to vector<1x64xf32>
    %c3_198 = arith.constant 3 : index
    %c0_199 = arith.constant 0 : index
    %c0_200 = arith.constant 0 : index
    %484 = vector.load %arg3[%c3_198, %c0_199, %c0_200] : memref<4x1x64xf32, #tpu.memory_space<vmem>>, vector<1x1x64xf32>
    %485 = vector.shape_cast %484 : vector<1x1x64xf32> to vector<1x64xf32>
    %cst_201 = arith.constant dense<0.000000e+00> : vector<8xf32>
    %486 = vector.multi_reduction <add>, %481, %cst_201 [1] : vector<8x64xf32> to vector<8xf32>
    %487 = vector.shape_cast %486 : vector<8xf32> to vector<8x1xf32>
    %cst_202 = arith.constant 6.400000e+01 : f32
    %488 = vector.broadcast %cst_202 : f32 to vector<8x1xf32>
    %489 = arith.divf %487, %488 : vector<8x1xf32>
    %490 = vector.broadcast %489 : vector<8x1xf32> to vector<8x64xf32>
    %491 = arith.subf %481, %490 : vector<8x64xf32>
    %492 = arith.mulf %491, %491 : vector<8x64xf32>
    %cst_203 = arith.constant dense<0.000000e+00> : vector<8xf32>
    %493 = vector.multi_reduction <add>, %492, %cst_203 [1] : vector<8x64xf32> to vector<8xf32>
    %494 = vector.shape_cast %493 : vector<8xf32> to vector<8x1xf32>
    %cst_204 = arith.constant 6.400000e+01 : f32
    %495 = vector.broadcast %cst_204 : f32 to vector<8x1xf32>
    %496 = arith.divf %494, %495 : vector<8x1xf32>
    %497 = vector.broadcast %489 : vector<8x1xf32> to vector<8x64xf32>
    %498 = arith.subf %481, %497 : vector<8x64xf32>
    %cst_205 = arith.constant 9.99999974E-6 : f32
    %499 = vector.broadcast %cst_205 : f32 to vector<8x1xf32>
    %500 = arith.addf %496, %499 : vector<8x1xf32>
    %501 = math.rsqrt %500 : vector<8x1xf32>
    %502 = vector.broadcast %501 : vector<8x1xf32> to vector<8x64xf32>
    %503 = arith.mulf %498, %502 : vector<8x64xf32>
    %504 = vector.broadcast %483 : vector<1x64xf32> to vector<8x64xf32>
    %505 = arith.mulf %503, %504 : vector<8x64xf32>
    %506 = vector.broadcast %485 : vector<1x64xf32> to vector<8x64xf32>
    %507 = arith.addf %505, %506 : vector<8x64xf32>
    %508 = arith.truncf %507 : vector<8x64xf32> to vector<8x64xbf16>
    %c3_206 = arith.constant 3 : index
    %c0_207 = arith.constant 0 : index
    %c0_208 = arith.constant 0 : index
    %509 = vector.load %arg4[%c3_206, %c0_207, %c0_208] : memref<4x64x192xbf16, #tpu.memory_space<vmem>>, vector<1x64x192xbf16>
    %510 = vector.shape_cast %509 : vector<1x64x192xbf16> to vector<64x192xbf16>
    %cst_209 = arith.constant dense<0.000000e+00> : vector<8x192xf32>
    %511 = tpu.matmul %508, %510, %cst_209 {dimension_numbers = #tpu.dot_dimension_numbers<[1], [0], [0], [1], [0, 0, 1, 1], [], []>} : vector<8x64xbf16>, vector<64x192xbf16>, vector<8x192xf32> -> vector<8x192xf32>
    %512 = vector.extract_strided_slice %511 {offsets = [0, 0], sizes = [8, 64], strides = [1, 1]} : vector<8x192xf32> to vector<8x64xf32>
    %cst_210 = arith.constant 2.500000e-01 : f32
    %513 = vector.broadcast %cst_210 : f32 to vector<8x64xf32>
    %514 = arith.mulf %512, %513 : vector<8x64xf32>
    %515 = vector.extract_strided_slice %511 {offsets = [0, 64], sizes = [8, 64], strides = [1, 1]} : vector<8x192xf32> to vector<8x64xf32>
    %516 = vector.extract_strided_slice %511 {offsets = [0, 128], sizes = [8, 64], strides = [1, 1]} : vector<8x192xf32> to vector<8x64xf32>
    %517 = vector.extract_strided_slice %514 {offsets = [0, 0], sizes = [8, 16], strides = [1, 1]} : vector<8x64xf32> to vector<8x16xf32>
    %518 = vector.extract_strided_slice %515 {offsets = [0, 0], sizes = [8, 16], strides = [1, 1]} : vector<8x64xf32> to vector<8x16xf32>
    %519 = tpu.transpose %518, [1, 0] : vector<8x16xf32> -> vector<16x8xf32>
    %cst_211 = arith.constant dense<0.000000e+00> : vector<8x8xf32>
    %520 = tpu.matmul %517, %519, %cst_211 {dimension_numbers = #tpu.dot_dimension_numbers<[1], [0], [0], [1], [0, 0, 1, 1], [], []>} : vector<8x16xf32>, vector<16x8xf32>, vector<8x8xf32> -> vector<8x8xf32>
    %521 = arith.addf %520, %7 : vector<8x8xf32>
    %cst_212 = arith.constant dense<0xFF800000> : vector<8xf32>
    %522 = vector.multi_reduction <maximumf>, %521, %cst_212 [1] : vector<8x8xf32> to vector<8xf32>
    %523 = vector.shape_cast %522 : vector<8xf32> to vector<8x1xf32>
    %524 = vector.broadcast %523 : vector<8x1xf32> to vector<8x8xf32>
    %525 = arith.subf %521, %524 : vector<8x8xf32>
    %526 = math.exp %525 : vector<8x8xf32>
    %cst_213 = arith.constant dense<0.000000e+00> : vector<8xf32>
    %527 = vector.multi_reduction <add>, %526, %cst_213 [1] : vector<8x8xf32> to vector<8xf32>
    %528 = vector.shape_cast %527 : vector<8xf32> to vector<8x1xf32>
    %529 = tpu.reciprocal %528 {approx = true} : vector<8x1xf32> -> vector<8x1xf32>
    %530 = vector.broadcast %529 : vector<8x1xf32> to vector<8x8xf32>
    %531 = arith.mulf %526, %530 : vector<8x8xf32>
    %532 = vector.extract_strided_slice %516 {offsets = [0, 0], sizes = [8, 16], strides = [1, 1]} : vector<8x64xf32> to vector<8x16xf32>
    %cst_214 = arith.constant dense<0.000000e+00> : vector<8x16xf32>
    %533 = tpu.matmul %531, %532, %cst_214 {dimension_numbers = #tpu.dot_dimension_numbers<[1], [0], [0], [1], [0, 0, 1, 1], [], []>} : vector<8x8xf32>, vector<8x16xf32>, vector<8x16xf32> -> vector<8x16xf32>
    %534 = vector.extract_strided_slice %514 {offsets = [0, 16], sizes = [8, 16], strides = [1, 1]} : vector<8x64xf32> to vector<8x16xf32>
    %535 = vector.extract_strided_slice %515 {offsets = [0, 16], sizes = [8, 16], strides = [1, 1]} : vector<8x64xf32> to vector<8x16xf32>
    %536 = tpu.transpose %535, [1, 0] : vector<8x16xf32> -> vector<16x8xf32>
    %cst_215 = arith.constant dense<0.000000e+00> : vector<8x8xf32>
    %537 = tpu.matmul %534, %536, %cst_215 {dimension_numbers = #tpu.dot_dimension_numbers<[1], [0], [0], [1], [0, 0, 1, 1], [], []>} : vector<8x16xf32>, vector<16x8xf32>, vector<8x8xf32> -> vector<8x8xf32>
    %538 = arith.addf %537, %7 : vector<8x8xf32>
    %cst_216 = arith.constant dense<0xFF800000> : vector<8xf32>
    %539 = vector.multi_reduction <maximumf>, %538, %cst_216 [1] : vector<8x8xf32> to vector<8xf32>
    %540 = vector.shape_cast %539 : vector<8xf32> to vector<8x1xf32>
    %541 = vector.broadcast %540 : vector<8x1xf32> to vector<8x8xf32>
    %542 = arith.subf %538, %541 : vector<8x8xf32>
    %543 = math.exp %542 : vector<8x8xf32>
    %cst_217 = arith.constant dense<0.000000e+00> : vector<8xf32>
    %544 = vector.multi_reduction <add>, %543, %cst_217 [1] : vector<8x8xf32> to vector<8xf32>
    %545 = vector.shape_cast %544 : vector<8xf32> to vector<8x1xf32>
    %546 = tpu.reciprocal %545 {approx = true} : vector<8x1xf32> -> vector<8x1xf32>
    %547 = vector.broadcast %546 : vector<8x1xf32> to vector<8x8xf32>
    %548 = arith.mulf %543, %547 : vector<8x8xf32>
    %549 = vector.extract_strided_slice %516 {offsets = [0, 16], sizes = [8, 16], strides = [1, 1]} : vector<8x64xf32> to vector<8x16xf32>
    %cst_218 = arith.constant dense<0.000000e+00> : vector<8x16xf32>
    %550 = tpu.matmul %548, %549, %cst_218 {dimension_numbers = #tpu.dot_dimension_numbers<[1], [0], [0], [1], [0, 0, 1, 1], [], []>} : vector<8x8xf32>, vector<8x16xf32>, vector<8x16xf32> -> vector<8x16xf32>
    %551 = vector.extract_strided_slice %514 {offsets = [0, 32], sizes = [8, 16], strides = [1, 1]} : vector<8x64xf32> to vector<8x16xf32>
    %552 = vector.extract_strided_slice %515 {offsets = [0, 32], sizes = [8, 16], strides = [1, 1]} : vector<8x64xf32> to vector<8x16xf32>
    %553 = tpu.transpose %552, [1, 0] : vector<8x16xf32> -> vector<16x8xf32>
    %cst_219 = arith.constant dense<0.000000e+00> : vector<8x8xf32>
    %554 = tpu.matmul %551, %553, %cst_219 {dimension_numbers = #tpu.dot_dimension_numbers<[1], [0], [0], [1], [0, 0, 1, 1], [], []>} : vector<8x16xf32>, vector<16x8xf32>, vector<8x8xf32> -> vector<8x8xf32>
    %555 = arith.addf %554, %7 : vector<8x8xf32>
    %cst_220 = arith.constant dense<0xFF800000> : vector<8xf32>
    %556 = vector.multi_reduction <maximumf>, %555, %cst_220 [1] : vector<8x8xf32> to vector<8xf32>
    %557 = vector.shape_cast %556 : vector<8xf32> to vector<8x1xf32>
    %558 = vector.broadcast %557 : vector<8x1xf32> to vector<8x8xf32>
    %559 = arith.subf %555, %558 : vector<8x8xf32>
    %560 = math.exp %559 : vector<8x8xf32>
    %cst_221 = arith.constant dense<0.000000e+00> : vector<8xf32>
    %561 = vector.multi_reduction <add>, %560, %cst_221 [1] : vector<8x8xf32> to vector<8xf32>
    %562 = vector.shape_cast %561 : vector<8xf32> to vector<8x1xf32>
    %563 = tpu.reciprocal %562 {approx = true} : vector<8x1xf32> -> vector<8x1xf32>
    %564 = vector.broadcast %563 : vector<8x1xf32> to vector<8x8xf32>
    %565 = arith.mulf %560, %564 : vector<8x8xf32>
    %566 = vector.extract_strided_slice %516 {offsets = [0, 32], sizes = [8, 16], strides = [1, 1]} : vector<8x64xf32> to vector<8x16xf32>
    %cst_222 = arith.constant dense<0.000000e+00> : vector<8x16xf32>
    %567 = tpu.matmul %565, %566, %cst_222 {dimension_numbers = #tpu.dot_dimension_numbers<[1], [0], [0], [1], [0, 0, 1, 1], [], []>} : vector<8x8xf32>, vector<8x16xf32>, vector<8x16xf32> -> vector<8x16xf32>
    %568 = vector.extract_strided_slice %514 {offsets = [0, 48], sizes = [8, 16], strides = [1, 1]} : vector<8x64xf32> to vector<8x16xf32>
    %569 = vector.extract_strided_slice %515 {offsets = [0, 48], sizes = [8, 16], strides = [1, 1]} : vector<8x64xf32> to vector<8x16xf32>
    %570 = tpu.transpose %569, [1, 0] : vector<8x16xf32> -> vector<16x8xf32>
    %cst_223 = arith.constant dense<0.000000e+00> : vector<8x8xf32>
    %571 = tpu.matmul %568, %570, %cst_223 {dimension_numbers = #tpu.dot_dimension_numbers<[1], [0], [0], [1], [0, 0, 1, 1], [], []>} : vector<8x16xf32>, vector<16x8xf32>, vector<8x8xf32> -> vector<8x8xf32>
    %572 = arith.addf %571, %7 : vector<8x8xf32>
    %cst_224 = arith.constant dense<0xFF800000> : vector<8xf32>
    %573 = vector.multi_reduction <maximumf>, %572, %cst_224 [1] : vector<8x8xf32> to vector<8xf32>
    %574 = vector.shape_cast %573 : vector<8xf32> to vector<8x1xf32>
    %575 = vector.broadcast %574 : vector<8x1xf32> to vector<8x8xf32>
    %576 = arith.subf %572, %575 : vector<8x8xf32>
    %577 = math.exp %576 : vector<8x8xf32>
    %cst_225 = arith.constant dense<0.000000e+00> : vector<8xf32>
    %578 = vector.multi_reduction <add>, %577, %cst_225 [1] : vector<8x8xf32> to vector<8xf32>
    %579 = vector.shape_cast %578 : vector<8xf32> to vector<8x1xf32>
    %580 = tpu.reciprocal %579 {approx = true} : vector<8x1xf32> -> vector<8x1xf32>
    %581 = vector.broadcast %580 : vector<8x1xf32> to vector<8x8xf32>
    %582 = arith.mulf %577, %581 : vector<8x8xf32>
    %583 = vector.extract_strided_slice %516 {offsets = [0, 48], sizes = [8, 16], strides = [1, 1]} : vector<8x64xf32> to vector<8x16xf32>
    %cst_226 = arith.constant dense<0.000000e+00> : vector<8x16xf32>
    %584 = tpu.matmul %582, %583, %cst_226 {dimension_numbers = #tpu.dot_dimension_numbers<[1], [0], [0], [1], [0, 0, 1, 1], [], []>} : vector<8x8xf32>, vector<8x16xf32>, vector<8x16xf32> -> vector<8x16xf32>
    %585 = tpu.concatenate %533, %550, %567, %584 in 1 : vector<8x16xf32>, vector<8x16xf32>, vector<8x16xf32>, vector<8x16xf32> -> vector<8x64xf32>
    %586 = arith.truncf %585 : vector<8x64xf32> to vector<8x64xbf16>
    %c3_227 = arith.constant 3 : index
    %c0_228 = arith.constant 0 : index
    %c0_229 = arith.constant 0 : index
    %587 = vector.load %arg5[%c3_227, %c0_228, %c0_229] : memref<4x64x64xbf16, #tpu.memory_space<vmem>>, vector<1x64x64xbf16>
    %588 = vector.shape_cast %587 : vector<1x64x64xbf16> to vector<64x64xbf16>
    %cst_230 = arith.constant dense<0.000000e+00> : vector<8x64xf32>
    %589 = tpu.matmul %586, %588, %cst_230 {dimension_numbers = #tpu.dot_dimension_numbers<[1], [0], [0], [1], [0, 0, 1, 1], [], []>} : vector<8x64xbf16>, vector<64x64xbf16>, vector<8x64xf32> -> vector<8x64xf32>
    %c3_231 = arith.constant 3 : index
    %c0_232 = arith.constant 0 : index
    %c0_233 = arith.constant 0 : index
    %590 = vector.load %arg6[%c3_231, %c0_232, %c0_233] : memref<4x1x64xf32, #tpu.memory_space<vmem>>, vector<1x1x64xf32>
    %591 = vector.shape_cast %590 : vector<1x1x64xf32> to vector<1x64xf32>
    %592 = vector.broadcast %591 : vector<1x64xf32> to vector<8x64xf32>
    %593 = arith.addf %589, %592 : vector<8x64xf32>
    %594 = arith.addf %481, %593 : vector<8x64xf32>
    %c3_234 = arith.constant 3 : index
    %c0_235 = arith.constant 0 : index
    %c0_236 = arith.constant 0 : index
    %595 = vector.load %arg7[%c3_234, %c0_235, %c0_236] : memref<4x1x64xf32, #tpu.memory_space<vmem>>, vector<1x1x64xf32>
    %596 = vector.shape_cast %595 : vector<1x1x64xf32> to vector<1x64xf32>
    %c3_237 = arith.constant 3 : index
    %c0_238 = arith.constant 0 : index
    %c0_239 = arith.constant 0 : index
    %597 = vector.load %arg8[%c3_237, %c0_238, %c0_239] : memref<4x1x64xf32, #tpu.memory_space<vmem>>, vector<1x1x64xf32>
    %598 = vector.shape_cast %597 : vector<1x1x64xf32> to vector<1x64xf32>
    %cst_240 = arith.constant dense<0.000000e+00> : vector<8xf32>
    %599 = vector.multi_reduction <add>, %594, %cst_240 [1] : vector<8x64xf32> to vector<8xf32>
    %600 = vector.shape_cast %599 : vector<8xf32> to vector<8x1xf32>
    %cst_241 = arith.constant 6.400000e+01 : f32
    %601 = vector.broadcast %cst_241 : f32 to vector<8x1xf32>
    %602 = arith.divf %600, %601 : vector<8x1xf32>
    %603 = vector.broadcast %602 : vector<8x1xf32> to vector<8x64xf32>
    %604 = arith.subf %594, %603 : vector<8x64xf32>
    %605 = arith.mulf %604, %604 : vector<8x64xf32>
    %cst_242 = arith.constant dense<0.000000e+00> : vector<8xf32>
    %606 = vector.multi_reduction <add>, %605, %cst_242 [1] : vector<8x64xf32> to vector<8xf32>
    %607 = vector.shape_cast %606 : vector<8xf32> to vector<8x1xf32>
    %cst_243 = arith.constant 6.400000e+01 : f32
    %608 = vector.broadcast %cst_243 : f32 to vector<8x1xf32>
    %609 = arith.divf %607, %608 : vector<8x1xf32>
    %610 = vector.broadcast %602 : vector<8x1xf32> to vector<8x64xf32>
    %611 = arith.subf %594, %610 : vector<8x64xf32>
    %cst_244 = arith.constant 9.99999974E-6 : f32
    %612 = vector.broadcast %cst_244 : f32 to vector<8x1xf32>
    %613 = arith.addf %609, %612 : vector<8x1xf32>
    %614 = math.rsqrt %613 : vector<8x1xf32>
    %615 = vector.broadcast %614 : vector<8x1xf32> to vector<8x64xf32>
    %616 = arith.mulf %611, %615 : vector<8x64xf32>
    %617 = vector.broadcast %596 : vector<1x64xf32> to vector<8x64xf32>
    %618 = arith.mulf %616, %617 : vector<8x64xf32>
    %619 = vector.broadcast %598 : vector<1x64xf32> to vector<8x64xf32>
    %620 = arith.addf %618, %619 : vector<8x64xf32>
    %621 = arith.truncf %620 : vector<8x64xf32> to vector<8x64xbf16>
    %c3_245 = arith.constant 3 : index
    %c0_246 = arith.constant 0 : index
    %c0_247 = arith.constant 0 : index
    %622 = vector.load %arg9[%c3_245, %c0_246, %c0_247] : memref<4x64x256xbf16, #tpu.memory_space<vmem>>, vector<1x64x256xbf16>
    %623 = vector.shape_cast %622 : vector<1x64x256xbf16> to vector<64x256xbf16>
    %cst_248 = arith.constant dense<0.000000e+00> : vector<8x256xf32>
    %624 = tpu.matmul %621, %623, %cst_248 {dimension_numbers = #tpu.dot_dimension_numbers<[1], [0], [0], [1], [0, 0, 1, 1], [], []>} : vector<8x64xbf16>, vector<64x256xbf16>, vector<8x256xf32> -> vector<8x256xf32>
    %c3_249 = arith.constant 3 : index
    %c0_250 = arith.constant 0 : index
    %c0_251 = arith.constant 0 : index
    %625 = vector.load %arg10[%c3_249, %c0_250, %c0_251] : memref<4x1x256xf32, #tpu.memory_space<vmem>>, vector<1x1x256xf32>
    %626 = vector.shape_cast %625 : vector<1x1x256xf32> to vector<1x256xf32>
    %627 = vector.broadcast %626 : vector<1x256xf32> to vector<8x256xf32>
    %628 = arith.addf %624, %627 : vector<8x256xf32>
    %cst_252 = arith.constant 0.000000e+00 : f32
    %629 = vector.broadcast %cst_252 : f32 to vector<8x256xf32>
    %630 = arith.maximumf %628, %629 : vector<8x256xf32>
    %631 = arith.truncf %630 : vector<8x256xf32> to vector<8x256xbf16>
    %c3_253 = arith.constant 3 : index
    %c0_254 = arith.constant 0 : index
    %c0_255 = arith.constant 0 : index
    %632 = vector.load %arg11[%c3_253, %c0_254, %c0_255] : memref<4x256x64xbf16, #tpu.memory_space<vmem>>, vector<1x256x64xbf16>
    %633 = vector.shape_cast %632 : vector<1x256x64xbf16> to vector<256x64xbf16>
    %cst_256 = arith.constant dense<0.000000e+00> : vector<8x64xf32>
    %634 = tpu.matmul %631, %633, %cst_256 {dimension_numbers = #tpu.dot_dimension_numbers<[1], [0], [0], [1], [0, 0, 1, 1], [], []>} : vector<8x256xbf16>, vector<256x64xbf16>, vector<8x64xf32> -> vector<8x64xf32>
    %c3_257 = arith.constant 3 : index
    %c0_258 = arith.constant 0 : index
    %c0_259 = arith.constant 0 : index
    %635 = vector.load %arg12[%c3_257, %c0_258, %c0_259] : memref<4x1x64xf32, #tpu.memory_space<vmem>>, vector<1x1x64xf32>
    %636 = vector.shape_cast %635 : vector<1x1x64xf32> to vector<1x64xf32>
    %637 = vector.broadcast %636 : vector<1x64xf32> to vector<8x64xf32>
    %638 = arith.addf %634, %637 : vector<8x64xf32>
    %639 = arith.addf %594, %638 : vector<8x64xf32>
    %c0_260 = arith.constant 0 : index
    %c0_261 = arith.constant 0 : index
    %640 = vector.load %arg13[%c0_260, %c0_261] : memref<1x64xf32, #tpu.memory_space<vmem>>, vector<1x64xf32>
    %c0_262 = arith.constant 0 : index
    %c0_263 = arith.constant 0 : index
    %641 = vector.load %arg14[%c0_262, %c0_263] : memref<1x64xf32, #tpu.memory_space<vmem>>, vector<1x64xf32>
    %cst_264 = arith.constant dense<0.000000e+00> : vector<8xf32>
    %642 = vector.multi_reduction <add>, %639, %cst_264 [1] : vector<8x64xf32> to vector<8xf32>
    %643 = vector.shape_cast %642 : vector<8xf32> to vector<8x1xf32>
    %cst_265 = arith.constant 6.400000e+01 : f32
    %644 = vector.broadcast %cst_265 : f32 to vector<8x1xf32>
    %645 = arith.divf %643, %644 : vector<8x1xf32>
    %646 = vector.broadcast %645 : vector<8x1xf32> to vector<8x64xf32>
    %647 = arith.subf %639, %646 : vector<8x64xf32>
    %648 = arith.mulf %647, %647 : vector<8x64xf32>
    %cst_266 = arith.constant dense<0.000000e+00> : vector<8xf32>
    %649 = vector.multi_reduction <add>, %648, %cst_266 [1] : vector<8x64xf32> to vector<8xf32>
    %650 = vector.shape_cast %649 : vector<8xf32> to vector<8x1xf32>
    %cst_267 = arith.constant 6.400000e+01 : f32
    %651 = vector.broadcast %cst_267 : f32 to vector<8x1xf32>
    %652 = arith.divf %650, %651 : vector<8x1xf32>
    %653 = vector.broadcast %645 : vector<8x1xf32> to vector<8x64xf32>
    %654 = arith.subf %639, %653 : vector<8x64xf32>
    %cst_268 = arith.constant 9.99999974E-6 : f32
    %655 = vector.broadcast %cst_268 : f32 to vector<8x1xf32>
    %656 = arith.addf %652, %655 : vector<8x1xf32>
    %657 = math.rsqrt %656 : vector<8x1xf32>
    %658 = vector.broadcast %657 : vector<8x1xf32> to vector<8x64xf32>
    %659 = arith.mulf %654, %658 : vector<8x64xf32>
    %660 = vector.broadcast %640 : vector<1x64xf32> to vector<8x64xf32>
    %661 = arith.mulf %659, %660 : vector<8x64xf32>
    %662 = vector.broadcast %641 : vector<1x64xf32> to vector<8x64xf32>
    %663 = arith.addf %661, %662 : vector<8x64xf32>
    %664 = arith.truncf %663 : vector<8x64xf32> to vector<8x64xbf16>
    %c0_269 = arith.constant 0 : index
    %c0_270 = arith.constant 0 : index
    %665 = vector.load %arg15[%c0_269, %c0_270] : memref<64x128xbf16, #tpu.memory_space<vmem>>, vector<64x128xbf16>
    %cst_271 = arith.constant dense<0.000000e+00> : vector<8x128xf32>
    %666 = tpu.matmul %664, %665, %cst_271 {dimension_numbers = #tpu.dot_dimension_numbers<[1], [0], [0], [1], [0, 0, 1, 1], [], []>} : vector<8x64xbf16>, vector<64x128xbf16>, vector<8x128xf32> -> vector<8x128xf32>
    %c0_272 = arith.constant 0 : index
    %c0_273 = arith.constant 0 : index
    %667 = vector.load %arg16[%c0_272, %c0_273] : memref<1x128xf32, #tpu.memory_space<vmem>>, vector<1x128xf32>
    %668 = vector.broadcast %667 : vector<1x128xf32> to vector<8x128xf32>
    %669 = arith.addf %666, %668 : vector<8x128xf32>
    %c0_274 = arith.constant 0 : index
    %c0_275 = arith.constant 0 : index
    %c0_276 = arith.constant 0 : index
    %670 = vector.load %arg17[%c0_274, %c0_275, %c0_276] : memref<1x8x128xf32, #tpu.memory_space<vmem>>, vector<1x8x128xf32>
    %671 = vector.shape_cast %670 : vector<1x8x128xf32> to vector<8x128xf32>
    %672 = vector.shape_cast %669 : vector<8x128xf32> to vector<1x8x128xf32>
    tpu.vector_store %arg17[%c0_274, %c0_275, %c0_276], %672 {strides = array<i32>} : memref<1x8x128xf32, #tpu.memory_space<vmem>>, vector<1x8x128xf32>,
    return
  }
  func.func @transform_0(%arg0: i32) -> (i32, i32, i32) {
    %c0_i32 = arith.constant 0 : i32
    %c0_i32_0 = arith.constant 0 : i32
    %c0_i32_1 = arith.constant 0 : i32
    return %arg0, %c0_i32, %c0_i32_0 : i32, i32, i32
  }
  func.func @transform_1(%arg0: i32) -> (i32, i32, i32) {
    %c0_i32 = arith.constant 0 : i32
    %c0_i32_0 = arith.constant 0 : i32
    %c0_i32_1 = arith.constant 0 : i32
    %c0_i32_2 = arith.constant 0 : i32
    return %c0_i32, %c0_i32_0, %c0_i32_1 : i32, i32, i32
  }
  func.func @transform_2(%arg0: i32) -> (i32, i32, i32) {
    %c0_i32 = arith.constant 0 : i32
    %c0_i32_0 = arith.constant 0 : i32
    %c0_i32_1 = arith.constant 0 : i32
    %c0_i32_2 = arith.constant 0 : i32
    return %c0_i32, %c0_i32_0, %c0_i32_1 : i32, i32, i32
  }
  func.func @transform_3(%arg0: i32) -> (i32, i32, i32) {
    %c0_i32 = arith.constant 0 : i32
    %c0_i32_0 = arith.constant 0 : i32
    %c0_i32_1 = arith.constant 0 : i32
    %c0_i32_2 = arith.constant 0 : i32
    return %c0_i32, %c0_i32_0, %c0_i32_1 : i32, i32, i32
  }
  func.func @transform_4(%arg0: i32) -> (i32, i32, i32) {
    %c0_i32 = arith.constant 0 : i32
    %c0_i32_0 = arith.constant 0 : i32
    %c0_i32_1 = arith.constant 0 : i32
    %c0_i32_2 = arith.constant 0 : i32
    return %c0_i32, %c0_i32_0, %c0_i32_1 : i32, i32, i32
  }
  func.func @transform_5(%arg0: i32) -> (i32, i32, i32) {
    %c0_i32 = arith.constant 0 : i32
    %c0_i32_0 = arith.constant 0 : i32
    %c0_i32_1 = arith.constant 0 : i32
    %c0_i32_2 = arith.constant 0 : i32
    return %c0_i32, %c0_i32_0, %c0_i32_1 : i32, i32, i32
  }
  func.func @transform_6(%arg0: i32) -> (i32, i32, i32) {
    %c0_i32 = arith.constant 0 : i32
    %c0_i32_0 = arith.constant 0 : i32
    %c0_i32_1 = arith.constant 0 : i32
    %c0_i32_2 = arith.constant 0 : i32
    return %c0_i32, %c0_i32_0, %c0_i32_1 : i32, i32, i32
  }
  func.func @transform_7(%arg0: i32) -> (i32, i32, i32) {
    %c0_i32 = arith.constant 0 : i32
    %c0_i32_0 = arith.constant 0 : i32
    %c0_i32_1 = arith.constant 0 : i32
    %c0_i32_2 = arith.constant 0 : i32
    return %c0_i32, %c0_i32_0, %c0_i32_1 : i32, i32, i32
  }
  func.func @transform_8(%arg0: i32) -> (i32, i32, i32) {
    %c0_i32 = arith.constant 0 : i32
    %c0_i32_0 = arith.constant 0 : i32
    %c0_i32_1 = arith.constant 0 : i32
    %c0_i32_2 = arith.constant 0 : i32
    return %c0_i32, %c0_i32_0, %c0_i32_1 : i32, i32, i32
  }
  func.func @transform_9(%arg0: i32) -> (i32, i32, i32) {
    %c0_i32 = arith.constant 0 : i32
    %c0_i32_0 = arith.constant 0 : i32
    %c0_i32_1 = arith.constant 0 : i32
    %c0_i32_2 = arith.constant 0 : i32
    return %c0_i32, %c0_i32_0, %c0_i32_1 : i32, i32, i32
  }
  func.func @transform_10(%arg0: i32) -> (i32, i32, i32) {
    %c0_i32 = arith.constant 0 : i32
    %c0_i32_0 = arith.constant 0 : i32
    %c0_i32_1 = arith.constant 0 : i32
    %c0_i32_2 = arith.constant 0 : i32
    return %c0_i32, %c0_i32_0, %c0_i32_1 : i32, i32, i32
  }
  func.func @transform_11(%arg0: i32) -> (i32, i32, i32) {
    %c0_i32 = arith.constant 0 : i32
    %c0_i32_0 = arith.constant 0 : i32
    %c0_i32_1 = arith.constant 0 : i32
    %c0_i32_2 = arith.constant 0 : i32
    return %c0_i32, %c0_i32_0, %c0_i32_1 : i32, i32, i32
  }
  func.func @transform_12(%arg0: i32) -> (i32, i32) {
    %c0_i32 = arith.constant 0 : i32
    %c0_i32_0 = arith.constant 0 : i32
    %c0_i32_1 = arith.constant 0 : i32
    return %c0_i32, %c0_i32_0 : i32, i32
  }
  func.func @transform_13(%arg0: i32) -> (i32, i32) {
    %c0_i32 = arith.constant 0 : i32
    %c0_i32_0 = arith.constant 0 : i32
    %c0_i32_1 = arith.constant 0 : i32
    return %c0_i32, %c0_i32_0 : i32, i32
  }
  func.func @transform_14(%arg0: i32) -> (i32, i32) {
    %c0_i32 = arith.constant 0 : i32
    %c0_i32_0 = arith.constant 0 : i32
    %c0_i32_1 = arith.constant 0 : i32
    return %c0_i32, %c0_i32_0 : i32, i32
  }
  func.func @transform_15(%arg0: i32) -> (i32, i32) {
    %c0_i32 = arith.constant 0 : i32
    %c0_i32_0 = arith.constant 0 : i32
    %c0_i32_1 = arith.constant 0 : i32
    return %c0_i32, %c0_i32_0 : i32, i32
  }
  func.func @transform_16(%arg0: i32) -> (i32, i32, i32) {
    %c0_i32 = arith.constant 0 : i32
    %c0_i32_0 = arith.constant 0 : i32
    %c0_i32_1 = arith.constant 0 : i32
    return %arg0, %c0_i32, %c0_i32_0 : i32, i32, i32
  }
}

</mosaic_0001>

<llo_original>
// kernel: gpt_forward.1
$region0: #{gpt_forward.1}
  #allocation0 [shape = 'u32[]', space=smem, size = 0x4, offset = 0x4, fixed_abs, tag = 'smem constant byte address 0x4 - core index']
  #allocation1 [shape = 'u32[144,128]{1,0:T(1,128)}', space=vmem, size = 0x12000, scoped, tag = 'internal scratch']
  %s0 = inlined_call_operand.vmem [shape: f32[2,8,64], index: 0, kind: input, shape index: {}]
  %s1 = inlined_call_operand.vmem [shape: f32[4,1,64], index: 1, kind: input, shape index: {}]
  %s2 = inlined_call_operand.vmem [shape: f32[4,1,64], index: 2, kind: input, shape index: {}]
  %s3 = inlined_call_operand.vmem [shape: bf16[4,64,192], index: 3, kind: input, shape index: {}]
  %s4 = inlined_call_operand.vmem [shape: bf16[4,64,64], index: 4, kind: input, shape index: {}]
  %s5 = inlined_call_operand.vmem [shape: f32[4,1,64], index: 5, kind: input, shape index: {}]
  %s6 = inlined_call_operand.vmem [shape: f32[4,1,64], index: 6, kind: input, shape index: {}]
  %s7 = inlined_call_operand.vmem [shape: f32[4,1,64], index: 7, kind: input, shape index: {}]
  %s8 = inlined_call_operand.vmem [shape: bf16[4,64,256], index: 8, kind: input, shape index: {}]
  %s9 = inlined_call_operand.vmem [shape: f32[4,1,256], index: 9, kind: input, shape index: {}]
  %s10 = inlined_call_operand.vmem [shape: bf16[4,256,64], index: 10, kind: input, shape index: {}]
  %s11 = inlined_call_operand.vmem [shape: f32[4,1,64], index: 11, kind: input, shape index: {}]
  %s12 = inlined_call_operand.vmem [shape: f32[1,64], index: 12, kind: input, shape index: {}]
  %s13 = inlined_call_operand.vmem [shape: f32[1,64], index: 13, kind: input, shape index: {}]
  %s14 = inlined_call_operand.vmem [shape: bf16[64,128], index: 14, kind: input, shape index: {}]
  %s15 = inlined_call_operand.vmem [shape: f32[1,128], index: 15, kind: input, shape index: {}]
  %s16 = inlined_call_operand.hbm [shape: f32[2,8,128], index: 16, kind: output, shape index: {}]
  %s17 = sld [smem:[#allocation0]]
  $region97: #{gpt_forward.1} parent=0
    _
  %s19 = ssub.s32 1, %s17
  %s20 = scalar_select 0, %s19, %s17
  $region1: #{gpt_forward.1} parent=0
    #allocation2 [shape = 'u8[8192]{0}', space=vmem, size = 0x2000, scoped, tag = 'output window, operand 0']
    #allocation3 [shape = 's32[2]{0}', space=sflag, size = 0x8, scoped, tag = 'scoped memory for gpt_forward.1']
    %21 = vsyncpa [#allocation3], 0
    %s22 = scalar_lea.sflag [#allocation3], 1
    %23 = vsyncpa %s22, 0
    loop: start=0, step=1, limit=4
    $region2: #{gpt_forward.1} parent=1 // loop_pre_header
      _
    $region3: #{gpt_forward.1} parent=1 // loop_header
      %s25 = sphi 0, %s29
      %p26 = scmp.ge.s32.totalorder %s25, 4
      %s35 = sphi 0, %s37
      %s38 = sphi 0, %s35
      %s39 = sphi 0, %s38
      %s55 = sphi 0, %s39
      %s59 = sphi 0, %s59
      %s61 = sphi 0, %s59
      %s62 = sphi 0, %s61
      %s76 = sphi 0, %s62
      %s80 = sphi 0, %s80
      %s82 = sphi 0, %s80
      %s83 = sphi 0, %s82
      %s97 = sphi 0, %s83
      %s101 = sphi 0, %s101
      %s103 = sphi 0, %s101
      %s104 = sphi 0, %s103
      %s118 = sphi 0, %s104
      %s122 = sphi 0, %s122
      %s124 = sphi 0, %s122
      %s125 = sphi 0, %s124
      %s139 = sphi 0, %s125
      %s143 = sphi 0, %s143
      %s145 = sphi 0, %s143
      %s146 = sphi 0, %s145
      %s160 = sphi 0, %s146
      %s164 = sphi 0, %s164
      %s166 = sphi 0, %s164
      %s167 = sphi 0, %s166
      %s181 = sphi 0, %s167
      %s185 = sphi 0, %s185
      %s187 = sphi 0, %s185
      %s188 = sphi 0, %s187
      %s202 = sphi 0, %s188
      %s206 = sphi 0, %s206
      %s208 = sphi 0, %s206
      %s209 = sphi 0, %s208
      %s223 = sphi 0, %s209
      %s227 = sphi 0, %s227
      %s229 = sphi 0, %s227
      %s230 = sphi 0, %s229
      %s244 = sphi 0, %s230
      %s248 = sphi 0, %s248
      %s250 = sphi 0, %s248
      %s251 = sphi 0, %s250
      %s265 = sphi 0, %s251
      %s269 = sphi 0, %s269
      %s271 = sphi 0, %s269
      %s272 = sphi 0, %s271
      %s286 = sphi 0, %s272
      %s290 = sphi 0, %s290
      %s292 = sphi 0, %s290
      %s293 = sphi 0, %s292
      %s307 = sphi 0, %s293
      %s311 = sphi 0, %s311
      %s313 = sphi 0, %s311
      %s314 = sphi 0, %s313
      %s328 = sphi 0, %s314
      %s332 = sphi 0, %s332
      %s334 = sphi 0, %s332
      %s335 = sphi 0, %s334
      %s349 = sphi 0, %s335
      %s353 = sphi 0, %s353
      %s355 = sphi 0, %s353
      %s356 = sphi 0, %s355
      %s370 = sphi 0, %s356
      %s376 = sphi 0, %s378
      %s379 = sphi 0, %s376
      %s380 = sphi 0, %s379
      %s396 = sphi 0, %s380
    $region4: #{gpt_forward.1} parent=1 // loop_header_branch
      %28 = sbr.rel (%p26) target = $region8
    $region5: #{gpt_forward.1} parent=1 // loop_body
      %s30 = ssub.s32 %s25, 1
      %s31 = ssub.s32 %s25, 2
      %s32 = sadd.s32 %s25, 1
      %s33 = ssub.s32 %s25, %s32
      %p34 = scmp.eq.s32.totalorder %s33, 0
      %s36 = sadd.s32 %s35, 1
      %s37 = scalar_select %p34, %s35, %s36
      %p40 = pneg %p34
      %p41 = scmp.eq.s32.totalorder %s25, 1
      %p42 = por %p40, %p41
      %p43 = scmp.ne.s32.totalorder %s35, %s38
      %p44 = scmp.eq.s32.totalorder %s25, 0
      %p45 = por %p43, %p44
      %p46 = scmp.ne.s32.totalorder %s35, %s38
      %p47 = scmp.eq.s32.totalorder %s30, 1
      %p48 = por %p46, %p47
      %p49 = scmp.ne.s32.totalorder %s38, %s39
      %p50 = scmp.eq.s32.totalorder %s30, 0
      %p51 = por %p49, %p50
      %p52 = scmp.ne.s32.totalorder %s38, %s39
      %p53 = scmp.eq.s32.totalorder %s31, 1
      %p54 = por %p52, %p53
      %p56 = scmp.ne.s32.totalorder %s39, %s55
      %p57 = scmp.eq.s32.totalorder %s31, 0
      %p58 = por %p56, %p57
      %s60 = sadd.s32 %s59, 1
      %p63 = scmp.eq.s32.totalorder %s25, 1
      %p64 = scmp.ne.s32.totalorder %s59, %s61
      %p65 = scmp.eq.s32.totalorder %s25, 0
      %p66 = por %p64, %p65
      %p67 = scmp.ne.s32.totalorder %s59, %s61
      %p68 = scmp.eq.s32.totalorder %s30, 1
      %p69 = por %p67, %p68
      %p70 = scmp.ne.s32.totalorder %s61, %s62
      %p71 = scmp.eq.s32.totalorder %s30, 0
      %p72 = por %p70, %p71
      %p73 = scmp.ne.s32.totalorder %s61, %s62
      %p74 = scmp.eq.s32.totalorder %s31, 1
      %p75 = por %p73, %p74
      %p77 = scmp.ne.s32.totalorder %s62, %s76
      %p78 = scmp.eq.s32.totalorder %s31, 0
      %p79 = por %p77, %p78
      %s81 = sadd.s32 %s80, 1
      %p84 = scmp.eq.s32.totalorder %s25, 1
      %p85 = scmp.ne.s32.totalorder %s80, %s82
      %p86 = scmp.eq.s32.totalorder %s25, 0
      %p87 = por %p85, %p86
      %p88 = scmp.ne.s32.totalorder %s80, %s82
      %p89 = scmp.eq.s32.totalorder %s30, 1
      %p90 = por %p88, %p89
      %p91 = scmp.ne.s32.totalorder %s82, %s83
      %p92 = scmp.eq.s32.totalorder %s30, 0
      %p93 = por %p91, %p92
      %p94 = scmp.ne.s32.totalorder %s82, %s83
      %p95 = scmp.eq.s32.totalorder %s31, 1
      %p96 = por %p94, %p95
      %p98 = scmp.ne.s32.totalorder %s83, %s97
      %p99 = scmp.eq.s32.totalorder %s31, 0
      %p100 = por %p98, %p99
      %s102 = sadd.s32 %s101, 1
      %p105 = scmp.eq.s32.totalorder %s25, 1
      %p106 = scmp.ne.s32.totalorder %s101, %s103
      %p107 = scmp.eq.s32.totalorder %s25, 0
      %p108 = por %p106, %p107
      %p109 = scmp.ne.s32.totalorder %s101, %s103
      %p110 = scmp.eq.s32.totalorder %s30, 1
      %p111 = por %p109, %p110
      %p112 = scmp.ne.s32.totalorder %s103, %s104
      %p113 = scmp.eq.s32.totalorder %s30, 0
      %p114 = por %p112, %p113
      %p115 = scmp.ne.s32.totalorder %s103, %s104
      %p116 = scmp.eq.s32.totalorder %s31, 1
      %p117 = por %p115, %p116
      %p119 = scmp.ne.s32.totalorder %s104, %s118
      %p120 = scmp.eq.s32.totalorder %s31, 0
      %p121 = por %p119, %p120
      %s123 = sadd.s32 %s122, 1
      %p126 = scmp.eq.s32.totalorder %s25, 1
      %p127 = scmp.ne.s32.totalorder %s122, %s124
      %p128 = scmp.eq.s32.totalorder %s25, 0
      %p129 = por %p127, %p128
      %p130 = scmp.ne.s32.totalorder %s122, %s124
      %p131 = scmp.eq.s32.totalorder %s30, 1
      %p132 = por %p130, %p131
      %p133 = scmp.ne.s32.totalorder %s124, %s125
      %p134 = scmp.eq.s32.totalorder %s30, 0
      %p135 = por %p133, %p134
      %p136 = scmp.ne.s32.totalorder %s124, %s125
      %p137 = scmp.eq.s32.totalorder %s31, 1
      %p138 = por %p136, %p137
      %p140 = scmp.ne.s32.totalorder %s125, %s139
      %p141 = scmp.eq.s32.totalorder %s31, 0
      %p142 = por %p140, %p141
      %s144 = sadd.s32 %s143, 1
      %p147 = scmp.eq.s32.totalorder %s25, 1
      %p148 = scmp.ne.s32.totalorder %s143, %s145
      %p149 = scmp.eq.s32.totalorder %s25, 0
      %p150 = por %p148, %p149
      %p151 = scmp.ne.s32.totalorder %s143, %s145
      %p152 = scmp.eq.s32.totalorder %s30, 1
      %p153 = por %p151, %p152
      %p154 = scmp.ne.s32.totalorder %s145, %s146
      %p155 = scmp.eq.s32.totalorder %s30, 0
      %p156 = por %p154, %p155
      %p157 = scmp.ne.s32.totalorder %s145, %s146
      %p158 = scmp.eq.s32.totalorder %s31, 1
      %p159 = por %p157, %p158
      %p161 = scmp.ne.s32.totalorder %s146, %s160
      %p162 = scmp.eq.s32.totalorder %s31, 0
      %p163 = por %p161, %p162
      %s165 = sadd.s32 %s164, 1
      %p168 = scmp.eq.s32.totalorder %s25, 1
      %p169 = scmp.ne.s32.totalorder %s164, %s166
      %p170 = scmp.eq.s32.totalorder %s25, 0
      %p171 = por %p169, %p170
      %p172 = scmp.ne.s32.totalorder %s164, %s166
      %p173 = scmp.eq.s32.totalorder %s30, 1
      %p174 = por %p172, %p173
      %p175 = scmp.ne.s32.totalorder %s166, %s167
      %p176 = scmp.eq.s32.totalorder %s30, 0
      %p177 = por %p175, %p176
      %p178 = scmp.ne.s32.totalorder %s166, %s167
      %p179 = scmp.eq.s32.totalorder %s31, 1
      %p180 = por %p178, %p179
      %p182 = scmp.ne.s32.totalorder %s167, %s181
      %p183 = scmp.eq.s32.totalorder %s31, 0
      %p184 = por %p182, %p183
      %s186 = sadd.s32 %s185, 1
      %p189 = scmp.eq.s32.totalorder %s25, 1
      %p190 = scmp.ne.s32.totalorder %s185, %s187
      %p191 = scmp.eq.s32.totalorder %s25, 0
      %p192 = por %p190, %p191
      %p193 = scmp.ne.s32.totalorder %s185, %s187
      %p194 = scmp.eq.s32.totalorder %s30, 1
      %p195 = por %p193, %p194
      %p196 = scmp.ne.s32.totalorder %s187, %s188
      %p197 = scmp.eq.s32.totalorder %s30, 0
      %p198 = por %p196, %p197
      %p199 = scmp.ne.s32.totalorder %s187, %s188
      %p200 = scmp.eq.s32.totalorder %s31, 1
      %p201 = por %p199, %p200
      %p203 = scmp.ne.s32.totalorder %s188, %s202
      %p204 = scmp.eq.s32.totalorder %s31, 0
      %p205 = por %p203, %p204
      %s207 = sadd.s32 %s206, 1
      %p210 = scmp.eq.s32.totalorder %s25, 1
      %p211 = scmp.ne.s32.totalorder %s206, %s208
      %p212 = scmp.eq.s32.totalorder %s25, 0
      %p213 = por %p211, %p212
      %p214 = scmp.ne.s32.totalorder %s206, %s208
      %p215 = scmp.eq.s32.totalorder %s30, 1
      %p216 = por %p214, %p215
      %p217 = scmp.ne.s32.totalorder %s208, %s209
      %p218 = scmp.eq.s32.totalorder %s30, 0
      %p219 = por %p217, %p218
      %p220 = scmp.ne.s32.totalorder %s208, %s209
      %p221 = scmp.eq.s32.totalorder %s31, 1
      %p222 = por %p220, %p221
      %p224 = scmp.ne.s32.totalorder %s209, %s223
      %p225 = scmp.eq.s32.totalorder %s31, 0
      %p226 = por %p224, %p225
      %s228 = sadd.s32 %s227, 1
      %p231 = scmp.eq.s32.totalorder %s25, 1
      %p232 = scmp.ne.s32.totalorder %s227, %s229
      %p233 = scmp.eq.s32.totalorder %s25, 0
      %p234 = por %p232, %p233
      %p235 = scmp.ne.s32.totalorder %s227, %s229
      %p236 = scmp.eq.s32.totalorder %s30, 1
      %p237 = por %p235, %p236
      %p238 = scmp.ne.s32.totalorder %s229, %s230
      %p239 = scmp.eq.s32.totalorder %s30, 0
      %p240 = por %p238, %p239
      %p241 = scmp.ne.s32.totalorder %s229, %s230
      %p242 = scmp.eq.s32.totalorder %s31, 1
      %p243 = por %p241, %p242
      %p245 = scmp.ne.s32.totalorder %s230, %s244
      %p246 = scmp.eq.s32.totalorder %s31, 0
      %p247 = por %p245, %p246
      %s249 = sadd.s32 %s248, 1
      %p252 = scmp.eq.s32.totalorder %s25, 1
      %p253 = scmp.ne.s32.totalorder %s248, %s250
      %p254 = scmp.eq.s32.totalorder %s25, 0
      %p255 = por %p253, %p254
      %p256 = scmp.ne.s32.totalorder %s248, %s250
      %p257 = scmp.eq.s32.totalorder %s30, 1
      %p258 = por %p256, %p257
      %p259 = scmp.ne.s32.totalorder %s250, %s251
      %p260 = scmp.eq.s32.totalorder %s30, 0
      %p261 = por %p259, %p260
      %p262 = scmp.ne.s32.totalorder %s250, %s251
      %p263 = scmp.eq.s32.totalorder %s31, 1
      %p264 = por %p262, %p263
      %p266 = scmp.ne.s32.totalorder %s251, %s265
      %p267 = scmp.eq.s32.totalorder %s31, 0
      %p268 = por %p266, %p267
      %s270 = sadd.s32 %s269, 1
      %p273 = scmp.eq.s32.totalorder %s25, 1
      %p274 = scmp.ne.s32.totalorder %s269, %s271
      %p275 = scmp.eq.s32.totalorder %s25, 0
      %p276 = por %p274, %p275
      %p277 = scmp.ne.s32.totalorder %s269, %s271
      %p278 = scmp.eq.s32.totalorder %s30, 1
      %p279 = por %p277, %p278
      %p280 = scmp.ne.s32.totalorder %s271, %s272
      %p281 = scmp.eq.s32.totalorder %s30, 0
      %p282 = por %p280, %p281
      %p283 = scmp.ne.s32.totalorder %s271, %s272
      %p284 = scmp.eq.s32.totalorder %s31, 1
      %p285 = por %p283, %p284
      %p287 = scmp.ne.s32.totalorder %s272, %s286
      %p288 = scmp.eq.s32.totalorder %s31, 0
      %p289 = por %p287, %p288
      %s291 = sadd.s32 %s290, 1
      %p294 = scmp.eq.s32.totalorder %s25, 1
      %p295 = scmp.ne.s32.totalorder %s290, %s292
      %p296 = scmp.eq.s32.totalorder %s25, 0
      %p297 = por %p295, %p296
      %p298 = scmp.ne.s32.totalorder %s290, %s292
      %p299 = scmp.eq.s32.totalorder %s30, 1
      %p300 = por %p298, %p299
      %p301 = scmp.ne.s32.totalorder %s292, %s293
      %p302 = scmp.eq.s32.totalorder %s30, 0
      %p303 = por %p301, %p302
      %p304 = scmp.ne.s32.totalorder %s292, %s293
      %p305 = scmp.eq.s32.totalorder %s31, 1
      %p306 = por %p304, %p305
      %p308 = scmp.ne.s32.totalorder %s293, %s307
      %p309 = scmp.eq.s32.totalorder %s31, 0
      %p310 = por %p308, %p309
      %s312 = sadd.s32 %s311, 1
      %p315 = scmp.eq.s32.totalorder %s25, 1
      %p316 = scmp.ne.s32.totalorder %s311, %s313
      %p317 = scmp.eq.s32.totalorder %s25, 0
      %p318 = por %p316, %p317
      %p319 = scmp.ne.s32.totalorder %s311, %s313
      %p320 = scmp.eq.s32.totalorder %s30, 1
      %p321 = por %p319, %p320
      %p322 = scmp.ne.s32.totalorder %s313, %s314
      %p323 = scmp.eq.s32.totalorder %s30, 0
      %p324 = por %p322, %p323
      %p325 = scmp.ne.s32.totalorder %s313, %s314
      %p326 = scmp.eq.s32.totalorder %s31, 1
      %p327 = por %p325, %p326
      %p329 = scmp.ne.s32.totalorder %s314, %s328
      %p330 = scmp.eq.s32.totalorder %s31, 0
      %p331 = por %p329, %p330
      %s333 = sadd.s32 %s332, 1
      %p336 = scmp.eq.s32.totalorder %s25, 1
      %p337 = scmp.ne.s32.totalorder %s332, %s334
      %p338 = scmp.eq.s32.totalorder %s25, 0
      %p339 = por %p337, %p338
      %p340 = scmp.ne.s32.totalorder %s332, %s334
      %p341 = scmp.eq.s32.totalorder %s30, 1
      %p342 = por %p340, %p341
      %p343 = scmp.ne.s32.totalorder %s334, %s335
      %p344 = scmp.eq.s32.totalorder %s30, 0
      %p345 = por %p343, %p344
      %p346 = scmp.ne.s32.totalorder %s334, %s335
      %p347 = scmp.eq.s32.totalorder %s31, 1
      %p348 = por %p346, %p347
      %p350 = scmp.ne.s32.totalorder %s335, %s349
      %p351 = scmp.eq.s32.totalorder %s31, 0
      %p352 = por %p350, %p351
      %s354 = sadd.s32 %s353, 1
      %p357 = scmp.eq.s32.totalorder %s25, 1
      %p358 = scmp.ne.s32.totalorder %s353, %s355
      %p359 = scmp.eq.s32.totalorder %s25, 0
      %p360 = por %p358, %p359
      %p361 = scmp.ne.s32.totalorder %s353, %s355
      %p362 = scmp.eq.s32.totalorder %s30, 1
      %p363 = por %p361, %p362
      %p364 = scmp.ne.s32.totalorder %s355, %s356
      %p365 = scmp.eq.s32.totalorder %s30, 0
      %p366 = por %p364, %p365
      %p367 = scmp.ne.s32.totalorder %s355, %s356
      %p368 = scmp.eq.s32.totalorder %s31, 1
      %p369 = por %p367, %p368
      %p371 = scmp.ne.s32.totalorder %s356, %s370
      %p372 = scmp.eq.s32.totalorder %s31, 0
      %p373 = por %p371, %p372
      %s374 = ssub.s32 %s25, %s32
      %p375 = scmp.eq.s32.totalorder %s374, 0
      %s377 = sadd.s32 %s376, 1
      %s378 = scalar_select %p375, %s376, %s377
      %p381 = pneg %p375
      %p382 = scmp.eq.s32.totalorder %s25, 1
      %p383 = por %p381, %p382
      %p384 = scmp.ne.s32.totalorder %s376, %s379
      %p385 = scmp.eq.s32.totalorder %s25, 0
      %p386 = por %p384, %p385
      %p387 = scmp.ne.s32.totalorder %s376, %s379
      %p388 = scmp.eq.s32.totalorder %s30, 1
      %p389 = por %p387, %p388
      %p390 = scmp.ne.s32.totalorder %s379, %s380
      %p391 = scmp.eq.s32.totalorder %s30, 0
      %p392 = por %p390, %p391
      %p393 = scmp.ne.s32.totalorder %s379, %s380
      %p394 = scmp.eq.s32.totalorder %s31, 1
      %p395 = por %p393, %p394
      %p397 = scmp.ne.s32.totalorder %s380, %s396
      %p398 = scmp.eq.s32.totalorder %s31, 0
      %p399 = por %p397, %p398
      %p400 = scmp.le.s32.totalorder 1, %s25
      %p401 = scmp.lt.s32.totalorder %s25, 3
      %p402 = pnand %p400, %p401
      %p403 = pneg %p402
      // Predicated region
      $region9: #{gpt_forward.1} parent=5 // pred_check
        _
      $region10: #{gpt_forward.1} parent=5 // pred_check_branch
        %405 = sbr.rel (%p402) target = $region12
      $region11: #{gpt_forward.1} parent=5 // pred_region
        %s406 = ssub.s32 %s25, 1
        // Predicated region
        $region13: #{gpt_forward.1} parent=11 // pred_check
          %p407 = pneg %p72
        $region14: #{gpt_forward.1} parent=11 // pred_check_branch
          %409 = sbr.rel (%p407) target = $region16
        $region15: #{gpt_forward.1} parent=11 // pred_region
          _
        $region16: #{gpt_forward.1} parent=11 // pred_fallthru
          _
        // Predicated region
        $region17: #{gpt_forward.1} parent=11 // pred_check
          %p410 = pneg %p93
        $region18: #{gpt_forward.1} parent=11 // pred_check_branch
          %412 = sbr.rel (%p410) target = $region20
        $region19: #{gpt_forward.1} parent=11 // pred_region
          _
        $region20: #{gpt_forward.1} parent=11 // pred_fallthru
          _
        // Predicated region
        $region21: #{gpt_forward.1} parent=11 // pred_check
          %p413 = pneg %p114
        $region22: #{gpt_forward.1} parent=11 // pred_check_branch
          %415 = sbr.rel (%p413) target = $region24
        $region23: #{gpt_forward.1} parent=11 // pred_region
          _
        $region24: #{gpt_forward.1} parent=11 // pred_fallthru
          _
        // Predicated region
        $region25: #{gpt_forward.1} parent=11 // pred_check
          %p416 = pneg %p135
        $region26: #{gpt_forward.1} parent=11 // pred_check_branch
          %418 = sbr.rel (%p416) target = $region28
        $region27: #{gpt_forward.1} parent=11 // pred_region
          _
        $region28: #{gpt_forward.1} parent=11 // pred_fallthru
          _
        // Predicated region
        $region29: #{gpt_forward.1} parent=11 // pred_check
          %p419 = pneg %p156
        $region30: #{gpt_forward.1} parent=11 // pred_check_branch
          %421 = sbr.rel (%p419) target = $region32
        $region31: #{gpt_forward.1} parent=11 // pred_region
          _
        $region32: #{gpt_forward.1} parent=11 // pred_fallthru
          _
        // Predicated region
        $region33: #{gpt_forward.1} parent=11 // pred_check
          %p422 = pneg %p177
        $region34: #{gpt_forward.1} parent=11 // pred_check_branch
          %424 = sbr.rel (%p422) target = $region36
        $region35: #{gpt_forward.1} parent=11 // pred_region
          _
        $region36: #{gpt_forward.1} parent=11 // pred_fallthru
          _
        // Predicated region
        $region37: #{gpt_forward.1} parent=11 // pred_check
          %p425 = pneg %p198
        $region38: #{gpt_forward.1} parent=11 // pred_check_branch
          %427 = sbr.rel (%p425) target = $region40
        $region39: #{gpt_forward.1} parent=11 // pred_region
          _
        $region40: #{gpt_forward.1} parent=11 // pred_fallthru
          _
        // Predicated region
        $region41: #{gpt_forward.1} parent=11 // pred_check
          %p428 = pneg %p219
        $region42: #{gpt_forward.1} parent=11 // pred_check_branch
          %430 = sbr.rel (%p428) target = $region44
        $region43: #{gpt_forward.1} parent=11 // pred_region
          _
        $region44: #{gpt_forward.1} parent=11 // pred_fallthru
          _
        // Predicated region
        $region45: #{gpt_forward.1} parent=11 // pred_check
          %p431 = pneg %p240
        $region46: #{gpt_forward.1} parent=11 // pred_check_branch
          %433 = sbr.rel (%p431) target = $region48
        $region47: #{gpt_forward.1} parent=11 // pred_region
          _
        $region48: #{gpt_forward.1} parent=11 // pred_fallthru
          _
        // Predicated region
        $region49: #{gpt_forward.1} parent=11 // pred_check
          %p434 = pneg %p261
        $region50: #{gpt_forward.1} parent=11 // pred_check_branch
          %436 = sbr.rel (%p434) target = $region52
        $region51: #{gpt_forward.1} parent=11 // pred_region
          _
        $region52: #{gpt_forward.1} parent=11 // pred_fallthru
          _
        // Predicated region
        $region53: #{gpt_forward.1} parent=11 // pred_check
          %p437 = pneg %p282
        $region54: #{gpt_forward.1} parent=11 // pred_check_branch
          %439 = sbr.rel (%p437) target = $region56
        $region55: #{gpt_forward.1} parent=11 // pred_region
          _
        $region56: #{gpt_forward.1} parent=11 // pred_fallthru
          _
        // Predicated region
        $region57: #{gpt_forward.1} parent=11 // pred_check
          %p440 = pneg %p303
        $region58: #{gpt_forward.1} parent=11 // pred_check_branch
          %442 = sbr.rel (%p440) target = $region60
        $region59: #{gpt_forward.1} parent=11 // pred_region
          _
        $region60: #{gpt_forward.1} parent=11 // pred_fallthru
          _
        // Predicated region
        $region61: #{gpt_forward.1} parent=11 // pred_check
          %p443 = pneg %p324
        $region62: #{gpt_forward.1} parent=11 // pred_check_branch
          %445 = sbr.rel (%p443) target = $region64
        $region63: #{gpt_forward.1} parent=11 // pred_region
          _
        $region64: #{gpt_forward.1} parent=11 // pred_fallthru
          _
        // Predicated region
        $region65: #{gpt_forward.1} parent=11 // pred_check
          %p446 = pneg %p345
        $region66: #{gpt_forward.1} parent=11 // pred_check_branch
          %448 = sbr.rel (%p446) target = $region68
        $region67: #{gpt_forward.1} parent=11 // pred_region
          _
        $region68: #{gpt_forward.1} parent=11 // pred_fallthru
          _
        // Predicated region
        $region69: #{gpt_forward.1} parent=11 // pred_check
          %p449 = pneg %p366
        $region70: #{gpt_forward.1} parent=11 // pred_check_branch
          %451 = sbr.rel (%p449) target = $region72
        $region71: #{gpt_forward.1} parent=11 // pred_region
          _
        $region72: #{gpt_forward.1} parent=11 // pred_fallthru
          _
      $region12: #{gpt_forward.1} parent=5 // pred_fallthru
        _
      %p452 = scmp.lt.s32.totalorder %s25, 2
      // Predicated region
      $region73: #{gpt_forward.1} parent=5 // pred_check
        %p453 = pneg %p452
      $region74: #{gpt_forward.1} parent=5 // pred_check_branch
        %455 = sbr.rel (%p453) target = $region76
      $region75: #{gpt_forward.1} parent=5 // pred_region
        // Predicated region
        $region77: #{gpt_forward.1} parent=75 // pred_check
          %p456 = pneg %p45
        $region78: #{gpt_forward.1} parent=75 // pred_check_branch
          %458 = sbr.rel (%p456) target = $region80
        $region79: #{gpt_forward.1} parent=75 // pred_region
          %p459 = scmp.lt.s32.totalorder %s25, 1
          %s460 = scalar_select %p459, %s25, 1
          %s461 = smul.addr %s460, 8
          %s462 = scalar_lea.vmem %s0, %s461
        $region80: #{gpt_forward.1} parent=75 // pred_fallthru
          _
      $region76: #{gpt_forward.1} parent=5 // pred_fallthru
        _
      %p463 = scmp.le.s32.totalorder 1, %s25
      %p464 = scmp.lt.s32.totalorder %s25, 3
      %p465 = pnand %p463, %p464
      %p466 = pneg %p465
      // Predicated region
      $region81: #{gpt_forward.1} parent=5 // pred_check
        _
      $region82: #{gpt_forward.1} parent=5 // pred_check_branch
        %468 = sbr.rel (%p465) target = $region84
      $region83: #{gpt_forward.1} parent=5 // pred_region
        %s469 = ssub.s32 %s25, 1
        %p470 = scmp.lt.s32.totalorder %s30, 1
        %s471 = scalar_select %p470, %s30, 1
        %s472 = smul.addr %s471, 8
        %s473 = scalar_lea.vmem %s0, %s472
        %p474 = pneg %p51
        %p475 = pneg %p48
        %p476 = pneg %p72
        %p477 = pneg %p69
        %p478 = pneg %p93
        %p479 = pneg %p90
        %p480 = pneg %p114
        %p481 = pneg %p111
        %p482 = pneg %p135
        %p483 = pneg %p132
        %p484 = pneg %p156
        %p485 = pneg %p153
        %p486 = pneg %p177
        %p487 = pneg %p174
        %p488 = pneg %p198
        %p489 = pneg %p195
        %p490 = pneg %p219
        %p491 = pneg %p216
        %p492 = pneg %p240
        %p493 = pneg %p237
        %p494 = pneg %p261
        %p495 = pneg %p258
        %p496 = pneg %p282
        %p497 = pneg %p279
        %p498 = pneg %p303
        %p499 = pneg %p300
        %p500 = pneg %p324
        %p501 = pneg %p321
        %p502 = pneg %p345
        %p503 = pneg %p342
        %p504 = pneg %p366
        %p505 = pneg %p363
        %p506 = pneg %p392
        %p507 = pneg %p389
        %s508 = sand.u32 %s379, 1
        %s509 = scalar_lea.sflag [#allocation3], %s508
        %s510 = sand.u32 %s379, 1
        %s511 = smul.addr %s510, 8
        %s512 = scalar_lea.vmem [#allocation2], %s511
        %p513 = scmp.lt.s32.totalorder %s30, 1
        %s514 = scalar_select %p513, %s30, 1
        %s515 = smul.addr %s514, 8
        %s516 = scalar_lea.vmem %s0, %s515
        %v518 = vld [vmem:[%s516] sm:$0xff]
        %v519 = vlaneseq
        %v520 = vshrl.u32 %v519, 7
        %v521 = vlaneseq
        %v522 = vand.u32 %v521, 127
        %vm523 = vcmp.ge.s32.totalorder %v520, %v522
        %v524 = vsel %vm523, 0.0, -1e+30
        %v525 = vld [vmem:[%s1] sm:$0x1]
        %v526 = vld [vmem:[%s2] sm:$0x1]
        %vm527 = vcmask 523264
        %v528 = vsel %vm527, %v518, 0.0
        %529 = vadd.xlane.f32.xlu0 %v528
        %v530 = vpop.xlane.xlu0 %529
        %v531 = vrcp.pop 64.0
        %v532 = vmul.f32 %v530, %v531
        %v533 = vsub.f32 %v518, %v532
        %v534 = vmul.f32 %v533, %v533
        %v535 = vsel %vm527, %v534, 0.0
        %536 = vadd.xlane.f32.xlu0 %v535
        %v537 = vpop.xlane.xlu0 %536
        %v538 = vmul.f32 %v537, %v531
        %v539 = vadd.f32 %v538, 1e-05
        %v540 = vrsqrt.pop %v539
        %v541 = vmul.f32 %v533, %v540
        %v543 = vlaneseq
        %v544 = vshrl.u32 %v543, 7
        %v545 = vsub.s32 0, %v544
        %v546 = vrot.slane %v525, %v545
        %v548 = vmul.f32 %v541, %v546
        %v550 = vlaneseq
        %v551 = vshrl.u32 %v550, 7
        %v552 = vsub.s32 0, %v551
        %v553 = vrot.slane %v526, %v552
        %v555 = vadd.f32 %v548, %v553
        %v556 = vpack.c.bf16 %v555, %v555
        %v557 = vld [vmem:[%s3] sm:$0xff]
        %v558 = vld [vmem:[%s3 + $0x8] sm:$0xff]
        %v559 = vld [vmem:[%s3 + $0x10] sm:$0xff]
        %v560 = vld [vmem:[%s3 + $0x18] sm:$0xff]
        %v561 = vld [vmem:[%s3 + $0x20] sm:$0xff]
        %v562 = vld [vmem:[%s3 + $0x28] sm:$0xff]
        %v563 = vld [vmem:[%s3 + $0x30] sm:$0xff]
        %v564 = vld [vmem:[%s3 + $0x38] sm:$0xff]
        %v573 = vunpack.c.l.b16 %v557
        %v574 = vunpack.c.h.b16 %v557
        %v575 = vunpack.c.l.b16 %v558
        %v576 = vunpack.c.h.b16 %v558
        %v577 = vunpack.c.l.b16 %v559
        %v578 = vunpack.c.h.b16 %v559
        %v579 = vunpack.c.l.b16 %v560
        %v580 = vunpack.c.h.b16 %v560
        %v581 = vunpack.c.l.b16 %v561
        %v582 = vunpack.c.h.b16 %v561
        %v583 = vunpack.c.l.b16 %v562
        %v584 = vunpack.c.h.b16 %v562
        %v585 = vunpack.c.l.b16 %v563
        %v586 = vunpack.c.h.b16 %v563
        %v587 = vunpack.c.l.b16 %v564
        %v588 = vunpack.c.h.b16 %v564
        %v589 = vpack.c.b16 %v575, %v573
        %v590 = vpack.c.b16 %v576, %v574
        %v591 = vpack.c.b16 %v579, %v577
        %v592 = vpack.c.b16 %v580, %v578
        %v593 = vpack.c.b16 %v583, %v581
        %v594 = vpack.c.b16 %v584, %v582
        %v595 = vpack.c.b16 %v587, %v585
        %v596 = vpack.c.b16 %v588, %v586
        %v606 = vsel %vm527, %v556, 0
        %608 = vmatprep.subr.bf16.mxu0 0
        %609 = vmatpush1.bf16.msra.mxu0 0
        %610 = vmatprep.subr.bf16.mxu0 0
        %611 = vmatpush1.bf16.msra.mxu0 0
        %612 = vmatprep.subr.bf16.mxu0 0
        %613 = vmatpush1.bf16.msra.mxu0 0
        %614 = vmatprep.subr.bf16.mxu0 0
        %615 = vmatpush1.bf16.msra.mxu0 0
        %616 = vmatprep.subr.bf16.mxu0 %v596
        %617 = vmatpush1.bf16.msra.mxu0 %v595
        %618 = vmatprep.subr.bf16.mxu0 %v594
        %619 = vmatpush1.bf16.msra.mxu0 %v593
        %620 = vmatprep.subr.bf16.mxu0 %v592
        %621 = vmatpush1.bf16.msra.mxu0 %v591
        %622 = vmatprep.subr.bf16.mxu0 %v590
        %623 = vmatpush1.bf16.msra.mxu0 %v589
        %624 = vmatprep.subr.bf16.mxu0 0
        %625 = vmatpush2.bf16.msra.mxu0 0
        %626 = vmatprep.subr.bf16.mxu0 0
        %627 = vmatpush2.bf16.msra.mxu0 0
        %628 = vmatprep.subr.bf16.mxu0 0
        %629 = vmatpush2.bf16.msra.mxu0 0
        %630 = vmatprep.subr.bf16.mxu0 0
        %631 = vmatpush2.bf16.msra.mxu0 0
        %632 = vmatprep.subr.bf16.mxu0 0
        %633 = vmatpush2.bf16.msra.mxu0 0
        %634 = vmatprep.subr.bf16.mxu0 0
        %635 = vmatpush2.bf16.msra.mxu0 0
        %636 = vmatprep.subr.bf16.mxu0 0
        %637 = vmatpush2.bf16.msra.mxu0 0
        %638 = vmatprep.subr.bf16.mxu0 0
        %639 = vmatpush2.bf16.msra.mxu0 0
        %640 = vmatprep.mubr.bf16.mxu0 0
        %641 = vmatmul.mubr.bf16.gmra.mxu0 %v606
        %v642 = vpop.f32.mrf.mxu0
        %v643 = vadd.f32 0.0, %v642
        %v644 = vpop.f32.mrf.mxu0
        %v645 = vadd.f32 0.0, %v644
        %v646 = vpop.f32.mrf.mxu0
        %v647 = vpop.f32.mrf.mxu0
        %648 = vdwg.mxu0
        %v649 = vmul.f32 %v643, 0.25
        %651 = vrot.lane.b32.xlu0 %v643, 64
        %v652 = vpop.permute.xlu0 %651
        %vm653 = vcmask 130048
        %v655 = vsel %vm653, %v649, 0
        %v657 = vsel %vm653, %v652, 0
        %659 = vmatprep.subr.mxu0 0.0
        %660 = vmatpush1.xpose.msra.mxu0 0.0
        %661 = vmatprep.subr.mxu0 0.0
        %662 = vmatpush1.xpose.msra.mxu0 0.0
        %663 = vmatprep.subr.mxu0 0.0
        %664 = vmatpush1.xpose.msra.mxu0 0.0
        %665 = vmatprep.subr.mxu0 0.0
        %666 = vmatpush1.xpose.msra.mxu0 0.0
        %667 = vmatprep.subr.mxu0 0.0
        %668 = vmatpush1.xpose.msra.mxu0 0.0
        %669 = vmatprep.subr.mxu0 0.0
        %670 = vmatpush1.xpose.msra.mxu0 0.0
        %671 = vmatprep.subr.mxu0 0.0
        %672 = vmatpush1.xpose.msra.mxu0 0.0
        %673 = vmatprep.subr.mxu0 0.0
        %674 = vmatpush1.xpose.msra.mxu0 0.0
        %675 = vmatprep.subr.mxu0 0.0
        %676 = vmatpush1.xpose.msra.mxu0 0.0
        %677 = vmatprep.subr.mxu0 0.0
        %678 = vmatpush1.xpose.msra.mxu0 0.0
        %679 = vmatprep.subr.mxu0 0.0
        %680 = vmatpush1.xpose.msra.mxu0 0.0
        %681 = vmatprep.subr.mxu0 0.0
        %682 = vmatpush1.xpose.msra.mxu0 0.0
        %683 = vmatprep.subr.mxu0 0.0
        %684 = vmatpush1.xpose.msra.mxu0 0.0
        %685 = vmatprep.subr.mxu0 0.0
        %686 = vmatpush1.xpose.msra.mxu0 0.0
        %687 = vmatprep.subr.mxu0 0.0
        %688 = vmatpush1.xpose.msra.mxu0 0.0
        %689 = vmatprep.subr.mxu0 0.0
        %690 = vmatpush1.xpose.msra.mxu0 %v657
        %691 = vmatprep.subr.mxu0 0.0
        %692 = vmatpush2.xpose.msra.mxu0 0.0
        %693 = vmatprep.subr.mxu0 0.0
        %694 = vmatpush2.xpose.msra.mxu0 0.0
        %695 = vmatprep.subr.mxu0 0.0
        %696 = vmatpush2.xpose.msra.mxu0 0.0
        %697 = vmatprep.subr.mxu0 0.0
        %698 = vmatpush2.xpose.msra.mxu0 0.0
        %699 = vmatprep.subr.mxu0 0.0
        %700 = vmatpush2.xpose.msra.mxu0 0.0
        %701 = vmatprep.subr.mxu0 0.0
        %702 = vmatpush2.xpose.msra.mxu0 0.0
        %703 = vmatprep.subr.mxu0 0.0
        %704 = vmatpush2.xpose.msra.mxu0 0.0
        %705 = vmatprep.subr.mxu0 0.0
        %706 = vmatpush2.xpose.msra.mxu0 0.0
        %707 = vmatprep.subr.mxu0 0.0
        %708 = vmatpush2.xpose.msra.mxu0 0.0
        %709 = vmatprep.subr.mxu0 0.0
        %710 = vmatpush2.xpose.msra.mxu0 0.0
        %711 = vmatprep.subr.mxu0 0.0
        %712 = vmatpush2.xpose.msra.mxu0 0.0
        %713 = vmatprep.subr.mxu0 0.0
        %714 = vmatpush2.xpose.msra.mxu0 0.0
        %715 = vmatprep.subr.mxu0 0.0
        %716 = vmatpush2.xpose.msra.mxu0 0.0
        %717 = vmatprep.subr.mxu0 0.0
        %718 = vmatpush2.xpose.msra.mxu0 0.0
        %719 = vmatprep.subr.mxu0 0.0
        %720 = vmatpush2.xpose.msra.mxu0 0.0
        %721 = vmatprep.subr.mxu0 0.0
        %722 = vmatpush2.xpose.msra.mxu0 0.0
        %723 = vmatprep.mubr.f32.mxu0 0.0
        %724 = vmatmul.mubr.f32.gmra.mxu0 %v655
        %v725 = vpop.f32.mrf.mxu0
        %v726 = vadd.f32 %v524, %v725
        %v727 = vpop.f32.mrf.mxu0
        %728 = vdwg.mxu0
        %vm729 = vcmask 64512
        %v730 = vsel %vm729, %v726, -inf
        %731 = vmax.xlane.f32.xlu0 %v730
        %v732 = vpop.xlane.xlu0 %731
        %v733 = vsub.f32 %v726, %v732
        %v734 = vmul.f32 %v733, 1.442695
        %v735 = vpow.pop %v734
        %v736 = vsel %vm729, %v735, 0.0
        %737 = vadd.xlane.f32.xlu0 %v736
        %v738 = vpop.xlane.xlu0 %737
        %v739 = vrcp.pop %v738
        %v740 = vmul.f32 %v735, %v739
        %v742 = vsel %vm729, %v740, 0
        %744 = vmatprep.subr.mxu0 0.0
        %745 = vmatpush1.msra.mxu0 0.0
        %746 = vmatprep.subr.mxu0 0.0
        %747 = vmatpush1.msra.mxu0 0.0
        %748 = vmatprep.subr.mxu0 0.0
        %749 = vmatpush1.msra.mxu0 0.0
        %750 = vmatprep.subr.mxu0 0.0
        %751 = vmatpush1.msra.mxu0 0.0
        %752 = vmatprep.subr.mxu0 0.0
        %753 = vmatpush1.msra.mxu0 0.0
        %754 = vmatprep.subr.mxu0 0.0
        %755 = vmatpush1.msra.mxu0 0.0
        %756 = vmatprep.subr.mxu0 0.0
        %757 = vmatpush1.msra.mxu0 0.0
        %758 = vmatprep.subr.mxu0 0.0
        %759 = vmatpush1.msra.mxu0 0.0
        %760 = vmatprep.subr.mxu0 0.0
        %761 = vmatpush1.msra.mxu0 0.0
        %762 = vmatprep.subr.mxu0 0.0
        %763 = vmatpush1.msra.mxu0 0.0
        %764 = vmatprep.subr.mxu0 0.0
        %765 = vmatpush1.msra.mxu0 0.0
        %766 = vmatprep.subr.mxu0 0.0
        %767 = vmatpush1.msra.mxu0 0.0
        %768 = vmatprep.subr.mxu0 0.0
        %769 = vmatpush1.msra.mxu0 0.0
        %770 = vmatprep.subr.mxu0 0.0
        %771 = vmatpush1.msra.mxu0 0.0
        %772 = vmatprep.subr.mxu0 0.0
        %773 = vmatpush1.msra.mxu0 0.0
        %774 = vmatprep.subr.mxu0 0.0
        %775 = vmatpush1.msra.mxu0 %v645
        %776 = vmatprep.subr.mxu0 0.0
        %777 = vmatpush2.msra.mxu0 0.0
        %778 = vmatprep.subr.mxu0 0.0
        %779 = vmatpush2.msra.mxu0 0.0
        %780 = vmatprep.subr.mxu0 0.0
        %781 = vmatpush2.msra.mxu0 0.0
        %782 = vmatprep.subr.mxu0 0.0
        %783 = vmatpush2.msra.mxu0 0.0
        %784 = vmatprep.subr.mxu0 0.0
        %785 = vmatpush2.msra.mxu0 0.0
        %786 = vmatprep.subr.mxu0 0.0
        %787 = vmatpush2.msra.mxu0 0.0
        %788 = vmatprep.subr.mxu0 0.0
        %789 = vmatpush2.msra.mxu0 0.0
        %790 = vmatprep.subr.mxu0 0.0
        %791 = vmatpush2.msra.mxu0 0.0
        %792 = vmatprep.subr.mxu0 0.0
        %793 = vmatpush2.msra.mxu0 0.0
        %794 = vmatprep.subr.mxu0 0.0
        %795 = vmatpush2.msra.mxu0 0.0
        %796 = vmatprep.subr.mxu0 0.0
        %797 = vmatpush2.msra.mxu0 0.0
        %798 = vmatprep.subr.mxu0 0.0
        %799 = vmatpush2.msra.mxu0 0.0
        %800 = vmatprep.subr.mxu0 0.0
        %801 = vmatpush2.msra.mxu0 0.0
        %802 = vmatprep.subr.mxu0 0.0
        %803 = vmatpush2.msra.mxu0 0.0
        %804 = vmatprep.subr.mxu0 0.0
        %805 = vmatpush2.msra.mxu0 0.0
        %806 = vmatprep.subr.mxu0 0.0
        %807 = vmatpush2.msra.mxu0 0.0
        %808 = vmatprep.mubr.f32.mxu0 0.0
        %809 = vmatmul.mubr.f32.gmra.mxu0 %v742
        %v810 = vpop.f32.mrf.mxu0
        %v811 = vadd.f32 0.0, %v810
        %v812 = vpop.f32.mrf.mxu0
        %813 = vdwg.mxu0
        %814 = vrot.lane.b32.xlu0 %v649, 112
        %v815 = vpop.permute.xlu0 %814
        %816 = vrot.lane.b32.xlu0 %v643, 48
        %v817 = vpop.permute.xlu0 %816
        %v818 = vsel %vm653, %v815, 0
        %v820 = vsel %vm653, %v817, 0
        %822 = vmatprep.subr.mxu0 0.0
        %823 = vmatpush1.xpose.msra.mxu0 0.0
        %824 = vmatprep.subr.mxu0 0.0
        %825 = vmatpush1.xpose.msra.mxu0 0.0
        %826 = vmatprep.subr.mxu0 0.0
        %827 = vmatpush1.xpose.msra.mxu0 0.0
        %828 = vmatprep.subr.mxu0 0.0
        %829 = vmatpush1.xpose.msra.mxu0 0.0
        %830 = vmatprep.subr.mxu0 0.0
        %831 = vmatpush1.xpose.msra.mxu0 0.0
        %832 = vmatprep.subr.mxu0 0.0
        %833 = vmatpush1.xpose.msra.mxu0 0.0
        %834 = vmatprep.subr.mxu0 0.0
        %835 = vmatpush1.xpose.msra.mxu0 0.0
        %836 = vmatprep.subr.mxu0 0.0
        %837 = vmatpush1.xpose.msra.mxu0 0.0
        %838 = vmatprep.subr.mxu0 0.0
        %839 = vmatpush1.xpose.msra.mxu0 0.0
        %840 = vmatprep.subr.mxu0 0.0
        %841 = vmatpush1.xpose.msra.mxu0 0.0
        %842 = vmatprep.subr.mxu0 0.0
        %843 = vmatpush1.xpose.msra.mxu0 0.0
        %844 = vmatprep.subr.mxu0 0.0
        %845 = vmatpush1.xpose.msra.mxu0 0.0
        %846 = vmatprep.subr.mxu0 0.0
        %847 = vmatpush1.xpose.msra.mxu0 0.0
        %848 = vmatprep.subr.mxu0 0.0
        %849 = vmatpush1.xpose.msra.mxu0 0.0
        %850 = vmatprep.subr.mxu0 0.0
        %851 = vmatpush1.xpose.msra.mxu0 0.0
        %852 = vmatprep.subr.mxu0 0.0
        %853 = vmatpush1.xpose.msra.mxu0 %v820
        %854 = vmatprep.subr.mxu0 0.0
        %855 = vmatpush2.xpose.msra.mxu0 0.0
        %856 = vmatprep.subr.mxu0 0.0
        %857 = vmatpush2.xpose.msra.mxu0 0.0
        %858 = vmatprep.subr.mxu0 0.0
        %859 = vmatpush2.xpose.msra.mxu0 0.0
        %860 = vmatprep.subr.mxu0 0.0
        %861 = vmatpush2.xpose.msra.mxu0 0.0
        %862 = vmatprep.subr.mxu0 0.0
        %863 = vmatpush2.xpose.msra.mxu0 0.0
        %864 = vmatprep.subr.mxu0 0.0
        %865 = vmatpush2.xpose.msra.mxu0 0.0
        %866 = vmatprep.subr.mxu0 0.0
        %867 = vmatpush2.xpose.msra.mxu0 0.0
        %868 = vmatprep.subr.mxu0 0.0
        %869 = vmatpush2.xpose.msra.mxu0 0.0
        %870 = vmatprep.subr.mxu0 0.0
        %871 = vmatpush2.xpose.msra.mxu0 0.0
        %872 = vmatprep.subr.mxu0 0.0
        %873 = vmatpush2.xpose.msra.mxu0 0.0
        %874 = vmatprep.subr.mxu0 0.0
        %875 = vmatpush2.xpose.msra.mxu0 0.0
        %876 = vmatprep.subr.mxu0 0.0
        %877 = vmatpush2.xpose.msra.mxu0 0.0
        %878 = vmatprep.subr.mxu0 0.0
        %879 = vmatpush2.xpose.msra.mxu0 0.0
        %880 = vmatprep.subr.mxu0 0.0
        %881 = vmatpush2.xpose.msra.mxu0 0.0
        %882 = vmatprep.subr.mxu0 0.0
        %883 = vmatpush2.xpose.msra.mxu0 0.0
        %884 = vmatprep.subr.mxu0 0.0
        %885 = vmatpush2.xpose.msra.mxu0 0.0
        %886 = vmatprep.mubr.f32.mxu0 0.0
        %887 = vmatmul.mubr.f32.gmra.mxu0 %v818
        %v888 = vpop.f32.mrf.mxu0
        %v889 = vadd.f32 %v524, %v888
        %v890 = vpop.f32.mrf.mxu0
        %891 = vdwg.mxu0
        %v892 = vsel %vm729, %v889, -inf
        %893 = vmax.xlane.f32.xlu0 %v892
        %v894 = vpop.xlane.xlu0 %893
        %v895 = vsub.f32 %v889, %v894
        %v896 = vmul.f32 %v895, 1.442695
        %v897 = vpow.pop %v896
        %v898 = vsel %vm729, %v897, 0.0
        %899 = vadd.xlane.f32.xlu0 %v898
        %v900 = vpop.xlane.xlu0 %899
        %v901 = vrcp.pop %v900
        %v902 = vmul.f32 %v897, %v901
        %904 = vrot.lane.b32.xlu0 %v645, 112
        %v905 = vpop.permute.xlu0 %904
        %v908 = vsel %vm729, %v902, 0
        %910 = vmatprep.subr.mxu0 0.0
        %911 = vmatpush1.msra.mxu0 0.0
        %912 = vmatprep.subr.mxu0 0.0
        %913 = vmatpush1.msra.mxu0 0.0
        %914 = vmatprep.subr.mxu0 0.0
        %915 = vmatpush1.msra.mxu0 0.0
        %916 = vmatprep.subr.mxu0 0.0
        %917 = vmatpush1.msra.mxu0 0.0
        %918 = vmatprep.subr.mxu0 0.0
        %919 = vmatpush1.msra.mxu0 0.0
        %920 = vmatprep.subr.mxu0 0.0
        %921 = vmatpush1.msra.mxu0 0.0
        %922 = vmatprep.subr.mxu0 0.0
        %923 = vmatpush1.msra.mxu0 0.0
        %924 = vmatprep.subr.mxu0 0.0
        %925 = vmatpush1.msra.mxu0 0.0
        %926 = vmatprep.subr.mxu0 0.0
        %927 = vmatpush1.msra.mxu0 0.0
        %928 = vmatprep.subr.mxu0 0.0
        %929 = vmatpush1.msra.mxu0 0.0
        %930 = vmatprep.subr.mxu0 0.0
        %931 = vmatpush1.msra.mxu0 0.0
        %932 = vmatprep.subr.mxu0 0.0
        %933 = vmatpush1.msra.mxu0 0.0
        %934 = vmatprep.subr.mxu0 0.0
        %935 = vmatpush1.msra.mxu0 0.0
        %936 = vmatprep.subr.mxu0 0.0
        %937 = vmatpush1.msra.mxu0 0.0
        %938 = vmatprep.subr.mxu0 0.0
        %939 = vmatpush1.msra.mxu0 0.0
        %940 = vmatprep.subr.mxu0 0.0
        %941 = vmatpush1.msra.mxu0 %v905
        %942 = vmatprep.subr.mxu0 0.0
        %943 = vmatpush2.msra.mxu0 0.0
        %944 = vmatprep.subr.mxu0 0.0
        %945 = vmatpush2.msra.mxu0 0.0
        %946 = vmatprep.subr.mxu0 0.0
        %947 = vmatpush2.msra.mxu0 0.0
        %948 = vmatprep.subr.mxu0 0.0
        %949 = vmatpush2.msra.mxu0 0.0
        %950 = vmatprep.subr.mxu0 0.0
        %951 = vmatpush2.msra.mxu0 0.0
        %952 = vmatprep.subr.mxu0 0.0
        %953 = vmatpush2.msra.mxu0 0.0
        %954 = vmatprep.subr.mxu0 0.0
        %955 = vmatpush2.msra.mxu0 0.0
        %956 = vmatprep.subr.mxu0 0.0
        %957 = vmatpush2.msra.mxu0 0.0
        %958 = vmatprep.subr.mxu0 0.0
        %959 = vmatpush2.msra.mxu0 0.0
        %960 = vmatprep.subr.mxu0 0.0
        %961 = vmatpush2.msra.mxu0 0.0
        %962 = vmatprep.subr.mxu0 0.0
        %963 = vmatpush2.msra.mxu0 0.0
        %964 = vmatprep.subr.mxu0 0.0
        %965 = vmatpush2.msra.mxu0 0.0
        %966 = vmatprep.subr.mxu0 0.0
        %967 = vmatpush2.msra.mxu0 0.0
        %968 = vmatprep.subr.mxu0 0.0
        %969 = vmatpush2.msra.mxu0 0.0
        %970 = vmatprep.subr.mxu0 0.0
        %971 = vmatpush2.msra.mxu0 0.0
        %972 = vmatprep.subr.mxu0 0.0
        %973 = vmatpush2.msra.mxu0 0.0
        %974 = vmatprep.mubr.f32.mxu0 0.0
        %975 = vmatmul.mubr.f32.gmra.mxu0 %v908
        %v976 = vpop.f32.mrf.mxu0
        %v977 = vadd.f32 0.0, %v976
        %v978 = vpop.f32.mrf.mxu0
        %979 = vdwg.mxu0
        %980 = vrot.lane.b32.xlu0 %v649, 96
        %v981 = vpop.permute.xlu0 %980
        %982 = vrot.lane.b32.xlu0 %v643, 32
        %v983 = vpop.permute.xlu0 %982
        %v984 = vsel %vm653, %v981, 0
        %v986 = vsel %vm653, %v983, 0
        %988 = vmatprep.subr.mxu0 0.0
        %989 = vmatpush1.xpose.msra.mxu0 0.0
        %990 = vmatprep.subr.mxu0 0.0
        %991 = vmatpush1.xpose.msra.mxu0 0.0
        %992 = vmatprep.subr.mxu0 0.0
        %993 = vmatpush1.xpose.msra.mxu0 0.0
        %994 = vmatprep.subr.mxu0 0.0
        %995 = vmatpush1.xpose.msra.mxu0 0.0
        %996 = vmatprep.subr.mxu0 0.0
        %997 = vmatpush1.xpose.msra.mxu0 0.0
        %998 = vmatprep.subr.mxu0 0.0
        %999 = vmatpush1.xpose.msra.mxu0 0.0
        %1000 = vmatprep.subr.mxu0 0.0
        %1001 = vmatpush1.xpose.msra.mxu0 0.0
        %1002 = vmatprep.subr.mxu0 0.0
        %1003 = vmatpush1.xpose.msra.mxu0 0.0
        %1004 = vmatprep.subr.mxu0 0.0
        %1005 = vmatpush1.xpose.msra.mxu0 0.0
        %1006 = vmatprep.subr.mxu0 0.0
        %1007 = vmatpush1.xpose.msra.mxu0 0.0
        %1008 = vmatprep.subr.mxu0 0.0
        %1009 = vmatpush1.xpose.msra.mxu0 0.0
        %1010 = vmatprep.subr.mxu0 0.0
        %1011 = vmatpush1.xpose.msra.mxu0 0.0
        %1012 = vmatprep.subr.mxu0 0.0
        %1013 = vmatpush1.xpose.msra.mxu0 0.0
        %1014 = vmatprep.subr.mxu0 0.0
        %1015 = vmatpush1.xpose.msra.mxu0 0.0
        %1016 = vmatprep.subr.mxu0 0.0
        %1017 = vmatpush1.xpose.msra.mxu0 0.0
        %1018 = vmatprep.subr.mxu0 0.0
        %1019 = vmatpush1.xpose.msra.mxu0 %v986
        %1020 = vmatprep.subr.mxu0 0.0
        %1021 = vmatpush2.xpose.msra.mxu0 0.0
        %1022 = vmatprep.subr.mxu0 0.0
        %1023 = vmatpush2.xpose.msra.mxu0 0.0
        %1024 = vmatprep.subr.mxu0 0.0
        %1025 = vmatpush2.xpose.msra.mxu0 0.0
        %1026 = vmatprep.subr.mxu0 0.0
        %1027 = vmatpush2.xpose.msra.mxu0 0.0
        %1028 = vmatprep.subr.mxu0 0.0
        %1029 = vmatpush2.xpose.msra.mxu0 0.0
        %1030 = vmatprep.subr.mxu0 0.0
        %1031 = vmatpush2.xpose.msra.mxu0 0.0
        %1032 = vmatprep.subr.mxu0 0.0
        %1033 = vmatpush2.xpose.msra.mxu0 0.0
        %1034 = vmatprep.subr.mxu0 0.0
        %1035 = vmatpush2.xpose.msra.mxu0 0.0
        %1036 = vmatprep.subr.mxu0 0.0
        %1037 = vmatpush2.xpose.msra.mxu0 0.0
        %1038 = vmatprep.subr.mxu0 0.0
        %1039 = vmatpush2.xpose.msra.mxu0 0.0
        %1040 = vmatprep.subr.mxu0 0.0
        %1041 = vmatpush2.xpose.msra.mxu0 0.0
        %1042 = vmatprep.subr.mxu0 0.0
        %1043 = vmatpush2.xpose.msra.mxu0 0.0
        %1044 = vmatprep.subr.mxu0 0.0
        %1045 = vmatpush2.xpose.msra.mxu0 0.0
        %1046 = vmatprep.subr.mxu0 0.0
        %1047 = vmatpush2.xpose.msra.mxu0 0.0
        %1048 = vmatprep.subr.mxu0 0.0
        %1049 = vmatpush2.xpose.msra.mxu0 0.0
        %1050 = vmatprep.subr.mxu0 0.0
        %1051 = vmatpush2.xpose.msra.mxu0 0.0
        %1052 = vmatprep.mubr.f32.mxu0 0.0
        %1053 = vmatmul.mubr.f32.gmra.mxu0 %v984
        %v1054 = vpop.f32.mrf.mxu0
        %v1055 = vadd.f32 %v524, %v1054
        %v1056 = vpop.f32.mrf.mxu0
        %1057 = vdwg.mxu0
        %v1058 = vsel %vm729, %v1055, -inf
        %1059 = vmax.xlane.f32.xlu0 %v1058
        %v1060 = vpop.xlane.xlu0 %1059
        %v1061 = vsub.f32 %v1055, %v1060
        %v1062 = vmul.f32 %v1061, 1.442695
        %v1063 = vpow.pop %v1062
        %v1064 = vsel %vm729, %v1063, 0.0
        %1065 = vadd.xlane.f32.xlu0 %v1064
        %v1066 = vpop.xlane.xlu0 %1065
        %v1067 = vrcp.pop %v1066
        %v1068 = vmul.f32 %v1063, %v1067
        %1069 = vrot.lane.b32.xlu0 %v645, 96
        %v1070 = vpop.permute.xlu0 %1069
        %v1073 = vsel %vm729, %v1068, 0
        %1075 = vmatprep.subr.mxu0 0.0
        %1076 = vmatpush1.msra.mxu0 0.0
        %1077 = vmatprep.subr.mxu0 0.0
        %1078 = vmatpush1.msra.mxu0 0.0
        %1079 = vmatprep.subr.mxu0 0.0
        %1080 = vmatpush1.msra.mxu0 0.0
        %1081 = vmatprep.subr.mxu0 0.0
        %1082 = vmatpush1.msra.mxu0 0.0
        %1083 = vmatprep.subr.mxu0 0.0
        %1084 = vmatpush1.msra.mxu0 0.0
        %1085 = vmatprep.subr.mxu0 0.0
        %1086 = vmatpush1.msra.mxu0 0.0
        %1087 = vmatprep.subr.mxu0 0.0
        %1088 = vmatpush1.msra.mxu0 0.0
        %1089 = vmatprep.subr.mxu0 0.0
        %1090 = vmatpush1.msra.mxu0 0.0
        %1091 = vmatprep.subr.mxu0 0.0
        %1092 = vmatpush1.msra.mxu0 0.0
        %1093 = vmatprep.subr.mxu0 0.0
        %1094 = vmatpush1.msra.mxu0 0.0
        %1095 = vmatprep.subr.mxu0 0.0
        %1096 = vmatpush1.msra.mxu0 0.0
        %1097 = vmatprep.subr.mxu0 0.0
        %1098 = vmatpush1.msra.mxu0 0.0
        %1099 = vmatprep.subr.mxu0 0.0
        %1100 = vmatpush1.msra.mxu0 0.0
        %1101 = vmatprep.subr.mxu0 0.0
        %1102 = vmatpush1.msra.mxu0 0.0
        %1103 = vmatprep.subr.mxu0 0.0
        %1104 = vmatpush1.msra.mxu0 0.0
        %1105 = vmatprep.subr.mxu0 0.0
        %1106 = vmatpush1.msra.mxu0 %v1070
        %1107 = vmatprep.subr.mxu0 0.0
        %1108 = vmatpush2.msra.mxu0 0.0
        %1109 = vmatprep.subr.mxu0 0.0
        %1110 = vmatpush2.msra.mxu0 0.0
        %1111 = vmatprep.subr.mxu0 0.0
        %1112 = vmatpush2.msra.mxu0 0.0
        %1113 = vmatprep.subr.mxu0 0.0
        %1114 = vmatpush2.msra.mxu0 0.0
        %1115 = vmatprep.subr.mxu0 0.0
        %1116 = vmatpush2.msra.mxu0 0.0
        %1117 = vmatprep.subr.mxu0 0.0
        %1118 = vmatpush2.msra.mxu0 0.0
        %1119 = vmatprep.subr.mxu0 0.0
        %1120 = vmatpush2.msra.mxu0 0.0
        %1121 = vmatprep.subr.mxu0 0.0
        %1122 = vmatpush2.msra.mxu0 0.0
        %1123 = vmatprep.subr.mxu0 0.0
        %1124 = vmatpush2.msra.mxu0 0.0
        %1125 = vmatprep.subr.mxu0 0.0
        %1126 = vmatpush2.msra.mxu0 0.0
        %1127 = vmatprep.subr.mxu0 0.0
        %1128 = vmatpush2.msra.mxu0 0.0
        %1129 = vmatprep.subr.mxu0 0.0
        %1130 = vmatpush2.msra.mxu0 0.0
        %1131 = vmatprep.subr.mxu0 0.0
        %1132 = vmatpush2.msra.mxu0 0.0
        %1133 = vmatprep.subr.mxu0 0.0
        %1134 = vmatpush2.msra.mxu0 0.0
        %1135 = vmatprep.subr.mxu0 0.0
        %1136 = vmatpush2.msra.mxu0 0.0
        %1137 = vmatprep.subr.mxu0 0.0
        %1138 = vmatpush2.msra.mxu0 0.0
        %1139 = vmatprep.mubr.f32.mxu0 0.0
        %1140 = vmatmul.mubr.f32.gmra.mxu0 %v1073
        %v1141 = vpop.f32.mrf.mxu0
        %v1142 = vadd.f32 0.0, %v1141
        %v1143 = vpop.f32.mrf.mxu0
        %1144 = vdwg.mxu0
        %1145 = vrot.lane.b32.xlu0 %v649, 80
        %v1146 = vpop.permute.xlu0 %1145
        %1147 = vrot.lane.b32.xlu0 %v643, 16
        %v1148 = vpop.permute.xlu0 %1147
        %v1149 = vsel %vm653, %v1146, 0
        %v1151 = vsel %vm653, %v1148, 0
        %1153 = vmatprep.subr.mxu0 0.0
        %1154 = vmatpush1.xpose.msra.mxu0 0.0
        %1155 = vmatprep.subr.mxu0 0.0
        %1156 = vmatpush1.xpose.msra.mxu0 0.0
        %1157 = vmatprep.subr.mxu0 0.0
        %1158 = vmatpush1.xpose.msra.mxu0 0.0
        %1159 = vmatprep.subr.mxu0 0.0
        %1160 = vmatpush1.xpose.msra.mxu0 0.0
        %1161 = vmatprep.subr.mxu0 0.0
        %1162 = vmatpush1.xpose.msra.mxu0 0.0
        %1163 = vmatprep.subr.mxu0 0.0
        %1164 = vmatpush1.xpose.msra.mxu0 0.0
        %1165 = vmatprep.subr.mxu0 0.0
        %1166 = vmatpush1.xpose.msra.mxu0 0.0
        %1167 = vmatprep.subr.mxu0 0.0
        %1168 = vmatpush1.xpose.msra.mxu0 0.0
        %1169 = vmatprep.subr.mxu0 0.0
        %1170 = vmatpush1.xpose.msra.mxu0 0.0
        %1171 = vmatprep.subr.mxu0 0.0
        %1172 = vmatpush1.xpose.msra.mxu0 0.0
        %1173 = vmatprep.subr.mxu0 0.0
        %1174 = vmatpush1.xpose.msra.mxu0 0.0
        %1175 = vmatprep.subr.mxu0 0.0
        %1176 = vmatpush1.xpose.msra.mxu0 0.0
        %1177 = vmatprep.subr.mxu0 0.0
        %1178 = vmatpush1.xpose.msra.mxu0 0.0
        %1179 = vmatprep.subr.mxu0 0.0
        %1180 = vmatpush1.xpose.msra.mxu0 0.0
        %1181 = vmatprep.subr.mxu0 0.0
        %1182 = vmatpush1.xpose.msra.mxu0 0.0
        %1183 = vmatprep.subr.mxu0 0.0
        %1184 = vmatpush1.xpose.msra.mxu0 %v1151
        %1185 = vmatprep.subr.mxu0 0.0
        %1186 = vmatpush2.xpose.msra.mxu0 0.0
        %1187 = vmatprep.subr.mxu0 0.0
        %1188 = vmatpush2.xpose.msra.mxu0 0.0
        %1189 = vmatprep.subr.mxu0 0.0
        %1190 = vmatpush2.xpose.msra.mxu0 0.0
        %1191 = vmatprep.subr.mxu0 0.0
        %1192 = vmatpush2.xpose.msra.mxu0 0.0
        %1193 = vmatprep.subr.mxu0 0.0
        %1194 = vmatpush2.xpose.msra.mxu0 0.0
        %1195 = vmatprep.subr.mxu0 0.0
        %1196 = vmatpush2.xpose.msra.mxu0 0.0
        %1197 = vmatprep.subr.mxu0 0.0
        %1198 = vmatpush2.xpose.msra.mxu0 0.0
        %1199 = vmatprep.subr.mxu0 0.0
        %1200 = vmatpush2.xpose.msra.mxu0 0.0
        %1201 = vmatprep.subr.mxu0 0.0
        %1202 = vmatpush2.xpose.msra.mxu0 0.0
        %1203 = vmatprep.subr.mxu0 0.0
        %1204 = vmatpush2.xpose.msra.mxu0 0.0
        %1205 = vmatprep.subr.mxu0 0.0
        %1206 = vmatpush2.xpose.msra.mxu0 0.0
        %1207 = vmatprep.subr.mxu0 0.0
        %1208 = vmatpush2.xpose.msra.mxu0 0.0
        %1209 = vmatprep.subr.mxu0 0.0
        %1210 = vmatpush2.xpose.msra.mxu0 0.0
        %1211 = vmatprep.subr.mxu0 0.0
        %1212 = vmatpush2.xpose.msra.mxu0 0.0
        %1213 = vmatprep.subr.mxu0 0.0
        %1214 = vmatpush2.xpose.msra.mxu0 0.0
        %1215 = vmatprep.subr.mxu0 0.0
        %1216 = vmatpush2.xpose.msra.mxu0 0.0
        %1217 = vmatprep.mubr.f32.mxu0 0.0
        %1218 = vmatmul.mubr.f32.gmra.mxu0 %v1149
        %v1219 = vpop.f32.mrf.mxu0
        %v1220 = vadd.f32 %v524, %v1219
        %v1221 = vpop.f32.mrf.mxu0
        %1222 = vdwg.mxu0
        %v1223 = vsel %vm729, %v1220, -inf
        %1224 = vmax.xlane.f32.xlu0 %v1223
        %v1225 = vpop.xlane.xlu0 %1224
        %v1226 = vsub.f32 %v1220, %v1225
        %v1227 = vmul.f32 %v1226, 1.442695
        %v1228 = vpow.pop %v1227
        %v1229 = vsel %vm729, %v1228, 0.0
        %1230 = vadd.xlane.f32.xlu0 %v1229
        %v1231 = vpop.xlane.xlu0 %1230
        %v1232 = vrcp.pop %v1231
        %v1233 = vmul.f32 %v1228, %v1232
        %1234 = vrot.lane.b32.xlu0 %v645, 80
        %v1235 = vpop.permute.xlu0 %1234
        %v1238 = vsel %vm729, %v1233, 0
        %1240 = vmatprep.subr.mxu0 0.0
        %1241 = vmatpush1.msra.mxu0 0.0
        %1242 = vmatprep.subr.mxu0 0.0
        %1243 = vmatpush1.msra.mxu0 0.0
        %1244 = vmatprep.subr.mxu0 0.0
        %1245 = vmatpush1.msra.mxu0 0.0
        %1246 = vmatprep.subr.mxu0 0.0
        %1247 = vmatpush1.msra.mxu0 0.0
        %1248 = vmatprep.subr.mxu0 0.0
        %1249 = vmatpush1.msra.mxu0 0.0
        %1250 = vmatprep.subr.mxu0 0.0
        %1251 = vmatpush1.msra.mxu0 0.0
        %1252 = vmatprep.subr.mxu0 0.0
        %1253 = vmatpush1.msra.mxu0 0.0
        %1254 = vmatprep.subr.mxu0 0.0
        %1255 = vmatpush1.msra.mxu0 0.0
        %1256 = vmatprep.subr.mxu0 0.0
        %1257 = vmatpush1.msra.mxu0 0.0
        %1258 = vmatprep.subr.mxu0 0.0
        %1259 = vmatpush1.msra.mxu0 0.0
        %1260 = vmatprep.subr.mxu0 0.0
        %1261 = vmatpush1.msra.mxu0 0.0
        %1262 = vmatprep.subr.mxu0 0.0
        %1263 = vmatpush1.msra.mxu0 0.0
        %1264 = vmatprep.subr.mxu0 0.0
        %1265 = vmatpush1.msra.mxu0 0.0
        %1266 = vmatprep.subr.mxu0 0.0
        %1267 = vmatpush1.msra.mxu0 0.0
        %1268 = vmatprep.subr.mxu0 0.0
        %1269 = vmatpush1.msra.mxu0 0.0
        %1270 = vmatprep.subr.mxu0 0.0
        %1271 = vmatpush1.msra.mxu0 %v1235
        %1272 = vmatprep.subr.mxu0 0.0
        %1273 = vmatpush2.msra.mxu0 0.0
        %1274 = vmatprep.subr.mxu0 0.0
        %1275 = vmatpush2.msra.mxu0 0.0
        %1276 = vmatprep.subr.mxu0 0.0
        %1277 = vmatpush2.msra.mxu0 0.0
        %1278 = vmatprep.subr.mxu0 0.0
        %1279 = vmatpush2.msra.mxu0 0.0
        %1280 = vmatprep.subr.mxu0 0.0
        %1281 = vmatpush2.msra.mxu0 0.0
        %1282 = vmatprep.subr.mxu0 0.0
        %1283 = vmatpush2.msra.mxu0 0.0
        %1284 = vmatprep.subr.mxu0 0.0
        %1285 = vmatpush2.msra.mxu0 0.0
        %1286 = vmatprep.subr.mxu0 0.0
        %1287 = vmatpush2.msra.mxu0 0.0
        %1288 = vmatprep.subr.mxu0 0.0
        %1289 = vmatpush2.msra.mxu0 0.0
        %1290 = vmatprep.subr.mxu0 0.0
        %1291 = vmatpush2.msra.mxu0 0.0
        %1292 = vmatprep.subr.mxu0 0.0
        %1293 = vmatpush2.msra.mxu0 0.0
        %1294 = vmatprep.subr.mxu0 0.0
        %1295 = vmatpush2.msra.mxu0 0.0
        %1296 = vmatprep.subr.mxu0 0.0
        %1297 = vmatpush2.msra.mxu0 0.0
        %1298 = vmatprep.subr.mxu0 0.0
        %1299 = vmatpush2.msra.mxu0 0.0
        %1300 = vmatprep.subr.mxu0 0.0
        %1301 = vmatpush2.msra.mxu0 0.0
        %1302 = vmatprep.subr.mxu0 0.0
        %1303 = vmatpush2.msra.mxu0 0.0
        %1304 = vmatprep.mubr.f32.mxu0 0.0
        %1305 = vmatmul.mubr.f32.gmra.mxu0 %v1238
        %v1306 = vpop.f32.mrf.mxu0
        %v1307 = vadd.f32 0.0, %v1306
        %v1308 = vpop.f32.mrf.mxu0
        %1309 = vdwg.mxu0
        %1311 = vrot.lane.b32.xlu0 %v977, 16
        %v1312 = vpop.permute.xlu0 %1311
        %1315 = vrot.lane.b32.xlu0 %v1142, 32
        %v1316 = vpop.permute.xlu0 %1315
        %1319 = vrot.lane.b32.xlu0 %v1307, 48
        %v1320 = vpop.permute.xlu0 %1319
        %v1322 = vsel %vm653, %v811, %v1312
        %vm1323 = vcmask 261120
        %v1324 = vsel %vm1323, %v1322, %v1316
        %vm1325 = vcmask 392192
        %v1326 = vsel %vm1325, %v1324, %v1320
        %v1327 = vpack.c.bf16 %v1326, %v1326
        %v1328 = vld [vmem:[%s4] sm:$0xf]
        %v1329 = vld [vmem:[%s4 + $0x4] sm:$0xf]
        %v1330 = vld [vmem:[%s4 + $0x8] sm:$0xf]
        %v1331 = vld [vmem:[%s4 + $0xc] sm:$0xf]
        %v1332 = vld [vmem:[%s4 + $0x10] sm:$0xf]
        %v1333 = vld [vmem:[%s4 + $0x14] sm:$0xf]
        %v1334 = vld [vmem:[%s4 + $0x18] sm:$0xf]
        %v1335 = vld [vmem:[%s4 + $0x1c] sm:$0xf]
        %v1336 = vld [vmem:[%s5] sm:$0x1]
        %v1338 = vlaneseq
        %v1339 = vshrl.u32 %v1338, 7
        %v1340 = vsub.s32 0, %v1339
        %v1341 = vrot.slane %v1336, %v1340
        %v1351 = vunpack.c.l.b16 %v1328
        %v1352 = vunpack.c.l.b16 %v1329
        %v1353 = vunpack.c.l.b16 %v1330
        %v1354 = vunpack.c.l.b16 %v1331
        %v1355 = vunpack.c.l.b16 %v1332
        %v1356 = vunpack.c.l.b16 %v1333
        %v1357 = vunpack.c.l.b16 %v1334
        %v1358 = vunpack.c.l.b16 %v1335
        %v1359 = vpack.c.b16 %v1352, %v1351
        %v1360 = vpack.c.b16 %v1354, %v1353
        %v1361 = vpack.c.b16 %v1356, %v1355
        %v1362 = vpack.c.b16 %v1358, %v1357
        %v1368 = vsel %vm527, %v1327, 0
        %1370 = vmatprep.subr.bf16.mxu0 0
        %1371 = vmatpush1.bf16.msra.mxu0 0
        %1372 = vmatprep.subr.bf16.mxu0 0
        %1373 = vmatpush1.bf16.msra.mxu0 0
        %1374 = vmatprep.subr.bf16.mxu0 0
        %1375 = vmatpush1.bf16.msra.mxu0 0
        %1376 = vmatprep.subr.bf16.mxu0 0
        %1377 = vmatpush1.bf16.msra.mxu0 0
        %1378 = vmatprep.subr.bf16.mxu0 0
        %1379 = vmatpush1.bf16.msra.mxu0 %v1362
        %1380 = vmatprep.subr.bf16.mxu0 0
        %1381 = vmatpush1.bf16.msra.mxu0 %v1361
        %1382 = vmatprep.subr.bf16.mxu0 0
        %1383 = vmatpush1.bf16.msra.mxu0 %v1360
        %1384 = vmatprep.subr.bf16.mxu0 0
        %1385 = vmatpush1.bf16.msra.mxu0 %v1359
        %1386 = vmatprep.subr.bf16.mxu0 0
        %1387 = vmatpush2.bf16.msra.mxu0 0
        %1388 = vmatprep.subr.bf16.mxu0 0
        %1389 = vmatpush2.bf16.msra.mxu0 0
        %1390 = vmatprep.subr.bf16.mxu0 0
        %1391 = vmatpush2.bf16.msra.mxu0 0
        %1392 = vmatprep.subr.bf16.mxu0 0
        %1393 = vmatpush2.bf16.msra.mxu0 0
        %1394 = vmatprep.subr.bf16.mxu0 0
        %1395 = vmatpush2.bf16.msra.mxu0 0
        %1396 = vmatprep.subr.bf16.mxu0 0
        %1397 = vmatpush2.bf16.msra.mxu0 0
        %1398 = vmatprep.subr.bf16.mxu0 0
        %1399 = vmatpush2.bf16.msra.mxu0 0
        %1400 = vmatprep.subr.bf16.mxu0 0
        %1401 = vmatpush2.bf16.msra.mxu0 0
        %1402 = vmatprep.mubr.bf16.mxu0 0
        %1403 = vmatmul.mubr.bf16.gmra.mxu0 %v1368
        %v1404 = vpop.f32.mrf.mxu0
        %v1405 = vadd.f32 %v1341, %v1404
        %v1406 = vpop.f32.mrf.mxu0
        %v1407 = vpop.f32.mrf.mxu0
        %v1408 = vpop.f32.mrf.mxu0
        %1409 = vdwg.mxu0
        %v1410 = vadd.f32 %v518, %v1405
        %v1411 = vld [vmem:[%s6] sm:$0x1]
        %v1412 = vld [vmem:[%s7] sm:$0x1]
        %v1413 = vsel %vm527, %v1410, 0.0
        %1414 = vadd.xlane.f32.xlu0 %v1413
        %v1415 = vpop.xlane.xlu0 %1414
        %v1416 = vmul.f32 %v1415, %v531
        %v1417 = vsub.f32 %v1410, %v1416
        %v1418 = vmul.f32 %v1417, %v1417
        %v1419 = vsel %vm527, %v1418, 0.0
        %1420 = vadd.xlane.f32.xlu0 %v1419
        %v1421 = vpop.xlane.xlu0 %1420
        %v1422 = vmul.f32 %v1421, %v531
        %v1423 = vadd.f32 %v1422, 1e-05
        %v1424 = vrsqrt.pop %v1423
        %v1425 = vmul.f32 %v1417, %v1424
        %v1427 = vlaneseq
        %v1428 = vshrl.u32 %v1427, 7
        %v1429 = vsub.s32 0, %v1428
        %v1430 = vrot.slane %v1411, %v1429
        %v1432 = vmul.f32 %v1425, %v1430
        %v1434 = vlaneseq
        %v1435 = vshrl.u32 %v1434, 7
        %v1436 = vsub.s32 0, %v1435
        %v1437 = vrot.slane %v1412, %v1436
        %v1439 = vadd.f32 %v1432, %v1437
        %v1440 = vpack.c.bf16 %v1439, %v1439
        %v1441 = vld [vmem:[%s8] sm:$0xff]
        %v1442 = vld [vmem:[%s8 + $0x8] sm:$0xff]
        %v1443 = vld [vmem:[%s8 + $0x10] sm:$0xff]
        %v1444 = vld [vmem:[%s8 + $0x18] sm:$0xff]
        %v1445 = vld [vmem:[%s8 + $0x20] sm:$0xff]
        %v1446 = vld [vmem:[%s8 + $0x28] sm:$0xff]
        %v1447 = vld [vmem:[%s8 + $0x30] sm:$0xff]
        %v1448 = vld [vmem:[%s8 + $0x38] sm:$0xff]
        %v1449 = vld [vmem:[%s9] sm:$0x3]
        %v1451 = vlaneseq
        %v1452 = vshrl.u32 %v1451, 7
        %v1453 = vsub.s32 0, %v1452
        %v1454 = vrot.slane %v1449, %v1453
        %v1455 = vlaneseq
        %v1456 = vshrl.u32 %v1455, 7
        %v1457 = vsub.s32 1, %v1456
        %v1458 = vrot.slane %v1449, %v1457
        %v1469 = vunpack.c.l.b16 %v1441
        %v1470 = vunpack.c.h.b16 %v1441
        %v1471 = vunpack.c.l.b16 %v1442
        %v1472 = vunpack.c.h.b16 %v1442
        %v1473 = vunpack.c.l.b16 %v1443
        %v1474 = vunpack.c.h.b16 %v1443
        %v1475 = vunpack.c.l.b16 %v1444
        %v1476 = vunpack.c.h.b16 %v1444
        %v1477 = vunpack.c.l.b16 %v1445
        %v1478 = vunpack.c.h.b16 %v1445
        %v1479 = vunpack.c.l.b16 %v1446
        %v1480 = vunpack.c.h.b16 %v1446
        %v1481 = vunpack.c.l.b16 %v1447
        %v1482 = vunpack.c.h.b16 %v1447
        %v1483 = vunpack.c.l.b16 %v1448
        %v1484 = vunpack.c.h.b16 %v1448
        %v1485 = vpack.c.b16 %v1471, %v1469
        %v1486 = vpack.c.b16 %v1472, %v1470
        %v1487 = vpack.c.b16 %v1475, %v1473
        %v1488 = vpack.c.b16 %v1476, %v1474
        %v1489 = vpack.c.b16 %v1479, %v1477
        %v1490 = vpack.c.b16 %v1480, %v1478
        %v1491 = vpack.c.b16 %v1483, %v1481
        %v1492 = vpack.c.b16 %v1484, %v1482
        %v1502 = vsel %vm527, %v1440, 0
        %1504 = vmatprep.subr.bf16.mxu0 0
        %1505 = vmatpush1.bf16.msra.mxu0 0
        %1506 = vmatprep.subr.bf16.mxu0 0
        %1507 = vmatpush1.bf16.msra.mxu0 0
        %1508 = vmatprep.subr.bf16.mxu0 0
        %1509 = vmatpush1.bf16.msra.mxu0 0
        %1510 = vmatprep.subr.bf16.mxu0 0
        %1511 = vmatpush1.bf16.msra.mxu0 0
        %1512 = vmatprep.subr.bf16.mxu0 %v1492
        %1513 = vmatpush1.bf16.msra.mxu0 %v1491
        %1514 = vmatprep.subr.bf16.mxu0 %v1490
        %1515 = vmatpush1.bf16.msra.mxu0 %v1489
        %1516 = vmatprep.subr.bf16.mxu0 %v1488
        %1517 = vmatpush1.bf16.msra.mxu0 %v1487
        %1518 = vmatprep.subr.bf16.mxu0 %v1486
        %1519 = vmatpush1.bf16.msra.mxu0 %v1485
        %1520 = vmatprep.subr.bf16.mxu0 0
        %1521 = vmatpush2.bf16.msra.mxu0 0
        %1522 = vmatprep.subr.bf16.mxu0 0
        %1523 = vmatpush2.bf16.msra.mxu0 0
        %1524 = vmatprep.subr.bf16.mxu0 0
        %1525 = vmatpush2.bf16.msra.mxu0 0
        %1526 = vmatprep.subr.bf16.mxu0 0
        %1527 = vmatpush2.bf16.msra.mxu0 0
        %1528 = vmatprep.subr.bf16.mxu0 0
        %1529 = vmatpush2.bf16.msra.mxu0 0
        %1530 = vmatprep.subr.bf16.mxu0 0
        %1531 = vmatpush2.bf16.msra.mxu0 0
        %1532 = vmatprep.subr.bf16.mxu0 0
        %1533 = vmatpush2.bf16.msra.mxu0 0
        %1534 = vmatprep.subr.bf16.mxu0 0
        %1535 = vmatpush2.bf16.msra.mxu0 0
        %1536 = vmatprep.mubr.bf16.mxu0 0
        %1537 = vmatmul.mubr.bf16.gmra.mxu0 %v1502
        %v1538 = vpop.f32.mrf.mxu0
        %v1539 = vadd.f32 %v1454, %v1538
        %v1540 = vpop.f32.mrf.mxu0
        %v1541 = vadd.f32 %v1458, %v1540
        %v1542 = vpop.f32.mrf.mxu0
        %v1543 = vpop.f32.mrf.mxu0
        %1544 = vdwg.mxu0
        %v1545 = vmax.f32 %v1539, 0.0
        %v1546 = vmax.f32 %v1541, 0.0
        %v1547 = vpack.c.bf16 %v1545, %v1545
        %v1548 = vpack.c.bf16 %v1546, %v1546
        %v1549 = vld [vmem:[%s10] sm:$0xf]
        %v1550 = vld [vmem:[%s10 + $0x4] sm:$0xf]
        %v1551 = vld [vmem:[%s10 + $0x8] sm:$0xf]
        %v1552 = vld [vmem:[%s10 + $0xc] sm:$0xf]
        %v1553 = vld [vmem:[%s10 + $0x10] sm:$0xf]
        %v1554 = vld [vmem:[%s10 + $0x14] sm:$0xf]
        %v1555 = vld [vmem:[%s10 + $0x18] sm:$0xf]
        %v1556 = vld [vmem:[%s10 + $0x1c] sm:$0xf]
        %v1557 = vld [vmem:[%s10 + $0x20] sm:$0xf]
        %v1558 = vld [vmem:[%s10 + $0x24] sm:$0xf]
        %v1559 = vld [vmem:[%s10 + $0x28] sm:$0xf]
        %v1560 = vld [vmem:[%s10 + $0x2c] sm:$0xf]
        %v1561 = vld [vmem:[%s10 + $0x30] sm:$0xf]
        %v1562 = vld [vmem:[%s10 + $0x34] sm:$0xf]
        %v1563 = vld [vmem:[%s10 + $0x38] sm:$0xf]
        %v1564 = vld [vmem:[%s10 + $0x3c] sm:$0xf]
        %v1565 = vld [vmem:[%s10 + $0x40] sm:$0xf]
        %v1566 = vld [vmem:[%s10 + $0x44] sm:$0xf]
        %v1567 = vld [vmem:[%s10 + $0x48] sm:$0xf]
        %v1568 = vld [vmem:[%s10 + $0x4c] sm:$0xf]
        %v1569 = vld [vmem:[%s10 + $0x50] sm:$0xf]
        %v1570 = vld [vmem:[%s10 + $0x54] sm:$0xf]
        %v1571 = vld [vmem:[%s10 + $0x58] sm:$0xf]
        %v1572 = vld [vmem:[%s10 + $0x5c] sm:$0xf]
        %v1573 = vld [vmem:[%s10 + $0x60] sm:$0xf]
        %v1574 = vld [vmem:[%s10 + $0x64] sm:$0xf]
        %v1575 = vld [vmem:[%s10 + $0x68] sm:$0xf]
        %v1576 = vld [vmem:[%s10 + $0x6c] sm:$0xf]
        %v1577 = vld [vmem:[%s10 + $0x70] sm:$0xf]
        %v1578 = vld [vmem:[%s10 + $0x74] sm:$0xf]
        %v1579 = vld [vmem:[%s10 + $0x78] sm:$0xf]
        %v1580 = vld [vmem:[%s10 + $0x7c] sm:$0xf]
        %v1581 = vld [vmem:[%s11] sm:$0x1]
        %v1583 = vlaneseq
        %v1584 = vshrl.u32 %v1583, 7
        %v1585 = vsub.s32 0, %v1584
        %v1586 = vrot.slane %v1581, %v1585
        %v1620 = vunpack.c.l.b16 %v1549
        %v1621 = vunpack.c.l.b16 %v1550
        %v1622 = vunpack.c.l.b16 %v1551
        %v1623 = vunpack.c.l.b16 %v1552
        %v1624 = vunpack.c.l.b16 %v1553
        %v1625 = vunpack.c.l.b16 %v1554
        %v1626 = vunpack.c.l.b16 %v1555
        %v1627 = vunpack.c.l.b16 %v1556
        %v1628 = vunpack.c.l.b16 %v1557
        %v1629 = vunpack.c.l.b16 %v1558
        %v1630 = vunpack.c.l.b16 %v1559
        %v1631 = vunpack.c.l.b16 %v1560
        %v1632 = vunpack.c.l.b16 %v1561
        %v1633 = vunpack.c.l.b16 %v1562
        %v1634 = vunpack.c.l.b16 %v1563
        %v1635 = vunpack.c.l.b16 %v1564
        %v1636 = vunpack.c.l.b16 %v1565
        %v1637 = vunpack.c.l.b16 %v1566
        %v1638 = vunpack.c.l.b16 %v1567
        %v1639 = vunpack.c.l.b16 %v1568
        %v1640 = vunpack.c.l.b16 %v1569
        %v1641 = vunpack.c.l.b16 %v1570
        %v1642 = vunpack.c.l.b16 %v1571
        %v1643 = vunpack.c.l.b16 %v1572
        %v1644 = vunpack.c.l.b16 %v1573
        %v1645 = vunpack.c.l.b16 %v1574
        %v1646 = vunpack.c.l.b16 %v1575
        %v1647 = vunpack.c.l.b16 %v1576
        %v1648 = vunpack.c.l.b16 %v1577
        %v1649 = vunpack.c.l.b16 %v1578
        %v1650 = vunpack.c.l.b16 %v1579
        %v1651 = vunpack.c.l.b16 %v1580
        %v1652 = vpack.c.b16 %v1621, %v1620
        %v1653 = vpack.c.b16 %v1623, %v1622
        %v1654 = vpack.c.b16 %v1625, %v1624
        %v1655 = vpack.c.b16 %v1627, %v1626
        %v1656 = vpack.c.b16 %v1629, %v1628
        %v1657 = vpack.c.b16 %v1631, %v1630
        %v1658 = vpack.c.b16 %v1633, %v1632
        %v1659 = vpack.c.b16 %v1635, %v1634
        %v1660 = vpack.c.b16 %v1637, %v1636
        %v1661 = vpack.c.b16 %v1639, %v1638
        %v1662 = vpack.c.b16 %v1641, %v1640
        %v1663 = vpack.c.b16 %v1643, %v1642
        %v1664 = vpack.c.b16 %v1645, %v1644
        %v1665 = vpack.c.b16 %v1647, %v1646
        %v1666 = vpack.c.b16 %v1649, %v1648
        %v1667 = vpack.c.b16 %v1651, %v1650
        %1684 = vmatprep.subr.bf16.mxu0 0
        %1685 = vmatpush1.bf16.msra.mxu0 %v1659
        %1686 = vmatprep.subr.bf16.mxu0 0
        %1687 = vmatpush1.bf16.msra.mxu0 %v1658
        %1688 = vmatprep.subr.bf16.mxu0 0
        %1689 = vmatpush1.bf16.msra.mxu0 %v1657
        %1690 = vmatprep.subr.bf16.mxu0 0
        %1691 = vmatpush1.bf16.msra.mxu0 %v1656
        %1692 = vmatprep.subr.bf16.mxu0 0
        %1693 = vmatpush1.bf16.msra.mxu0 %v1655
        %1694 = vmatprep.subr.bf16.mxu0 0
        %1695 = vmatpush1.bf16.msra.mxu0 %v1654
        %1696 = vmatprep.subr.bf16.mxu0 0
        %1697 = vmatpush1.bf16.msra.mxu0 %v1653
        %1698 = vmatprep.subr.bf16.mxu0 0
        %1699 = vmatpush1.bf16.msra.mxu0 %v1652
        %1700 = vmatprep.subr.bf16.mxu0 0
        %1701 = vmatpush2.bf16.msra.mxu0 %v1667
        %1702 = vmatprep.subr.bf16.mxu0 0
        %1703 = vmatpush2.bf16.msra.mxu0 %v1666
        %1704 = vmatprep.subr.bf16.mxu0 0
        %1705 = vmatpush2.bf16.msra.mxu0 %v1665
        %1706 = vmatprep.subr.bf16.mxu0 0
        %1707 = vmatpush2.bf16.msra.mxu0 %v1664
        %1708 = vmatprep.subr.bf16.mxu0 0
        %1709 = vmatpush2.bf16.msra.mxu0 %v1663
        %1710 = vmatprep.subr.bf16.mxu0 0
        %1711 = vmatpush2.bf16.msra.mxu0 %v1662
        %1712 = vmatprep.subr.bf16.mxu0 0
        %1713 = vmatpush2.bf16.msra.mxu0 %v1661
        %1714 = vmatprep.subr.bf16.mxu0 0
        %1715 = vmatpush2.bf16.msra.mxu0 %v1660
        %1716 = vmatprep.mubr.bf16.mxu0 %v1548
        %1717 = vmatmul.mubr.bf16.gmra.mxu0 %v1547
        %v1718 = vpop.f32.mrf.mxu0
        %v1719 = vadd.f32 %v1586, %v1718
        %v1720 = vpop.f32.mrf.mxu0
        %v1721 = vpop.f32.mrf.mxu0
        %v1722 = vpop.f32.mrf.mxu0
        %1723 = vdwg.mxu0
        %v1724 = vadd.f32 %v1410, %v1719
        %s1725 = scalar_lea.vmem %s1, 1
        %v1726 = vld [vmem:[%s1725] sm:$0x1]
        %s1727 = scalar_lea.vmem %s2, 1
        %v1728 = vld [vmem:[%s1727] sm:$0x1]
        %v1729 = vsel %vm527, %v1724, 0.0
        %1730 = vadd.xlane.f32.xlu0 %v1729
        %v1731 = vpop.xlane.xlu0 %1730
        %v1732 = vmul.f32 %v1731, %v531
        %v1733 = vsub.f32 %v1724, %v1732
        %v1734 = vmul.f32 %v1733, %v1733
        %v1735 = vsel %vm527, %v1734, 0.0
        %1736 = vadd.xlane.f32.xlu0 %v1735
        %v1737 = vpop.xlane.xlu0 %1736
        %v1738 = vmul.f32 %v1737, %v531
        %v1739 = vadd.f32 %v1738, 1e-05
        %v1740 = vrsqrt.pop %v1739
        %v1741 = vmul.f32 %v1733, %v1740
        %v1743 = vlaneseq
        %v1744 = vshrl.u32 %v1743, 7
        %v1745 = vsub.s32 0, %v1744
        %v1746 = vrot.slane %v1726, %v1745
        %v1748 = vmul.f32 %v1741, %v1746
        %v1750 = vlaneseq
        %v1751 = vshrl.u32 %v1750, 7
        %v1752 = vsub.s32 0, %v1751
        %v1753 = vrot.slane %v1728, %v1752
        %v1755 = vadd.f32 %v1748, %v1753
        %v1756 = vpack.c.bf16 %v1755, %v1755
        %s1757 = scalar_lea.vmem %s3, 64
        %v1758 = vld [vmem:[%s1757] sm:$0xff]
        %v1759 = vld [vmem:[%s1757 + $0x8] sm:$0xff]
        %v1760 = vld [vmem:[%s1757 + $0x10] sm:$0xff]
        %v1761 = vld [vmem:[%s1757 + $0x18] sm:$0xff]
        %v1762 = vld [vmem:[%s1757 + $0x20] sm:$0xff]
        %v1763 = vld [vmem:[%s1757 + $0x28] sm:$0xff]
        %v1764 = vld [vmem:[%s1757 + $0x30] sm:$0xff]
        %v1765 = vld [vmem:[%s1757 + $0x38] sm:$0xff]
        %v1774 = vunpack.c.l.b16 %v1758
        %v1775 = vunpack.c.h.b16 %v1758
        %v1776 = vunpack.c.l.b16 %v1759
        %v1777 = vunpack.c.h.b16 %v1759
        %v1778 = vunpack.c.l.b16 %v1760
        %v1779 = vunpack.c.h.b16 %v1760
        %v1780 = vunpack.c.l.b16 %v1761
        %v1781 = vunpack.c.h.b16 %v1761
        %v1782 = vunpack.c.l.b16 %v1762
        %v1783 = vunpack.c.h.b16 %v1762
        %v1784 = vunpack.c.l.b16 %v1763
        %v1785 = vunpack.c.h.b16 %v1763
        %v1786 = vunpack.c.l.b16 %v1764
        %v1787 = vunpack.c.h.b16 %v1764
        %v1788 = vunpack.c.l.b16 %v1765
        %v1789 = vunpack.c.h.b16 %v1765
        %v1790 = vpack.c.b16 %v1776, %v1774
        %v1791 = vpack.c.b16 %v1777, %v1775
        %v1792 = vpack.c.b16 %v1780, %v1778
        %v1793 = vpack.c.b16 %v1781, %v1779
        %v1794 = vpack.c.b16 %v1784, %v1782
        %v1795 = vpack.c.b16 %v1785, %v1783
        %v1796 = vpack.c.b16 %v1788, %v1786
        %v1797 = vpack.c.b16 %v1789, %v1787
        %v1807 = vsel %vm527, %v1756, 0
        %1809 = vmatprep.subr.bf16.mxu0 0
        %1810 = vmatpush1.bf16.msra.mxu0 0
        %1811 = vmatprep.subr.bf16.mxu0 0
        %1812 = vmatpush1.bf16.msra.mxu0 0
        %1813 = vmatprep.subr.bf16.mxu0 0
        %1814 = vmatpush1.bf16.msra.mxu0 0
        %1815 = vmatprep.subr.bf16.mxu0 0
        %1816 = vmatpush1.bf16.msra.mxu0 0
        %1817 = vmatprep.subr.bf16.mxu0 %v1797
        %1818 = vmatpush1.bf16.msra.mxu0 %v1796
        %1819 = vmatprep.subr.bf16.mxu0 %v1795
        %1820 = vmatpush1.bf16.msra.mxu0 %v1794
        %1821 = vmatprep.subr.bf16.mxu0 %v1793
        %1822 = vmatpush1.bf16.msra.mxu0 %v1792
        %1823 = vmatprep.subr.bf16.mxu0 %v1791
        %1824 = vmatpush1.bf16.msra.mxu0 %v1790
        %1825 = vmatprep.subr.bf16.mxu0 0
        %1826 = vmatpush2.bf16.msra.mxu0 0
        %1827 = vmatprep.subr.bf16.mxu0 0
        %1828 = vmatpush2.bf16.msra.mxu0 0
        %1829 = vmatprep.subr.bf16.mxu0 0
        %1830 = vmatpush2.bf16.msra.mxu0 0
        %1831 = vmatprep.subr.bf16.mxu0 0
        %1832 = vmatpush2.bf16.msra.mxu0 0
        %1833 = vmatprep.subr.bf16.mxu0 0
        %1834 = vmatpush2.bf16.msra.mxu0 0
        %1835 = vmatprep.subr.bf16.mxu0 0
        %1836 = vmatpush2.bf16.msra.mxu0 0
        %1837 = vmatprep.subr.bf16.mxu0 0
        %1838 = vmatpush2.bf16.msra.mxu0 0
        %1839 = vmatprep.subr.bf16.mxu0 0
        %1840 = vmatpush2.bf16.msra.mxu0 0
        %1841 = vmatprep.mubr.bf16.mxu0 0
        %1842 = vmatmul.mubr.bf16.gmra.mxu0 %v1807
        %v1843 = vpop.f32.mrf.mxu0
        %v1844 = vadd.f32 0.0, %v1843
        %v1845 = vpop.f32.mrf.mxu0
        %v1846 = vadd.f32 0.0, %v1845
        %v1847 = vpop.f32.mrf.mxu0
        %v1848 = vpop.f32.mrf.mxu0
        %1849 = vdwg.mxu0
        %v1850 = vmul.f32 %v1844, 0.25
        %1852 = vrot.lane.b32.xlu0 %v1844, 64
        %v1853 = vpop.permute.xlu0 %1852
        %v1855 = vsel %vm653, %v1850, 0
        %v1857 = vsel %vm653, %v1853, 0
        %1859 = vmatprep.subr.mxu0 0.0
        %1860 = vmatpush1.xpose.msra.mxu0 0.0
        %1861 = vmatprep.subr.mxu0 0.0
        %1862 = vmatpush1.xpose.msra.mxu0 0.0
        %1863 = vmatprep.subr.mxu0 0.0
        %1864 = vmatpush1.xpose.msra.mxu0 0.0
        %1865 = vmatprep.subr.mxu0 0.0
        %1866 = vmatpush1.xpose.msra.mxu0 0.0
        %1867 = vmatprep.subr.mxu0 0.0
        %1868 = vmatpush1.xpose.msra.mxu0 0.0
        %1869 = vmatprep.subr.mxu0 0.0
        %1870 = vmatpush1.xpose.msra.mxu0 0.0
        %1871 = vmatprep.subr.mxu0 0.0
        %1872 = vmatpush1.xpose.msra.mxu0 0.0
        %1873 = vmatprep.subr.mxu0 0.0
        %1874 = vmatpush1.xpose.msra.mxu0 0.0
        %1875 = vmatprep.subr.mxu0 0.0
        %1876 = vmatpush1.xpose.msra.mxu0 0.0
        %1877 = vmatprep.subr.mxu0 0.0
        %1878 = vmatpush1.xpose.msra.mxu0 0.0
        %1879 = vmatprep.subr.mxu0 0.0
        %1880 = vmatpush1.xpose.msra.mxu0 0.0
        %1881 = vmatprep.subr.mxu0 0.0
        %1882 = vmatpush1.xpose.msra.mxu0 0.0
        %1883 = vmatprep.subr.mxu0 0.0
        %1884 = vmatpush1.xpose.msra.mxu0 0.0
        %1885 = vmatprep.subr.mxu0 0.0
        %1886 = vmatpush1.xpose.msra.mxu0 0.0
        %1887 = vmatprep.subr.mxu0 0.0
        %1888 = vmatpush1.xpose.msra.mxu0 0.0
        %1889 = vmatprep.subr.mxu0 0.0
        %1890 = vmatpush1.xpose.msra.mxu0 %v1857
        %1891 = vmatprep.subr.mxu0 0.0
        %1892 = vmatpush2.xpose.msra.mxu0 0.0
        %1893 = vmatprep.subr.mxu0 0.0
        %1894 = vmatpush2.xpose.msra.mxu0 0.0
        %1895 = vmatprep.subr.mxu0 0.0
        %1896 = vmatpush2.xpose.msra.mxu0 0.0
        %1897 = vmatprep.subr.mxu0 0.0
        %1898 = vmatpush2.xpose.msra.mxu0 0.0
        %1899 = vmatprep.subr.mxu0 0.0
        %1900 = vmatpush2.xpose.msra.mxu0 0.0
        %1901 = vmatprep.subr.mxu0 0.0
        %1902 = vmatpush2.xpose.msra.mxu0 0.0
        %1903 = vmatprep.subr.mxu0 0.0
        %1904 = vmatpush2.xpose.msra.mxu0 0.0
        %1905 = vmatprep.subr.mxu0 0.0
        %1906 = vmatpush2.xpose.msra.mxu0 0.0
        %1907 = vmatprep.subr.mxu0 0.0
        %1908 = vmatpush2.xpose.msra.mxu0 0.0
        %1909 = vmatprep.subr.mxu0 0.0
        %1910 = vmatpush2.xpose.msra.mxu0 0.0
        %1911 = vmatprep.subr.mxu0 0.0
        %1912 = vmatpush2.xpose.msra.mxu0 0.0
        %1913 = vmatprep.subr.mxu0 0.0
        %1914 = vmatpush2.xpose.msra.mxu0 0.0
        %1915 = vmatprep.subr.mxu0 0.0
        %1916 = vmatpush2.xpose.msra.mxu0 0.0
        %1917 = vmatprep.subr.mxu0 0.0
        %1918 = vmatpush2.xpose.msra.mxu0 0.0
        %1919 = vmatprep.subr.mxu0 0.0
        %1920 = vmatpush2.xpose.msra.mxu0 0.0
        %1921 = vmatprep.subr.mxu0 0.0
        %1922 = vmatpush2.xpose.msra.mxu0 0.0
        %1923 = vmatprep.mubr.f32.mxu0 0.0
        %1924 = vmatmul.mubr.f32.gmra.mxu0 %v1855
        %v1925 = vpop.f32.mrf.mxu0
        %v1926 = vadd.f32 %v524, %v1925
        %v1927 = vpop.f32.mrf.mxu0
        %1928 = vdwg.mxu0
        %v1929 = vsel %vm729, %v1926, -inf
        %1930 = vmax.xlane.f32.xlu0 %v1929
        %v1931 = vpop.xlane.xlu0 %1930
        %v1932 = vsub.f32 %v1926, %v1931
        %v1933 = vmul.f32 %v1932, 1.442695
        %v1934 = vpow.pop %v1933
        %v1935 = vsel %vm729, %v1934, 0.0
        %1936 = vadd.xlane.f32.xlu0 %v1935
        %v1937 = vpop.xlane.xlu0 %1936
        %v1938 = vrcp.pop %v1937
        %v1939 = vmul.f32 %v1934, %v1938
        %v1941 = vsel %vm729, %v1939, 0
        %1943 = vmatprep.subr.mxu0 0.0
        %1944 = vmatpush1.msra.mxu0 0.0
        %1945 = vmatprep.subr.mxu0 0.0
        %1946 = vmatpush1.msra.mxu0 0.0
        %1947 = vmatprep.subr.mxu0 0.0
        %1948 = vmatpush1.msra.mxu0 0.0
        %1949 = vmatprep.subr.mxu0 0.0
        %1950 = vmatpush1.msra.mxu0 0.0
        %1951 = vmatprep.subr.mxu0 0.0
        %1952 = vmatpush1.msra.mxu0 0.0
        %1953 = vmatprep.subr.mxu0 0.0
        %1954 = vmatpush1.msra.mxu0 0.0
        %1955 = vmatprep.subr.mxu0 0.0
        %1956 = vmatpush1.msra.mxu0 0.0
        %1957 = vmatprep.subr.mxu0 0.0
        %1958 = vmatpush1.msra.mxu0 0.0
        %1959 = vmatprep.subr.mxu0 0.0
        %1960 = vmatpush1.msra.mxu0 0.0
        %1961 = vmatprep.subr.mxu0 0.0
        %1962 = vmatpush1.msra.mxu0 0.0
        %1963 = vmatprep.subr.mxu0 0.0
        %1964 = vmatpush1.msra.mxu0 0.0
        %1965 = vmatprep.subr.mxu0 0.0
        %1966 = vmatpush1.msra.mxu0 0.0
        %1967 = vmatprep.subr.mxu0 0.0
        %1968 = vmatpush1.msra.mxu0 0.0
        %1969 = vmatprep.subr.mxu0 0.0
        %1970 = vmatpush1.msra.mxu0 0.0
        %1971 = vmatprep.subr.mxu0 0.0
        %1972 = vmatpush1.msra.mxu0 0.0
        %1973 = vmatprep.subr.mxu0 0.0
        %1974 = vmatpush1.msra.mxu0 %v1846
        %1975 = vmatprep.subr.mxu0 0.0
        %1976 = vmatpush2.msra.mxu0 0.0
        %1977 = vmatprep.subr.mxu0 0.0
        %1978 = vmatpush2.msra.mxu0 0.0
        %1979 = vmatprep.subr.mxu0 0.0
        %1980 = vmatpush2.msra.mxu0 0.0
        %1981 = vmatprep.subr.mxu0 0.0
        %1982 = vmatpush2.msra.mxu0 0.0
        %1983 = vmatprep.subr.mxu0 0.0
        %1984 = vmatpush2.msra.mxu0 0.0
        %1985 = vmatprep.subr.mxu0 0.0
        %1986 = vmatpush2.msra.mxu0 0.0
        %1987 = vmatprep.subr.mxu0 0.0
        %1988 = vmatpush2.msra.mxu0 0.0
        %1989 = vmatprep.subr.mxu0 0.0
        %1990 = vmatpush2.msra.mxu0 0.0
        %1991 = vmatprep.subr.mxu0 0.0
        %1992 = vmatpush2.msra.mxu0 0.0
        %1993 = vmatprep.subr.mxu0 0.0
        %1994 = vmatpush2.msra.mxu0 0.0
        %1995 = vmatprep.subr.mxu0 0.0
        %1996 = vmatpush2.msra.mxu0 0.0
        %1997 = vmatprep.subr.mxu0 0.0
        %1998 = vmatpush2.msra.mxu0 0.0
        %1999 = vmatprep.subr.mxu0 0.0
        %2000 = vmatpush2.msra.mxu0 0.0
        %2001 = vmatprep.subr.mxu0 0.0
        %2002 = vmatpush2.msra.mxu0 0.0
        %2003 = vmatprep.subr.mxu0 0.0
        %2004 = vmatpush2.msra.mxu0 0.0
        %2005 = vmatprep.subr.mxu0 0.0
        %2006 = vmatpush2.msra.mxu0 0.0
        %2007 = vmatprep.mubr.f32.mxu0 0.0
        %2008 = vmatmul.mubr.f32.gmra.mxu0 %v1941
        %v2009 = vpop.f32.mrf.mxu0
        %v2010 = vadd.f32 0.0, %v2009
        %v2011 = vpop.f32.mrf.mxu0
        %2012 = vdwg.mxu0
        %2013 = vrot.lane.b32.xlu0 %v1850, 112
        %v2014 = vpop.permute.xlu0 %2013
        %2015 = vrot.lane.b32.xlu0 %v1844, 48
        %v2016 = vpop.permute.xlu0 %2015
        %v2017 = vsel %vm653, %v2014, 0
        %v2019 = vsel %vm653, %v2016, 0
        %2021 = vmatprep.subr.mxu0 0.0
        %2022 = vmatpush1.xpose.msra.mxu0 0.0
        %2023 = vmatprep.subr.mxu0 0.0
        %2024 = vmatpush1.xpose.msra.mxu0 0.0
        %2025 = vmatprep.subr.mxu0 0.0
        %2026 = vmatpush1.xpose.msra.mxu0 0.0
        %2027 = vmatprep.subr.mxu0 0.0
        %2028 = vmatpush1.xpose.msra.mxu0 0.0
        %2029 = vmatprep.subr.mxu0 0.0
        %2030 = vmatpush1.xpose.msra.mxu0 0.0
        %2031 = vmatprep.subr.mxu0 0.0
        %2032 = vmatpush1.xpose.msra.mxu0 0.0
        %2033 = vmatprep.subr.mxu0 0.0
        %2034 = vmatpush1.xpose.msra.mxu0 0.0
        %2035 = vmatprep.subr.mxu0 0.0
        %2036 = vmatpush1.xpose.msra.mxu0 0.0
        %2037 = vmatprep.subr.mxu0 0.0
        %2038 = vmatpush1.xpose.msra.mxu0 0.0
        %2039 = vmatprep.subr.mxu0 0.0
        %2040 = vmatpush1.xpose.msra.mxu0 0.0
        %2041 = vmatprep.subr.mxu0 0.0
        %2042 = vmatpush1.xpose.msra.mxu0 0.0
        %2043 = vmatprep.subr.mxu0 0.0
        %2044 = vmatpush1.xpose.msra.mxu0 0.0
        %2045 = vmatprep.subr.mxu0 0.0
        %2046 = vmatpush1.xpose.msra.mxu0 0.0
        %2047 = vmatprep.subr.mxu0 0.0
        %2048 = vmatpush1.xpose.msra.mxu0 0.0
        %2049 = vmatprep.subr.mxu0 0.0
        %2050 = vmatpush1.xpose.msra.mxu0 0.0
        %2051 = vmatprep.subr.mxu0 0.0
        %2052 = vmatpush1.xpose.msra.mxu0 %v2019
        %2053 = vmatprep.subr.mxu0 0.0
        %2054 = vmatpush2.xpose.msra.mxu0 0.0
        %2055 = vmatprep.subr.mxu0 0.0
        %2056 = vmatpush2.xpose.msra.mxu0 0.0
        %2057 = vmatprep.subr.mxu0 0.0
        %2058 = vmatpush2.xpose.msra.mxu0 0.0
        %2059 = vmatprep.subr.mxu0 0.0
        %2060 = vmatpush2.xpose.msra.mxu0 0.0
        %2061 = vmatprep.subr.mxu0 0.0
        %2062 = vmatpush2.xpose.msra.mxu0 0.0
        %2063 = vmatprep.subr.mxu0 0.0
        %2064 = vmatpush2.xpose.msra.mxu0 0.0
        %2065 = vmatprep.subr.mxu0 0.0
        %2066 = vmatpush2.xpose.msra.mxu0 0.0
        %2067 = vmatprep.subr.mxu0 0.0
        %2068 = vmatpush2.xpose.msra.mxu0 0.0
        %2069 = vmatprep.subr.mxu0 0.0
        %2070 = vmatpush2.xpose.msra.mxu0 0.0
        %2071 = vmatprep.subr.mxu0 0.0
        %2072 = vmatpush2.xpose.msra.mxu0 0.0
        %2073 = vmatprep.subr.mxu0 0.0
        %2074 = vmatpush2.xpose.msra.mxu0 0.0
        %2075 = vmatprep.subr.mxu0 0.0
        %2076 = vmatpush2.xpose.msra.mxu0 0.0
        %2077 = vmatprep.subr.mxu0 0.0
        %2078 = vmatpush2.xpose.msra.mxu0 0.0
        %2079 = vmatprep.subr.mxu0 0.0
        %2080 = vmatpush2.xpose.msra.mxu0 0.0
        %2081 = vmatprep.subr.mxu0 0.0
        %2082 = vmatpush2.xpose.msra.mxu0 0.0
        %2083 = vmatprep.subr.mxu0 0.0
        %2084 = vmatpush2.xpose.msra.mxu0 0.0
        %2085 = vmatprep.mubr.f32.mxu0 0.0
        %2086 = vmatmul.mubr.f32.gmra.mxu0 %v2017
        %v2087 = vpop.f32.mrf.mxu0
        %v2088 = vadd.f32 %v524, %v2087
        %v2089 = vpop.f32.mrf.mxu0
        %2090 = vdwg.mxu0
        %v2091 = vsel %vm729, %v2088, -inf
        %2092 = vmax.xlane.f32.xlu0 %v2091
        %v2093 = vpop.xlane.xlu0 %2092
        %v2094 = vsub.f32 %v2088, %v2093
        %v2095 = vmul.f32 %v2094, 1.442695
        %v2096 = vpow.pop %v2095
        %v2097 = vsel %vm729, %v2096, 0.0
        %2098 = vadd.xlane.f32.xlu0 %v2097
        %v2099 = vpop.xlane.xlu0 %2098
        %v2100 = vrcp.pop %v2099
        %v2101 = vmul.f32 %v2096, %v2100
        %2103 = vrot.lane.b32.xlu0 %v1846, 112
        %v2104 = vpop.permute.xlu0 %2103
        %v2107 = vsel %vm729, %v2101, 0
        %2109 = vmatprep.subr.mxu0 0.0
        %2110 = vmatpush1.msra.mxu0 0.0
        %2111 = vmatprep.subr.mxu0 0.0
        %2112 = vmatpush1.msra.mxu0 0.0
        %2113 = vmatprep.subr.mxu0 0.0
        %2114 = vmatpush1.msra.mxu0 0.0
        %2115 = vmatprep.subr.mxu0 0.0
        %2116 = vmatpush1.msra.mxu0 0.0
        %2117 = vmatprep.subr.mxu0 0.0
        %2118 = vmatpush1.msra.mxu0 0.0
        %2119 = vmatprep.subr.mxu0 0.0
        %2120 = vmatpush1.msra.mxu0 0.0
        %2121 = vmatprep.subr.mxu0 0.0
        %2122 = vmatpush1.msra.mxu0 0.0
        %2123 = vmatprep.subr.mxu0 0.0
        %2124 = vmatpush1.msra.mxu0 0.0
        %2125 = vmatprep.subr.mxu0 0.0
        %2126 = vmatpush1.msra.mxu0 0.0
        %2127 = vmatprep.subr.mxu0 0.0
        %2128 = vmatpush1.msra.mxu0 0.0
        %2129 = vmatprep.subr.mxu0 0.0
        %2130 = vmatpush1.msra.mxu0 0.0
        %2131 = vmatprep.subr.mxu0 0.0
        %2132 = vmatpush1.msra.mxu0 0.0
        %2133 = vmatprep.subr.mxu0 0.0
        %2134 = vmatpush1.msra.mxu0 0.0
        %2135 = vmatprep.subr.mxu0 0.0
        %2136 = vmatpush1.msra.mxu0 0.0
        %2137 = vmatprep.subr.mxu0 0.0
        %2138 = vmatpush1.msra.mxu0 0.0
        %2139 = vmatprep.subr.mxu0 0.0
        %2140 = vmatpush1.msra.mxu0 %v2104
        %2141 = vmatprep.subr.mxu0 0.0
        %2142 = vmatpush2.msra.mxu0 0.0
        %2143 = vmatprep.subr.mxu0 0.0
        %2144 = vmatpush2.msra.mxu0 0.0
        %2145 = vmatprep.subr.mxu0 0.0
        %2146 = vmatpush2.msra.mxu0 0.0
        %2147 = vmatprep.subr.mxu0 0.0
        %2148 = vmatpush2.msra.mxu0 0.0
        %2149 = vmatprep.subr.mxu0 0.0
        %2150 = vmatpush2.msra.mxu0 0.0
        %2151 = vmatprep.subr.mxu0 0.0
        %2152 = vmatpush2.msra.mxu0 0.0
        %2153 = vmatprep.subr.mxu0 0.0
        %2154 = vmatpush2.msra.mxu0 0.0
        %2155 = vmatprep.subr.mxu0 0.0
        %2156 = vmatpush2.msra.mxu0 0.0
        %2157 = vmatprep.subr.mxu0 0.0
        %2158 = vmatpush2.msra.mxu0 0.0
        %2159 = vmatprep.subr.mxu0 0.0
        %2160 = vmatpush2.msra.mxu0 0.0
        %2161 = vmatprep.subr.mxu0 0.0
        %2162 = vmatpush2.msra.mxu0 0.0
        %2163 = vmatprep.subr.mxu0 0.0
        %2164 = vmatpush2.msra.mxu0 0.0
        %2165 = vmatprep.subr.mxu0 0.0
        %2166 = vmatpush2.msra.mxu0 0.0
        %2167 = vmatprep.subr.mxu0 0.0
        %2168 = vmatpush2.msra.mxu0 0.0
        %2169 = vmatprep.subr.mxu0 0.0
        %2170 = vmatpush2.msra.mxu0 0.0
        %2171 = vmatprep.subr.mxu0 0.0
        %2172 = vmatpush2.msra.mxu0 0.0
        %2173 = vmatprep.mubr.f32.mxu0 0.0
        %2174 = vmatmul.mubr.f32.gmra.mxu0 %v2107
        %v2175 = vpop.f32.mrf.mxu0
        %v2176 = vadd.f32 0.0, %v2175
        %v2177 = vpop.f32.mrf.mxu0
        %2178 = vdwg.mxu0
        %2179 = vrot.lane.b32.xlu0 %v1850, 96
        %v2180 = vpop.permute.xlu0 %2179
        %2181 = vrot.lane.b32.xlu0 %v1844, 32
        %v2182 = vpop.permute.xlu0 %2181
        %v2183 = vsel %vm653, %v2180, 0
        %v2185 = vsel %vm653, %v2182, 0
        %2187 = vmatprep.subr.mxu0 0.0
        %2188 = vmatpush1.xpose.msra.mxu0 0.0
        %2189 = vmatprep.subr.mxu0 0.0
        %2190 = vmatpush1.xpose.msra.mxu0 0.0
        %2191 = vmatprep.subr.mxu0 0.0
        %2192 = vmatpush1.xpose.msra.mxu0 0.0
        %2193 = vmatprep.subr.mxu0 0.0
        %2194 = vmatpush1.xpose.msra.mxu0 0.0
        %2195 = vmatprep.subr.mxu0 0.0
        %2196 = vmatpush1.xpose.msra.mxu0 0.0
        %2197 = vmatprep.subr.mxu0 0.0
        %2198 = vmatpush1.xpose.msra.mxu0 0.0
        %2199 = vmatprep.subr.mxu0 0.0
        %2200 = vmatpush1.xpose.msra.mxu0 0.0
        %2201 = vmatprep.subr.mxu0 0.0
        %2202 = vmatpush1.xpose.msra.mxu0 0.0
        %2203 = vmatprep.subr.mxu0 0.0
        %2204 = vmatpush1.xpose.msra.mxu0 0.0
        %2205 = vmatprep.subr.mxu0 0.0
        %2206 = vmatpush1.xpose.msra.mxu0 0.0
        %2207 = vmatprep.subr.mxu0 0.0
        %2208 = vmatpush1.xpose.msra.mxu0 0.0
        %2209 = vmatprep.subr.mxu0 0.0
        %2210 = vmatpush1.xpose.msra.mxu0 0.0
        %2211 = vmatprep.subr.mxu0 0.0
        %2212 = vmatpush1.xpose.msra.mxu0 0.0
        %2213 = vmatprep.subr.mxu0 0.0
        %2214 = vmatpush1.xpose.msra.mxu0 0.0
        %2215 = vmatprep.subr.mxu0 0.0
        %2216 = vmatpush1.xpose.msra.mxu0 0.0
        %2217 = vmatprep.subr.mxu0 0.0
        %2218 = vmatpush1.xpose.msra.mxu0 %v2185
        %2219 = vmatprep.subr.mxu0 0.0
        %2220 = vmatpush2.xpose.msra.mxu0 0.0
        %2221 = vmatprep.subr.mxu0 0.0
        %2222 = vmatpush2.xpose.msra.mxu0 0.0
        %2223 = vmatprep.subr.mxu0 0.0
        %2224 = vmatpush2.xpose.msra.mxu0 0.0
        %2225 = vmatprep.subr.mxu0 0.0
        %2226 = vmatpush2.xpose.msra.mxu0 0.0
        %2227 = vmatprep.subr.mxu0 0.0
        %2228 = vmatpush2.xpose.msra.mxu0 0.0
        %2229 = vmatprep.subr.mxu0 0.0
        %2230 = vmatpush2.xpose.msra.mxu0 0.0
        %2231 = vmatprep.subr.mxu0 0.0
        %2232 = vmatpush2.xpose.msra.mxu0 0.0
        %2233 = vmatprep.subr.mxu0 0.0
        %2234 = vmatpush2.xpose.msra.mxu0 0.0
        %2235 = vmatprep.subr.mxu0 0.0
        %2236 = vmatpush2.xpose.msra.mxu0 0.0
        %2237 = vmatprep.subr.mxu0 0.0
        %2238 = vmatpush2.xpose.msra.mxu0 0.0
        %2239 = vmatprep.subr.mxu0 0.0
        %2240 = vmatpush2.xpose.msra.mxu0 0.0
        %2241 = vmatprep.subr.mxu0 0.0
        %2242 = vmatpush2.xpose.msra.mxu0 0.0
        %2243 = vmatprep.subr.mxu0 0.0
        %2244 = vmatpush2.xpose.msra.mxu0 0.0
        %2245 = vmatprep.subr.mxu0 0.0
        %2246 = vmatpush2.xpose.msra.mxu0 0.0
        %2247 = vmatprep.subr.mxu0 0.0
        %2248 = vmatpush2.xpose.msra.mxu0 0.0
        %2249 = vmatprep.subr.mxu0 0.0
        %2250 = vmatpush2.xpose.msra.mxu0 0.0
        %2251 = vmatprep.mubr.f32.mxu0 0.0
        %2252 = vmatmul.mubr.f32.gmra.mxu0 %v2183
        %v2253 = vpop.f32.mrf.mxu0
        %v2254 = vadd.f32 %v524, %v2253
        %v2255 = vpop.f32.mrf.mxu0
        %2256 = vdwg.mxu0
        %v2257 = vsel %vm729, %v2254, -inf
        %2258 = vmax.xlane.f32.xlu0 %v2257
        %v2259 = vpop.xlane.xlu0 %2258
        %v2260 = vsub.f32 %v2254, %v2259
        %v2261 = vmul.f32 %v2260, 1.442695
        %v2262 = vpow.pop %v2261
        %v2263 = vsel %vm729, %v2262, 0.0
        %2264 = vadd.xlane.f32.xlu0 %v2263
        %v2265 = vpop.xlane.xlu0 %2264
        %v2266 = vrcp.pop %v2265
        %v2267 = vmul.f32 %v2262, %v2266
        %2268 = vrot.lane.b32.xlu0 %v1846, 96
        %v2269 = vpop.permute.xlu0 %2268
        %v2272 = vsel %vm729, %v2267, 0
        %2274 = vmatprep.subr.mxu0 0.0
        %2275 = vmatpush1.msra.mxu0 0.0
        %2276 = vmatprep.subr.mxu0 0.0
        %2277 = vmatpush1.msra.mxu0 0.0
        %2278 = vmatprep.subr.mxu0 0.0
        %2279 = vmatpush1.msra.mxu0 0.0
        %2280 = vmatprep.subr.mxu0 0.0
        %2281 = vmatpush1.msra.mxu0 0.0
        %2282 = vmatprep.subr.mxu0 0.0
        %2283 = vmatpush1.msra.mxu0 0.0
        %2284 = vmatprep.subr.mxu0 0.0
        %2285 = vmatpush1.msra.mxu0 0.0
        %2286 = vmatprep.subr.mxu0 0.0
        %2287 = vmatpush1.msra.mxu0 0.0
        %2288 = vmatprep.subr.mxu0 0.0
        %2289 = vmatpush1.msra.mxu0 0.0
        %2290 = vmatprep.subr.mxu0 0.0
        %2291 = vmatpush1.msra.mxu0 0.0
        %2292 = vmatprep.subr.mxu0 0.0
        %2293 = vmatpush1.msra.mxu0 0.0
        %2294 = vmatprep.subr.mxu0 0.0
        %2295 = vmatpush1.msra.mxu0 0.0
        %2296 = vmatprep.subr.mxu0 0.0
        %2297 = vmatpush1.msra.mxu0 0.0
        %2298 = vmatprep.subr.mxu0 0.0
        %2299 = vmatpush1.msra.mxu0 0.0
        %2300 = vmatprep.subr.mxu0 0.0
        %2301 = vmatpush1.msra.mxu0 0.0
        %2302 = vmatprep.subr.mxu0 0.0
        %2303 = vmatpush1.msra.mxu0 0.0
        %2304 = vmatprep.subr.mxu0 0.0
        %2305 = vmatpush1.msra.mxu0 %v2269
        %2306 = vmatprep.subr.mxu0 0.0
        %2307 = vmatpush2.msra.mxu0 0.0
        %2308 = vmatprep.subr.mxu0 0.0
        %2309 = vmatpush2.msra.mxu0 0.0
        %2310 = vmatprep.subr.mxu0 0.0
        %2311 = vmatpush2.msra.mxu0 0.0
        %2312 = vmatprep.subr.mxu0 0.0
        %2313 = vmatpush2.msra.mxu0 0.0
        %2314 = vmatprep.subr.mxu0 0.0
        %2315 = vmatpush2.msra.mxu0 0.0
        %2316 = vmatprep.subr.mxu0 0.0
        %2317 = vmatpush2.msra.mxu0 0.0
        %2318 = vmatprep.subr.mxu0 0.0
        %2319 = vmatpush2.msra.mxu0 0.0
        %2320 = vmatprep.subr.mxu0 0.0
        %2321 = vmatpush2.msra.mxu0 0.0
        %2322 = vmatprep.subr.mxu0 0.0
        %2323 = vmatpush2.msra.mxu0 0.0
        %2324 = vmatprep.subr.mxu0 0.0
        %2325 = vmatpush2.msra.mxu0 0.0
        %2326 = vmatprep.subr.mxu0 0.0
        %2327 = vmatpush2.msra.mxu0 0.0
        %2328 = vmatprep.subr.mxu0 0.0
        %2329 = vmatpush2.msra.mxu0 0.0
        %2330 = vmatprep.subr.mxu0 0.0
        %2331 = vmatpush2.msra.mxu0 0.0
        %2332 = vmatprep.subr.mxu0 0.0
        %2333 = vmatpush2.msra.mxu0 0.0
        %2334 = vmatprep.subr.mxu0 0.0
        %2335 = vmatpush2.msra.mxu0 0.0
        %2336 = vmatprep.subr.mxu0 0.0
        %2337 = vmatpush2.msra.mxu0 0.0
        %2338 = vmatprep.mubr.f32.mxu0 0.0
        %2339 = vmatmul.mubr.f32.gmra.mxu0 %v2272
        %v2340 = vpop.f32.mrf.mxu0
        %v2341 = vadd.f32 0.0, %v2340
        %v2342 = vpop.f32.mrf.mxu0
        %2343 = vdwg.mxu0
        %2344 = vrot.lane.b32.xlu0 %v1850, 80
        %v2345 = vpop.permute.xlu0 %2344
        %2346 = vrot.lane.b32.xlu0 %v1844, 16
        %v2347 = vpop.permute.xlu0 %2346
        %v2348 = vsel %vm653, %v2345, 0
        %v2350 = vsel %vm653, %v2347, 0
        %2352 = vmatprep.subr.mxu0 0.0
        %2353 = vmatpush1.xpose.msra.mxu0 0.0
        %2354 = vmatprep.subr.mxu0 0.0
        %2355 = vmatpush1.xpose.msra.mxu0 0.0
        %2356 = vmatprep.subr.mxu0 0.0
        %2357 = vmatpush1.xpose.msra.mxu0 0.0
        %2358 = vmatprep.subr.mxu0 0.0
        %2359 = vmatpush1.xpose.msra.mxu0 0.0
        %2360 = vmatprep.subr.mxu0 0.0
        %2361 = vmatpush1.xpose.msra.mxu0 0.0
        %2362 = vmatprep.subr.mxu0 0.0
        %2363 = vmatpush1.xpose.msra.mxu0 0.0
        %2364 = vmatprep.subr.mxu0 0.0
        %2365 = vmatpush1.xpose.msra.mxu0 0.0
        %2366 = vmatprep.subr.mxu0 0.0
        %2367 = vmatpush1.xpose.msra.mxu0 0.0
        %2368 = vmatprep.subr.mxu0 0.0
        %2369 = vmatpush1.xpose.msra.mxu0 0.0
        %2370 = vmatprep.subr.mxu0 0.0
        %2371 = vmatpush1.xpose.msra.mxu0 0.0
        %2372 = vmatprep.subr.mxu0 0.0
        %2373 = vmatpush1.xpose.msra.mxu0 0.0
        %2374 = vmatprep.subr.mxu0 0.0
        %2375 = vmatpush1.xpose.msra.mxu0 0.0
        %2376 = vmatprep.subr.mxu0 0.0
        %2377 = vmatpush1.xpose.msra.mxu0 0.0
        %2378 = vmatprep.subr.mxu0 0.0
        %2379 = vmatpush1.xpose.msra.mxu0 0.0
        %2380 = vmatprep.subr.mxu0 0.0
        %2381 = vmatpush1.xpose.msra.mxu0 0.0
        %2382 = vmatprep.subr.mxu0 0.0
        %2383 = vmatpush1.xpose.msra.mxu0 %v2350
        %2384 = vmatprep.subr.mxu0 0.0
        %2385 = vmatpush2.xpose.msra.mxu0 0.0
        %2386 = vmatprep.subr.mxu0 0.0
        %2387 = vmatpush2.xpose.msra.mxu0 0.0
        %2388 = vmatprep.subr.mxu0 0.0
        %2389 = vmatpush2.xpose.msra.mxu0 0.0
        %2390 = vmatprep.subr.mxu0 0.0
        %2391 = vmatpush2.xpose.msra.mxu0 0.0
        %2392 = vmatprep.subr.mxu0 0.0
        %2393 = vmatpush2.xpose.msra.mxu0 0.0
        %2394 = vmatprep.subr.mxu0 0.0
        %2395 = vmatpush2.xpose.msra.mxu0 0.0
        %2396 = vmatprep.subr.mxu0 0.0
        %2397 = vmatpush2.xpose.msra.mxu0 0.0
        %2398 = vmatprep.subr.mxu0 0.0
        %2399 = vmatpush2.xpose.msra.mxu0 0.0
        %2400 = vmatprep.subr.mxu0 0.0
        %2401 = vmatpush2.xpose.msra.mxu0 0.0
        %2402 = vmatprep.subr.mxu0 0.0
        %2403 = vmatpush2.xpose.msra.mxu0 0.0
        %2404 = vmatprep.subr.mxu0 0.0
        %2405 = vmatpush2.xpose.msra.mxu0 0.0
        %2406 = vmatprep.subr.mxu0 0.0
        %2407 = vmatpush2.xpose.msra.mxu0 0.0
        %2408 = vmatprep.subr.mxu0 0.0
        %2409 = vmatpush2.xpose.msra.mxu0 0.0
        %2410 = vmatprep.subr.mxu0 0.0
        %2411 = vmatpush2.xpose.msra.mxu0 0.0
        %2412 = vmatprep.subr.mxu0 0.0
        %2413 = vmatpush2.xpose.msra.mxu0 0.0
        %2414 = vmatprep.subr.mxu0 0.0
        %2415 = vmatpush2.xpose.msra.mxu0 0.0
        %2416 = vmatprep.mubr.f32.mxu0 0.0
        %2417 = vmatmul.mubr.f32.gmra.mxu0 %v2348
        %v2418 = vpop.f32.mrf.mxu0
        %v2419 = vadd.f32 %v524, %v2418
        %v2420 = vpop.f32.mrf.mxu0
        %2421 = vdwg.mxu0
        %v2422 = vsel %vm729, %v2419, -inf
        %2423 = vmax.xlane.f32.xlu0 %v2422
        %v2424 = vpop.xlane.xlu0 %2423
        %v2425 = vsub.f32 %v2419, %v2424
        %v2426 = vmul.f32 %v2425, 1.442695
        %v2427 = vpow.pop %v2426
        %v2428 = vsel %vm729, %v2427, 0.0
        %2429 = vadd.xlane.f32.xlu0 %v2428
        %v2430 = vpop.xlane.xlu0 %2429
        %v2431 = vrcp.pop %v2430
        %v2432 = vmul.f32 %v2427, %v2431
        %2433 = vrot.lane.b32.xlu0 %v1846, 80
        %v2434 = vpop.permute.xlu0 %2433
        %v2437 = vsel %vm729, %v2432, 0
        %2439 = vmatprep.subr.mxu0 0.0
        %2440 = vmatpush1.msra.mxu0 0.0
        %2441 = vmatprep.subr.mxu0 0.0
        %2442 = vmatpush1.msra.mxu0 0.0
        %2443 = vmatprep.subr.mxu0 0.0
        %2444 = vmatpush1.msra.mxu0 0.0
        %2445 = vmatprep.subr.mxu0 0.0
        %2446 = vmatpush1.msra.mxu0 0.0
        %2447 = vmatprep.subr.mxu0 0.0
        %2448 = vmatpush1.msra.mxu0 0.0
        %2449 = vmatprep.subr.mxu0 0.0
        %2450 = vmatpush1.msra.mxu0 0.0
        %2451 = vmatprep.subr.mxu0 0.0
        %2452 = vmatpush1.msra.mxu0 0.0
        %2453 = vmatprep.subr.mxu0 0.0
        %2454 = vmatpush1.msra.mxu0 0.0
        %2455 = vmatprep.subr.mxu0 0.0
        %2456 = vmatpush1.msra.mxu0 0.0
        %2457 = vmatprep.subr.mxu0 0.0
        %2458 = vmatpush1.msra.mxu0 0.0
        %2459 = vmatprep.subr.mxu0 0.0
        %2460 = vmatpush1.msra.mxu0 0.0
        %2461 = vmatprep.subr.mxu0 0.0
        %2462 = vmatpush1.msra.mxu0 0.0
        %2463 = vmatprep.subr.mxu0 0.0
        %2464 = vmatpush1.msra.mxu0 0.0
        %2465 = vmatprep.subr.mxu0 0.0
        %2466 = vmatpush1.msra.mxu0 0.0
        %2467 = vmatprep.subr.mxu0 0.0
        %2468 = vmatpush1.msra.mxu0 0.0
        %2469 = vmatprep.subr.mxu0 0.0
        %2470 = vmatpush1.msra.mxu0 %v2434
        %2471 = vmatprep.subr.mxu0 0.0
        %2472 = vmatpush2.msra.mxu0 0.0
        %2473 = vmatprep.subr.mxu0 0.0
        %2474 = vmatpush2.msra.mxu0 0.0
        %2475 = vmatprep.subr.mxu0 0.0
        %2476 = vmatpush2.msra.mxu0 0.0
        %2477 = vmatprep.subr.mxu0 0.0
        %2478 = vmatpush2.msra.mxu0 0.0
        %2479 = vmatprep.subr.mxu0 0.0
        %2480 = vmatpush2.msra.mxu0 0.0
        %2481 = vmatprep.subr.mxu0 0.0
        %2482 = vmatpush2.msra.mxu0 0.0
        %2483 = vmatprep.subr.mxu0 0.0
        %2484 = vmatpush2.msra.mxu0 0.0
        %2485 = vmatprep.subr.mxu0 0.0
        %2486 = vmatpush2.msra.mxu0 0.0
        %2487 = vmatprep.subr.mxu0 0.0
        %2488 = vmatpush2.msra.mxu0 0.0
        %2489 = vmatprep.subr.mxu0 0.0
        %2490 = vmatpush2.msra.mxu0 0.0
        %2491 = vmatprep.subr.mxu0 0.0
        %2492 = vmatpush2.msra.mxu0 0.0
        %2493 = vmatprep.subr.mxu0 0.0
        %2494 = vmatpush2.msra.mxu0 0.0
        %2495 = vmatprep.subr.mxu0 0.0
        %2496 = vmatpush2.msra.mxu0 0.0
        %2497 = vmatprep.subr.mxu0 0.0
        %2498 = vmatpush2.msra.mxu0 0.0
        %2499 = vmatprep.subr.mxu0 0.0
        %2500 = vmatpush2.msra.mxu0 0.0
        %2501 = vmatprep.subr.mxu0 0.0
        %2502 = vmatpush2.msra.mxu0 0.0
        %2503 = vmatprep.mubr.f32.mxu0 0.0
        %2504 = vmatmul.mubr.f32.gmra.mxu0 %v2437
        %v2505 = vpop.f32.mrf.mxu0
        %v2506 = vadd.f32 0.0, %v2505
        %v2507 = vpop.f32.mrf.mxu0
        %2508 = vdwg.mxu0
        %2510 = vrot.lane.b32.xlu0 %v2176, 16
        %v2511 = vpop.permute.xlu0 %2510
        %2514 = vrot.lane.b32.xlu0 %v2341, 32
        %v2515 = vpop.permute.xlu0 %2514
        %2518 = vrot.lane.b32.xlu0 %v2506, 48
        %v2519 = vpop.permute.xlu0 %2518
        %v2521 = vsel %vm653, %v2010, %v2511
        %v2522 = vsel %vm1323, %v2521, %v2515
        %v2523 = vsel %vm1325, %v2522, %v2519
        %v2524 = vpack.c.bf16 %v2523, %v2523
        %s2525 = scalar_lea.vmem %s4, 32
        %v2526 = vld [vmem:[%s2525] sm:$0xf]
        %v2527 = vld [vmem:[%s2525 + $0x4] sm:$0xf]
        %v2528 = vld [vmem:[%s2525 + $0x8] sm:$0xf]
        %v2529 = vld [vmem:[%s2525 + $0xc] sm:$0xf]
        %v2530 = vld [vmem:[%s2525 + $0x10] sm:$0xf]
        %v2531 = vld [vmem:[%s2525 + $0x14] sm:$0xf]
        %v2532 = vld [vmem:[%s2525 + $0x18] sm:$0xf]
        %v2533 = vld [vmem:[%s2525 + $0x1c] sm:$0xf]
        %s2534 = scalar_lea.vmem %s5, 1
        %v2535 = vld [vmem:[%s2534] sm:$0x1]
        %v2537 = vlaneseq
        %v2538 = vshrl.u32 %v2537, 7
        %v2539 = vsub.s32 0, %v2538
        %v2540 = vrot.slane %v2535, %v2539
        %v2550 = vunpack.c.l.b16 %v2526
        %v2551 = vunpack.c.l.b16 %v2527
        %v2552 = vunpack.c.l.b16 %v2528
        %v2553 = vunpack.c.l.b16 %v2529
        %v2554 = vunpack.c.l.b16 %v2530
        %v2555 = vunpack.c.l.b16 %v2531
        %v2556 = vunpack.c.l.b16 %v2532
        %v2557 = vunpack.c.l.b16 %v2533
        %v2558 = vpack.c.b16 %v2551, %v2550
        %v2559 = vpack.c.b16 %v2553, %v2552
        %v2560 = vpack.c.b16 %v2555, %v2554
        %v2561 = vpack.c.b16 %v2557, %v2556
        %v2567 = vsel %vm527, %v2524, 0
        %2569 = vmatprep.subr.bf16.mxu0 0
        %2570 = vmatpush1.bf16.msra.mxu0 0
        %2571 = vmatprep.subr.bf16.mxu0 0
        %2572 = vmatpush1.bf16.msra.mxu0 0
        %2573 = vmatprep.subr.bf16.mxu0 0
        %2574 = vmatpush1.bf16.msra.mxu0 0
        %2575 = vmatprep.subr.bf16.mxu0 0
        %2576 = vmatpush1.bf16.msra.mxu0 0
        %2577 = vmatprep.subr.bf16.mxu0 0
        %2578 = vmatpush1.bf16.msra.mxu0 %v2561
        %2579 = vmatprep.subr.bf16.mxu0 0
        %2580 = vmatpush1.bf16.msra.mxu0 %v2560
        %2581 = vmatprep.subr.bf16.mxu0 0
        %2582 = vmatpush1.bf16.msra.mxu0 %v2559
        %2583 = vmatprep.subr.bf16.mxu0 0
        %2584 = vmatpush1.bf16.msra.mxu0 %v2558
        %2585 = vmatprep.subr.bf16.mxu0 0
        %2586 = vmatpush2.bf16.msra.mxu0 0
        %2587 = vmatprep.subr.bf16.mxu0 0
        %2588 = vmatpush2.bf16.msra.mxu0 0
        %2589 = vmatprep.subr.bf16.mxu0 0
        %2590 = vmatpush2.bf16.msra.mxu0 0
        %2591 = vmatprep.subr.bf16.mxu0 0
        %2592 = vmatpush2.bf16.msra.mxu0 0
        %2593 = vmatprep.subr.bf16.mxu0 0
        %2594 = vmatpush2.bf16.msra.mxu0 0
        %2595 = vmatprep.subr.bf16.mxu0 0
        %2596 = vmatpush2.bf16.msra.mxu0 0
        %2597 = vmatprep.subr.bf16.mxu0 0
        %2598 = vmatpush2.bf16.msra.mxu0 0
        %2599 = vmatprep.subr.bf16.mxu0 0
        %2600 = vmatpush2.bf16.msra.mxu0 0
        %2601 = vmatprep.mubr.bf16.mxu0 0
        %2602 = vmatmul.mubr.bf16.gmra.mxu0 %v2567
        %v2603 = vpop.f32.mrf.mxu0
        %v2604 = vadd.f32 %v2540, %v2603
        %v2605 = vpop.f32.mrf.mxu0
        %v2606 = vpop.f32.mrf.mxu0
        %v2607 = vpop.f32.mrf.mxu0
        %2608 = vdwg.mxu0
        %v2609 = vadd.f32 %v1724, %v2604
        %s2610 = scalar_lea.vmem %s6, 1
        %v2611 = vld [vmem:[%s2610] sm:$0x1]
        %s2612 = scalar_lea.vmem %s7, 1
        %v2613 = vld [vmem:[%s2612] sm:$0x1]
        %v2614 = vsel %vm527, %v2609, 0.0
        %2615 = vadd.xlane.f32.xlu0 %v2614
        %v2616 = vpop.xlane.xlu0 %2615
        %v2617 = vmul.f32 %v2616, %v531
        %v2618 = vsub.f32 %v2609, %v2617
        %v2619 = vmul.f32 %v2618, %v2618
        %v2620 = vsel %vm527, %v2619, 0.0
        %2621 = vadd.xlane.f32.xlu0 %v2620
        %v2622 = vpop.xlane.xlu0 %2621
        %v2623 = vmul.f32 %v2622, %v531
        %v2624 = vadd.f32 %v2623, 1e-05
        %v2625 = vrsqrt.pop %v2624
        %v2626 = vmul.f32 %v2618, %v2625
        %v2628 = vlaneseq
        %v2629 = vshrl.u32 %v2628, 7
        %v2630 = vsub.s32 0, %v2629
        %v2631 = vrot.slane %v2611, %v2630
        %v2633 = vmul.f32 %v2626, %v2631
        %v2635 = vlaneseq
        %v2636 = vshrl.u32 %v2635, 7
        %v2637 = vsub.s32 0, %v2636
        %v2638 = vrot.slane %v2613, %v2637
        %v2640 = vadd.f32 %v2633, %v2638
        %v2641 = vpack.c.bf16 %v2640, %v2640
        %s2642 = scalar_lea.vmem %s8, 64
        %v2643 = vld [vmem:[%s2642] sm:$0xff]
        %v2644 = vld [vmem:[%s2642 + $0x8] sm:$0xff]
        %v2645 = vld [vmem:[%s2642 + $0x10] sm:$0xff]
        %v2646 = vld [vmem:[%s2642 + $0x18] sm:$0xff]
        %v2647 = vld [vmem:[%s2642 + $0x20] sm:$0xff]
        %v2648 = vld [vmem:[%s2642 + $0x28] sm:$0xff]
        %v2649 = vld [vmem:[%s2642 + $0x30] sm:$0xff]
        %v2650 = vld [vmem:[%s2642 + $0x38] sm:$0xff]
        %s2651 = scalar_lea.vmem %s9, 2
        %v2652 = vld [vmem:[%s2651] sm:$0x3]
        %v2654 = vlaneseq
        %v2655 = vshrl.u32 %v2654, 7
        %v2656 = vsub.s32 0, %v2655
        %v2657 = vrot.slane %v2652, %v2656
        %v2658 = vlaneseq
        %v2659 = vshrl.u32 %v2658, 7
        %v2660 = vsub.s32 1, %v2659
        %v2661 = vrot.slane %v2652, %v2660
        %v2672 = vunpack.c.l.b16 %v2643
        %v2673 = vunpack.c.h.b16 %v2643
        %v2674 = vunpack.c.l.b16 %v2644
        %v2675 = vunpack.c.h.b16 %v2644
        %v2676 = vunpack.c.l.b16 %v2645
        %v2677 = vunpack.c.h.b16 %v2645
        %v2678 = vunpack.c.l.b16 %v2646
        %v2679 = vunpack.c.h.b16 %v2646
        %v2680 = vunpack.c.l.b16 %v2647
        %v2681 = vunpack.c.h.b16 %v2647
        %v2682 = vunpack.c.l.b16 %v2648
        %v2683 = vunpack.c.h.b16 %v2648
        %v2684 = vunpack.c.l.b16 %v2649
        %v2685 = vunpack.c.h.b16 %v2649
        %v2686 = vunpack.c.l.b16 %v2650
        %v2687 = vunpack.c.h.b16 %v2650
        %v2688 = vpack.c.b16 %v2674, %v2672
        %v2689 = vpack.c.b16 %v2675, %v2673
        %v2690 = vpack.c.b16 %v2678, %v2676
        %v2691 = vpack.c.b16 %v2679, %v2677
        %v2692 = vpack.c.b16 %v2682, %v2680
        %v2693 = vpack.c.b16 %v2683, %v2681
        %v2694 = vpack.c.b16 %v2686, %v2684
        %v2695 = vpack.c.b16 %v2687, %v2685
        %v2705 = vsel %vm527, %v2641, 0
        %2707 = vmatprep.subr.bf16.mxu0 0
        %2708 = vmatpush1.bf16.msra.mxu0 0
        %2709 = vmatprep.subr.bf16.mxu0 0
        %2710 = vmatpush1.bf16.msra.mxu0 0
        %2711 = vmatprep.subr.bf16.mxu0 0
        %2712 = vmatpush1.bf16.msra.mxu0 0
        %2713 = vmatprep.subr.bf16.mxu0 0
        %2714 = vmatpush1.bf16.msra.mxu0 0
        %2715 = vmatprep.subr.bf16.mxu0 %v2695
        %2716 = vmatpush1.bf16.msra.mxu0 %v2694
        %2717 = vmatprep.subr.bf16.mxu0 %v2693
        %2718 = vmatpush1.bf16.msra.mxu0 %v2692
        %2719 = vmatprep.subr.bf16.mxu0 %v2691
        %2720 = vmatpush1.bf16.msra.mxu0 %v2690
        %2721 = vmatprep.subr.bf16.mxu0 %v2689
        %2722 = vmatpush1.bf16.msra.mxu0 %v2688
        %2723 = vmatprep.subr.bf16.mxu0 0
        %2724 = vmatpush2.bf16.msra.mxu0 0
        %2725 = vmatprep.subr.bf16.mxu0 0
        %2726 = vmatpush2.bf16.msra.mxu0 0
        %2727 = vmatprep.subr.bf16.mxu0 0
        %2728 = vmatpush2.bf16.msra.mxu0 0
        %2729 = vmatprep.subr.bf16.mxu0 0
        %2730 = vmatpush2.bf16.msra.mxu0 0
        %2731 = vmatprep.subr.bf16.mxu0 0
        %2732 = vmatpush2.bf16.msra.mxu0 0
        %2733 = vmatprep.subr.bf16.mxu0 0
        %2734 = vmatpush2.bf16.msra.mxu0 0
        %2735 = vmatprep.subr.bf16.mxu0 0
        %2736 = vmatpush2.bf16.msra.mxu0 0
        %2737 = vmatprep.subr.bf16.mxu0 0
        %2738 = vmatpush2.bf16.msra.mxu0 0
        %2739 = vmatprep.mubr.bf16.mxu0 0
        %2740 = vmatmul.mubr.bf16.gmra.mxu0 %v2705
        %v2741 = vpop.f32.mrf.mxu0
        %v2742 = vadd.f32 %v2657, %v2741
        %v2743 = vpop.f32.mrf.mxu0
        %v2744 = vadd.f32 %v2661, %v2743
        %v2745 = vpop.f32.mrf.mxu0
        %v2746 = vpop.f32.mrf.mxu0
        %2747 = vdwg.mxu0
        %v2748 = vmax.f32 %v2742, 0.0
        %v2749 = vmax.f32 %v2744, 0.0
        %v2750 = vpack.c.bf16 %v2748, %v2748
        %v2751 = vpack.c.bf16 %v2749, %v2749
        %s2752 = scalar_lea.vmem %s10, 128
        %v2753 = vld [vmem:[%s2752] sm:$0xf]
        %v2754 = vld [vmem:[%s2752 + $0x4] sm:$0xf]
        %v2755 = vld [vmem:[%s2752 + $0x8] sm:$0xf]
        %v2756 = vld [vmem:[%s2752 + $0xc] sm:$0xf]
        %v2757 = vld [vmem:[%s2752 + $0x10] sm:$0xf]
        %v2758 = vld [vmem:[%s2752 + $0x14] sm:$0xf]
        %v2759 = vld [vmem:[%s2752 + $0x18] sm:$0xf]
        %v2760 = vld [vmem:[%s2752 + $0x1c] sm:$0xf]
        %v2761 = vld [vmem:[%s2752 + $0x20] sm:$0xf]
        %v2762 = vld [vmem:[%s2752 + $0x24] sm:$0xf]
        %v2763 = vld [vmem:[%s2752 + $0x28] sm:$0xf]
        %v2764 = vld [vmem:[%s2752 + $0x2c] sm:$0xf]
        %v2765 = vld [vmem:[%s2752 + $0x30] sm:$0xf]
        %v2766 = vld [vmem:[%s2752 + $0x34] sm:$0xf]
        %v2767 = vld [vmem:[%s2752 + $0x38] sm:$0xf]
        %v2768 = vld [vmem:[%s2752 + $0x3c] sm:$0xf]
        %v2769 = vld [vmem:[%s2752 + $0x40] sm:$0xf]
        %v2770 = vld [vmem:[%s2752 + $0x44] sm:$0xf]
        %v2771 = vld [vmem:[%s2752 + $0x48] sm:$0xf]
        %v2772 = vld [vmem:[%s2752 + $0x4c] sm:$0xf]
        %v2773 = vld [vmem:[%s2752 + $0x50] sm:$0xf]
        %v2774 = vld [vmem:[%s2752 + $0x54] sm:$0xf]
        %v2775 = vld [vmem:[%s2752 + $0x58] sm:$0xf]
        %v2776 = vld [vmem:[%s2752 + $0x5c] sm:$0xf]
        %v2777 = vld [vmem:[%s2752 + $0x60] sm:$0xf]
        %v2778 = vld [vmem:[%s2752 + $0x64] sm:$0xf]
        %v2779 = vld [vmem:[%s2752 + $0x68] sm:$0xf]
        %v2780 = vld [vmem:[%s2752 + $0x6c] sm:$0xf]
        %v2781 = vld [vmem:[%s2752 + $0x70] sm:$0xf]
        %v2782 = vld [vmem:[%s2752 + $0x74] sm:$0xf]
        %v2783 = vld [vmem:[%s2752 + $0x78] sm:$0xf]
        %v2784 = vld [vmem:[%s2752 + $0x7c] sm:$0xf]
        %s2785 = scalar_lea.vmem %s11, 1
        %v2786 = vld [vmem:[%s2785] sm:$0x1]
        %v2788 = vlaneseq
        %v2789 = vshrl.u32 %v2788, 7
        %v2790 = vsub.s32 0, %v2789
        %v2791 = vrot.slane %v2786, %v2790
        %v2825 = vunpack.c.l.b16 %v2753
        %v2826 = vunpack.c.l.b16 %v2754
        %v2827 = vunpack.c.l.b16 %v2755
        %v2828 = vunpack.c.l.b16 %v2756
        %v2829 = vunpack.c.l.b16 %v2757
        %v2830 = vunpack.c.l.b16 %v2758
        %v2831 = vunpack.c.l.b16 %v2759
        %v2832 = vunpack.c.l.b16 %v2760
        %v2833 = vunpack.c.l.b16 %v2761
        %v2834 = vunpack.c.l.b16 %v2762
        %v2835 = vunpack.c.l.b16 %v2763
        %v2836 = vunpack.c.l.b16 %v2764
        %v2837 = vunpack.c.l.b16 %v2765
        %v2838 = vunpack.c.l.b16 %v2766
        %v2839 = vunpack.c.l.b16 %v2767
        %v2840 = vunpack.c.l.b16 %v2768
        %v2841 = vunpack.c.l.b16 %v2769
        %v2842 = vunpack.c.l.b16 %v2770
        %v2843 = vunpack.c.l.b16 %v2771
        %v2844 = vunpack.c.l.b16 %v2772
        %v2845 = vunpack.c.l.b16 %v2773
        %v2846 = vunpack.c.l.b16 %v2774
        %v2847 = vunpack.c.l.b16 %v2775
        %v2848 = vunpack.c.l.b16 %v2776
        %v2849 = vunpack.c.l.b16 %v2777
        %v2850 = vunpack.c.l.b16 %v2778
        %v2851 = vunpack.c.l.b16 %v2779
        %v2852 = vunpack.c.l.b16 %v2780
        %v2853 = vunpack.c.l.b16 %v2781
        %v2854 = vunpack.c.l.b16 %v2782
        %v2855 = vunpack.c.l.b16 %v2783
        %v2856 = vunpack.c.l.b16 %v2784
        %v2857 = vpack.c.b16 %v2826, %v2825
        %v2858 = vpack.c.b16 %v2828, %v2827
        %v2859 = vpack.c.b16 %v2830, %v2829
        %v2860 = vpack.c.b16 %v2832, %v2831
        %v2861 = vpack.c.b16 %v2834, %v2833
        %v2862 = vpack.c.b16 %v2836, %v2835
        %v2863 = vpack.c.b16 %v2838, %v2837
        %v2864 = vpack.c.b16 %v2840, %v2839
        %v2865 = vpack.c.b16 %v2842, %v2841
        %v2866 = vpack.c.b16 %v2844, %v2843
        %v2867 = vpack.c.b16 %v2846, %v2845
        %v2868 = vpack.c.b16 %v2848, %v2847
        %v2869 = vpack.c.b16 %v2850, %v2849
        %v2870 = vpack.c.b16 %v2852, %v2851
        %v2871 = vpack.c.b16 %v2854, %v2853
        %v2872 = vpack.c.b16 %v2856, %v2855
        %2889 = vmatprep.subr.bf16.mxu0 0
        %2890 = vmatpush1.bf16.msra.mxu0 %v2864
        %2891 = vmatprep.subr.bf16.mxu0 0
        %2892 = vmatpush1.bf16.msra.mxu0 %v2863
        %2893 = vmatprep.subr.bf16.mxu0 0
        %2894 = vmatpush1.bf16.msra.mxu0 %v2862
        %2895 = vmatprep.subr.bf16.mxu0 0
        %2896 = vmatpush1.bf16.msra.mxu0 %v2861
        %2897 = vmatprep.subr.bf16.mxu0 0
        %2898 = vmatpush1.bf16.msra.mxu0 %v2860
        %2899 = vmatprep.subr.bf16.mxu0 0
        %2900 = vmatpush1.bf16.msra.mxu0 %v2859
        %2901 = vmatprep.subr.bf16.mxu0 0
        %2902 = vmatpush1.bf16.msra.mxu0 %v2858
        %2903 = vmatprep.subr.bf16.mxu0 0
        %2904 = vmatpush1.bf16.msra.mxu0 %v2857
        %2905 = vmatprep.subr.bf16.mxu0 0
        %2906 = vmatpush2.bf16.msra.mxu0 %v2872
        %2907 = vmatprep.subr.bf16.mxu0 0
        %2908 = vmatpush2.bf16.msra.mxu0 %v2871
        %2909 = vmatprep.subr.bf16.mxu0 0
        %2910 = vmatpush2.bf16.msra.mxu0 %v2870
        %2911 = vmatprep.subr.bf16.mxu0 0
        %2912 = vmatpush2.bf16.msra.mxu0 %v2869
        %2913 = vmatprep.subr.bf16.mxu0 0
        %2914 = vmatpush2.bf16.msra.mxu0 %v2868
        %2915 = vmatprep.subr.bf16.mxu0 0
        %2916 = vmatpush2.bf16.msra.mxu0 %v2867
        %2917 = vmatprep.subr.bf16.mxu0 0
        %2918 = vmatpush2.bf16.msra.mxu0 %v2866
        %2919 = vmatprep.subr.bf16.mxu0 0
        %2920 = vmatpush2.bf16.msra.mxu0 %v2865
        %2921 = vmatprep.mubr.bf16.mxu0 %v2751
        %2922 = vmatmul.mubr.bf16.gmra.mxu0 %v2750
        %v2923 = vpop.f32.mrf.mxu0
        %v2924 = vadd.f32 %v2791, %v2923
        %v2925 = vpop.f32.mrf.mxu0
        %v2926 = vpop.f32.mrf.mxu0
        %v2927 = vpop.f32.mrf.mxu0
        %2928 = vdwg.mxu0
        %v2929 = vadd.f32 %v2609, %v2924
        %s2930 = scalar_lea.vmem %s1, 2
        %v2931 = vld [vmem:[%s2930] sm:$0x1]
        %s2932 = scalar_lea.vmem %s2, 2
        %v2933 = vld [vmem:[%s2932] sm:$0x1]
        %v2934 = vsel %vm527, %v2929, 0.0
        %2935 = vadd.xlane.f32.xlu0 %v2934
        %v2936 = vpop.xlane.xlu0 %2935
        %v2937 = vmul.f32 %v2936, %v531
        %v2938 = vsub.f32 %v2929, %v2937
        %v2939 = vmul.f32 %v2938, %v2938
        %v2940 = vsel %vm527, %v2939, 0.0
        %2941 = vadd.xlane.f32.xlu0 %v2940
        %v2942 = vpop.xlane.xlu0 %2941
        %v2943 = vmul.f32 %v2942, %v531
        %v2944 = vadd.f32 %v2943, 1e-05
        %v2945 = vrsqrt.pop %v2944
        %v2946 = vmul.f32 %v2938, %v2945
        %v2948 = vlaneseq
        %v2949 = vshrl.u32 %v2948, 7
        %v2950 = vsub.s32 0, %v2949
        %v2951 = vrot.slane %v2931, %v2950
        %v2953 = vmul.f32 %v2946, %v2951
        %v2955 = vlaneseq
        %v2956 = vshrl.u32 %v2955, 7
        %v2957 = vsub.s32 0, %v2956
        %v2958 = vrot.slane %v2933, %v2957
        %v2960 = vadd.f32 %v2953, %v2958
        %v2961 = vpack.c.bf16 %v2960, %v2960
        %s2962 = scalar_lea.vmem %s3, 128
        %v2963 = vld [vmem:[%s2962] sm:$0xff]
        %v2964 = vld [vmem:[%s2962 + $0x8] sm:$0xff]
        %v2965 = vld [vmem:[%s2962 + $0x10] sm:$0xff]
        %v2966 = vld [vmem:[%s2962 + $0x18] sm:$0xff]
        %v2967 = vld [vmem:[%s2962 + $0x20] sm:$0xff]
        %v2968 = vld [vmem:[%s2962 + $0x28] sm:$0xff]
        %v2969 = vld [vmem:[%s2962 + $0x30] sm:$0xff]
        %v2970 = vld [vmem:[%s2962 + $0x38] sm:$0xff]
        %v2979 = vunpack.c.l.b16 %v2963
        %v2980 = vunpack.c.h.b16 %v2963
        %v2981 = vunpack.c.l.b16 %v2964
        %v2982 = vunpack.c.h.b16 %v2964
        %v2983 = vunpack.c.l.b16 %v2965
        %v2984 = vunpack.c.h.b16 %v2965
        %v2985 = vunpack.c.l.b16 %v2966
        %v2986 = vunpack.c.h.b16 %v2966
        %v2987 = vunpack.c.l.b16 %v2967
        %v2988 = vunpack.c.h.b16 %v2967
        %v2989 = vunpack.c.l.b16 %v2968
        %v2990 = vunpack.c.h.b16 %v2968
        %v2991 = vunpack.c.l.b16 %v2969
        %v2992 = vunpack.c.h.b16 %v2969
        %v2993 = vunpack.c.l.b16 %v2970
        %v2994 = vunpack.c.h.b16 %v2970
        %v2995 = vpack.c.b16 %v2981, %v2979
        %v2996 = vpack.c.b16 %v2982, %v2980
        %v2997 = vpack.c.b16 %v2985, %v2983
        %v2998 = vpack.c.b16 %v2986, %v2984
        %v2999 = vpack.c.b16 %v2989, %v2987
        %v3000 = vpack.c.b16 %v2990, %v2988
        %v3001 = vpack.c.b16 %v2993, %v2991
        %v3002 = vpack.c.b16 %v2994, %v2992
        %v3012 = vsel %vm527, %v2961, 0
        %3014 = vmatprep.subr.bf16.mxu0 0
        %3015 = vmatpush1.bf16.msra.mxu0 0
        %3016 = vmatprep.subr.bf16.mxu0 0
        %3017 = vmatpush1.bf16.msra.mxu0 0
        %3018 = vmatprep.subr.bf16.mxu0 0
        %3019 = vmatpush1.bf16.msra.mxu0 0
        %3020 = vmatprep.subr.bf16.mxu0 0
        %3021 = vmatpush1.bf16.msra.mxu0 0
        %3022 = vmatprep.subr.bf16.mxu0 %v3002
        %3023 = vmatpush1.bf16.msra.mxu0 %v3001
        %3024 = vmatprep.subr.bf16.mxu0 %v3000
        %3025 = vmatpush1.bf16.msra.mxu0 %v2999
        %3026 = vmatprep.subr.bf16.mxu0 %v2998
        %3027 = vmatpush1.bf16.msra.mxu0 %v2997
        %3028 = vmatprep.subr.bf16.mxu0 %v2996
        %3029 = vmatpush1.bf16.msra.mxu0 %v2995
        %3030 = vmatprep.subr.bf16.mxu0 0
        %3031 = vmatpush2.bf16.msra.mxu0 0
        %3032 = vmatprep.subr.bf16.mxu0 0
        %3033 = vmatpush2.bf16.msra.mxu0 0
        %3034 = vmatprep.subr.bf16.mxu0 0
        %3035 = vmatpush2.bf16.msra.mxu0 0
        %3036 = vmatprep.subr.bf16.mxu0 0
        %3037 = vmatpush2.bf16.msra.mxu0 0
        %3038 = vmatprep.subr.bf16.mxu0 0
        %3039 = vmatpush2.bf16.msra.mxu0 0
        %3040 = vmatprep.subr.bf16.mxu0 0
        %3041 = vmatpush2.bf16.msra.mxu0 0
        %3042 = vmatprep.subr.bf16.mxu0 0
        %3043 = vmatpush2.bf16.msra.mxu0 0
        %3044 = vmatprep.subr.bf16.mxu0 0
        %3045 = vmatpush2.bf16.msra.mxu0 0
        %3046 = vmatprep.mubr.bf16.mxu0 0
        %3047 = vmatmul.mubr.bf16.gmra.mxu0 %v3012
        %v3048 = vpop.f32.mrf.mxu0
        %v3049 = vadd.f32 0.0, %v3048
        %v3050 = vpop.f32.mrf.mxu0
        %v3051 = vadd.f32 0.0, %v3050
        %v3052 = vpop.f32.mrf.mxu0
        %v3053 = vpop.f32.mrf.mxu0
        %3054 = vdwg.mxu0
        %v3055 = vmul.f32 %v3049, 0.25
        %3057 = vrot.lane.b32.xlu0 %v3049, 64
        %v3058 = vpop.permute.xlu0 %3057
        %v3060 = vsel %vm653, %v3055, 0
        %v3062 = vsel %vm653, %v3058, 0
        %3064 = vmatprep.subr.mxu0 0.0
        %3065 = vmatpush1.xpose.msra.mxu0 0.0
        %3066 = vmatprep.subr.mxu0 0.0
        %3067 = vmatpush1.xpose.msra.mxu0 0.0
        %3068 = vmatprep.subr.mxu0 0.0
        %3069 = vmatpush1.xpose.msra.mxu0 0.0
        %3070 = vmatprep.subr.mxu0 0.0
        %3071 = vmatpush1.xpose.msra.mxu0 0.0
        %3072 = vmatprep.subr.mxu0 0.0
        %3073 = vmatpush1.xpose.msra.mxu0 0.0
        %3074 = vmatprep.subr.mxu0 0.0
        %3075 = vmatpush1.xpose.msra.mxu0 0.0
        %3076 = vmatprep.subr.mxu0 0.0
        %3077 = vmatpush1.xpose.msra.mxu0 0.0
        %3078 = vmatprep.subr.mxu0 0.0
        %3079 = vmatpush1.xpose.msra.mxu0 0.0
        %3080 = vmatprep.subr.mxu0 0.0
        %3081 = vmatpush1.xpose.msra.mxu0 0.0
        %3082 = vmatprep.subr.mxu0 0.0
        %3083 = vmatpush1.xpose.msra.mxu0 0.0
        %3084 = vmatprep.subr.mxu0 0.0
        %3085 = vmatpush1.xpose.msra.mxu0 0.0
        %3086 = vmatprep.subr.mxu0 0.0
        %3087 = vmatpush1.xpose.msra.mxu0 0.0
        %3088 = vmatprep.subr.mxu0 0.0
        %3089 = vmatpush1.xpose.msra.mxu0 0.0
        %3090 = vmatprep.subr.mxu0 0.0
        %3091 = vmatpush1.xpose.msra.mxu0 0.0
        %3092 = vmatprep.subr.mxu0 0.0
        %3093 = vmatpush1.xpose.msra.mxu0 0.0
        %3094 = vmatprep.subr.mxu0 0.0
        %3095 = vmatpush1.xpose.msra.mxu0 %v3062
        %3096 = vmatprep.subr.mxu0 0.0
        %3097 = vmatpush2.xpose.msra.mxu0 0.0
        %3098 = vmatprep.subr.mxu0 0.0
        %3099 = vmatpush2.xpose.msra.mxu0 0.0
        %3100 = vmatprep.subr.mxu0 0.0
        %3101 = vmatpush2.xpose.msra.mxu0 0.0
        %3102 = vmatprep.subr.mxu0 0.0
        %3103 = vmatpush2.xpose.msra.mxu0 0.0
        %3104 = vmatprep.subr.mxu0 0.0
        %3105 = vmatpush2.xpose.msra.mxu0 0.0
        %3106 = vmatprep.subr.mxu0 0.0
        %3107 = vmatpush2.xpose.msra.mxu0 0.0
        %3108 = vmatprep.subr.mxu0 0.0
        %3109 = vmatpush2.xpose.msra.mxu0 0.0
        %3110 = vmatprep.subr.mxu0 0.0
        %3111 = vmatpush2.xpose.msra.mxu0 0.0
        %3112 = vmatprep.subr.mxu0 0.0
        %3113 = vmatpush2.xpose.msra.mxu0 0.0
        %3114 = vmatprep.subr.mxu0 0.0
        %3115 = vmatpush2.xpose.msra.mxu0 0.0
        %3116 = vmatprep.subr.mxu0 0.0
        %3117 = vmatpush2.xpose.msra.mxu0 0.0
        %3118 = vmatprep.subr.mxu0 0.0
        %3119 = vmatpush2.xpose.msra.mxu0 0.0
        %3120 = vmatprep.subr.mxu0 0.0
        %3121 = vmatpush2.xpose.msra.mxu0 0.0
        %3122 = vmatprep.subr.mxu0 0.0
        %3123 = vmatpush2.xpose.msra.mxu0 0.0
        %3124 = vmatprep.subr.mxu0 0.0
        %3125 = vmatpush2.xpose.msra.mxu0 0.0
        %3126 = vmatprep.subr.mxu0 0.0
        %3127 = vmatpush2.xpose.msra.mxu0 0.0
        %3128 = vmatprep.mubr.f32.mxu0 0.0
        %3129 = vmatmul.mubr.f32.gmra.mxu0 %v3060
        %v3130 = vpop.f32.mrf.mxu0
        %v3131 = vadd.f32 %v524, %v3130
        %v3132 = vpop.f32.mrf.mxu0
        %3133 = vdwg.mxu0
        %v3134 = vsel %vm729, %v3131, -inf
        %3135 = vmax.xlane.f32.xlu0 %v3134
        %v3136 = vpop.xlane.xlu0 %3135
        %v3137 = vsub.f32 %v3131, %v3136
        %v3138 = vmul.f32 %v3137, 1.442695
        %v3139 = vpow.pop %v3138
        %v3140 = vsel %vm729, %v3139, 0.0
        %3141 = vadd.xlane.f32.xlu0 %v3140
        %v3142 = vpop.xlane.xlu0 %3141
        %v3143 = vrcp.pop %v3142
        %v3144 = vmul.f32 %v3139, %v3143
        %v3146 = vsel %vm729, %v3144, 0
        %3148 = vmatprep.subr.mxu0 0.0
        %3149 = vmatpush1.msra.mxu0 0.0
        %3150 = vmatprep.subr.mxu0 0.0
        %3151 = vmatpush1.msra.mxu0 0.0
        %3152 = vmatprep.subr.mxu0 0.0
        %3153 = vmatpush1.msra.mxu0 0.0
        %3154 = vmatprep.subr.mxu0 0.0
        %3155 = vmatpush1.msra.mxu0 0.0
        %3156 = vmatprep.subr.mxu0 0.0
        %3157 = vmatpush1.msra.mxu0 0.0
        %3158 = vmatprep.subr.mxu0 0.0
        %3159 = vmatpush1.msra.mxu0 0.0
        %3160 = vmatprep.subr.mxu0 0.0
        %3161 = vmatpush1.msra.mxu0 0.0
        %3162 = vmatprep.subr.mxu0 0.0
        %3163 = vmatpush1.msra.mxu0 0.0
        %3164 = vmatprep.subr.mxu0 0.0
        %3165 = vmatpush1.msra.mxu0 0.0
        %3166 = vmatprep.subr.mxu0 0.0
        %3167 = vmatpush1.msra.mxu0 0.0
        %3168 = vmatprep.subr.mxu0 0.0
        %3169 = vmatpush1.msra.mxu0 0.0
        %3170 = vmatprep.subr.mxu0 0.0
        %3171 = vmatpush1.msra.mxu0 0.0
        %3172 = vmatprep.subr.mxu0 0.0
        %3173 = vmatpush1.msra.mxu0 0.0
        %3174 = vmatprep.subr.mxu0 0.0
        %3175 = vmatpush1.msra.mxu0 0.0
        %3176 = vmatprep.subr.mxu0 0.0
        %3177 = vmatpush1.msra.mxu0 0.0
        %3178 = vmatprep.subr.mxu0 0.0
        %3179 = vmatpush1.msra.mxu0 %v3051
        %3180 = vmatprep.subr.mxu0 0.0
        %3181 = vmatpush2.msra.mxu0 0.0
        %3182 = vmatprep.subr.mxu0 0.0
        %3183 = vmatpush2.msra.mxu0 0.0
        %3184 = vmatprep.subr.mxu0 0.0
        %3185 = vmatpush2.msra.mxu0 0.0
        %3186 = vmatprep.subr.mxu0 0.0
        %3187 = vmatpush2.msra.mxu0 0.0
        %3188 = vmatprep.subr.mxu0 0.0
        %3189 = vmatpush2.msra.mxu0 0.0
        %3190 = vmatprep.subr.mxu0 0.0
        %3191 = vmatpush2.msra.mxu0 0.0
        %3192 = vmatprep.subr.mxu0 0.0
        %3193 = vmatpush2.msra.mxu0 0.0
        %3194 = vmatprep.subr.mxu0 0.0
        %3195 = vmatpush2.msra.mxu0 0.0
        %3196 = vmatprep.subr.mxu0 0.0
        %3197 = vmatpush2.msra.mxu0 0.0
        %3198 = vmatprep.subr.mxu0 0.0
        %3199 = vmatpush2.msra.mxu0 0.0
        %3200 = vmatprep.subr.mxu0 0.0
        %3201 = vmatpush2.msra.mxu0 0.0
        %3202 = vmatprep.subr.mxu0 0.0
        %3203 = vmatpush2.msra.mxu0 0.0
        %3204 = vmatprep.subr.mxu0 0.0
        %3205 = vmatpush2.msra.mxu0 0.0
        %3206 = vmatprep.subr.mxu0 0.0
        %3207 = vmatpush2.msra.mxu0 0.0
        %3208 = vmatprep.subr.mxu0 0.0
        %3209 = vmatpush2.msra.mxu0 0.0
        %3210 = vmatprep.subr.mxu0 0.0
        %3211 = vmatpush2.msra.mxu0 0.0
        %3212 = vmatprep.mubr.f32.mxu0 0.0
        %3213 = vmatmul.mubr.f32.gmra.mxu0 %v3146
        %v3214 = vpop.f32.mrf.mxu0
        %v3215 = vadd.f32 0.0, %v3214
        %v3216 = vpop.f32.mrf.mxu0
        %3217 = vdwg.mxu0
        %3218 = vrot.lane.b32.xlu0 %v3055, 112
        %v3219 = vpop.permute.xlu0 %3218
        %3220 = vrot.lane.b32.xlu0 %v3049, 48
        %v3221 = vpop.permute.xlu0 %3220
        %v3222 = vsel %vm653, %v3219, 0
        %v3224 = vsel %vm653, %v3221, 0
        %3226 = vmatprep.subr.mxu0 0.0
        %3227 = vmatpush1.xpose.msra.mxu0 0.0
        %3228 = vmatprep.subr.mxu0 0.0
        %3229 = vmatpush1.xpose.msra.mxu0 0.0
        %3230 = vmatprep.subr.mxu0 0.0
        %3231 = vmatpush1.xpose.msra.mxu0 0.0
        %3232 = vmatprep.subr.mxu0 0.0
        %3233 = vmatpush1.xpose.msra.mxu0 0.0
        %3234 = vmatprep.subr.mxu0 0.0
        %3235 = vmatpush1.xpose.msra.mxu0 0.0
        %3236 = vmatprep.subr.mxu0 0.0
        %3237 = vmatpush1.xpose.msra.mxu0 0.0
        %3238 = vmatprep.subr.mxu0 0.0
        %3239 = vmatpush1.xpose.msra.mxu0 0.0
        %3240 = vmatprep.subr.mxu0 0.0
        %3241 = vmatpush1.xpose.msra.mxu0 0.0
        %3242 = vmatprep.subr.mxu0 0.0
        %3243 = vmatpush1.xpose.msra.mxu0 0.0
        %3244 = vmatprep.subr.mxu0 0.0
        %3245 = vmatpush1.xpose.msra.mxu0 0.0
        %3246 = vmatprep.subr.mxu0 0.0
        %3247 = vmatpush1.xpose.msra.mxu0 0.0
        %3248 = vmatprep.subr.mxu0 0.0
        %3249 = vmatpush1.xpose.msra.mxu0 0.0
        %3250 = vmatprep.subr.mxu0 0.0
        %3251 = vmatpush1.xpose.msra.mxu0 0.0
        %3252 = vmatprep.subr.mxu0 0.0
        %3253 = vmatpush1.xpose.msra.mxu0 0.0
        %3254 = vmatprep.subr.mxu0 0.0
        %3255 = vmatpush1.xpose.msra.mxu0 0.0
        %3256 = vmatprep.subr.mxu0 0.0
        %3257 = vmatpush1.xpose.msra.mxu0 %v3224
        %3258 = vmatprep.subr.mxu0 0.0
        %3259 = vmatpush2.xpose.msra.mxu0 0.0
        %3260 = vmatprep.subr.mxu0 0.0
        %3261 = vmatpush2.xpose.msra.mxu0 0.0
        %3262 = vmatprep.subr.mxu0 0.0
        %3263 = vmatpush2.xpose.msra.mxu0 0.0
        %3264 = vmatprep.subr.mxu0 0.0
        %3265 = vmatpush2.xpose.msra.mxu0 0.0
        %3266 = vmatprep.subr.mxu0 0.0
        %3267 = vmatpush2.xpose.msra.mxu0 0.0
        %3268 = vmatprep.subr.mxu0 0.0
        %3269 = vmatpush2.xpose.msra.mxu0 0.0
        %3270 = vmatprep.subr.mxu0 0.0
        %3271 = vmatpush2.xpose.msra.mxu0 0.0
        %3272 = vmatprep.subr.mxu0 0.0
        %3273 = vmatpush2.xpose.msra.mxu0 0.0
        %3274 = vmatprep.subr.mxu0 0.0
        %3275 = vmatpush2.xpose.msra.mxu0 0.0
        %3276 = vmatprep.subr.mxu0 0.0
        %3277 = vmatpush2.xpose.msra.mxu0 0.0
        %3278 = vmatprep.subr.mxu0 0.0
        %3279 = vmatpush2.xpose.msra.mxu0 0.0
        %3280 = vmatprep.subr.mxu0 0.0
        %3281 = vmatpush2.xpose.msra.mxu0 0.0
        %3282 = vmatprep.subr.mxu0 0.0
        %3283 = vmatpush2.xpose.msra.mxu0 0.0
        %3284 = vmatprep.subr.mxu0 0.0
        %3285 = vmatpush2.xpose.msra.mxu0 0.0
        %3286 = vmatprep.subr.mxu0 0.0
        %3287 = vmatpush2.xpose.msra.mxu0 0.0
        %3288 = vmatprep.subr.mxu0 0.0
        %3289 = vmatpush2.xpose.msra.mxu0 0.0
        %3290 = vmatprep.mubr.f32.mxu0 0.0
        %3291 = vmatmul.mubr.f32.gmra.mxu0 %v3222
        %v3292 = vpop.f32.mrf.mxu0
        %v3293 = vadd.f32 %v524, %v3292
        %v3294 = vpop.f32.mrf.mxu0
        %3295 = vdwg.mxu0
        %v3296 = vsel %vm729, %v3293, -inf
        %3297 = vmax.xlane.f32.xlu0 %v3296
        %v3298 = vpop.xlane.xlu0 %3297
        %v3299 = vsub.f32 %v3293, %v3298
        %v3300 = vmul.f32 %v3299, 1.442695
        %v3301 = vpow.pop %v3300
        %v3302 = vsel %vm729, %v3301, 0.0
        %3303 = vadd.xlane.f32.xlu0 %v3302
        %v3304 = vpop.xlane.xlu0 %3303
        %v3305 = vrcp.pop %v3304
        %v3306 = vmul.f32 %v3301, %v3305
        %3308 = vrot.lane.b32.xlu0 %v3051, 112
        %v3309 = vpop.permute.xlu0 %3308
        %v3312 = vsel %vm729, %v3306, 0
        %3314 = vmatprep.subr.mxu0 0.0
        %3315 = vmatpush1.msra.mxu0 0.0
        %3316 = vmatprep.subr.mxu0 0.0
        %3317 = vmatpush1.msra.mxu0 0.0
        %3318 = vmatprep.subr.mxu0 0.0
        %3319 = vmatpush1.msra.mxu0 0.0
        %3320 = vmatprep.subr.mxu0 0.0
        %3321 = vmatpush1.msra.mxu0 0.0
        %3322 = vmatprep.subr.mxu0 0.0
        %3323 = vmatpush1.msra.mxu0 0.0
        %3324 = vmatprep.subr.mxu0 0.0
        %3325 = vmatpush1.msra.mxu0 0.0
        %3326 = vmatprep.subr.mxu0 0.0
        %3327 = vmatpush1.msra.mxu0 0.0
        %3328 = vmatprep.subr.mxu0 0.0
        %3329 = vmatpush1.msra.mxu0 0.0
        %3330 = vmatprep.subr.mxu0 0.0
        %3331 = vmatpush1.msra.mxu0 0.0
        %3332 = vmatprep.subr.mxu0 0.0
        %3333 = vmatpush1.msra.mxu0 0.0
        %3334 = vmatprep.subr.mxu0 0.0
        %3335 = vmatpush1.msra.mxu0 0.0
        %3336 = vmatprep.subr.mxu0 0.0
        %3337 = vmatpush1.msra.mxu0 0.0
        %3338 = vmatprep.subr.mxu0 0.0
        %3339 = vmatpush1.msra.mxu0 0.0
        %3340 = vmatprep.subr.mxu0 0.0
        %3341 = vmatpush1.msra.mxu0 0.0
        %3342 = vmatprep.subr.mxu0 0.0
        %3343 = vmatpush1.msra.mxu0 0.0
        %3344 = vmatprep.subr.mxu0 0.0
        %3345 = vmatpush1.msra.mxu0 %v3309
        %3346 = vmatprep.subr.mxu0 0.0
        %3347 = vmatpush2.msra.mxu0 0.0
        %3348 = vmatprep.subr.mxu0 0.0
        %3349 = vmatpush2.msra.mxu0 0.0
        %3350 = vmatprep.subr.mxu0 0.0
        %3351 = vmatpush2.msra.mxu0 0.0
        %3352 = vmatprep.subr.mxu0 0.0
        %3353 = vmatpush2.msra.mxu0 0.0
        %3354 = vmatprep.subr.mxu0 0.0
        %3355 = vmatpush2.msra.mxu0 0.0
        %3356 = vmatprep.subr.mxu0 0.0
        %3357 = vmatpush2.msra.mxu0 0.0
        %3358 = vmatprep.subr.mxu0 0.0
        %3359 = vmatpush2.msra.mxu0 0.0
        %3360 = vmatprep.subr.mxu0 0.0
        %3361 = vmatpush2.msra.mxu0 0.0
        %3362 = vmatprep.subr.mxu0 0.0
        %3363 = vmatpush2.msra.mxu0 0.0
        %3364 = vmatprep.subr.mxu0 0.0
        %3365 = vmatpush2.msra.mxu0 0.0
        %3366 = vmatprep.subr.mxu0 0.0
        %3367 = vmatpush2.msra.mxu0 0.0
        %3368 = vmatprep.subr.mxu0 0.0
        %3369 = vmatpush2.msra.mxu0 0.0
        %3370 = vmatprep.subr.mxu0 0.0
        %3371 = vmatpush2.msra.mxu0 0.0
        %3372 = vmatprep.subr.mxu0 0.0
        %3373 = vmatpush2.msra.mxu0 0.0
        %3374 = vmatprep.subr.mxu0 0.0
        %3375 = vmatpush2.msra.mxu0 0.0
        %3376 = vmatprep.subr.mxu0 0.0
        %3377 = vmatpush2.msra.mxu0 0.0
        %3378 = vmatprep.mubr.f32.mxu0 0.0
        %3379 = vmatmul.mubr.f32.gmra.mxu0 %v3312
        %v3380 = vpop.f32.mrf.mxu0
        %v3381 = vadd.f32 0.0, %v3380
        %v3382 = vpop.f32.mrf.mxu0
        %3383 = vdwg.mxu0
        %3384 = vrot.lane.b32.xlu0 %v3055, 96
        %v3385 = vpop.permute.xlu0 %3384
        %3386 = vrot.lane.b32.xlu0 %v3049, 32
        %v3387 = vpop.permute.xlu0 %3386
        %v3388 = vsel %vm653, %v3385, 0
        %v3390 = vsel %vm653, %v3387, 0
        %3392 = vmatprep.subr.mxu0 0.0
        %3393 = vmatpush1.xpose.msra.mxu0 0.0
        %3394 = vmatprep.subr.mxu0 0.0
        %3395 = vmatpush1.xpose.msra.mxu0 0.0
        %3396 = vmatprep.subr.mxu0 0.0
        %3397 = vmatpush1.xpose.msra.mxu0 0.0
        %3398 = vmatprep.subr.mxu0 0.0
        %3399 = vmatpush1.xpose.msra.mxu0 0.0
        %3400 = vmatprep.subr.mxu0 0.0
        %3401 = vmatpush1.xpose.msra.mxu0 0.0
        %3402 = vmatprep.subr.mxu0 0.0
        %3403 = vmatpush1.xpose.msra.mxu0 0.0
        %3404 = vmatprep.subr.mxu0 0.0
        %3405 = vmatpush1.xpose.msra.mxu0 0.0
        %3406 = vmatprep.subr.mxu0 0.0
        %3407 = vmatpush1.xpose.msra.mxu0 0.0
        %3408 = vmatprep.subr.mxu0 0.0
        %3409 = vmatpush1.xpose.msra.mxu0 0.0
        %3410 = vmatprep.subr.mxu0 0.0
        %3411 = vmatpush1.xpose.msra.mxu0 0.0
        %3412 = vmatprep.subr.mxu0 0.0
        %3413 = vmatpush1.xpose.msra.mxu0 0.0
        %3414 = vmatprep.subr.mxu0 0.0
        %3415 = vmatpush1.xpose.msra.mxu0 0.0
        %3416 = vmatprep.subr.mxu0 0.0
        %3417 = vmatpush1.xpose.msra.mxu0 0.0
        %3418 = vmatprep.subr.mxu0 0.0
        %3419 = vmatpush1.xpose.msra.mxu0 0.0
        %3420 = vmatprep.subr.mxu0 0.0
        %3421 = vmatpush1.xpose.msra.mxu0 0.0
        %3422 = vmatprep.subr.mxu0 0.0
        %3423 = vmatpush1.xpose.msra.mxu0 %v3390
        %3424 = vmatprep.subr.mxu0 0.0
        %3425 = vmatpush2.xpose.msra.mxu0 0.0
        %3426 = vmatprep.subr.mxu0 0.0
        %3427 = vmatpush2.xpose.msra.mxu0 0.0
        %3428 = vmatprep.subr.mxu0 0.0
        %3429 = vmatpush2.xpose.msra.mxu0 0.0
        %3430 = vmatprep.subr.mxu0 0.0
        %3431 = vmatpush2.xpose.msra.mxu0 0.0
        %3432 = vmatprep.subr.mxu0 0.0
        %3433 = vmatpush2.xpose.msra.mxu0 0.0
        %3434 = vmatprep.subr.mxu0 0.0
        %3435 = vmatpush2.xpose.msra.mxu0 0.0
        %3436 = vmatprep.subr.mxu0 0.0
        %3437 = vmatpush2.xpose.msra.mxu0 0.0
        %3438 = vmatprep.subr.mxu0 0.0
        %3439 = vmatpush2.xpose.msra.mxu0 0.0
        %3440 = vmatprep.subr.mxu0 0.0
        %3441 = vmatpush2.xpose.msra.mxu0 0.0
        %3442 = vmatprep.subr.mxu0 0.0
        %3443 = vmatpush2.xpose.msra.mxu0 0.0
        %3444 = vmatprep.subr.mxu0 0.0
        %3445 = vmatpush2.xpose.msra.mxu0 0.0
        %3446 = vmatprep.subr.mxu0 0.0
        %3447 = vmatpush2.xpose.msra.mxu0 0.0
        %3448 = vmatprep.subr.mxu0 0.0
        %3449 = vmatpush2.xpose.msra.mxu0 0.0
        %3450 = vmatprep.subr.mxu0 0.0
        %3451 = vmatpush2.xpose.msra.mxu0 0.0
        %3452 = vmatprep.subr.mxu0 0.0
        %3453 = vmatpush2.xpose.msra.mxu0 0.0
        %3454 = vmatprep.subr.mxu0 0.0
        %3455 = vmatpush2.xpose.msra.mxu0 0.0
        %3456 = vmatprep.mubr.f32.mxu0 0.0
        %3457 = vmatmul.mubr.f32.gmra.mxu0 %v3388
        %v3458 = vpop.f32.mrf.mxu0
        %v3459 = vadd.f32 %v524, %v3458
        %v3460 = vpop.f32.mrf.mxu0
        %3461 = vdwg.mxu0
        %v3462 = vsel %vm729, %v3459, -inf
        %3463 = vmax.xlane.f32.xlu0 %v3462
        %v3464 = vpop.xlane.xlu0 %3463
        %v3465 = vsub.f32 %v3459, %v3464
        %v3466 = vmul.f32 %v3465, 1.442695
        %v3467 = vpow.pop %v3466
        %v3468 = vsel %vm729, %v3467, 0.0
        %3469 = vadd.xlane.f32.xlu0 %v3468
        %v3470 = vpop.xlane.xlu0 %3469
        %v3471 = vrcp.pop %v3470
        %v3472 = vmul.f32 %v3467, %v3471
        %3473 = vrot.lane.b32.xlu0 %v3051, 96
        %v3474 = vpop.permute.xlu0 %3473
        %v3477 = vsel %vm729, %v3472, 0
        %3479 = vmatprep.subr.mxu0 0.0
        %3480 = vmatpush1.msra.mxu0 0.0
        %3481 = vmatprep.subr.mxu0 0.0
        %3482 = vmatpush1.msra.mxu0 0.0
        %3483 = vmatprep.subr.mxu0 0.0
        %3484 = vmatpush1.msra.mxu0 0.0
        %3485 = vmatprep.subr.mxu0 0.0
        %3486 = vmatpush1.msra.mxu0 0.0
        %3487 = vmatprep.subr.mxu0 0.0
        %3488 = vmatpush1.msra.mxu0 0.0
        %3489 = vmatprep.subr.mxu0 0.0
        %3490 = vmatpush1.msra.mxu0 0.0
        %3491 = vmatprep.subr.mxu0 0.0
        %3492 = vmatpush1.msra.mxu0 0.0
        %3493 = vmatprep.subr.mxu0 0.0
        %3494 = vmatpush1.msra.mxu0 0.0
        %3495 = vmatprep.subr.mxu0 0.0
        %3496 = vmatpush1.msra.mxu0 0.0
        %3497 = vmatprep.subr.mxu0 0.0
        %3498 = vmatpush1.msra.mxu0 0.0
        %3499 = vmatprep.subr.mxu0 0.0
        %3500 = vmatpush1.msra.mxu0 0.0
        %3501 = vmatprep.subr.mxu0 0.0
        %3502 = vmatpush1.msra.mxu0 0.0
        %3503 = vmatprep.subr.mxu0 0.0
        %3504 = vmatpush1.msra.mxu0 0.0
        %3505 = vmatprep.subr.mxu0 0.0
        %3506 = vmatpush1.msra.mxu0 0.0
        %3507 = vmatprep.subr.mxu0 0.0
        %3508 = vmatpush1.msra.mxu0 0.0
        %3509 = vmatprep.subr.mxu0 0.0
        %3510 = vmatpush1.msra.mxu0 %v3474
        %3511 = vmatprep.subr.mxu0 0.0
        %3512 = vmatpush2.msra.mxu0 0.0
        %3513 = vmatprep.subr.mxu0 0.0
        %3514 = vmatpush2.msra.mxu0 0.0
        %3515 = vmatprep.subr.mxu0 0.0
        %3516 = vmatpush2.msra.mxu0 0.0
        %3517 = vmatprep.subr.mxu0 0.0
        %3518 = vmatpush2.msra.mxu0 0.0
        %3519 = vmatprep.subr.mxu0 0.0
        %3520 = vmatpush2.msra.mxu0 0.0
        %3521 = vmatprep.subr.mxu0 0.0
        %3522 = vmatpush2.msra.mxu0 0.0
        %3523 = vmatprep.subr.mxu0 0.0
        %3524 = vmatpush2.msra.mxu0 0.0
        %3525 = vmatprep.subr.mxu0 0.0
        %3526 = vmatpush2.msra.mxu0 0.0
        %3527 = vmatprep.subr.mxu0 0.0
        %3528 = vmatpush2.msra.mxu0 0.0
        %3529 = vmatprep.subr.mxu0 0.0
        %3530 = vmatpush2.msra.mxu0 0.0
        %3531 = vmatprep.subr.mxu0 0.0
        %3532 = vmatpush2.msra.mxu0 0.0
        %3533 = vmatprep.subr.mxu0 0.0
        %3534 = vmatpush2.msra.mxu0 0.0
        %3535 = vmatprep.subr.mxu0 0.0
        %3536 = vmatpush2.msra.mxu0 0.0
        %3537 = vmatprep.subr.mxu0 0.0
        %3538 = vmatpush2.msra.mxu0 0.0
        %3539 = vmatprep.subr.mxu0 0.0
        %3540 = vmatpush2.msra.mxu0 0.0
        %3541 = vmatprep.subr.mxu0 0.0
        %3542 = vmatpush2.msra.mxu0 0.0
        %3543 = vmatprep.mubr.f32.mxu0 0.0
        %3544 = vmatmul.mubr.f32.gmra.mxu0 %v3477
        %v3545 = vpop.f32.mrf.mxu0
        %v3546 = vadd.f32 0.0, %v3545
        %v3547 = vpop.f32.mrf.mxu0
        %3548 = vdwg.mxu0
        %3549 = vrot.lane.b32.xlu0 %v3055, 80
        %v3550 = vpop.permute.xlu0 %3549
        %3551 = vrot.lane.b32.xlu0 %v3049, 16
        %v3552 = vpop.permute.xlu0 %3551
        %v3553 = vsel %vm653, %v3550, 0
        %v3555 = vsel %vm653, %v3552, 0
        %3557 = vmatprep.subr.mxu0 0.0
        %3558 = vmatpush1.xpose.msra.mxu0 0.0
        %3559 = vmatprep.subr.mxu0 0.0
        %3560 = vmatpush1.xpose.msra.mxu0 0.0
        %3561 = vmatprep.subr.mxu0 0.0
        %3562 = vmatpush1.xpose.msra.mxu0 0.0
        %3563 = vmatprep.subr.mxu0 0.0
        %3564 = vmatpush1.xpose.msra.mxu0 0.0
        %3565 = vmatprep.subr.mxu0 0.0
        %3566 = vmatpush1.xpose.msra.mxu0 0.0
        %3567 = vmatprep.subr.mxu0 0.0
        %3568 = vmatpush1.xpose.msra.mxu0 0.0
        %3569 = vmatprep.subr.mxu0 0.0
        %3570 = vmatpush1.xpose.msra.mxu0 0.0
        %3571 = vmatprep.subr.mxu0 0.0
        %3572 = vmatpush1.xpose.msra.mxu0 0.0
        %3573 = vmatprep.subr.mxu0 0.0
        %3574 = vmatpush1.xpose.msra.mxu0 0.0
        %3575 = vmatprep.subr.mxu0 0.0
        %3576 = vmatpush1.xpose.msra.mxu0 0.0
        %3577 = vmatprep.subr.mxu0 0.0
        %3578 = vmatpush1.xpose.msra.mxu0 0.0
        %3579 = vmatprep.subr.mxu0 0.0
        %3580 = vmatpush1.xpose.msra.mxu0 0.0
        %3581 = vmatprep.subr.mxu0 0.0
        %3582 = vmatpush1.xpose.msra.mxu0 0.0
        %3583 = vmatprep.subr.mxu0 0.0
        %3584 = vmatpush1.xpose.msra.mxu0 0.0
        %3585 = vmatprep.subr.mxu0 0.0
        %3586 = vmatpush1.xpose.msra.mxu0 0.0
        %3587 = vmatprep.subr.mxu0 0.0
        %3588 = vmatpush1.xpose.msra.mxu0 %v3555
        %3589 = vmatprep.subr.mxu0 0.0
        %3590 = vmatpush2.xpose.msra.mxu0 0.0
        %3591 = vmatprep.subr.mxu0 0.0
        %3592 = vmatpush2.xpose.msra.mxu0 0.0
        %3593 = vmatprep.subr.mxu0 0.0
        %3594 = vmatpush2.xpose.msra.mxu0 0.0
        %3595 = vmatprep.subr.mxu0 0.0
        %3596 = vmatpush2.xpose.msra.mxu0 0.0
        %3597 = vmatprep.subr.mxu0 0.0
        %3598 = vmatpush2.xpose.msra.mxu0 0.0
        %3599 = vmatprep.subr.mxu0 0.0
        %3600 = vmatpush2.xpose.msra.mxu0 0.0
        %3601 = vmatprep.subr.mxu0 0.0
        %3602 = vmatpush2.xpose.msra.mxu0 0.0
        %3603 = vmatprep.subr.mxu0 0.0
        %3604 = vmatpush2.xpose.msra.mxu0 0.0
        %3605 = vmatprep.subr.mxu0 0.0
        %3606 = vmatpush2.xpose.msra.mxu0 0.0
        %3607 = vmatprep.subr.mxu0 0.0
        %3608 = vmatpush2.xpose.msra.mxu0 0.0
        %3609 = vmatprep.subr.mxu0 0.0
        %3610 = vmatpush2.xpose.msra.mxu0 0.0
        %3611 = vmatprep.subr.mxu0 0.0
        %3612 = vmatpush2.xpose.msra.mxu0 0.0
        %3613 = vmatprep.subr.mxu0 0.0
        %3614 = vmatpush2.xpose.msra.mxu0 0.0
        %3615 = vmatprep.subr.mxu0 0.0
        %3616 = vmatpush2.xpose.msra.mxu0 0.0
        %3617 = vmatprep.subr.mxu0 0.0
        %3618 = vmatpush2.xpose.msra.mxu0 0.0
        %3619 = vmatprep.subr.mxu0 0.0
        %3620 = vmatpush2.xpose.msra.mxu0 0.0
        %3621 = vmatprep.mubr.f32.mxu0 0.0
        %3622 = vmatmul.mubr.f32.gmra.mxu0 %v3553
        %v3623 = vpop.f32.mrf.mxu0
        %v3624 = vadd.f32 %v524, %v3623
        %v3625 = vpop.f32.mrf.mxu0
        %3626 = vdwg.mxu0
        %v3627 = vsel %vm729, %v3624, -inf
        %3628 = vmax.xlane.f32.xlu0 %v3627
        %v3629 = vpop.xlane.xlu0 %3628
        %v3630 = vsub.f32 %v3624, %v3629
        %v3631 = vmul.f32 %v3630, 1.442695
        %v3632 = vpow.pop %v3631
        %v3633 = vsel %vm729, %v3632, 0.0
        %3634 = vadd.xlane.f32.xlu0 %v3633
        %v3635 = vpop.xlane.xlu0 %3634
        %v3636 = vrcp.pop %v3635
        %v3637 = vmul.f32 %v3632, %v3636
        %3638 = vrot.lane.b32.xlu0 %v3051, 80
        %v3639 = vpop.permute.xlu0 %3638
        %v3642 = vsel %vm729, %v3637, 0
        %3644 = vmatprep.subr.mxu0 0.0
        %3645 = vmatpush1.msra.mxu0 0.0
        %3646 = vmatprep.subr.mxu0 0.0
        %3647 = vmatpush1.msra.mxu0 0.0
        %3648 = vmatprep.subr.mxu0 0.0
        %3649 = vmatpush1.msra.mxu0 0.0
        %3650 = vmatprep.subr.mxu0 0.0
        %3651 = vmatpush1.msra.mxu0 0.0
        %3652 = vmatprep.subr.mxu0 0.0
        %3653 = vmatpush1.msra.mxu0 0.0
        %3654 = vmatprep.subr.mxu0 0.0
        %3655 = vmatpush1.msra.mxu0 0.0
        %3656 = vmatprep.subr.mxu0 0.0
        %3657 = vmatpush1.msra.mxu0 0.0
        %3658 = vmatprep.subr.mxu0 0.0
        %3659 = vmatpush1.msra.mxu0 0.0
        %3660 = vmatprep.subr.mxu0 0.0
        %3661 = vmatpush1.msra.mxu0 0.0
        %3662 = vmatprep.subr.mxu0 0.0
        %3663 = vmatpush1.msra.mxu0 0.0
        %3664 = vmatprep.subr.mxu0 0.0
        %3665 = vmatpush1.msra.mxu0 0.0
        %3666 = vmatprep.subr.mxu0 0.0
        %3667 = vmatpush1.msra.mxu0 0.0
        %3668 = vmatprep.subr.mxu0 0.0
        %3669 = vmatpush1.msra.mxu0 0.0
        %3670 = vmatprep.subr.mxu0 0.0
        %3671 = vmatpush1.msra.mxu0 0.0
        %3672 = vmatprep.subr.mxu0 0.0
        %3673 = vmatpush1.msra.mxu0 0.0
        %3674 = vmatprep.subr.mxu0 0.0
        %3675 = vmatpush1.msra.mxu0 %v3639
        %3676 = vmatprep.subr.mxu0 0.0
        %3677 = vmatpush2.msra.mxu0 0.0
        %3678 = vmatprep.subr.mxu0 0.0
        %3679 = vmatpush2.msra.mxu0 0.0
        %3680 = vmatprep.subr.mxu0 0.0
        %3681 = vmatpush2.msra.mxu0 0.0
        %3682 = vmatprep.subr.mxu0 0.0
        %3683 = vmatpush2.msra.mxu0 0.0
        %3684 = vmatprep.subr.mxu0 0.0
        %3685 = vmatpush2.msra.mxu0 0.0
        %3686 = vmatprep.subr.mxu0 0.0
        %3687 = vmatpush2.msra.mxu0 0.0
        %3688 = vmatprep.subr.mxu0 0.0
        %3689 = vmatpush2.msra.mxu0 0.0
        %3690 = vmatprep.subr.mxu0 0.0
        %3691 = vmatpush2.msra.mxu0 0.0
        %3692 = vmatprep.subr.mxu0 0.0
        %3693 = vmatpush2.msra.mxu0 0.0
        %3694 = vmatprep.subr.mxu0 0.0
        %3695 = vmatpush2.msra.mxu0 0.0
        %3696 = vmatprep.subr.mxu0 0.0
        %3697 = vmatpush2.msra.mxu0 0.0
        %3698 = vmatprep.subr.mxu0 0.0
        %3699 = vmatpush2.msra.mxu0 0.0
        %3700 = vmatprep.subr.mxu0 0.0
        %3701 = vmatpush2.msra.mxu0 0.0
        %3702 = vmatprep.subr.mxu0 0.0
        %3703 = vmatpush2.msra.mxu0 0.0
        %3704 = vmatprep.subr.mxu0 0.0
        %3705 = vmatpush2.msra.mxu0 0.0
        %3706 = vmatprep.subr.mxu0 0.0
        %3707 = vmatpush2.msra.mxu0 0.0
        %3708 = vmatprep.mubr.f32.mxu0 0.0
        %3709 = vmatmul.mubr.f32.gmra.mxu0 %v3642
        %v3710 = vpop.f32.mrf.mxu0
        %v3711 = vadd.f32 0.0, %v3710
        %v3712 = vpop.f32.mrf.mxu0
        %3713 = vdwg.mxu0
        %3715 = vrot.lane.b32.xlu0 %v3381, 16
        %v3716 = vpop.permute.xlu0 %3715
        %3719 = vrot.lane.b32.xlu0 %v3546, 32
        %v3720 = vpop.permute.xlu0 %3719
        %3723 = vrot.lane.b32.xlu0 %v3711, 48
        %v3724 = vpop.permute.xlu0 %3723
        %v3726 = vsel %vm653, %v3215, %v3716
        %v3727 = vsel %vm1323, %v3726, %v3720
        %v3728 = vsel %vm1325, %v3727, %v3724
        %v3729 = vpack.c.bf16 %v3728, %v3728
        %s3730 = scalar_lea.vmem %s4, 64
        %v3731 = vld [vmem:[%s3730] sm:$0xf]
        %v3732 = vld [vmem:[%s3730 + $0x4] sm:$0xf]
        %v3733 = vld [vmem:[%s3730 + $0x8] sm:$0xf]
        %v3734 = vld [vmem:[%s3730 + $0xc] sm:$0xf]
        %v3735 = vld [vmem:[%s3730 + $0x10] sm:$0xf]
        %v3736 = vld [vmem:[%s3730 + $0x14] sm:$0xf]
        %v3737 = vld [vmem:[%s3730 + $0x18] sm:$0xf]
        %v3738 = vld [vmem:[%s3730 + $0x1c] sm:$0xf]
        %s3739 = scalar_lea.vmem %s5, 2
        %v3740 = vld [vmem:[%s3739] sm:$0x1]
        %v3742 = vlaneseq
        %v3743 = vshrl.u32 %v3742, 7
        %v3744 = vsub.s32 0, %v3743
        %v3745 = vrot.slane %v3740, %v3744
        %v3755 = vunpack.c.l.b16 %v3731
        %v3756 = vunpack.c.l.b16 %v3732
        %v3757 = vunpack.c.l.b16 %v3733
        %v3758 = vunpack.c.l.b16 %v3734
        %v3759 = vunpack.c.l.b16 %v3735
        %v3760 = vunpack.c.l.b16 %v3736
        %v3761 = vunpack.c.l.b16 %v3737
        %v3762 = vunpack.c.l.b16 %v3738
        %v3763 = vpack.c.b16 %v3756, %v3755
        %v3764 = vpack.c.b16 %v3758, %v3757
        %v3765 = vpack.c.b16 %v3760, %v3759
        %v3766 = vpack.c.b16 %v3762, %v3761
        %v3772 = vsel %vm527, %v3729, 0
        %3774 = vmatprep.subr.bf16.mxu0 0
        %3775 = vmatpush1.bf16.msra.mxu0 0
        %3776 = vmatprep.subr.bf16.mxu0 0
        %3777 = vmatpush1.bf16.msra.mxu0 0
        %3778 = vmatprep.subr.bf16.mxu0 0
        %3779 = vmatpush1.bf16.msra.mxu0 0
        %3780 = vmatprep.subr.bf16.mxu0 0
        %3781 = vmatpush1.bf16.msra.mxu0 0
        %3782 = vmatprep.subr.bf16.mxu0 0
        %3783 = vmatpush1.bf16.msra.mxu0 %v3766
        %3784 = vmatprep.subr.bf16.mxu0 0
        %3785 = vmatpush1.bf16.msra.mxu0 %v3765
        %3786 = vmatprep.subr.bf16.mxu0 0
        %3787 = vmatpush1.bf16.msra.mxu0 %v3764
        %3788 = vmatprep.subr.bf16.mxu0 0
        %3789 = vmatpush1.bf16.msra.mxu0 %v3763
        %3790 = vmatprep.subr.bf16.mxu0 0
        %3791 = vmatpush2.bf16.msra.mxu0 0
        %3792 = vmatprep.subr.bf16.mxu0 0
        %3793 = vmatpush2.bf16.msra.mxu0 0
        %3794 = vmatprep.subr.bf16.mxu0 0
        %3795 = vmatpush2.bf16.msra.mxu0 0
        %3796 = vmatprep.subr.bf16.mxu0 0
        %3797 = vmatpush2.bf16.msra.mxu0 0
        %3798 = vmatprep.subr.bf16.mxu0 0
        %3799 = vmatpush2.bf16.msra.mxu0 0
        %3800 = vmatprep.subr.bf16.mxu0 0
        %3801 = vmatpush2.bf16.msra.mxu0 0
        %3802 = vmatprep.subr.bf16.mxu0 0
        %3803 = vmatpush2.bf16.msra.mxu0 0
        %3804 = vmatprep.subr.bf16.mxu0 0
        %3805 = vmatpush2.bf16.msra.mxu0 0
        %3806 = vmatprep.mubr.bf16.mxu0 0
        %3807 = vmatmul.mubr.bf16.gmra.mxu0 %v3772
        %v3808 = vpop.f32.mrf.mxu0
        %v3809 = vadd.f32 %v3745, %v3808
        %v3810 = vpop.f32.mrf.mxu0
        %v3811 = vpop.f32.mrf.mxu0
        %v3812 = vpop.f32.mrf.mxu0
        %3813 = vdwg.mxu0
        %v3814 = vadd.f32 %v2929, %v3809
        %s3815 = scalar_lea.vmem %s6, 2
        %v3816 = vld [vmem:[%s3815] sm:$0x1]
        %s3817 = scalar_lea.vmem %s7, 2
        %v3818 = vld [vmem:[%s3817] sm:$0x1]
        %v3819 = vsel %vm527, %v3814, 0.0
        %3820 = vadd.xlane.f32.xlu0 %v3819
        %v3821 = vpop.xlane.xlu0 %3820
        %v3822 = vmul.f32 %v3821, %v531
        %v3823 = vsub.f32 %v3814, %v3822
        %v3824 = vmul.f32 %v3823, %v3823
        %v3825 = vsel %vm527, %v3824, 0.0
        %3826 = vadd.xlane.f32.xlu0 %v3825
        %v3827 = vpop.xlane.xlu0 %3826
        %v3828 = vmul.f32 %v3827, %v531
        %v3829 = vadd.f32 %v3828, 1e-05
        %v3830 = vrsqrt.pop %v3829
        %v3831 = vmul.f32 %v3823, %v3830
        %v3833 = vlaneseq
        %v3834 = vshrl.u32 %v3833, 7
        %v3835 = vsub.s32 0, %v3834
        %v3836 = vrot.slane %v3816, %v3835
        %v3838 = vmul.f32 %v3831, %v3836
        %v3840 = vlaneseq
        %v3841 = vshrl.u32 %v3840, 7
        %v3842 = vsub.s32 0, %v3841
        %v3843 = vrot.slane %v3818, %v3842
        %v3845 = vadd.f32 %v3838, %v3843
        %v3846 = vpack.c.bf16 %v3845, %v3845
        %s3847 = scalar_lea.vmem %s8, 128
        %v3848 = vld [vmem:[%s3847] sm:$0xff]
        %v3849 = vld [vmem:[%s3847 + $0x8] sm:$0xff]
        %v3850 = vld [vmem:[%s3847 + $0x10] sm:$0xff]
        %v3851 = vld [vmem:[%s3847 + $0x18] sm:$0xff]
        %v3852 = vld [vmem:[%s3847 + $0x20] sm:$0xff]
        %v3853 = vld [vmem:[%s3847 + $0x28] sm:$0xff]
        %v3854 = vld [vmem:[%s3847 + $0x30] sm:$0xff]
        %v3855 = vld [vmem:[%s3847 + $0x38] sm:$0xff]
        %s3856 = scalar_lea.vmem %s9, 4
        %v3857 = vld [vmem:[%s3856] sm:$0x3]
        %v3859 = vlaneseq
        %v3860 = vshrl.u32 %v3859, 7
        %v3861 = vsub.s32 0, %v3860
        %v3862 = vrot.slane %v3857, %v3861
        %v3863 = vlaneseq
        %v3864 = vshrl.u32 %v3863, 7
        %v3865 = vsub.s32 1, %v3864
        %v3866 = vrot.slane %v3857, %v3865
        %v3877 = vunpack.c.l.b16 %v3848
        %v3878 = vunpack.c.h.b16 %v3848
        %v3879 = vunpack.c.l.b16 %v3849
        %v3880 = vunpack.c.h.b16 %v3849
        %v3881 = vunpack.c.l.b16 %v3850
        %v3882 = vunpack.c.h.b16 %v3850
        %v3883 = vunpack.c.l.b16 %v3851
        %v3884 = vunpack.c.h.b16 %v3851
        %v3885 = vunpack.c.l.b16 %v3852
        %v3886 = vunpack.c.h.b16 %v3852
        %v3887 = vunpack.c.l.b16 %v3853
        %v3888 = vunpack.c.h.b16 %v3853
        %v3889 = vunpack.c.l.b16 %v3854
        %v3890 = vunpack.c.h.b16 %v3854
        %v3891 = vunpack.c.l.b16 %v3855
        %v3892 = vunpack.c.h.b16 %v3855
        %v3893 = vpack.c.b16 %v3879, %v3877
        %v3894 = vpack.c.b16 %v3880, %v3878
        %v3895 = vpack.c.b16 %v3883, %v3881
        %v3896 = vpack.c.b16 %v3884, %v3882
        %v3897 = vpack.c.b16 %v3887, %v3885
        %v3898 = vpack.c.b16 %v3888, %v3886
        %v3899 = vpack.c.b16 %v3891, %v3889
        %v3900 = vpack.c.b16 %v3892, %v3890
        %v3910 = vsel %vm527, %v3846, 0
        %3912 = vmatprep.subr.bf16.mxu0 0
        %3913 = vmatpush1.bf16.msra.mxu0 0
        %3914 = vmatprep.subr.bf16.mxu0 0
        %3915 = vmatpush1.bf16.msra.mxu0 0
        %3916 = vmatprep.subr.bf16.mxu0 0
        %3917 = vmatpush1.bf16.msra.mxu0 0
        %3918 = vmatprep.subr.bf16.mxu0 0
        %3919 = vmatpush1.bf16.msra.mxu0 0
        %3920 = vmatprep.subr.bf16.mxu0 %v3900
        %3921 = vmatpush1.bf16.msra.mxu0 %v3899
        %3922 = vmatprep.subr.bf16.mxu0 %v3898
        %3923 = vmatpush1.bf16.msra.mxu0 %v3897
        %3924 = vmatprep.subr.bf16.mxu0 %v3896
        %3925 = vmatpush1.bf16.msra.mxu0 %v3895
        %3926 = vmatprep.subr.bf16.mxu0 %v3894
        %3927 = vmatpush1.bf16.msra.mxu0 %v3893
        %3928 = vmatprep.subr.bf16.mxu0 0
        %3929 = vmatpush2.bf16.msra.mxu0 0
        %3930 = vmatprep.subr.bf16.mxu0 0
        %3931 = vmatpush2.bf16.msra.mxu0 0
        %3932 = vmatprep.subr.bf16.mxu0 0
        %3933 = vmatpush2.bf16.msra.mxu0 0
        %3934 = vmatprep.subr.bf16.mxu0 0
        %3935 = vmatpush2.bf16.msra.mxu0 0
        %3936 = vmatprep.subr.bf16.mxu0 0
        %3937 = vmatpush2.bf16.msra.mxu0 0
        %3938 = vmatprep.subr.bf16.mxu0 0
        %3939 = vmatpush2.bf16.msra.mxu0 0
        %3940 = vmatprep.subr.bf16.mxu0 0
        %3941 = vmatpush2.bf16.msra.mxu0 0
        %3942 = vmatprep.subr.bf16.mxu0 0
        %3943 = vmatpush2.bf16.msra.mxu0 0
        %3944 = vmatprep.mubr.bf16.mxu0 0
        %3945 = vmatmul.mubr.bf16.gmra.mxu0 %v3910
        %v3946 = vpop.f32.mrf.mxu0
        %v3947 = vadd.f32 %v3862, %v3946
        %v3948 = vpop.f32.mrf.mxu0
        %v3949 = vadd.f32 %v3866, %v3948
        %v3950 = vpop.f32.mrf.mxu0
        %v3951 = vpop.f32.mrf.mxu0
        %3952 = vdwg.mxu0
        %v3953 = vmax.f32 %v3947, 0.0
        %v3954 = vmax.f32 %v3949, 0.0
        %v3955 = vpack.c.bf16 %v3953, %v3953
        %v3956 = vpack.c.bf16 %v3954, %v3954
        %s3957 = scalar_lea.vmem %s10, 256
        %v3958 = vld [vmem:[%s3957] sm:$0xf]
        %v3959 = vld [vmem:[%s3957 + $0x4] sm:$0xf]
        %v3960 = vld [vmem:[%s3957 + $0x8] sm:$0xf]
        %v3961 = vld [vmem:[%s3957 + $0xc] sm:$0xf]
        %v3962 = vld [vmem:[%s3957 + $0x10] sm:$0xf]
        %v3963 = vld [vmem:[%s3957 + $0x14] sm:$0xf]
        %v3964 = vld [vmem:[%s3957 + $0x18] sm:$0xf]
        %v3965 = vld [vmem:[%s3957 + $0x1c] sm:$0xf]
        %v3966 = vld [vmem:[%s3957 + $0x20] sm:$0xf]
        %v3967 = vld [vmem:[%s3957 + $0x24] sm:$0xf]
        %v3968 = vld [vmem:[%s3957 + $0x28] sm:$0xf]
        %v3969 = vld [vmem:[%s3957 + $0x2c] sm:$0xf]
        %v3970 = vld [vmem:[%s3957 + $0x30] sm:$0xf]
        %v3971 = vld [vmem:[%s3957 + $0x34] sm:$0xf]
        %v3972 = vld [vmem:[%s3957 + $0x38] sm:$0xf]
        %v3973 = vld [vmem:[%s3957 + $0x3c] sm:$0xf]
        %v3974 = vld [vmem:[%s3957 + $0x40] sm:$0xf]
        %v3975 = vld [vmem:[%s3957 + $0x44] sm:$0xf]
        %v3976 = vld [vmem:[%s3957 + $0x48] sm:$0xf]
        %v3977 = vld [vmem:[%s3957 + $0x4c] sm:$0xf]
        %v3978 = vld [vmem:[%s3957 + $0x50] sm:$0xf]
        %v3979 = vld [vmem:[%s3957 + $0x54] sm:$0xf]
        %v3980 = vld [vmem:[%s3957 + $0x58] sm:$0xf]
        %v3981 = vld [vmem:[%s3957 + $0x5c] sm:$0xf]
        %v3982 = vld [vmem:[%s3957 + $0x60] sm:$0xf]
        %v3983 = vld [vmem:[%s3957 + $0x64] sm:$0xf]
        %v3984 = vld [vmem:[%s3957 + $0x68] sm:$0xf]
        %v3985 = vld [vmem:[%s3957 + $0x6c] sm:$0xf]
        %v3986 = vld [vmem:[%s3957 + $0x70] sm:$0xf]
        %v3987 = vld [vmem:[%s3957 + $0x74] sm:$0xf]
        %v3988 = vld [vmem:[%s3957 + $0x78] sm:$0xf]
        %v3989 = vld [vmem:[%s3957 + $0x7c] sm:$0xf]
        %s3990 = scalar_lea.vmem %s11, 2
        %v3991 = vld [vmem:[%s3990] sm:$0x1]
        %v3993 = vlaneseq
        %v3994 = vshrl.u32 %v3993, 7
        %v3995 = vsub.s32 0, %v3994
        %v3996 = vrot.slane %v3991, %v3995
        %v4030 = vunpack.c.l.b16 %v3958
        %v4031 = vunpack.c.l.b16 %v3959
        %v4032 = vunpack.c.l.b16 %v3960
        %v4033 = vunpack.c.l.b16 %v3961
        %v4034 = vunpack.c.l.b16 %v3962
        %v4035 = vunpack.c.l.b16 %v3963
        %v4036 = vunpack.c.l.b16 %v3964
        %v4037 = vunpack.c.l.b16 %v3965
        %v4038 = vunpack.c.l.b16 %v3966
        %v4039 = vunpack.c.l.b16 %v3967
        %v4040 = vunpack.c.l.b16 %v3968
        %v4041 = vunpack.c.l.b16 %v3969
        %v4042 = vunpack.c.l.b16 %v3970
        %v4043 = vunpack.c.l.b16 %v3971
        %v4044 = vunpack.c.l.b16 %v3972
        %v4045 = vunpack.c.l.b16 %v3973
        %v4046 = vunpack.c.l.b16 %v3974
        %v4047 = vunpack.c.l.b16 %v3975
        %v4048 = vunpack.c.l.b16 %v3976
        %v4049 = vunpack.c.l.b16 %v3977
        %v4050 = vunpack.c.l.b16 %v3978
        %v4051 = vunpack.c.l.b16 %v3979
        %v4052 = vunpack.c.l.b16 %v3980
        %v4053 = vunpack.c.l.b16 %v3981
        %v4054 = vunpack.c.l.b16 %v3982
        %v4055 = vunpack.c.l.b16 %v3983
        %v4056 = vunpack.c.l.b16 %v3984
        %v4057 = vunpack.c.l.b16 %v3985
        %v4058 = vunpack.c.l.b16 %v3986
        %v4059 = vunpack.c.l.b16 %v3987
        %v4060 = vunpack.c.l.b16 %v3988
        %v4061 = vunpack.c.l.b16 %v3989
        %v4062 = vpack.c.b16 %v4031, %v4030
        %v4063 = vpack.c.b16 %v4033, %v4032
        %v4064 = vpack.c.b16 %v4035, %v4034
        %v4065 = vpack.c.b16 %v4037, %v4036
        %v4066 = vpack.c.b16 %v4039, %v4038
        %v4067 = vpack.c.b16 %v4041, %v4040
        %v4068 = vpack.c.b16 %v4043, %v4042
        %v4069 = vpack.c.b16 %v4045, %v4044
        %v4070 = vpack.c.b16 %v4047, %v4046
        %v4071 = vpack.c.b16 %v4049, %v4048
        %v4072 = vpack.c.b16 %v4051, %v4050
        %v4073 = vpack.c.b16 %v4053, %v4052
        %v4074 = vpack.c.b16 %v4055, %v4054
        %v4075 = vpack.c.b16 %v4057, %v4056
        %v4076 = vpack.c.b16 %v4059, %v4058
        %v4077 = vpack.c.b16 %v4061, %v4060
        %4094 = vmatprep.subr.bf16.mxu0 0
        %4095 = vmatpush1.bf16.msra.mxu0 %v4069
        %4096 = vmatprep.subr.bf16.mxu0 0
        %4097 = vmatpush1.bf16.msra.mxu0 %v4068
        %4098 = vmatprep.subr.bf16.mxu0 0
        %4099 = vmatpush1.bf16.msra.mxu0 %v4067
        %4100 = vmatprep.subr.bf16.mxu0 0
        %4101 = vmatpush1.bf16.msra.mxu0 %v4066
        %4102 = vmatprep.subr.bf16.mxu0 0
        %4103 = vmatpush1.bf16.msra.mxu0 %v4065
        %4104 = vmatprep.subr.bf16.mxu0 0
        %4105 = vmatpush1.bf16.msra.mxu0 %v4064
        %4106 = vmatprep.subr.bf16.mxu0 0
        %4107 = vmatpush1.bf16.msra.mxu0 %v4063
        %4108 = vmatprep.subr.bf16.mxu0 0
        %4109 = vmatpush1.bf16.msra.mxu0 %v4062
        %4110 = vmatprep.subr.bf16.mxu0 0
        %4111 = vmatpush2.bf16.msra.mxu0 %v4077
        %4112 = vmatprep.subr.bf16.mxu0 0
        %4113 = vmatpush2.bf16.msra.mxu0 %v4076
        %4114 = vmatprep.subr.bf16.mxu0 0
        %4115 = vmatpush2.bf16.msra.mxu0 %v4075
        %4116 = vmatprep.subr.bf16.mxu0 0
        %4117 = vmatpush2.bf16.msra.mxu0 %v4074
        %4118 = vmatprep.subr.bf16.mxu0 0
        %4119 = vmatpush2.bf16.msra.mxu0 %v4073
        %4120 = vmatprep.subr.bf16.mxu0 0
        %4121 = vmatpush2.bf16.msra.mxu0 %v4072
        %4122 = vmatprep.subr.bf16.mxu0 0
        %4123 = vmatpush2.bf16.msra.mxu0 %v4071
        %4124 = vmatprep.subr.bf16.mxu0 0
        %4125 = vmatpush2.bf16.msra.mxu0 %v4070
        %4126 = vmatprep.mubr.bf16.mxu0 %v3956
        %4127 = vmatmul.mubr.bf16.gmra.mxu0 %v3955
        %v4128 = vpop.f32.mrf.mxu0
        %v4129 = vadd.f32 %v3996, %v4128
        %v4130 = vpop.f32.mrf.mxu0
        %v4131 = vpop.f32.mrf.mxu0
        %v4132 = vpop.f32.mrf.mxu0
        %4133 = vdwg.mxu0
        %v4134 = vadd.f32 %v3814, %v4129
        %s4135 = scalar_lea.vmem %s1, 3
        %v4136 = vld [vmem:[%s4135] sm:$0x1]
        %s4137 = scalar_lea.vmem %s2, 3
        %v4138 = vld [vmem:[%s4137] sm:$0x1]
        %v4139 = vsel %vm527, %v4134, 0.0
        %4140 = vadd.xlane.f32.xlu0 %v4139
        %v4141 = vpop.xlane.xlu0 %4140
        %v4142 = vmul.f32 %v4141, %v531
        %v4143 = vsub.f32 %v4134, %v4142
        %v4144 = vmul.f32 %v4143, %v4143
        %v4145 = vsel %vm527, %v4144, 0.0
        %4146 = vadd.xlane.f32.xlu0 %v4145
        %v4147 = vpop.xlane.xlu0 %4146
        %v4148 = vmul.f32 %v4147, %v531
        %v4149 = vadd.f32 %v4148, 1e-05
        %v4150 = vrsqrt.pop %v4149
        %v4151 = vmul.f32 %v4143, %v4150
        %v4153 = vlaneseq
        %v4154 = vshrl.u32 %v4153, 7
        %v4155 = vsub.s32 0, %v4154
        %v4156 = vrot.slane %v4136, %v4155
        %v4158 = vmul.f32 %v4151, %v4156
        %v4160 = vlaneseq
        %v4161 = vshrl.u32 %v4160, 7
        %v4162 = vsub.s32 0, %v4161
        %v4163 = vrot.slane %v4138, %v4162
        %v4165 = vadd.f32 %v4158, %v4163
        %v4166 = vpack.c.bf16 %v4165, %v4165
        %s4167 = scalar_lea.vmem %s3, 192
        %v4168 = vld [vmem:[%s4167] sm:$0xff]
        %v4169 = vld [vmem:[%s4167 + $0x8] sm:$0xff]
        %v4170 = vld [vmem:[%s4167 + $0x10] sm:$0xff]
        %v4171 = vld [vmem:[%s4167 + $0x18] sm:$0xff]
        %v4172 = vld [vmem:[%s4167 + $0x20] sm:$0xff]
        %v4173 = vld [vmem:[%s4167 + $0x28] sm:$0xff]
        %v4174 = vld [vmem:[%s4167 + $0x30] sm:$0xff]
        %v4175 = vld [vmem:[%s4167 + $0x38] sm:$0xff]
        %v4184 = vunpack.c.l.b16 %v4168
        %v4185 = vunpack.c.h.b16 %v4168
        %v4186 = vunpack.c.l.b16 %v4169
        %v4187 = vunpack.c.h.b16 %v4169
        %v4188 = vunpack.c.l.b16 %v4170
        %v4189 = vunpack.c.h.b16 %v4170
        %v4190 = vunpack.c.l.b16 %v4171
        %v4191 = vunpack.c.h.b16 %v4171
        %v4192 = vunpack.c.l.b16 %v4172
        %v4193 = vunpack.c.h.b16 %v4172
        %v4194 = vunpack.c.l.b16 %v4173
        %v4195 = vunpack.c.h.b16 %v4173
        %v4196 = vunpack.c.l.b16 %v4174
        %v4197 = vunpack.c.h.b16 %v4174
        %v4198 = vunpack.c.l.b16 %v4175
        %v4199 = vunpack.c.h.b16 %v4175
        %v4200 = vpack.c.b16 %v4186, %v4184
        %v4201 = vpack.c.b16 %v4187, %v4185
        %v4202 = vpack.c.b16 %v4190, %v4188
        %v4203 = vpack.c.b16 %v4191, %v4189
        %v4204 = vpack.c.b16 %v4194, %v4192
        %v4205 = vpack.c.b16 %v4195, %v4193
        %v4206 = vpack.c.b16 %v4198, %v4196
        %v4207 = vpack.c.b16 %v4199, %v4197
        %v4217 = vsel %vm527, %v4166, 0
        %4219 = vmatprep.subr.bf16.mxu0 0
        %4220 = vmatpush1.bf16.msra.mxu0 0
        %4221 = vmatprep.subr.bf16.mxu0 0
        %4222 = vmatpush1.bf16.msra.mxu0 0
        %4223 = vmatprep.subr.bf16.mxu0 0
        %4224 = vmatpush1.bf16.msra.mxu0 0
        %4225 = vmatprep.subr.bf16.mxu0 0
        %4226 = vmatpush1.bf16.msra.mxu0 0
        %4227 = vmatprep.subr.bf16.mxu0 %v4207
        %4228 = vmatpush1.bf16.msra.mxu0 %v4206
        %4229 = vmatprep.subr.bf16.mxu0 %v4205
        %4230 = vmatpush1.bf16.msra.mxu0 %v4204
        %4231 = vmatprep.subr.bf16.mxu0 %v4203
        %4232 = vmatpush1.bf16.msra.mxu0 %v4202
        %4233 = vmatprep.subr.bf16.mxu0 %v4201
        %4234 = vmatpush1.bf16.msra.mxu0 %v4200
        %4235 = vmatprep.subr.bf16.mxu0 0
        %4236 = vmatpush2.bf16.msra.mxu0 0
        %4237 = vmatprep.subr.bf16.mxu0 0
        %4238 = vmatpush2.bf16.msra.mxu0 0
        %4239 = vmatprep.subr.bf16.mxu0 0
        %4240 = vmatpush2.bf16.msra.mxu0 0
        %4241 = vmatprep.subr.bf16.mxu0 0
        %4242 = vmatpush2.bf16.msra.mxu0 0
        %4243 = vmatprep.subr.bf16.mxu0 0
        %4244 = vmatpush2.bf16.msra.mxu0 0
        %4245 = vmatprep.subr.bf16.mxu0 0
        %4246 = vmatpush2.bf16.msra.mxu0 0
        %4247 = vmatprep.subr.bf16.mxu0 0
        %4248 = vmatpush2.bf16.msra.mxu0 0
        %4249 = vmatprep.subr.bf16.mxu0 0
        %4250 = vmatpush2.bf16.msra.mxu0 0
        %4251 = vmatprep.mubr.bf16.mxu0 0
        %4252 = vmatmul.mubr.bf16.gmra.mxu0 %v4217
        %v4253 = vpop.f32.mrf.mxu0
        %v4254 = vadd.f32 0.0, %v4253
        %v4255 = vpop.f32.mrf.mxu0
        %v4256 = vadd.f32 0.0, %v4255
        %v4257 = vpop.f32.mrf.mxu0
        %v4258 = vpop.f32.mrf.mxu0
        %4259 = vdwg.mxu0
        %v4260 = vmul.f32 %v4254, 0.25
        %4262 = vrot.lane.b32.xlu0 %v4254, 64
        %v4263 = vpop.permute.xlu0 %4262
        %v4265 = vsel %vm653, %v4260, 0
        %v4267 = vsel %vm653, %v4263, 0
        %4269 = vmatprep.subr.mxu0 0.0
        %4270 = vmatpush1.xpose.msra.mxu0 0.0
        %4271 = vmatprep.subr.mxu0 0.0
        %4272 = vmatpush1.xpose.msra.mxu0 0.0
        %4273 = vmatprep.subr.mxu0 0.0
        %4274 = vmatpush1.xpose.msra.mxu0 0.0
        %4275 = vmatprep.subr.mxu0 0.0
        %4276 = vmatpush1.xpose.msra.mxu0 0.0
        %4277 = vmatprep.subr.mxu0 0.0
        %4278 = vmatpush1.xpose.msra.mxu0 0.0
        %4279 = vmatprep.subr.mxu0 0.0
        %4280 = vmatpush1.xpose.msra.mxu0 0.0
        %4281 = vmatprep.subr.mxu0 0.0
        %4282 = vmatpush1.xpose.msra.mxu0 0.0
        %4283 = vmatprep.subr.mxu0 0.0
        %4284 = vmatpush1.xpose.msra.mxu0 0.0
        %4285 = vmatprep.subr.mxu0 0.0
        %4286 = vmatpush1.xpose.msra.mxu0 0.0
        %4287 = vmatprep.subr.mxu0 0.0
        %4288 = vmatpush1.xpose.msra.mxu0 0.0
        %4289 = vmatprep.subr.mxu0 0.0
        %4290 = vmatpush1.xpose.msra.mxu0 0.0
        %4291 = vmatprep.subr.mxu0 0.0
        %4292 = vmatpush1.xpose.msra.mxu0 0.0
        %4293 = vmatprep.subr.mxu0 0.0
        %4294 = vmatpush1.xpose.msra.mxu0 0.0
        %4295 = vmatprep.subr.mxu0 0.0
        %4296 = vmatpush1.xpose.msra.mxu0 0.0
        %4297 = vmatprep.subr.mxu0 0.0
        %4298 = vmatpush1.xpose.msra.mxu0 0.0
        %4299 = vmatprep.subr.mxu0 0.0
        %4300 = vmatpush1.xpose.msra.mxu0 %v4267
        %4301 = vmatprep.subr.mxu0 0.0
        %4302 = vmatpush2.xpose.msra.mxu0 0.0
        %4303 = vmatprep.subr.mxu0 0.0
        %4304 = vmatpush2.xpose.msra.mxu0 0.0
        %4305 = vmatprep.subr.mxu0 0.0
        %4306 = vmatpush2.xpose.msra.mxu0 0.0
        %4307 = vmatprep.subr.mxu0 0.0
        %4308 = vmatpush2.xpose.msra.mxu0 0.0
        %4309 = vmatprep.subr.mxu0 0.0
        %4310 = vmatpush2.xpose.msra.mxu0 0.0
        %4311 = vmatprep.subr.mxu0 0.0
        %4312 = vmatpush2.xpose.msra.mxu0 0.0
        %4313 = vmatprep.subr.mxu0 0.0
        %4314 = vmatpush2.xpose.msra.mxu0 0.0
        %4315 = vmatprep.subr.mxu0 0.0
        %4316 = vmatpush2.xpose.msra.mxu0 0.0
        %4317 = vmatprep.subr.mxu0 0.0
        %4318 = vmatpush2.xpose.msra.mxu0 0.0
        %4319 = vmatprep.subr.mxu0 0.0
        %4320 = vmatpush2.xpose.msra.mxu0 0.0
        %4321 = vmatprep.subr.mxu0 0.0
        %4322 = vmatpush2.xpose.msra.mxu0 0.0
        %4323 = vmatprep.subr.mxu0 0.0
        %4324 = vmatpush2.xpose.msra.mxu0 0.0
        %4325 = vmatprep.subr.mxu0 0.0
        %4326 = vmatpush2.xpose.msra.mxu0 0.0
        %4327 = vmatprep.subr.mxu0 0.0
        %4328 = vmatpush2.xpose.msra.mxu0 0.0
        %4329 = vmatprep.subr.mxu0 0.0
        %4330 = vmatpush2.xpose.msra.mxu0 0.0
        %4331 = vmatprep.subr.mxu0 0.0
        %4332 = vmatpush2.xpose.msra.mxu0 0.0
        %4333 = vmatprep.mubr.f32.mxu0 0.0
        %4334 = vmatmul.mubr.f32.gmra.mxu0 %v4265
        %v4335 = vpop.f32.mrf.mxu0
        %v4336 = vadd.f32 %v524, %v4335
        %v4337 = vpop.f32.mrf.mxu0
        %4338 = vdwg.mxu0
        %v4339 = vsel %vm729, %v4336, -inf
        %4340 = vmax.xlane.f32.xlu0 %v4339
        %v4341 = vpop.xlane.xlu0 %4340
        %v4342 = vsub.f32 %v4336, %v4341
        %v4343 = vmul.f32 %v4342, 1.442695
        %v4344 = vpow.pop %v4343
        %v4345 = vsel %vm729, %v4344, 0.0
        %4346 = vadd.xlane.f32.xlu0 %v4345
        %v4347 = vpop.xlane.xlu0 %4346
        %v4348 = vrcp.pop %v4347
        %v4349 = vmul.f32 %v4344, %v4348
        %v4351 = vsel %vm729, %v4349, 0
        %4353 = vmatprep.subr.mxu0 0.0
        %4354 = vmatpush1.msra.mxu0 0.0
        %4355 = vmatprep.subr.mxu0 0.0
        %4356 = vmatpush1.msra.mxu0 0.0
        %4357 = vmatprep.subr.mxu0 0.0
        %4358 = vmatpush1.msra.mxu0 0.0
        %4359 = vmatprep.subr.mxu0 0.0
        %4360 = vmatpush1.msra.mxu0 0.0
        %4361 = vmatprep.subr.mxu0 0.0
        %4362 = vmatpush1.msra.mxu0 0.0
        %4363 = vmatprep.subr.mxu0 0.0
        %4364 = vmatpush1.msra.mxu0 0.0
        %4365 = vmatprep.subr.mxu0 0.0
        %4366 = vmatpush1.msra.mxu0 0.0
        %4367 = vmatprep.subr.mxu0 0.0
        %4368 = vmatpush1.msra.mxu0 0.0
        %4369 = vmatprep.subr.mxu0 0.0
        %4370 = vmatpush1.msra.mxu0 0.0
        %4371 = vmatprep.subr.mxu0 0.0
        %4372 = vmatpush1.msra.mxu0 0.0
        %4373 = vmatprep.subr.mxu0 0.0
        %4374 = vmatpush1.msra.mxu0 0.0
        %4375 = vmatprep.subr.mxu0 0.0
        %4376 = vmatpush1.msra.mxu0 0.0
        %4377 = vmatprep.subr.mxu0 0.0
        %4378 = vmatpush1.msra.mxu0 0.0
        %4379 = vmatprep.subr.mxu0 0.0
        %4380 = vmatpush1.msra.mxu0 0.0
        %4381 = vmatprep.subr.mxu0 0.0
        %4382 = vmatpush1.msra.mxu0 0.0
        %4383 = vmatprep.subr.mxu0 0.0
        %4384 = vmatpush1.msra.mxu0 %v4256
        %4385 = vmatprep.subr.mxu0 0.0
        %4386 = vmatpush2.msra.mxu0 0.0
        %4387 = vmatprep.subr.mxu0 0.0
        %4388 = vmatpush2.msra.mxu0 0.0
        %4389 = vmatprep.subr.mxu0 0.0
        %4390 = vmatpush2.msra.mxu0 0.0
        %4391 = vmatprep.subr.mxu0 0.0
        %4392 = vmatpush2.msra.mxu0 0.0
        %4393 = vmatprep.subr.mxu0 0.0
        %4394 = vmatpush2.msra.mxu0 0.0
        %4395 = vmatprep.subr.mxu0 0.0
        %4396 = vmatpush2.msra.mxu0 0.0
        %4397 = vmatprep.subr.mxu0 0.0
        %4398 = vmatpush2.msra.mxu0 0.0
        %4399 = vmatprep.subr.mxu0 0.0
        %4400 = vmatpush2.msra.mxu0 0.0
        %4401 = vmatprep.subr.mxu0 0.0
        %4402 = vmatpush2.msra.mxu0 0.0
        %4403 = vmatprep.subr.mxu0 0.0
        %4404 = vmatpush2.msra.mxu0 0.0
        %4405 = vmatprep.subr.mxu0 0.0
        %4406 = vmatpush2.msra.mxu0 0.0
        %4407 = vmatprep.subr.mxu0 0.0
        %4408 = vmatpush2.msra.mxu0 0.0
        %4409 = vmatprep.subr.mxu0 0.0
        %4410 = vmatpush2.msra.mxu0 0.0
        %4411 = vmatprep.subr.mxu0 0.0
        %4412 = vmatpush2.msra.mxu0 0.0
        %4413 = vmatprep.subr.mxu0 0.0
        %4414 = vmatpush2.msra.mxu0 0.0
        %4415 = vmatprep.subr.mxu0 0.0
        %4416 = vmatpush2.msra.mxu0 0.0
        %4417 = vmatprep.mubr.f32.mxu0 0.0
        %4418 = vmatmul.mubr.f32.gmra.mxu0 %v4351
        %v4419 = vpop.f32.mrf.mxu0
        %v4420 = vadd.f32 0.0, %v4419
        %v4421 = vpop.f32.mrf.mxu0
        %4422 = vdwg.mxu0
        %4423 = vrot.lane.b32.xlu0 %v4260, 112
        %v4424 = vpop.permute.xlu0 %4423
        %4425 = vrot.lane.b32.xlu0 %v4254, 48
        %v4426 = vpop.permute.xlu0 %4425
        %v4427 = vsel %vm653, %v4424, 0
        %v4429 = vsel %vm653, %v4426, 0
        %4431 = vmatprep.subr.mxu0 0.0
        %4432 = vmatpush1.xpose.msra.mxu0 0.0
        %4433 = vmatprep.subr.mxu0 0.0
        %4434 = vmatpush1.xpose.msra.mxu0 0.0
        %4435 = vmatprep.subr.mxu0 0.0
        %4436 = vmatpush1.xpose.msra.mxu0 0.0
        %4437 = vmatprep.subr.mxu0 0.0
        %4438 = vmatpush1.xpose.msra.mxu0 0.0
        %4439 = vmatprep.subr.mxu0 0.0
        %4440 = vmatpush1.xpose.msra.mxu0 0.0
        %4441 = vmatprep.subr.mxu0 0.0
        %4442 = vmatpush1.xpose.msra.mxu0 0.0
        %4443 = vmatprep.subr.mxu0 0.0
        %4444 = vmatpush1.xpose.msra.mxu0 0.0
        %4445 = vmatprep.subr.mxu0 0.0
        %4446 = vmatpush1.xpose.msra.mxu0 0.0
        %4447 = vmatprep.subr.mxu0 0.0
        %4448 = vmatpush1.xpose.msra.mxu0 0.0
        %4449 = vmatprep.subr.mxu0 0.0
        %4450 = vmatpush1.xpose.msra.mxu0 0.0
        %4451 = vmatprep.subr.mxu0 0.0
        %4452 = vmatpush1.xpose.msra.mxu0 0.0
        %4453 = vmatprep.subr.mxu0 0.0
        %4454 = vmatpush1.xpose.msra.mxu0 0.0
        %4455 = vmatprep.subr.mxu0 0.0
        %4456 = vmatpush1.xpose.msra.mxu0 0.0
        %4457 = vmatprep.subr.mxu0 0.0
        %4458 = vmatpush1.xpose.msra.mxu0 0.0
        %4459 = vmatprep.subr.mxu0 0.0
        %4460 = vmatpush1.xpose.msra.mxu0 0.0
        %4461 = vmatprep.subr.mxu0 0.0
        %4462 = vmatpush1.xpose.msra.mxu0 %v4429
        %4463 = vmatprep.subr.mxu0 0.0
        %4464 = vmatpush2.xpose.msra.mxu0 0.0
        %4465 = vmatprep.subr.mxu0 0.0
        %4466 = vmatpush2.xpose.msra.mxu0 0.0
        %4467 = vmatprep.subr.mxu0 0.0
        %4468 = vmatpush2.xpose.msra.mxu0 0.0
        %4469 = vmatprep.subr.mxu0 0.0
        %4470 = vmatpush2.xpose.msra.mxu0 0.0
        %4471 = vmatprep.subr.mxu0 0.0
        %4472 = vmatpush2.xpose.msra.mxu0 0.0
        %4473 = vmatprep.subr.mxu0 0.0
        %4474 = vmatpush2.xpose.msra.mxu0 0.0
        %4475 = vmatprep.subr.mxu0 0.0
        %4476 = vmatpush2.xpose.msra.mxu0 0.0
        %4477 = vmatprep.subr.mxu0 0.0
        %4478 = vmatpush2.xpose.msra.mxu0 0.0
        %4479 = vmatprep.subr.mxu0 0.0
        %4480 = vmatpush2.xpose.msra.mxu0 0.0
        %4481 = vmatprep.subr.mxu0 0.0
        %4482 = vmatpush2.xpose.msra.mxu0 0.0
        %4483 = vmatprep.subr.mxu0 0.0
        %4484 = vmatpush2.xpose.msra.mxu0 0.0
        %4485 = vmatprep.subr.mxu0 0.0
        %4486 = vmatpush2.xpose.msra.mxu0 0.0
        %4487 = vmatprep.subr.mxu0 0.0
        %4488 = vmatpush2.xpose.msra.mxu0 0.0
        %4489 = vmatprep.subr.mxu0 0.0
        %4490 = vmatpush2.xpose.msra.mxu0 0.0
        %4491 = vmatprep.subr.mxu0 0.0
        %4492 = vmatpush2.xpose.msra.mxu0 0.0
        %4493 = vmatprep.subr.mxu0 0.0
        %4494 = vmatpush2.xpose.msra.mxu0 0.0
        %4495 = vmatprep.mubr.f32.mxu0 0.0
        %4496 = vmatmul.mubr.f32.gmra.mxu0 %v4427
        %v4497 = vpop.f32.mrf.mxu0
        %v4498 = vadd.f32 %v524, %v4497
        %v4499 = vpop.f32.mrf.mxu0
        %4500 = vdwg.mxu0
        %v4501 = vsel %vm729, %v4498, -inf
        %4502 = vmax.xlane.f32.xlu0 %v4501
        %v4503 = vpop.xlane.xlu0 %4502
        %v4504 = vsub.f32 %v4498, %v4503
        %v4505 = vmul.f32 %v4504, 1.442695
        %v4506 = vpow.pop %v4505
        %v4507 = vsel %vm729, %v4506, 0.0
        %4508 = vadd.xlane.f32.xlu0 %v4507
        %v4509 = vpop.xlane.xlu0 %4508
        %v4510 = vrcp.pop %v4509
        %v4511 = vmul.f32 %v4506, %v4510
        %4513 = vrot.lane.b32.xlu0 %v4256, 112
        %v4514 = vpop.permute.xlu0 %4513
        %v4517 = vsel %vm729, %v4511, 0
        %4519 = vmatprep.subr.mxu0 0.0
        %4520 = vmatpush1.msra.mxu0 0.0
        %4521 = vmatprep.subr.mxu0 0.0
        %4522 = vmatpush1.msra.mxu0 0.0
        %4523 = vmatprep.subr.mxu0 0.0
        %4524 = vmatpush1.msra.mxu0 0.0
        %4525 = vmatprep.subr.mxu0 0.0
        %4526 = vmatpush1.msra.mxu0 0.0
        %4527 = vmatprep.subr.mxu0 0.0
        %4528 = vmatpush1.msra.mxu0 0.0
        %4529 = vmatprep.subr.mxu0 0.0
        %4530 = vmatpush1.msra.mxu0 0.0
        %4531 = vmatprep.subr.mxu0 0.0
        %4532 = vmatpush1.msra.mxu0 0.0
        %4533 = vmatprep.subr.mxu0 0.0
        %4534 = vmatpush1.msra.mxu0 0.0
        %4535 = vmatprep.subr.mxu0 0.0
        %4536 = vmatpush1.msra.mxu0 0.0
        %4537 = vmatprep.subr.mxu0 0.0
        %4538 = vmatpush1.msra.mxu0 0.0
        %4539 = vmatprep.subr.mxu0 0.0
        %4540 = vmatpush1.msra.mxu0 0.0
        %4541 = vmatprep.subr.mxu0 0.0
        %4542 = vmatpush1.msra.mxu0 0.0
        %4543 = vmatprep.subr.mxu0 0.0
        %4544 = vmatpush1.msra.mxu0 0.0
        %4545 = vmatprep.subr.mxu0 0.0
        %4546 = vmatpush1.msra.mxu0 0.0
        %4547 = vmatprep.subr.mxu0 0.0
        %4548 = vmatpush1.msra.mxu0 0.0
        %4549 = vmatprep.subr.mxu0 0.0
        %4550 = vmatpush1.msra.mxu0 %v4514
        %4551 = vmatprep.subr.mxu0 0.0
        %4552 = vmatpush2.msra.mxu0 0.0
        %4553 = vmatprep.subr.mxu0 0.0
        %4554 = vmatpush2.msra.mxu0 0.0
        %4555 = vmatprep.subr.mxu0 0.0
        %4556 = vmatpush2.msra.mxu0 0.0
        %4557 = vmatprep.subr.mxu0 0.0
        %4558 = vmatpush2.msra.mxu0 0.0
        %4559 = vmatprep.subr.mxu0 0.0
        %4560 = vmatpush2.msra.mxu0 0.0
        %4561 = vmatprep.subr.mxu0 0.0
        %4562 = vmatpush2.msra.mxu0 0.0
        %4563 = vmatprep.subr.mxu0 0.0
        %4564 = vmatpush2.msra.mxu0 0.0
        %4565 = vmatprep.subr.mxu0 0.0
        %4566 = vmatpush2.msra.mxu0 0.0
        %4567 = vmatprep.subr.mxu0 0.0
        %4568 = vmatpush2.msra.mxu0 0.0
        %4569 = vmatprep.subr.mxu0 0.0
        %4570 = vmatpush2.msra.mxu0 0.0
        %4571 = vmatprep.subr.mxu0 0.0
        %4572 = vmatpush2.msra.mxu0 0.0
        %4573 = vmatprep.subr.mxu0 0.0
        %4574 = vmatpush2.msra.mxu0 0.0
        %4575 = vmatprep.subr.mxu0 0.0
        %4576 = vmatpush2.msra.mxu0 0.0
        %4577 = vmatprep.subr.mxu0 0.0
        %4578 = vmatpush2.msra.mxu0 0.0
        %4579 = vmatprep.subr.mxu0 0.0
        %4580 = vmatpush2.msra.mxu0 0.0
        %4581 = vmatprep.subr.mxu0 0.0
        %4582 = vmatpush2.msra.mxu0 0.0
        %4583 = vmatprep.mubr.f32.mxu0 0.0
        %4584 = vmatmul.mubr.f32.gmra.mxu0 %v4517
        %v4585 = vpop.f32.mrf.mxu0
        %v4586 = vadd.f32 0.0, %v4585
        %v4587 = vpop.f32.mrf.mxu0
        %4588 = vdwg.mxu0
        %4589 = vrot.lane.b32.xlu0 %v4260, 96
        %v4590 = vpop.permute.xlu0 %4589
        %4591 = vrot.lane.b32.xlu0 %v4254, 32
        %v4592 = vpop.permute.xlu0 %4591
        %v4593 = vsel %vm653, %v4590, 0
        %v4595 = vsel %vm653, %v4592, 0
        %4597 = vmatprep.subr.mxu0 0.0
        %4598 = vmatpush1.xpose.msra.mxu0 0.0
        %4599 = vmatprep.subr.mxu0 0.0
        %4600 = vmatpush1.xpose.msra.mxu0 0.0
        %4601 = vmatprep.subr.mxu0 0.0
        %4602 = vmatpush1.xpose.msra.mxu0 0.0
        %4603 = vmatprep.subr.mxu0 0.0
        %4604 = vmatpush1.xpose.msra.mxu0 0.0
        %4605 = vmatprep.subr.mxu0 0.0
        %4606 = vmatpush1.xpose.msra.mxu0 0.0
        %4607 = vmatprep.subr.mxu0 0.0
        %4608 = vmatpush1.xpose.msra.mxu0 0.0
        %4609 = vmatprep.subr.mxu0 0.0
        %4610 = vmatpush1.xpose.msra.mxu0 0.0
        %4611 = vmatprep.subr.mxu0 0.0
        %4612 = vmatpush1.xpose.msra.mxu0 0.0
        %4613 = vmatprep.subr.mxu0 0.0
        %4614 = vmatpush1.xpose.msra.mxu0 0.0
        %4615 = vmatprep.subr.mxu0 0.0
        %4616 = vmatpush1.xpose.msra.mxu0 0.0
        %4617 = vmatprep.subr.mxu0 0.0
        %4618 = vmatpush1.xpose.msra.mxu0 0.0
        %4619 = vmatprep.subr.mxu0 0.0
        %4620 = vmatpush1.xpose.msra.mxu0 0.0
        %4621 = vmatprep.subr.mxu0 0.0
        %4622 = vmatpush1.xpose.msra.mxu0 0.0
        %4623 = vmatprep.subr.mxu0 0.0
        %4624 = vmatpush1.xpose.msra.mxu0 0.0
        %4625 = vmatprep.subr.mxu0 0.0
        %4626 = vmatpush1.xpose.msra.mxu0 0.0
        %4627 = vmatprep.subr.mxu0 0.0
        %4628 = vmatpush1.xpose.msra.mxu0 %v4595
        %4629 = vmatprep.subr.mxu0 0.0
        %4630 = vmatpush2.xpose.msra.mxu0 0.0
        %4631 = vmatprep.subr.mxu0 0.0
        %4632 = vmatpush2.xpose.msra.mxu0 0.0
        %4633 = vmatprep.subr.mxu0 0.0
        %4634 = vmatpush2.xpose.msra.mxu0 0.0
        %4635 = vmatprep.subr.mxu0 0.0
        %4636 = vmatpush2.xpose.msra.mxu0 0.0
        %4637 = vmatprep.subr.mxu0 0.0
        %4638 = vmatpush2.xpose.msra.mxu0 0.0
        %4639 = vmatprep.subr.mxu0 0.0
        %4640 = vmatpush2.xpose.msra.mxu0 0.0
        %4641 = vmatprep.subr.mxu0 0.0
        %4642 = vmatpush2.xpose.msra.mxu0 0.0
        %4643 = vmatprep.subr.mxu0 0.0
        %4644 = vmatpush2.xpose.msra.mxu0 0.0
        %4645 = vmatprep.subr.mxu0 0.0
        %4646 = vmatpush2.xpose.msra.mxu0 0.0
        %4647 = vmatprep.subr.mxu0 0.0
        %4648 = vmatpush2.xpose.msra.mxu0 0.0
        %4649 = vmatprep.subr.mxu0 0.0
        %4650 = vmatpush2.xpose.msra.mxu0 0.0
        %4651 = vmatprep.subr.mxu0 0.0
        %4652 = vmatpush2.xpose.msra.mxu0 0.0
        %4653 = vmatprep.subr.mxu0 0.0
        %4654 = vmatpush2.xpose.msra.mxu0 0.0
        %4655 = vmatprep.subr.mxu0 0.0
        %4656 = vmatpush2.xpose.msra.mxu0 0.0
        %4657 = vmatprep.subr.mxu0 0.0
        %4658 = vmatpush2.xpose.msra.mxu0 0.0
        %4659 = vmatprep.subr.mxu0 0.0
        %4660 = vmatpush2.xpose.msra.mxu0 0.0
        %4661 = vmatprep.mubr.f32.mxu0 0.0
        %4662 = vmatmul.mubr.f32.gmra.mxu0 %v4593
        %v4663 = vpop.f32.mrf.mxu0
        %v4664 = vadd.f32 %v524, %v4663
        %v4665 = vpop.f32.mrf.mxu0
        %4666 = vdwg.mxu0
        %v4667 = vsel %vm729, %v4664, -inf
        %4668 = vmax.xlane.f32.xlu0 %v4667
        %v4669 = vpop.xlane.xlu0 %4668
        %v4670 = vsub.f32 %v4664, %v4669
        %v4671 = vmul.f32 %v4670, 1.442695
        %v4672 = vpow.pop %v4671
        %v4673 = vsel %vm729, %v4672, 0.0
        %4674 = vadd.xlane.f32.xlu0 %v4673
        %v4675 = vpop.xlane.xlu0 %4674
        %v4676 = vrcp.pop %v4675
        %v4677 = vmul.f32 %v4672, %v4676
        %4678 = vrot.lane.b32.xlu0 %v4256, 96
        %v4679 = vpop.permute.xlu0 %4678
        %v4682 = vsel %vm729, %v4677, 0
        %4684 = vmatprep.subr.mxu0 0.0
        %4685 = vmatpush1.msra.mxu0 0.0
        %4686 = vmatprep.subr.mxu0 0.0
        %4687 = vmatpush1.msra.mxu0 0.0
        %4688 = vmatprep.subr.mxu0 0.0
        %4689 = vmatpush1.msra.mxu0 0.0
        %4690 = vmatprep.subr.mxu0 0.0
        %4691 = vmatpush1.msra.mxu0 0.0
        %4692 = vmatprep.subr.mxu0 0.0
        %4693 = vmatpush1.msra.mxu0 0.0
        %4694 = vmatprep.subr.mxu0 0.0
        %4695 = vmatpush1.msra.mxu0 0.0
        %4696 = vmatprep.subr.mxu0 0.0
        %4697 = vmatpush1.msra.mxu0 0.0
        %4698 = vmatprep.subr.mxu0 0.0
        %4699 = vmatpush1.msra.mxu0 0.0
        %4700 = vmatprep.subr.mxu0 0.0
        %4701 = vmatpush1.msra.mxu0 0.0
        %4702 = vmatprep.subr.mxu0 0.0
        %4703 = vmatpush1.msra.mxu0 0.0
        %4704 = vmatprep.subr.mxu0 0.0
        %4705 = vmatpush1.msra.mxu0 0.0
        %4706 = vmatprep.subr.mxu0 0.0
        %4707 = vmatpush1.msra.mxu0 0.0
        %4708 = vmatprep.subr.mxu0 0.0
        %4709 = vmatpush1.msra.mxu0 0.0
        %4710 = vmatprep.subr.mxu0 0.0
        %4711 = vmatpush1.msra.mxu0 0.0
        %4712 = vmatprep.subr.mxu0 0.0
        %4713 = vmatpush1.msra.mxu0 0.0
        %4714 = vmatprep.subr.mxu0 0.0
        %4715 = vmatpush1.msra.mxu0 %v4679
        %4716 = vmatprep.subr.mxu0 0.0
        %4717 = vmatpush2.msra.mxu0 0.0
        %4718 = vmatprep.subr.mxu0 0.0
        %4719 = vmatpush2.msra.mxu0 0.0
        %4720 = vmatprep.subr.mxu0 0.0
        %4721 = vmatpush2.msra.mxu0 0.0
        %4722 = vmatprep.subr.mxu0 0.0
        %4723 = vmatpush2.msra.mxu0 0.0
        %4724 = vmatprep.subr.mxu0 0.0
        %4725 = vmatpush2.msra.mxu0 0.0
        %4726 = vmatprep.subr.mxu0 0.0
        %4727 = vmatpush2.msra.mxu0 0.0
        %4728 = vmatprep.subr.mxu0 0.0
        %4729 = vmatpush2.msra.mxu0 0.0
        %4730 = vmatprep.subr.mxu0 0.0
        %4731 = vmatpush2.msra.mxu0 0.0
        %4732 = vmatprep.subr.mxu0 0.0
        %4733 = vmatpush2.msra.mxu0 0.0
        %4734 = vmatprep.subr.mxu0 0.0
        %4735 = vmatpush2.msra.mxu0 0.0
        %4736 = vmatprep.subr.mxu0 0.0
        %4737 = vmatpush2.msra.mxu0 0.0
        %4738 = vmatprep.subr.mxu0 0.0
        %4739 = vmatpush2.msra.mxu0 0.0
        %4740 = vmatprep.subr.mxu0 0.0
        %4741 = vmatpush2.msra.mxu0 0.0
        %4742 = vmatprep.subr.mxu0 0.0
        %4743 = vmatpush2.msra.mxu0 0.0
        %4744 = vmatprep.subr.mxu0 0.0
        %4745 = vmatpush2.msra.mxu0 0.0
        %4746 = vmatprep.subr.mxu0 0.0
        %4747 = vmatpush2.msra.mxu0 0.0
        %4748 = vmatprep.mubr.f32.mxu0 0.0
        %4749 = vmatmul.mubr.f32.gmra.mxu0 %v4682
        %v4750 = vpop.f32.mrf.mxu0
        %v4751 = vadd.f32 0.0, %v4750
        %v4752 = vpop.f32.mrf.mxu0
        %4753 = vdwg.mxu0
        %4754 = vrot.lane.b32.xlu0 %v4260, 80
        %v4755 = vpop.permute.xlu0 %4754
        %4756 = vrot.lane.b32.xlu0 %v4254, 16
        %v4757 = vpop.permute.xlu0 %4756
        %v4758 = vsel %vm653, %v4755, 0
        %v4760 = vsel %vm653, %v4757, 0
        %4762 = vmatprep.subr.mxu0 0.0
        %4763 = vmatpush1.xpose.msra.mxu0 0.0
        %4764 = vmatprep.subr.mxu0 0.0
        %4765 = vmatpush1.xpose.msra.mxu0 0.0
        %4766 = vmatprep.subr.mxu0 0.0
        %4767 = vmatpush1.xpose.msra.mxu0 0.0
        %4768 = vmatprep.subr.mxu0 0.0
        %4769 = vmatpush1.xpose.msra.mxu0 0.0
        %4770 = vmatprep.subr.mxu0 0.0
        %4771 = vmatpush1.xpose.msra.mxu0 0.0
        %4772 = vmatprep.subr.mxu0 0.0
        %4773 = vmatpush1.xpose.msra.mxu0 0.0
        %4774 = vmatprep.subr.mxu0 0.0
        %4775 = vmatpush1.xpose.msra.mxu0 0.0
        %4776 = vmatprep.subr.mxu0 0.0
        %4777 = vmatpush1.xpose.msra.mxu0 0.0
        %4778 = vmatprep.subr.mxu0 0.0
        %4779 = vmatpush1.xpose.msra.mxu0 0.0
        %4780 = vmatprep.subr.mxu0 0.0
        %4781 = vmatpush1.xpose.msra.mxu0 0.0
        %4782 = vmatprep.subr.mxu0 0.0
        %4783 = vmatpush1.xpose.msra.mxu0 0.0
        %4784 = vmatprep.subr.mxu0 0.0
        %4785 = vmatpush1.xpose.msra.mxu0 0.0
        %4786 = vmatprep.subr.mxu0 0.0
        %4787 = vmatpush1.xpose.msra.mxu0 0.0
        %4788 = vmatprep.subr.mxu0 0.0
        %4789 = vmatpush1.xpose.msra.mxu0 0.0
        %4790 = vmatprep.subr.mxu0 0.0
        %4791 = vmatpush1.xpose.msra.mxu0 0.0
        %4792 = vmatprep.subr.mxu0 0.0
        %4793 = vmatpush1.xpose.msra.mxu0 %v4760
        %4794 = vmatprep.subr.mxu0 0.0
        %4795 = vmatpush2.xpose.msra.mxu0 0.0
        %4796 = vmatprep.subr.mxu0 0.0
        %4797 = vmatpush2.xpose.msra.mxu0 0.0
        %4798 = vmatprep.subr.mxu0 0.0
        %4799 = vmatpush2.xpose.msra.mxu0 0.0
        %4800 = vmatprep.subr.mxu0 0.0
        %4801 = vmatpush2.xpose.msra.mxu0 0.0
        %4802 = vmatprep.subr.mxu0 0.0
        %4803 = vmatpush2.xpose.msra.mxu0 0.0
        %4804 = vmatprep.subr.mxu0 0.0
        %4805 = vmatpush2.xpose.msra.mxu0 0.0
        %4806 = vmatprep.subr.mxu0 0.0
        %4807 = vmatpush2.xpose.msra.mxu0 0.0
        %4808 = vmatprep.subr.mxu0 0.0
        %4809 = vmatpush2.xpose.msra.mxu0 0.0
        %4810 = vmatprep.subr.mxu0 0.0
        %4811 = vmatpush2.xpose.msra.mxu0 0.0
        %4812 = vmatprep.subr.mxu0 0.0
        %4813 = vmatpush2.xpose.msra.mxu0 0.0
        %4814 = vmatprep.subr.mxu0 0.0
        %4815 = vmatpush2.xpose.msra.mxu0 0.0
        %4816 = vmatprep.subr.mxu0 0.0
        %4817 = vmatpush2.xpose.msra.mxu0 0.0
        %4818 = vmatprep.subr.mxu0 0.0
        %4819 = vmatpush2.xpose.msra.mxu0 0.0
        %4820 = vmatprep.subr.mxu0 0.0
        %4821 = vmatpush2.xpose.msra.mxu0 0.0
        %4822 = vmatprep.subr.mxu0 0.0
        %4823 = vmatpush2.xpose.msra.mxu0 0.0
        %4824 = vmatprep.subr.mxu0 0.0
        %4825 = vmatpush2.xpose.msra.mxu0 0.0
        %4826 = vmatprep.mubr.f32.mxu0 0.0
        %4827 = vmatmul.mubr.f32.gmra.mxu0 %v4758
        %v4828 = vpop.f32.mrf.mxu0
        %v4829 = vadd.f32 %v524, %v4828
        %v4830 = vpop.f32.mrf.mxu0
        %4831 = vdwg.mxu0
        %v4832 = vsel %vm729, %v4829, -inf
        %4833 = vmax.xlane.f32.xlu0 %v4832
        %v4834 = vpop.xlane.xlu0 %4833
        %v4835 = vsub.f32 %v4829, %v4834
        %v4836 = vmul.f32 %v4835, 1.442695
        %v4837 = vpow.pop %v4836
        %v4838 = vsel %vm729, %v4837, 0.0
        %4839 = vadd.xlane.f32.xlu0 %v4838
        %v4840 = vpop.xlane.xlu0 %4839
        %v4841 = vrcp.pop %v4840
        %v4842 = vmul.f32 %v4837, %v4841
        %4843 = vrot.lane.b32.xlu0 %v4256, 80
        %v4844 = vpop.permute.xlu0 %4843
        %v4847 = vsel %vm729, %v4842, 0
        %4849 = vmatprep.subr.mxu0 0.0
        %4850 = vmatpush1.msra.mxu0 0.0
        %4851 = vmatprep.subr.mxu0 0.0
        %4852 = vmatpush1.msra.mxu0 0.0
        %4853 = vmatprep.subr.mxu0 0.0
        %4854 = vmatpush1.msra.mxu0 0.0
        %4855 = vmatprep.subr.mxu0 0.0
        %4856 = vmatpush1.msra.mxu0 0.0
        %4857 = vmatprep.subr.mxu0 0.0
        %4858 = vmatpush1.msra.mxu0 0.0
        %4859 = vmatprep.subr.mxu0 0.0
        %4860 = vmatpush1.msra.mxu0 0.0
        %4861 = vmatprep.subr.mxu0 0.0
        %4862 = vmatpush1.msra.mxu0 0.0
        %4863 = vmatprep.subr.mxu0 0.0
        %4864 = vmatpush1.msra.mxu0 0.0
        %4865 = vmatprep.subr.mxu0 0.0
        %4866 = vmatpush1.msra.mxu0 0.0
        %4867 = vmatprep.subr.mxu0 0.0
        %4868 = vmatpush1.msra.mxu0 0.0
        %4869 = vmatprep.subr.mxu0 0.0
        %4870 = vmatpush1.msra.mxu0 0.0
        %4871 = vmatprep.subr.mxu0 0.0
        %4872 = vmatpush1.msra.mxu0 0.0
        %4873 = vmatprep.subr.mxu0 0.0
        %4874 = vmatpush1.msra.mxu0 0.0
        %4875 = vmatprep.subr.mxu0 0.0
        %4876 = vmatpush1.msra.mxu0 0.0
        %4877 = vmatprep.subr.mxu0 0.0
        %4878 = vmatpush1.msra.mxu0 0.0
        %4879 = vmatprep.subr.mxu0 0.0
        %4880 = vmatpush1.msra.mxu0 %v4844
        %4881 = vmatprep.subr.mxu0 0.0
        %4882 = vmatpush2.msra.mxu0 0.0
        %4883 = vmatprep.subr.mxu0 0.0
        %4884 = vmatpush2.msra.mxu0 0.0
        %4885 = vmatprep.subr.mxu0 0.0
        %4886 = vmatpush2.msra.mxu0 0.0
        %4887 = vmatprep.subr.mxu0 0.0
        %4888 = vmatpush2.msra.mxu0 0.0
        %4889 = vmatprep.subr.mxu0 0.0
        %4890 = vmatpush2.msra.mxu0 0.0
        %4891 = vmatprep.subr.mxu0 0.0
        %4892 = vmatpush2.msra.mxu0 0.0
        %4893 = vmatprep.subr.mxu0 0.0
        %4894 = vmatpush2.msra.mxu0 0.0
        %4895 = vmatprep.subr.mxu0 0.0
        %4896 = vmatpush2.msra.mxu0 0.0
        %4897 = vmatprep.subr.mxu0 0.0
        %4898 = vmatpush2.msra.mxu0 0.0
        %4899 = vmatprep.subr.mxu0 0.0
        %4900 = vmatpush2.msra.mxu0 0.0
        %4901 = vmatprep.subr.mxu0 0.0
        %4902 = vmatpush2.msra.mxu0 0.0
        %4903 = vmatprep.subr.mxu0 0.0
        %4904 = vmatpush2.msra.mxu0 0.0
        %4905 = vmatprep.subr.mxu0 0.0
        %4906 = vmatpush2.msra.mxu0 0.0
        %4907 = vmatprep.subr.mxu0 0.0
        %4908 = vmatpush2.msra.mxu0 0.0
        %4909 = vmatprep.subr.mxu0 0.0
        %4910 = vmatpush2.msra.mxu0 0.0
        %4911 = vmatprep.subr.mxu0 0.0
        %4912 = vmatpush2.msra.mxu0 0.0
        %4913 = vmatprep.mubr.f32.mxu0 0.0
        %4914 = vmatmul.mubr.f32.gmra.mxu0 %v4847
        %v4915 = vpop.f32.mrf.mxu0
        %v4916 = vadd.f32 0.0, %v4915
        %v4917 = vpop.f32.mrf.mxu0
        %4918 = vdwg.mxu0
        %4920 = vrot.lane.b32.xlu0 %v4586, 16
        %v4921 = vpop.permute.xlu0 %4920
        %4924 = vrot.lane.b32.xlu0 %v4751, 32
        %v4925 = vpop.permute.xlu0 %4924
        %4928 = vrot.lane.b32.xlu0 %v4916, 48
        %v4929 = vpop.permute.xlu0 %4928
        %v4931 = vsel %vm653, %v4420, %v4921
        %v4932 = vsel %vm1323, %v4931, %v4925
        %v4933 = vsel %vm1325, %v4932, %v4929
        %v4934 = vpack.c.bf16 %v4933, %v4933
        %s4935 = scalar_lea.vmem %s4, 96
        %v4936 = vld [vmem:[%s4935] sm:$0xf]
        %v4937 = vld [vmem:[%s4935 + $0x4] sm:$0xf]
        %v4938 = vld [vmem:[%s4935 + $0x8] sm:$0xf]
        %v4939 = vld [vmem:[%s4935 + $0xc] sm:$0xf]
        %v4940 = vld [vmem:[%s4935 + $0x10] sm:$0xf]
        %v4941 = vld [vmem:[%s4935 + $0x14] sm:$0xf]
        %v4942 = vld [vmem:[%s4935 + $0x18] sm:$0xf]
        %v4943 = vld [vmem:[%s4935 + $0x1c] sm:$0xf]
        %s4944 = scalar_lea.vmem %s5, 3
        %v4945 = vld [vmem:[%s4944] sm:$0x1]
        %v4947 = vlaneseq
        %v4948 = vshrl.u32 %v4947, 7
        %v4949 = vsub.s32 0, %v4948
        %v4950 = vrot.slane %v4945, %v4949
        %v4960 = vunpack.c.l.b16 %v4936
        %v4961 = vunpack.c.l.b16 %v4937
        %v4962 = vunpack.c.l.b16 %v4938
        %v4963 = vunpack.c.l.b16 %v4939
        %v4964 = vunpack.c.l.b16 %v4940
        %v4965 = vunpack.c.l.b16 %v4941
        %v4966 = vunpack.c.l.b16 %v4942
        %v4967 = vunpack.c.l.b16 %v4943
        %v4968 = vpack.c.b16 %v4961, %v4960
        %v4969 = vpack.c.b16 %v4963, %v4962
        %v4970 = vpack.c.b16 %v4965, %v4964
        %v4971 = vpack.c.b16 %v4967, %v4966
        %v4977 = vsel %vm527, %v4934, 0
        %4979 = vmatprep.subr.bf16.mxu0 0
        %4980 = vmatpush1.bf16.msra.mxu0 0
        %4981 = vmatprep.subr.bf16.mxu0 0
        %4982 = vmatpush1.bf16.msra.mxu0 0
        %4983 = vmatprep.subr.bf16.mxu0 0
        %4984 = vmatpush1.bf16.msra.mxu0 0
        %4985 = vmatprep.subr.bf16.mxu0 0
        %4986 = vmatpush1.bf16.msra.mxu0 0
        %4987 = vmatprep.subr.bf16.mxu0 0
        %4988 = vmatpush1.bf16.msra.mxu0 %v4971
        %4989 = vmatprep.subr.bf16.mxu0 0
        %4990 = vmatpush1.bf16.msra.mxu0 %v4970
        %4991 = vmatprep.subr.bf16.mxu0 0
        %4992 = vmatpush1.bf16.msra.mxu0 %v4969
        %4993 = vmatprep.subr.bf16.mxu0 0
        %4994 = vmatpush1.bf16.msra.mxu0 %v4968
        %4995 = vmatprep.subr.bf16.mxu0 0
        %4996 = vmatpush2.bf16.msra.mxu0 0
        %4997 = vmatprep.subr.bf16.mxu0 0
        %4998 = vmatpush2.bf16.msra.mxu0 0
        %4999 = vmatprep.subr.bf16.mxu0 0
        %5000 = vmatpush2.bf16.msra.mxu0 0
        %5001 = vmatprep.subr.bf16.mxu0 0
        %5002 = vmatpush2.bf16.msra.mxu0 0
        %5003 = vmatprep.subr.bf16.mxu0 0
        %5004 = vmatpush2.bf16.msra.mxu0 0
        %5005 = vmatprep.subr.bf16.mxu0 0
        %5006 = vmatpush2.bf16.msra.mxu0 0
        %5007 = vmatprep.subr.bf16.mxu0 0
        %5008 = vmatpush2.bf16.msra.mxu0 0
        %5009 = vmatprep.subr.bf16.mxu0 0
        %5010 = vmatpush2.bf16.msra.mxu0 0
        %5011 = vmatprep.mubr.bf16.mxu0 0
        %5012 = vmatmul.mubr.bf16.gmra.mxu0 %v4977
        %v5013 = vpop.f32.mrf.mxu0
        %v5014 = vadd.f32 %v4950, %v5013
        %v5015 = vpop.f32.mrf.mxu0
        %v5016 = vpop.f32.mrf.mxu0
        %v5017 = vpop.f32.mrf.mxu0
        %5018 = vdwg.mxu0
        %v5019 = vadd.f32 %v4134, %v5014
        %s5020 = scalar_lea.vmem %s6, 3
        %v5021 = vld [vmem:[%s5020] sm:$0x1]
        %s5022 = scalar_lea.vmem %s7, 3
        %v5023 = vld [vmem:[%s5022] sm:$0x1]
        %v5024 = vsel %vm527, %v5019, 0.0
        %5025 = vadd.xlane.f32.xlu0 %v5024
        %v5026 = vpop.xlane.xlu0 %5025
        %v5027 = vmul.f32 %v5026, %v531
        %v5028 = vsub.f32 %v5019, %v5027
        %v5029 = vmul.f32 %v5028, %v5028
        %v5030 = vsel %vm527, %v5029, 0.0
        %5031 = vadd.xlane.f32.xlu0 %v5030
        %v5032 = vpop.xlane.xlu0 %5031
        %v5033 = vmul.f32 %v5032, %v531
        %v5034 = vadd.f32 %v5033, 1e-05
        %v5035 = vrsqrt.pop %v5034
        %v5036 = vmul.f32 %v5028, %v5035
        %v5038 = vlaneseq
        %v5039 = vshrl.u32 %v5038, 7
        %v5040 = vsub.s32 0, %v5039
        %v5041 = vrot.slane %v5021, %v5040
        %v5043 = vmul.f32 %v5036, %v5041
        %v5045 = vlaneseq
        %v5046 = vshrl.u32 %v5045, 7
        %v5047 = vsub.s32 0, %v5046
        %v5048 = vrot.slane %v5023, %v5047
        %v5050 = vadd.f32 %v5043, %v5048
        %v5051 = vpack.c.bf16 %v5050, %v5050
        %s5052 = scalar_lea.vmem %s8, 192
        %v5053 = vld [vmem:[%s5052] sm:$0xff]
        %v5054 = vld [vmem:[%s5052 + $0x8] sm:$0xff]
        %v5055 = vld [vmem:[%s5052 + $0x10] sm:$0xff]
        %v5056 = vld [vmem:[%s5052 + $0x18] sm:$0xff]
        %v5057 = vld [vmem:[%s5052 + $0x20] sm:$0xff]
        %v5058 = vld [vmem:[%s5052 + $0x28] sm:$0xff]
        %v5059 = vld [vmem:[%s5052 + $0x30] sm:$0xff]
        %v5060 = vld [vmem:[%s5052 + $0x38] sm:$0xff]
        %s5061 = scalar_lea.vmem %s9, 6
        %v5062 = vld [vmem:[%s5061] sm:$0x3]
        %v5064 = vlaneseq
        %v5065 = vshrl.u32 %v5064, 7
        %v5066 = vsub.s32 0, %v5065
        %v5067 = vrot.slane %v5062, %v5066
        %v5068 = vlaneseq
        %v5069 = vshrl.u32 %v5068, 7
        %v5070 = vsub.s32 1, %v5069
        %v5071 = vrot.slane %v5062, %v5070
        %v5082 = vunpack.c.l.b16 %v5053
        %v5083 = vunpack.c.h.b16 %v5053
        %v5084 = vunpack.c.l.b16 %v5054
        %v5085 = vunpack.c.h.b16 %v5054
        %v5086 = vunpack.c.l.b16 %v5055
        %v5087 = vunpack.c.h.b16 %v5055
        %v5088 = vunpack.c.l.b16 %v5056
        %v5089 = vunpack.c.h.b16 %v5056
        %v5090 = vunpack.c.l.b16 %v5057
        %v5091 = vunpack.c.h.b16 %v5057
        %v5092 = vunpack.c.l.b16 %v5058
        %v5093 = vunpack.c.h.b16 %v5058
        %v5094 = vunpack.c.l.b16 %v5059
        %v5095 = vunpack.c.h.b16 %v5059
        %v5096 = vunpack.c.l.b16 %v5060
        %v5097 = vunpack.c.h.b16 %v5060
        %v5098 = vpack.c.b16 %v5084, %v5082
        %v5099 = vpack.c.b16 %v5085, %v5083
        %v5100 = vpack.c.b16 %v5088, %v5086
        %v5101 = vpack.c.b16 %v5089, %v5087
        %v5102 = vpack.c.b16 %v5092, %v5090
        %v5103 = vpack.c.b16 %v5093, %v5091
        %v5104 = vpack.c.b16 %v5096, %v5094
        %v5105 = vpack.c.b16 %v5097, %v5095
        %v5115 = vsel %vm527, %v5051, 0
        %5117 = vmatprep.subr.bf16.mxu0 0
        %5118 = vmatpush1.bf16.msra.mxu0 0
        %5119 = vmatprep.subr.bf16.mxu0 0
        %5120 = vmatpush1.bf16.msra.mxu0 0
        %5121 = vmatprep.subr.bf16.mxu0 0
        %5122 = vmatpush1.bf16.msra.mxu0 0
        %5123 = vmatprep.subr.bf16.mxu0 0
        %5124 = vmatpush1.bf16.msra.mxu0 0
        %5125 = vmatprep.subr.bf16.mxu0 %v5105
        %5126 = vmatpush1.bf16.msra.mxu0 %v5104
        %5127 = vmatprep.subr.bf16.mxu0 %v5103
        %5128 = vmatpush1.bf16.msra.mxu0 %v5102
        %5129 = vmatprep.subr.bf16.mxu0 %v5101
        %5130 = vmatpush1.bf16.msra.mxu0 %v5100
        %5131 = vmatprep.subr.bf16.mxu0 %v5099
        %5132 = vmatpush1.bf16.msra.mxu0 %v5098
        %5133 = vmatprep.subr.bf16.mxu0 0
        %5134 = vmatpush2.bf16.msra.mxu0 0
        %5135 = vmatprep.subr.bf16.mxu0 0
        %5136 = vmatpush2.bf16.msra.mxu0 0
        %5137 = vmatprep.subr.bf16.mxu0 0
        %5138 = vmatpush2.bf16.msra.mxu0 0
        %5139 = vmatprep.subr.bf16.mxu0 0
        %5140 = vmatpush2.bf16.msra.mxu0 0
        %5141 = vmatprep.subr.bf16.mxu0 0
        %5142 = vmatpush2.bf16.msra.mxu0 0
        %5143 = vmatprep.subr.bf16.mxu0 0
        %5144 = vmatpush2.bf16.msra.mxu0 0
        %5145 = vmatprep.subr.bf16.mxu0 0
        %5146 = vmatpush2.bf16.msra.mxu0 0
        %5147 = vmatprep.subr.bf16.mxu0 0
        %5148 = vmatpush2.bf16.msra.mxu0 0
        %5149 = vmatprep.mubr.bf16.mxu0 0
        %5150 = vmatmul.mubr.bf16.gmra.mxu0 %v5115
        %v5151 = vpop.f32.mrf.mxu0
        %v5152 = vadd.f32 %v5067, %v5151
        %v5153 = vpop.f32.mrf.mxu0
        %v5154 = vadd.f32 %v5071, %v5153
        %v5155 = vpop.f32.mrf.mxu0
        %v5156 = vpop.f32.mrf.mxu0
        %5157 = vdwg.mxu0
        %v5158 = vmax.f32 %v5152, 0.0
        %v5159 = vmax.f32 %v5154, 0.0
        %v5160 = vpack.c.bf16 %v5158, %v5158
        %v5161 = vpack.c.bf16 %v5159, %v5159
        %s5162 = scalar_lea.vmem %s10, 384
        %v5163 = vld [vmem:[%s5162] sm:$0xf]
        %v5164 = vld [vmem:[%s5162 + $0x4] sm:$0xf]
        %v5165 = vld [vmem:[%s5162 + $0x8] sm:$0xf]
        %v5166 = vld [vmem:[%s5162 + $0xc] sm:$0xf]
        %v5167 = vld [vmem:[%s5162 + $0x10] sm:$0xf]
        %v5168 = vld [vmem:[%s5162 + $0x14] sm:$0xf]
        %v5169 = vld [vmem:[%s5162 + $0x18] sm:$0xf]
        %v5170 = vld [vmem:[%s5162 + $0x1c] sm:$0xf]
        %v5171 = vld [vmem:[%s5162 + $0x20] sm:$0xf]
        %v5172 = vld [vmem:[%s5162 + $0x24] sm:$0xf]
        %v5173 = vld [vmem:[%s5162 + $0x28] sm:$0xf]
        %v5174 = vld [vmem:[%s5162 + $0x2c] sm:$0xf]
        %v5175 = vld [vmem:[%s5162 + $0x30] sm:$0xf]
        %v5176 = vld [vmem:[%s5162 + $0x34] sm:$0xf]
        %v5177 = vld [vmem:[%s5162 + $0x38] sm:$0xf]
        %v5178 = vld [vmem:[%s5162 + $0x3c] sm:$0xf]
        %v5179 = vld [vmem:[%s5162 + $0x40] sm:$0xf]
        %v5180 = vld [vmem:[%s5162 + $0x44] sm:$0xf]
        %v5181 = vld [vmem:[%s5162 + $0x48] sm:$0xf]
        %v5182 = vld [vmem:[%s5162 + $0x4c] sm:$0xf]
        %v5183 = vld [vmem:[%s5162 + $0x50] sm:$0xf]
        %v5184 = vld [vmem:[%s5162 + $0x54] sm:$0xf]
        %v5185 = vld [vmem:[%s5162 + $0x58] sm:$0xf]
        %v5186 = vld [vmem:[%s5162 + $0x5c] sm:$0xf]
        %v5187 = vld [vmem:[%s5162 + $0x60] sm:$0xf]
        %v5188 = vld [vmem:[%s5162 + $0x64] sm:$0xf]
        %v5189 = vld [vmem:[%s5162 + $0x68] sm:$0xf]
        %v5190 = vld [vmem:[%s5162 + $0x6c] sm:$0xf]
        %v5191 = vld [vmem:[%s5162 + $0x70] sm:$0xf]
        %v5192 = vld [vmem:[%s5162 + $0x74] sm:$0xf]
        %v5193 = vld [vmem:[%s5162 + $0x78] sm:$0xf]
        %v5194 = vld [vmem:[%s5162 + $0x7c] sm:$0xf]
        %s5195 = scalar_lea.vmem %s11, 3
        %v5196 = vld [vmem:[%s5195] sm:$0x1]
        %v5198 = vlaneseq
        %v5199 = vshrl.u32 %v5198, 7
        %v5200 = vsub.s32 0, %v5199
        %v5201 = vrot.slane %v5196, %v5200
        %v5235 = vunpack.c.l.b16 %v5163
        %v5236 = vunpack.c.l.b16 %v5164
        %v5237 = vunpack.c.l.b16 %v5165
        %v5238 = vunpack.c.l.b16 %v5166
        %v5239 = vunpack.c.l.b16 %v5167
        %v5240 = vunpack.c.l.b16 %v5168
        %v5241 = vunpack.c.l.b16 %v5169
        %v5242 = vunpack.c.l.b16 %v5170
        %v5243 = vunpack.c.l.b16 %v5171
        %v5244 = vunpack.c.l.b16 %v5172
        %v5245 = vunpack.c.l.b16 %v5173
        %v5246 = vunpack.c.l.b16 %v5174
        %v5247 = vunpack.c.l.b16 %v5175
        %v5248 = vunpack.c.l.b16 %v5176
        %v5249 = vunpack.c.l.b16 %v5177
        %v5250 = vunpack.c.l.b16 %v5178
        %v5251 = vunpack.c.l.b16 %v5179
        %v5252 = vunpack.c.l.b16 %v5180
        %v5253 = vunpack.c.l.b16 %v5181
        %v5254 = vunpack.c.l.b16 %v5182
        %v5255 = vunpack.c.l.b16 %v5183
        %v5256 = vunpack.c.l.b16 %v5184
        %v5257 = vunpack.c.l.b16 %v5185
        %v5258 = vunpack.c.l.b16 %v5186
        %v5259 = vunpack.c.l.b16 %v5187
        %v5260 = vunpack.c.l.b16 %v5188
        %v5261 = vunpack.c.l.b16 %v5189
        %v5262 = vunpack.c.l.b16 %v5190
        %v5263 = vunpack.c.l.b16 %v5191
        %v5264 = vunpack.c.l.b16 %v5192
        %v5265 = vunpack.c.l.b16 %v5193
        %v5266 = vunpack.c.l.b16 %v5194
        %v5267 = vpack.c.b16 %v5236, %v5235
        %v5268 = vpack.c.b16 %v5238, %v5237
        %v5269 = vpack.c.b16 %v5240, %v5239
        %v5270 = vpack.c.b16 %v5242, %v5241
        %v5271 = vpack.c.b16 %v5244, %v5243
        %v5272 = vpack.c.b16 %v5246, %v5245
        %v5273 = vpack.c.b16 %v5248, %v5247
        %v5274 = vpack.c.b16 %v5250, %v5249
        %v5275 = vpack.c.b16 %v5252, %v5251
        %v5276 = vpack.c.b16 %v5254, %v5253
        %v5277 = vpack.c.b16 %v5256, %v5255
        %v5278 = vpack.c.b16 %v5258, %v5257
        %v5279 = vpack.c.b16 %v5260, %v5259
        %v5280 = vpack.c.b16 %v5262, %v5261
        %v5281 = vpack.c.b16 %v5264, %v5263
        %v5282 = vpack.c.b16 %v5266, %v5265
        %5299 = vmatprep.subr.bf16.mxu0 0
        %5300 = vmatpush1.bf16.msra.mxu0 %v5274
        %5301 = vmatprep.subr.bf16.mxu0 0
        %5302 = vmatpush1.bf16.msra.mxu0 %v5273
        %5303 = vmatprep.subr.bf16.mxu0 0
        %5304 = vmatpush1.bf16.msra.mxu0 %v5272
        %5305 = vmatprep.subr.bf16.mxu0 0
        %5306 = vmatpush1.bf16.msra.mxu0 %v5271
        %5307 = vmatprep.subr.bf16.mxu0 0
        %5308 = vmatpush1.bf16.msra.mxu0 %v5270
        %5309 = vmatprep.subr.bf16.mxu0 0
        %5310 = vmatpush1.bf16.msra.mxu0 %v5269
        %5311 = vmatprep.subr.bf16.mxu0 0
        %5312 = vmatpush1.bf16.msra.mxu0 %v5268
        %5313 = vmatprep.subr.bf16.mxu0 0
        %5314 = vmatpush1.bf16.msra.mxu0 %v5267
        %5315 = vmatprep.subr.bf16.mxu0 0
        %5316 = vmatpush2.bf16.msra.mxu0 %v5282
        %5317 = vmatprep.subr.bf16.mxu0 0
        %5318 = vmatpush2.bf16.msra.mxu0 %v5281
        %5319 = vmatprep.subr.bf16.mxu0 0
        %5320 = vmatpush2.bf16.msra.mxu0 %v5280
        %5321 = vmatprep.subr.bf16.mxu0 0
        %5322 = vmatpush2.bf16.msra.mxu0 %v5279
        %5323 = vmatprep.subr.bf16.mxu0 0
        %5324 = vmatpush2.bf16.msra.mxu0 %v5278
        %5325 = vmatprep.subr.bf16.mxu0 0
        %5326 = vmatpush2.bf16.msra.mxu0 %v5277
        %5327 = vmatprep.subr.bf16.mxu0 0
        %5328 = vmatpush2.bf16.msra.mxu0 %v5276
        %5329 = vmatprep.subr.bf16.mxu0 0
        %5330 = vmatpush2.bf16.msra.mxu0 %v5275
        %5331 = vmatprep.mubr.bf16.mxu0 %v5161
        %5332 = vmatmul.mubr.bf16.gmra.mxu0 %v5160
        %v5333 = vpop.f32.mrf.mxu0
        %v5334 = vadd.f32 %v5201, %v5333
        %v5335 = vpop.f32.mrf.mxu0
        %v5336 = vpop.f32.mrf.mxu0
        %v5337 = vpop.f32.mrf.mxu0
        %5338 = vdwg.mxu0
        %v5339 = vadd.f32 %v5019, %v5334
        %v5340 = vld [vmem:[%s12] sm:$0x1]
        %v5341 = vld [vmem:[%s13] sm:$0x1]
        %v5342 = vsel %vm527, %v5339, 0.0
        %5343 = vadd.xlane.f32.xlu0 %v5342
        %v5344 = vpop.xlane.xlu0 %5343
        %v5345 = vmul.f32 %v5344, %v531
        %v5346 = vsub.f32 %v5339, %v5345
        %v5347 = vmul.f32 %v5346, %v5346
        %v5348 = vsel %vm527, %v5347, 0.0
        %5349 = vadd.xlane.f32.xlu0 %v5348
        %v5350 = vpop.xlane.xlu0 %5349
        %v5351 = vmul.f32 %v5350, %v531
        %v5352 = vadd.f32 %v5351, 1e-05
        %v5353 = vrsqrt.pop %v5352
        %v5354 = vmul.f32 %v5346, %v5353
        %v5356 = vlaneseq
        %v5357 = vshrl.u32 %v5356, 7
        %v5358 = vsub.s32 0, %v5357
        %v5359 = vrot.slane %v5340, %v5358
        %v5361 = vmul.f32 %v5354, %v5359
        %v5363 = vlaneseq
        %v5364 = vshrl.u32 %v5363, 7
        %v5365 = vsub.s32 0, %v5364
        %v5366 = vrot.slane %v5341, %v5365
        %v5368 = vadd.f32 %v5361, %v5366
        %v5369 = vpack.c.bf16 %v5368, %v5368
        %v5370 = vld [vmem:[%s14] sm:$0xf]
        %v5371 = vld [vmem:[%s14 + $0x4] sm:$0xf]
        %v5372 = vld [vmem:[%s14 + $0x8] sm:$0xf]
        %v5373 = vld [vmem:[%s14 + $0xc] sm:$0xf]
        %v5374 = vld [vmem:[%s14 + $0x10] sm:$0xf]
        %v5375 = vld [vmem:[%s14 + $0x14] sm:$0xf]
        %v5376 = vld [vmem:[%s14 + $0x18] sm:$0xf]
        %v5377 = vld [vmem:[%s14 + $0x1c] sm:$0xf]
        %v5378 = vld [vmem:[%s15] sm:$0x1]
        %v5380 = vlaneseq
        %v5381 = vshrl.u32 %v5380, 7
        %v5382 = vsub.s32 0, %v5381
        %v5383 = vrot.slane %v5378, %v5382
        %v5393 = vunpack.c.l.b16 %v5370
        %v5394 = vunpack.c.l.b16 %v5371
        %v5395 = vunpack.c.l.b16 %v5372
        %v5396 = vunpack.c.l.b16 %v5373
        %v5397 = vunpack.c.l.b16 %v5374
        %v5398 = vunpack.c.l.b16 %v5375
        %v5399 = vunpack.c.l.b16 %v5376
        %v5400 = vunpack.c.l.b16 %v5377
        %v5401 = vpack.c.b16 %v5394, %v5393
        %v5402 = vpack.c.b16 %v5396, %v5395
        %v5403 = vpack.c.b16 %v5398, %v5397
        %v5404 = vpack.c.b16 %v5400, %v5399
        %v5410 = vsel %vm527, %v5369, 0
        %5412 = vmatprep.subr.bf16.mxu0 0
        %5413 = vmatpush1.bf16.msra.mxu0 0
        %5414 = vmatprep.subr.bf16.mxu0 0
        %5415 = vmatpush1.bf16.msra.mxu0 0
        %5416 = vmatprep.subr.bf16.mxu0 0
        %5417 = vmatpush1.bf16.msra.mxu0 0
        %5418 = vmatprep.subr.bf16.mxu0 0
        %5419 = vmatpush1.bf16.msra.mxu0 0
        %5420 = vmatprep.subr.bf16.mxu0 0
        %5421 = vmatpush1.bf16.msra.mxu0 %v5404
        %5422 = vmatprep.subr.bf16.mxu0 0
        %5423 = vmatpush1.bf16.msra.mxu0 %v5403
        %5424 = vmatprep.subr.bf16.mxu0 0
        %5425 = vmatpush1.bf16.msra.mxu0 %v5402
        %5426 = vmatprep.subr.bf16.mxu0 0
        %5427 = vmatpush1.bf16.msra.mxu0 %v5401
        %5428 = vmatprep.subr.bf16.mxu0 0
        %5429 = vmatpush2.bf16.msra.mxu0 0
        %5430 = vmatprep.subr.bf16.mxu0 0
        %5431 = vmatpush2.bf16.msra.mxu0 0
        %5432 = vmatprep.subr.bf16.mxu0 0
        %5433 = vmatpush2.bf16.msra.mxu0 0
        %5434 = vmatprep.subr.bf16.mxu0 0
        %5435 = vmatpush2.bf16.msra.mxu0 0
        %5436 = vmatprep.subr.bf16.mxu0 0
        %5437 = vmatpush2.bf16.msra.mxu0 0
        %5438 = vmatprep.subr.bf16.mxu0 0
        %5439 = vmatpush2.bf16.msra.mxu0 0
        %5440 = vmatprep.subr.bf16.mxu0 0
        %5441 = vmatpush2.bf16.msra.mxu0 0
        %5442 = vmatprep.subr.bf16.mxu0 0
        %5443 = vmatpush2.bf16.msra.mxu0 0
        %5444 = vmatprep.mubr.bf16.mxu0 0
        %5445 = vmatmul.mubr.bf16.gmra.mxu0 %v5410
        %v5446 = vpop.f32.mrf.mxu0
        %v5447 = vadd.f32 %v5383, %v5446
        %v5448 = vpop.f32.mrf.mxu0
        %v5449 = vpop.f32.mrf.mxu0
        %v5450 = vpop.f32.mrf.mxu0
        %5451 = vdwg.mxu0
        %5452 = vst [vmem:[%s512] sm:$0xff] %v5447
        %s5453 = sand.u32 %s379, 1
        %s5454 = scalar_lea.sflag [#allocation3], %s5453
        %s5455 = sand.u32 %s379, 1
        %s5456 = smul.addr %s5455, 8
        %s5457 = scalar_lea.vmem [#allocation2], %s5456
        // Predicated region
        $region85: #{gpt_forward.1} parent=83 // pred_check
          %p5458 = pneg %p389
        $region86: #{gpt_forward.1} parent=83 // pred_check_branch
          %5460 = sbr.rel (%p5458) target = $region88
        $region87: #{gpt_forward.1} parent=83 // pred_region
          %s5462 = ssub.s32 128, 128
          %5463 = vsyncadd %s5454, %s5462
          %s5464 = smul.addr %s30, 128
          %s5465 = scalar_lea.hbm %s16, %s5464
          %s5467 = sshll.u32 %s5457, 4
          %s5468 = int_to_ptr.vmem [resolvable:$true] %s5467
          %5470 = dma.vmem_to_hbm [thread:$0]  %s5468, 128, %s5465, %s5454
        $region88: #{gpt_forward.1} parent=83 // pred_fallthru
          _
      $region84: #{gpt_forward.1} parent=5 // pred_fallthru
        _
      %p5471 = scmp.le.s32.totalorder 2, %s25
      // Predicated region
      $region89: #{gpt_forward.1} parent=5 // pred_check
        %p5472 = pneg %p5471
      $region90: #{gpt_forward.1} parent=5 // pred_check_branch
        %5474 = sbr.rel (%p5472) target = $region92
      $region91: #{gpt_forward.1} parent=5 // pred_region
        %s5475 = ssub.s32 %s25, 2
        // Predicated region
        $region93: #{gpt_forward.1} parent=91 // pred_check
          %p5476 = pneg %p395
        $region94: #{gpt_forward.1} parent=91 // pred_check_branch
          %5478 = sbr.rel (%p5476) target = $region96
        $region95: #{gpt_forward.1} parent=91 // pred_region
          %s5479 = sand.u32 %s380, 1
          %s5480 = scalar_lea.sflag [#allocation3], %s5479
          %s5481 = sand.u32 %s380, 1
          %s5482 = smul.addr %s5481, 8
          %s5483 = scalar_lea.vmem [#allocation2], %s5482
          %5484 = dma.done %s5480, 128
        $region96: #{gpt_forward.1} parent=91 // pred_fallthru
          _
      $region92: #{gpt_forward.1} parent=5 // pred_fallthru
        _
    $region6: #{gpt_forward.1} parent=1 // loop_footer
      %s29 = sadd.s32 1, %s25
    $region7: #{gpt_forward.1} parent=1 // loop_footer_branch
      %24 = sbr.rel target = $region3
    $region8: #{gpt_forward.1} parent=1 // loop_exit
      _
    %5485 = vsyncpa [#allocation3], 1
    %s5486 = scalar_lea.sflag [#allocation3], 1
    %5487 = vsyncpa %s5486, 1

</llo_original>
